<compile_context>
chip_gen: v7x
topology: tpu7x:2x2x1
jax: 0.10.0
libtpu: 0.0.40
codegen_flags: <defaults>
</compile_context>

<pallas_src>
import functools
import math

import jax
import jax.numpy as jnp
from jax import lax
from jax.experimental import pallas as pl
from jax.experimental.pallas import tpu as pltpu


# ----------------------------- in-kernel helpers -----------------------------

def _mm(a, w):
    """bf16 operands, f32 accumulation on the MXU. `w` is already bf16."""
    return jnp.dot(a.astype(jnp.bfloat16), w, preferred_element_type=jnp.float32)


def _layernorm(x, g, b):
    # PyTorch nn.LayerNorm semantics: biased variance, eps=1e-5 inside sqrt. f32 stats.
    mu = jnp.mean(x, axis=-1, keepdims=True)
    var = jnp.mean((x - mu) ** 2, axis=-1, keepdims=True)
    return (x - mu) * lax.rsqrt(var + jnp.float32(1e-5)) * g + b


def _attend(q, k, v, mask, n_heads, attn_ref=None):
    """q: [Lq, H] f32, k/v: [Lk, H] f32, mask: bool broadcastable to [Lq, Lk].

    All heads of this (batch-element) tile are processed here; attention probs are only
    written to HBM when attn_ref is provided (last decoder cross-attention).
    """
    Hd = q.shape[-1]
    Dh = Hd // n_heads
    scale = jnp.float32(1.0 / math.sqrt(Dh))
    outs = []
    for h in range(n_heads):
        qs = q[:, h * Dh:(h + 1) * Dh].astype(jnp.bfloat16)
        ks = k[:, h * Dh:(h + 1) * Dh].astype(jnp.bfloat16)
        vs = v[:, h * Dh:(h + 1) * Dh].astype(jnp.bfloat16)
        energy = lax.dot_general(
            qs, ks, (((1,), (1,)), ((), ())), preferred_element_type=jnp.float32
        ) * scale
        energy = jnp.where(mask, energy, jnp.float32(-1e10))
        m = jnp.max(energy, axis=-1, keepdims=True)
        e = jnp.exp(energy - m)
        denom = jnp.sum(e, axis=-1, keepdims=True)
        attn = e * pl.reciprocal(denom, approx=True)
        if attn_ref is not None:
            attn_ref[0, h] = attn
        outs.append(
            jnp.dot(attn.astype(jnp.bfloat16), vs, preferred_element_type=jnp.float32)
        )
    return jnp.concatenate(outs, axis=-1)


# ----------------------------- fused layer kernels ----------------------------

def _encoder_layer_kernel(x_ref, km_ref,
                          wqkv_ref, bqkv_ref, wo_ref, bo_ref, ln1g_ref, ln1b_ref,
                          w1_ref, b1_ref, w2_ref, b2_ref, ln2g_ref, ln2b_ref,
                          o_ref, *, n_heads):
    x = x_ref[0]                         # [L, H] f32
    H = x.shape[-1]
    keep = km_ref[0] > 0                 # [1, L] bool (key pad mask)

    qkv = _mm(x, wqkv_ref[...]) + bqkv_ref[...]
    q, k, v = qkv[:, :H], qkv[:, H:2 * H], qkv[:, 2 * H:]
    ctx = _attend(q, k, v, keep, n_heads)
    ctx = _mm(ctx, wo_ref[...]) + bo_ref[...]
    x = _layernorm(x + ctx, ln1g_ref[...], ln1b_ref[...])

    hdd = jnp.maximum(_mm(x, w1_ref[...]) + b1_ref[...], jnp.float32(0.0))
    ff = _mm(hdd, w2_ref[...]) + b2_ref[...]
    x = _layernorm(x + ff, ln2g_ref[...], ln2b_ref[...])
    o_ref[0] = x


def _decoder_layer_body(x_ref, enc_ref, tkm_ref, skm_ref,
                        wqkv_s_ref, bqkv_s_ref, wo_s_ref, bo_s_ref, ln1g_ref, ln1b_ref,
                        wq_c_ref, bq_c_ref, wkv_c_ref, bkv_c_ref, wo_c_ref, bo_c_ref,
                        ln2g_ref, ln2b_ref,
                        w1_ref, b1_ref, w2_ref, b2_ref, ln3g_ref, ln3b_ref,
                        *, o_ref, attn_ref, n_heads):
    x = x_ref[0]                         # [Lt, H]
    enc = enc_ref[0]                     # [Ls, H]
    H = x.shape[-1]
    Lt = x.shape[0]

    trg_keep = tkm_ref[0] > 0            # [1, Lt]
    src_keep = skm_ref[0] > 0            # [1, Ls]
    row = lax.broadcasted_iota(jnp.int32, (Lt, Lt), 0)
    col = lax.broadcasted_iota(jnp.int32, (Lt, Lt), 1)
    self_mask = (col <= row) & trg_keep  # causal & target-pad, built in-kernel

    # --- masked self-attention + residual + LN ---
    qkv = _mm(x, wqkv_s_ref[...]) + bqkv_s_ref[...]
    q, k, v = qkv[:, :H], qkv[:, H:2 * H], qkv[:, 2 * H:]
    ctx = _attend(q, k, v, self_mask, n_heads)
    ctx = _mm(ctx, wo_s_ref[...]) + bo_s_ref[...]
    x = _layernorm(x + ctx, ln1g_ref[...], ln1b_ref[...])

    # --- encoder-decoder cross attention + residual + LN ---
    qc = _mm(x, wq_c_ref[...]) + bq_c_ref[...]
    kvc = _mm(enc, wkv_c_ref[...]) + bkv_c_ref[...]
    kc, vc = kvc[:, :H], kvc[:, H:]
    ctx = _attend(qc, kc, vc, src_keep, n_heads, attn_ref=attn_ref)
    ctx = _mm(ctx, wo_c_ref[...]) + bo_c_ref[...]
    x = _layernorm(x + ctx, ln2g_ref[...], ln2b_ref[...])

    # --- position-wise feed-forward + residual + LN ---
    hdd = jnp.maximum(_mm(x, w1_ref[...]) + b1_ref[...], jnp.float32(0.0))
    ff = _mm(hdd, w2_ref[...]) + b2_ref[...]
    x = _layernorm(x + ff, ln3g_ref[...], ln3b_ref[...])
    o_ref[0] = x


def _decoder_layer_kernel_noattn(*args, n_heads):
    *ins, o_ref = args
    _decoder_layer_body(*ins, o_ref=o_ref, attn_ref=None, n_heads=n_heads)


def _decoder_layer_kernel_attn(*args, n_heads):
    *ins, o_ref, attn_ref = args
    _decoder_layer_body(*ins, o_ref=o_ref, attn_ref=attn_ref, n_heads=n_heads)


def _linear_kernel(x_ref, w_ref, b_ref, o_ref):
    o_ref[...] = _mm(x_ref[...], w_ref[...]) + b_ref[...]


# ----------------------------- Pallas wrappers --------------------------------

def _const_spec(arr):
    nd = arr.ndim
    return pl.BlockSpec(arr.shape, lambda b, _nd=nd: (0,) * _nd)


def encoder_layer(lp, x, key_mask, n_heads):
    B, L, H = x.shape
    P = lp["ff_w1"].shape[1]
    bf = lambda w: w.astype(jnp.bfloat16)
    args = [
        x, key_mask,
        bf(lp["wqkv"]), lp["bqkv"].reshape(1, 3 * H),
        bf(lp["wo"]), lp["bo"].reshape(1, H),
        lp["ln1_g"].reshape(1, H), lp["ln1_b"].reshape(1, H),
        bf(lp["ff_w1"]), lp["ff_b1"].reshape(1, P),
        bf(lp["ff_w2"]), lp["ff_b2"].reshape(1, H),
        lp["ln2_g"].reshape(1, H), lp["ln2_b"].reshape(1, H),
    ]
    in_specs = [
        pl.BlockSpec((1, L, H), lambda b: (b, 0, 0)),
        pl.BlockSpec((1, 1, L), lambda b: (b, 0, 0)),
    ] + [_const_spec(a) for a in args[2:]]
    return pl.pallas_call(
        functools.partial(_encoder_layer_kernel, n_heads=n_heads),
        out_shape=jax.ShapeDtypeStruct((B, L, H), jnp.float32),
        grid=(B,),
        in_specs=in_specs,
        out_specs=pl.BlockSpec((1, L, H), lambda b: (b, 0, 0)),
        compiler_params=pltpu.CompilerParams(dimension_semantics=("parallel",)),
    )(*args)


def decoder_layer(lp, x, enc_src, trg_key_mask, src_key_mask, n_heads, return_attn):
    B, Lt, H = x.shape
    Ls = enc_src.shape[1]
    P = lp["ff_w1"].shape[1]
    bf = lambda w: w.astype(jnp.bfloat16)
    sa, ca = lp["self_attn"], lp["enc_attn"]
    args = [
        x, enc_src, trg_key_mask, src_key_mask,
        bf(sa["wqkv"]), sa["bqkv"].reshape(1, 3 * H),
        bf(sa["wo"]), sa["bo"].reshape(1, H),
        lp["ln1_g"].reshape(1, H), lp["ln1_b"].reshape(1, H),
        bf(ca["wq"]), ca["bq"].reshape(1, H),
        bf(ca["wkv"]), ca["bkv"].reshape(1, 2 * H),
        bf(ca["wo"]), ca["bo"].reshape(1, H),
        lp["ln2_g"].reshape(1, H), lp["ln2_b"].reshape(1, H),
        bf(lp["ff_w1"]), lp["ff_b1"].reshape(1, P),
        bf(lp["ff_w2"]), lp["ff_b2"].reshape(1, H),
        lp["ln3_g"].reshape(1, H), lp["ln3_b"].reshape(1, H),
    ]
    in_specs = [
        pl.BlockSpec((1, Lt, H), lambda b: (b, 0, 0)),
        pl.BlockSpec((1, Ls, H), lambda b: (b, 0, 0)),
        pl.BlockSpec((1, 1, Lt), lambda b: (b, 0, 0)),
        pl.BlockSpec((1, 1, Ls), lambda b: (b, 0, 0)),
    ] + [_const_spec(a) for a in args[4:]]

    x_spec = pl.BlockSpec((1, Lt, H), lambda b: (b, 0, 0))
    if return_attn:
        out_shape = (
            jax.ShapeDtypeStruct((B, Lt, H), jnp.float32),
            jax.ShapeDtypeStruct((B, n_heads, Lt, Ls), jnp.float32),
        )
        out_specs = (x_spec, pl.BlockSpec((1, n_heads, Lt, Ls), lambda b: (b, 0, 0, 0)))
        kern = functools.partial(_decoder_layer_kernel_attn, n_heads=n_heads)
    else:
        out_shape = jax.ShapeDtypeStruct((B, Lt, H), jnp.float32)
        out_specs = x_spec
        kern = functools.partial(_decoder_layer_kernel_noattn, n_heads=n_heads)

    res = pl.pallas_call(
        kern,
        out_shape=out_shape,
        grid=(B,),
        in_specs=in_specs,
        out_specs=out_specs,
        compiler_params=pltpu.CompilerParams(dimension_semantics=("parallel",)),
    )(*args)
    if return_attn:
        return res[0], res[1]
    return res, None


def pallas_linear_padded(x, w, b, lane_pad=128):
    """x: [M, K] f32, w: [K, N] f32, b: [N] f32 -> [M, N] f32. N padded to lane_pad."""
    M, K = x.shape
    N = w.shape[1]
    Np = ((N + lane_pad - 1) // lane_pad) * lane_pad
    w_p = jnp.zeros((K, Np), jnp.float32).at[:, :N].set(w).astype(jnp.bfloat16)
    b_p = jnp.zeros((1, Np), jnp.float32).at[0, :N].set(b)
    out = pl.pallas_call(
        _linear_kernel,
        out_shape=jax.ShapeDtypeStruct((M, Np), jnp.float32),
        grid=(1,),
        in_specs=[
            pl.BlockSpec((M, K), lambda i: (0, 0)),
            pl.BlockSpec((K, Np), lambda i: (0, 0)),
            pl.BlockSpec((1, Np), lambda i: (0, 0)),
        ],
        out_specs=pl.BlockSpec((M, Np), lambda i: (0, 0)),
    )(x, w_p, b_p)
    return out[:, :N]


# ----------------------------- model components -------------------------------

def make_key_mask(tokens, pad_idx):
    # compact [B, 1, L] f32 pad mask (1 = keep); per-head broadcast & causal part
    # are built inside the kernels.
    B, L = tokens.shape
    return (tokens != pad_idx).astype(jnp.float32).reshape(B, 1, L)


def encoder_forward(p, src, src_key_mask, hid_dim, n_heads):
    B, L = src.shape
    scale = jnp.sqrt(jnp.float32(hid_dim))
    x = p["tok_emb"][src] * scale + p["pos_emb"][:L][None, :, :]
    for lp in p["layers"]:
        x = encoder_layer(lp, x, src_key_mask, n_heads)
    return x


def decoder_forward(p, trg, enc_src, trg_key_mask, src_key_mask, hid_dim, n_heads):
    B, L = trg.shape
    scale = jnp.sqrt(jnp.float32(hid_dim))
    x = p["tok_emb"][trg] * scale + p["pos_emb"][:L][None, :, :]
    attention = None
    n_layers = len(p["layers"])
    for i, lp in enumerate(p["layers"]):
        x, attn = decoder_layer(
            lp, x, enc_src, trg_key_mask, src_key_mask, n_heads,
            return_attn=(i == n_layers - 1),
        )
        if attn is not None:
            attention = attn
    out = pallas_linear_padded(x.reshape(B * L, hid_dim), p["fc_out_w"], p["fc_out_b"])
    return out.reshape(B, L, -1), attention


def seq2seq_forward(params, src, trg, src_pad_idx, trg_pad_idx, hid_dim, n_heads):
    src_km = make_key_mask(src, src_pad_idx)
    trg_km = make_key_mask(trg, trg_pad_idx)
    enc_src = encoder_forward(params["encoder"], src, src_km, hid_dim, n_heads)
    output, attention = decoder_forward(
        params["decoder"], trg, enc_src, trg_km, src_km, hid_dim, n_heads
    )
    return output, attention


# ----------------------------- parameter init ---------------------------------

def _init_self_attn(key, hid):
    ks = jax.random.split(key, 4)
    lin = lambda k: jax.random.normal(k, (hid, hid), jnp.float32) * 0.02
    return {
        "wqkv": jnp.concatenate([lin(ks[0]), lin(ks[1]), lin(ks[2])], axis=1),
        "bqkv": jnp.zeros((3 * hid,), jnp.float32),
        "wo": lin(ks[3]), "bo": jnp.zeros((hid,), jnp.float32),
    }


def _init_cross_attn(key, hid):
    ks = jax.random.split(key, 4)
    lin = lambda k: jax.random.normal(k, (hid, hid), jnp.float32) * 0.02
    return {
        "wq": lin(ks[0]), "bq": jnp.zeros((hid,), jnp.float32),
        "wkv": jnp.concatenate([lin(ks[1]), lin(ks[2])], axis=1),
        "bkv": jnp.zeros((2 * hid,), jnp.float32),
        "wo": lin(ks[3]), "bo": jnp.zeros((hid,), jnp.float32),
    }


def _init_enc_layer(key, hid, pf):
    ks = jax.random.split(key, 3)
    lp = _init_self_attn(ks[0], hid)
    return {
        "wqkv": lp["wqkv"], "bqkv": lp["bqkv"], "wo": lp["wo"], "bo": lp["bo"],
        "ln1_g": jnp.ones((hid,), jnp.float32), "ln1_b": jnp.zeros((hid,), jnp.float32),
        "ff_w1": jax.random.normal(ks[1], (hid, pf), jnp.float32) * 0.02,
        "ff_b1": jnp.zeros((pf,), jnp.float32),
        "ff_w2": jax.random.normal(ks[2], (pf, hid), jnp.float32) * 0.02,
        "ff_b2": jnp.zeros((hid,), jnp.float32),
        "ln2_g": jnp.ones((hid,), jnp.float32), "ln2_b": jnp.zeros((hid,), jnp.float32),
    }


def _init_dec_layer(key, hid, pf):
    ks = jax.random.split(key, 4)
    return {
        "self_attn": _init_self_attn(ks[0], hid),
        "ln1_g": jnp.ones((hid,), jnp.float32), "ln1_b": jnp.zeros((hid,), jnp.float32),
        "enc_attn": _init_cross_attn(ks[1], hid),
        "ln2_g": jnp.ones((hid,), jnp.float32), "ln2_b": jnp.zeros((hid,), jnp.float32),
        "ff_w1": jax.random.normal(ks[2], (hid, pf), jnp.float32) * 0.02,
        "ff_b1": jnp.zeros((pf,), jnp.float32),
        "ff_w2": jax.random.normal(ks[3], (pf, hid), jnp.float32) * 0.02,
        "ff_b2": jnp.zeros((hid,), jnp.float32),
        "ln3_g": jnp.ones((hid,), jnp.float32), "ln3_b": jnp.zeros((hid,), jnp.float32),
    }


def init_params(key, input_dim, output_dim, hid, pf, n_layers, max_len):
    ke, kd = jax.random.split(key)
    ke_tok, ke_pos, *ke_layers = jax.random.split(ke, 2 + n_layers)
    kd_tok, kd_pos, kd_fc, *kd_layers = jax.random.split(kd, 3 + n_layers)
    encoder = {
        "tok_emb": jax.random.normal(ke_tok, (input_dim, hid), jnp.float32) * 0.02,
        "pos_emb": jax.random.normal(ke_pos, (max_len, hid), jnp.float32) * 0.02,
        "layers": [_init_enc_layer(k, hid, pf) for k in ke_layers],
    }
    decoder = {
        "tok_emb": jax.random.normal(kd_tok, (output_dim, hid), jnp.float32) * 0.02,
        "pos_emb": jax.random.normal(kd_pos, (max_len, hid), jnp.float32) * 0.02,
        "layers": [_init_dec_layer(k, hid, pf) for k in kd_layers],
        "fc_out_w": jax.random.normal(kd_fc, (hid, output_dim), jnp.float32) * 0.02,
        "fc_out_b": jnp.zeros((output_dim,), jnp.float32),
    }
    return {"encoder": encoder, "decoder": decoder}


# ---------------------------------- main ---------------------------------------

if __name__ == "__main__":
    INPUT_DIM = 50     # source vocab
    OUTPUT_DIM = 60    # target vocab
    HID_DIM = 32
    N_LAYERS = 2
    N_HEADS = 4
    PF_DIM = 64
    MAX_LEN = 32
    SRC_PAD_IDX = 0
    TRG_PAD_IDX = 0

    B, SRC_LEN, TRG_LEN = 2, 8, 8

    root = jax.random.PRNGKey(0)
    k_params, k_src, k_trg = jax.random.split(root, 3)
    params = init_params(k_params, INPUT_DIM, OUTPUT_DIM, HID_DIM, PF_DIM, N_LAYERS, MAX_LEN)

    src = jax.random.randint(k_src, (B, SRC_LEN), 1, INPUT_DIM, dtype=jnp.int32)
    trg = jax.random.randint(k_trg, (B, TRG_LEN), 1, OUTPUT_DIM, dtype=jnp.int32)
    # introduce padding so the masks actually do something
    src = src.at[0, 6:].set(SRC_PAD_IDX)
    trg = trg.at[1, 5:].set(TRG_PAD_IDX)

    fwd = jax.jit(
        lambda p, s, t: seq2seq_forward(p, s, t, SRC_PAD_IDX, TRG_PAD_IDX, HID_DIM, N_HEADS)
    )
    output, attention = fwd(params, src, trg)
    jax.block_until_ready((output, attention))

    assert output.shape == (B, TRG_LEN, OUTPUT_DIM), output.shape
    assert attention.shape == (B, N_HEADS, TRG_LEN, SRC_LEN), attention.shape
    assert bool(jnp.all(jnp.isfinite(output))) and bool(jnp.all(jnp.isfinite(attention)))
    # attention rows are softmax distributions -> sum to ~1 (approx reciprocal on EUP)
    assert bool(jnp.allclose(attention.sum(-1), 1.0, atol=5e-3))

    print("KERNEL_OK")
</pallas_src>

<mosaic_0001>
module attributes {stable_mosaic.version = 11 : i64} {
  func.func @_encoder_layer_kernel(%arg0: i32, %arg1: memref<1x8x32xf32, #tpu.memory_space<vmem>>, %arg2: memref<1x1x8xf32, #tpu.memory_space<vmem>>, %arg3: memref<32x96xbf16, #tpu.memory_space<vmem>>, %arg4: memref<1x96xf32, #tpu.memory_space<vmem>>, %arg5: memref<32x32xbf16, #tpu.memory_space<vmem>>, %arg6: memref<1x32xf32, #tpu.memory_space<vmem>>, %arg7: memref<1x32xf32, #tpu.memory_space<vmem>>, %arg8: memref<1x32xf32, #tpu.memory_space<vmem>>, %arg9: memref<32x64xbf16, #tpu.memory_space<vmem>>, %arg10: memref<1x64xf32, #tpu.memory_space<vmem>>, %arg11: memref<64x32xbf16, #tpu.memory_space<vmem>>, %arg12: memref<1x32xf32, #tpu.memory_space<vmem>>, %arg13: memref<1x32xf32, #tpu.memory_space<vmem>>, %arg14: memref<1x32xf32, #tpu.memory_space<vmem>>, %arg15: memref<1x8x32xf32, #tpu.memory_space<vmem>>) attributes {dimension_semantics = [#tpu.dimension_semantics<parallel>], iteration_bounds = array<i64: 2>, scalar_prefetch = 0 : i64, scratch_operands = 0 : i64, tpu.core_type = #tpu.core_type<tc>, window_params = [{transform_indices = @transform_0, window_bounds = array<i64: 1, 8, 32>}, {transform_indices = @transform_1, window_bounds = array<i64: 1, 1, 8>}, {pipeline_mode = #tpu.pipeline_mode<synchronous>, transform_indices = @transform_2, window_bounds = array<i64: 32, 96>}, {pipeline_mode = #tpu.pipeline_mode<synchronous>, transform_indices = @transform_3, window_bounds = array<i64: 1, 96>}, {pipeline_mode = #tpu.pipeline_mode<synchronous>, transform_indices = @transform_4, window_bounds = array<i64: 32, 32>}, {pipeline_mode = #tpu.pipeline_mode<synchronous>, transform_indices = @transform_5, window_bounds = array<i64: 1, 32>}, {pipeline_mode = #tpu.pipeline_mode<synchronous>, transform_indices = @transform_6, window_bounds = array<i64: 1, 32>}, {pipeline_mode = #tpu.pipeline_mode<synchronous>, transform_indices = @transform_7, window_bounds = array<i64: 1, 32>}, {pipeline_mode = #tpu.pipeline_mode<synchronous>, transform_indices = @transform_8, window_bounds = array<i64: 32, 64>}, {pipeline_mode = #tpu.pipeline_mode<synchronous>, transform_indices = @transform_9, window_bounds = array<i64: 1, 64>}, {pipeline_mode = #tpu.pipeline_mode<synchronous>, transform_indices = @transform_10, window_bounds = array<i64: 64, 32>}, {pipeline_mode = #tpu.pipeline_mode<synchronous>, transform_indices = @transform_11, window_bounds = array<i64: 1, 32>}, {pipeline_mode = #tpu.pipeline_mode<synchronous>, transform_indices = @transform_12, window_bounds = array<i64: 1, 32>}, {pipeline_mode = #tpu.pipeline_mode<synchronous>, transform_indices = @transform_13, window_bounds = array<i64: 1, 32>}, {transform_indices = @transform_14, window_bounds = array<i64: 1, 8, 32>}]} {
    %c0 = arith.constant 0 : index
    %c0_0 = arith.constant 0 : index
    %c0_1 = arith.constant 0 : index
    %0 = vector.load %arg1[%c0, %c0_0, %c0_1] : memref<1x8x32xf32, #tpu.memory_space<vmem>>, vector<1x8x32xf32>
    %1 = vector.shape_cast %0 : vector<1x8x32xf32> to vector<8x32xf32>
    %c0_2 = arith.constant 0 : index
    %c0_3 = arith.constant 0 : index
    %c0_4 = arith.constant 0 : index
    %2 = vector.load %arg2[%c0_2, %c0_3, %c0_4] : memref<1x1x8xf32, #tpu.memory_space<vmem>>, vector<1x1x8xf32>
    %3 = vector.shape_cast %2 : vector<1x1x8xf32> to vector<1x8xf32>
    %cst = arith.constant 0.000000e+00 : f32
    %4 = vector.broadcast %cst : f32 to vector<1x8xf32>
    %5 = arith.cmpf ogt, %3, %4 : vector<1x8xf32>
    %c0_5 = arith.constant 0 : index
    %c0_6 = arith.constant 0 : index
    %6 = vector.load %arg3[%c0_5, %c0_6] : memref<32x96xbf16, #tpu.memory_space<vmem>>, vector<32x96xbf16>
    %7 = arith.truncf %1 : vector<8x32xf32> to vector<8x32xbf16>
    %cst_7 = arith.constant dense<0.000000e+00> : vector<8x96xf32>
    %8 = tpu.matmul %7, %6, %cst_7 {dimension_numbers = #tpu.dot_dimension_numbers<[1], [0], [0], [1], [0, 0, 1, 1], [], []>} : vector<8x32xbf16>, vector<32x96xbf16>, vector<8x96xf32> -> vector<8x96xf32>
    %c0_8 = arith.constant 0 : index
    %c0_9 = arith.constant 0 : index
    %9 = vector.load %arg4[%c0_8, %c0_9] : memref<1x96xf32, #tpu.memory_space<vmem>>, vector<1x96xf32>
    %10 = vector.broadcast %9 : vector<1x96xf32> to vector<8x96xf32>
    %11 = arith.addf %8, %10 : vector<8x96xf32>
    %12 = vector.extract_strided_slice %11 {offsets = [0, 0], sizes = [8, 32], strides = [1, 1]} : vector<8x96xf32> to vector<8x32xf32>
    %13 = vector.extract_strided_slice %11 {offsets = [0, 32], sizes = [8, 32], strides = [1, 1]} : vector<8x96xf32> to vector<8x32xf32>
    %14 = vector.extract_strided_slice %11 {offsets = [0, 64], sizes = [8, 32], strides = [1, 1]} : vector<8x96xf32> to vector<8x32xf32>
    %15 = vector.extract_strided_slice %12 {offsets = [0, 0], sizes = [8, 8], strides = [1, 1]} : vector<8x32xf32> to vector<8x8xf32>
    %16 = arith.truncf %15 : vector<8x8xf32> to vector<8x8xbf16>
    %17 = vector.extract_strided_slice %13 {offsets = [0, 0], sizes = [8, 8], strides = [1, 1]} : vector<8x32xf32> to vector<8x8xf32>
    %18 = arith.truncf %17 : vector<8x8xf32> to vector<8x8xbf16>
    %19 = vector.extract_strided_slice %14 {offsets = [0, 0], sizes = [8, 8], strides = [1, 1]} : vector<8x32xf32> to vector<8x8xf32>
    %20 = arith.truncf %19 : vector<8x8xf32> to vector<8x8xbf16>
    %cst_10 = arith.constant dense<0.000000e+00> : vector<8x8xf32>
    %21 = tpu.matmul %16, %18, %cst_10 {dimension_numbers = #tpu.dot_dimension_numbers<[1], [1], [0], [0], [0, 0, 1, 0], [], []>} : vector<8x8xbf16>, vector<8x8xbf16>, vector<8x8xf32> -> vector<8x8xf32>
    %cst_11 = arith.constant 0.353553385 : f32
    %22 = vector.broadcast %cst_11 : f32 to vector<8x8xf32>
    %23 = arith.mulf %21, %22 : vector<8x8xf32>
    %cst_12 = arith.constant -1.000000e+10 : f32
    %24 = vector.shape_cast %5 : vector<1x8xi1> to vector<1x8xi1>
    %25 = vector.broadcast %24 : vector<1x8xi1> to vector<8x8xi1>
    %26 = vector.broadcast %cst_12 : f32 to vector<8x8xf32>
    %27 = arith.select %25, %23, %26 : vector<8x8xi1>, vector<8x8xf32>
    %cst_13 = arith.constant dense<0xFF800000> : vector<8xf32>
    %28 = vector.multi_reduction <maximumf>, %27, %cst_13 [1] : vector<8x8xf32> to vector<8xf32>
    %29 = vector.shape_cast %28 : vector<8xf32> to vector<8x1xf32>
    %30 = vector.broadcast %29 : vector<8x1xf32> to vector<8x8xf32>
    %31 = arith.subf %27, %30 : vector<8x8xf32>
    %32 = math.exp %31 : vector<8x8xf32>
    %cst_14 = arith.constant dense<0.000000e+00> : vector<8xf32>
    %33 = vector.multi_reduction <add>, %32, %cst_14 [1] : vector<8x8xf32> to vector<8xf32>
    %34 = vector.shape_cast %33 : vector<8xf32> to vector<8x1xf32>
    %35 = tpu.reciprocal %34 {approx = true} : vector<8x1xf32> -> vector<8x1xf32>
    %36 = vector.broadcast %35 : vector<8x1xf32> to vector<8x8xf32>
    %37 = arith.mulf %32, %36 : vector<8x8xf32>
    %38 = arith.truncf %37 : vector<8x8xf32> to vector<8x8xbf16>
    %cst_15 = arith.constant dense<0.000000e+00> : vector<8x8xf32>
    %39 = tpu.matmul %38, %20, %cst_15 {dimension_numbers = #tpu.dot_dimension_numbers<[1], [0], [0], [1], [0, 0, 1, 1], [], []>} : vector<8x8xbf16>, vector<8x8xbf16>, vector<8x8xf32> -> vector<8x8xf32>
    %40 = vector.extract_strided_slice %12 {offsets = [0, 8], sizes = [8, 8], strides = [1, 1]} : vector<8x32xf32> to vector<8x8xf32>
    %41 = arith.truncf %40 : vector<8x8xf32> to vector<8x8xbf16>
    %42 = vector.extract_strided_slice %13 {offsets = [0, 8], sizes = [8, 8], strides = [1, 1]} : vector<8x32xf32> to vector<8x8xf32>
    %43 = arith.truncf %42 : vector<8x8xf32> to vector<8x8xbf16>
    %44 = vector.extract_strided_slice %14 {offsets = [0, 8], sizes = [8, 8], strides = [1, 1]} : vector<8x32xf32> to vector<8x8xf32>
    %45 = arith.truncf %44 : vector<8x8xf32> to vector<8x8xbf16>
    %cst_16 = arith.constant dense<0.000000e+00> : vector<8x8xf32>
    %46 = tpu.matmul %41, %43, %cst_16 {dimension_numbers = #tpu.dot_dimension_numbers<[1], [1], [0], [0], [0, 0, 1, 0], [], []>} : vector<8x8xbf16>, vector<8x8xbf16>, vector<8x8xf32> -> vector<8x8xf32>
    %cst_17 = arith.constant 0.353553385 : f32
    %47 = vector.broadcast %cst_17 : f32 to vector<8x8xf32>
    %48 = arith.mulf %46, %47 : vector<8x8xf32>
    %cst_18 = arith.constant -1.000000e+10 : f32
    %49 = vector.shape_cast %5 : vector<1x8xi1> to vector<1x8xi1>
    %50 = vector.broadcast %49 : vector<1x8xi1> to vector<8x8xi1>
    %51 = vector.broadcast %cst_18 : f32 to vector<8x8xf32>
    %52 = arith.select %50, %48, %51 : vector<8x8xi1>, vector<8x8xf32>
    %cst_19 = arith.constant dense<0xFF800000> : vector<8xf32>
    %53 = vector.multi_reduction <maximumf>, %52, %cst_19 [1] : vector<8x8xf32> to vector<8xf32>
    %54 = vector.shape_cast %53 : vector<8xf32> to vector<8x1xf32>
    %55 = vector.broadcast %54 : vector<8x1xf32> to vector<8x8xf32>
    %56 = arith.subf %52, %55 : vector<8x8xf32>
    %57 = math.exp %56 : vector<8x8xf32>
    %cst_20 = arith.constant dense<0.000000e+00> : vector<8xf32>
    %58 = vector.multi_reduction <add>, %57, %cst_20 [1] : vector<8x8xf32> to vector<8xf32>
    %59 = vector.shape_cast %58 : vector<8xf32> to vector<8x1xf32>
    %60 = tpu.reciprocal %59 {approx = true} : vector<8x1xf32> -> vector<8x1xf32>
    %61 = vector.broadcast %60 : vector<8x1xf32> to vector<8x8xf32>
    %62 = arith.mulf %57, %61 : vector<8x8xf32>
    %63 = arith.truncf %62 : vector<8x8xf32> to vector<8x8xbf16>
    %cst_21 = arith.constant dense<0.000000e+00> : vector<8x8xf32>
    %64 = tpu.matmul %63, %45, %cst_21 {dimension_numbers = #tpu.dot_dimension_numbers<[1], [0], [0], [1], [0, 0, 1, 1], [], []>} : vector<8x8xbf16>, vector<8x8xbf16>, vector<8x8xf32> -> vector<8x8xf32>
    %65 = vector.extract_strided_slice %12 {offsets = [0, 16], sizes = [8, 8], strides = [1, 1]} : vector<8x32xf32> to vector<8x8xf32>
    %66 = arith.truncf %65 : vector<8x8xf32> to vector<8x8xbf16>
    %67 = vector.extract_strided_slice %13 {offsets = [0, 16], sizes = [8, 8], strides = [1, 1]} : vector<8x32xf32> to vector<8x8xf32>
    %68 = arith.truncf %67 : vector<8x8xf32> to vector<8x8xbf16>
    %69 = vector.extract_strided_slice %14 {offsets = [0, 16], sizes = [8, 8], strides = [1, 1]} : vector<8x32xf32> to vector<8x8xf32>
    %70 = arith.truncf %69 : vector<8x8xf32> to vector<8x8xbf16>
    %cst_22 = arith.constant dense<0.000000e+00> : vector<8x8xf32>
    %71 = tpu.matmul %66, %68, %cst_22 {dimension_numbers = #tpu.dot_dimension_numbers<[1], [1], [0], [0], [0, 0, 1, 0], [], []>} : vector<8x8xbf16>, vector<8x8xbf16>, vector<8x8xf32> -> vector<8x8xf32>
    %cst_23 = arith.constant 0.353553385 : f32
    %72 = vector.broadcast %cst_23 : f32 to vector<8x8xf32>
    %73 = arith.mulf %71, %72 : vector<8x8xf32>
    %cst_24 = arith.constant -1.000000e+10 : f32
    %74 = vector.shape_cast %5 : vector<1x8xi1> to vector<1x8xi1>
    %75 = vector.broadcast %74 : vector<1x8xi1> to vector<8x8xi1>
    %76 = vector.broadcast %cst_24 : f32 to vector<8x8xf32>
    %77 = arith.select %75, %73, %76 : vector<8x8xi1>, vector<8x8xf32>
    %cst_25 = arith.constant dense<0xFF800000> : vector<8xf32>
    %78 = vector.multi_reduction <maximumf>, %77, %cst_25 [1] : vector<8x8xf32> to vector<8xf32>
    %79 = vector.shape_cast %78 : vector<8xf32> to vector<8x1xf32>
    %80 = vector.broadcast %79 : vector<8x1xf32> to vector<8x8xf32>
    %81 = arith.subf %77, %80 : vector<8x8xf32>
    %82 = math.exp %81 : vector<8x8xf32>
    %cst_26 = arith.constant dense<0.000000e+00> : vector<8xf32>
    %83 = vector.multi_reduction <add>, %82, %cst_26 [1] : vector<8x8xf32> to vector<8xf32>
    %84 = vector.shape_cast %83 : vector<8xf32> to vector<8x1xf32>
    %85 = tpu.reciprocal %84 {approx = true} : vector<8x1xf32> -> vector<8x1xf32>
    %86 = vector.broadcast %85 : vector<8x1xf32> to vector<8x8xf32>
    %87 = arith.mulf %82, %86 : vector<8x8xf32>
    %88 = arith.truncf %87 : vector<8x8xf32> to vector<8x8xbf16>
    %cst_27 = arith.constant dense<0.000000e+00> : vector<8x8xf32>
    %89 = tpu.matmul %88, %70, %cst_27 {dimension_numbers = #tpu.dot_dimension_numbers<[1], [0], [0], [1], [0, 0, 1, 1], [], []>} : vector<8x8xbf16>, vector<8x8xbf16>, vector<8x8xf32> -> vector<8x8xf32>
    %90 = vector.extract_strided_slice %12 {offsets = [0, 24], sizes = [8, 8], strides = [1, 1]} : vector<8x32xf32> to vector<8x8xf32>
    %91 = arith.truncf %90 : vector<8x8xf32> to vector<8x8xbf16>
    %92 = vector.extract_strided_slice %13 {offsets = [0, 24], sizes = [8, 8], strides = [1, 1]} : vector<8x32xf32> to vector<8x8xf32>
    %93 = arith.truncf %92 : vector<8x8xf32> to vector<8x8xbf16>
    %94 = vector.extract_strided_slice %14 {offsets = [0, 24], sizes = [8, 8], strides = [1, 1]} : vector<8x32xf32> to vector<8x8xf32>
    %95 = arith.truncf %94 : vector<8x8xf32> to vector<8x8xbf16>
    %cst_28 = arith.constant dense<0.000000e+00> : vector<8x8xf32>
    %96 = tpu.matmul %91, %93, %cst_28 {dimension_numbers = #tpu.dot_dimension_numbers<[1], [1], [0], [0], [0, 0, 1, 0], [], []>} : vector<8x8xbf16>, vector<8x8xbf16>, vector<8x8xf32> -> vector<8x8xf32>
    %cst_29 = arith.constant 0.353553385 : f32
    %97 = vector.broadcast %cst_29 : f32 to vector<8x8xf32>
    %98 = arith.mulf %96, %97 : vector<8x8xf32>
    %cst_30 = arith.constant -1.000000e+10 : f32
    %99 = vector.shape_cast %5 : vector<1x8xi1> to vector<1x8xi1>
    %100 = vector.broadcast %99 : vector<1x8xi1> to vector<8x8xi1>
    %101 = vector.broadcast %cst_30 : f32 to vector<8x8xf32>
    %102 = arith.select %100, %98, %101 : vector<8x8xi1>, vector<8x8xf32>
    %cst_31 = arith.constant dense<0xFF800000> : vector<8xf32>
    %103 = vector.multi_reduction <maximumf>, %102, %cst_31 [1] : vector<8x8xf32> to vector<8xf32>
    %104 = vector.shape_cast %103 : vector<8xf32> to vector<8x1xf32>
    %105 = vector.broadcast %104 : vector<8x1xf32> to vector<8x8xf32>
    %106 = arith.subf %102, %105 : vector<8x8xf32>
    %107 = math.exp %106 : vector<8x8xf32>
    %cst_32 = arith.constant dense<0.000000e+00> : vector<8xf32>
    %108 = vector.multi_reduction <add>, %107, %cst_32 [1] : vector<8x8xf32> to vector<8xf32>
    %109 = vector.shape_cast %108 : vector<8xf32> to vector<8x1xf32>
    %110 = tpu.reciprocal %109 {approx = true} : vector<8x1xf32> -> vector<8x1xf32>
    %111 = vector.broadcast %110 : vector<8x1xf32> to vector<8x8xf32>
    %112 = arith.mulf %107, %111 : vector<8x8xf32>
    %113 = arith.truncf %112 : vector<8x8xf32> to vector<8x8xbf16>
    %cst_33 = arith.constant dense<0.000000e+00> : vector<8x8xf32>
    %114 = tpu.matmul %113, %95, %cst_33 {dimension_numbers = #tpu.dot_dimension_numbers<[1], [0], [0], [1], [0, 0, 1, 1], [], []>} : vector<8x8xbf16>, vector<8x8xbf16>, vector<8x8xf32> -> vector<8x8xf32>
    %115 = tpu.concatenate %39, %64, %89, %114 in 1 : vector<8x8xf32>, vector<8x8xf32>, vector<8x8xf32>, vector<8x8xf32> -> vector<8x32xf32>
    %c0_34 = arith.constant 0 : index
    %c0_35 = arith.constant 0 : index
    %116 = vector.load %arg5[%c0_34, %c0_35] : memref<32x32xbf16, #tpu.memory_space<vmem>>, vector<32x32xbf16>
    %117 = arith.truncf %115 : vector<8x32xf32> to vector<8x32xbf16>
    %cst_36 = arith.constant dense<0.000000e+00> : vector<8x32xf32>
    %118 = tpu.matmul %117, %116, %cst_36 {dimension_numbers = #tpu.dot_dimension_numbers<[1], [0], [0], [1], [0, 0, 1, 1], [], []>} : vector<8x32xbf16>, vector<32x32xbf16>, vector<8x32xf32> -> vector<8x32xf32>
    %c0_37 = arith.constant 0 : index
    %c0_38 = arith.constant 0 : index
    %119 = vector.load %arg6[%c0_37, %c0_38] : memref<1x32xf32, #tpu.memory_space<vmem>>, vector<1x32xf32>
    %120 = vector.broadcast %119 : vector<1x32xf32> to vector<8x32xf32>
    %121 = arith.addf %118, %120 : vector<8x32xf32>
    %122 = arith.addf %1, %121 : vector<8x32xf32>
    %c0_39 = arith.constant 0 : index
    %c0_40 = arith.constant 0 : index
    %123 = vector.load %arg7[%c0_39, %c0_40] : memref<1x32xf32, #tpu.memory_space<vmem>>, vector<1x32xf32>
    %c0_41 = arith.constant 0 : index
    %c0_42 = arith.constant 0 : index
    %124 = vector.load %arg8[%c0_41, %c0_42] : memref<1x32xf32, #tpu.memory_space<vmem>>, vector<1x32xf32>
    %cst_43 = arith.constant dense<0.000000e+00> : vector<8xf32>
    %125 = vector.multi_reduction <add>, %122, %cst_43 [1] : vector<8x32xf32> to vector<8xf32>
    %126 = vector.shape_cast %125 : vector<8xf32> to vector<8x1xf32>
    %cst_44 = arith.constant 3.200000e+01 : f32
    %127 = vector.broadcast %cst_44 : f32 to vector<8x1xf32>
    %128 = arith.divf %126, %127 : vector<8x1xf32>
    %129 = vector.broadcast %128 : vector<8x1xf32> to vector<8x32xf32>
    %130 = arith.subf %122, %129 : vector<8x32xf32>
    %131 = arith.mulf %130, %130 : vector<8x32xf32>
    %cst_45 = arith.constant dense<0.000000e+00> : vector<8xf32>
    %132 = vector.multi_reduction <add>, %131, %cst_45 [1] : vector<8x32xf32> to vector<8xf32>
    %133 = vector.shape_cast %132 : vector<8xf32> to vector<8x1xf32>
    %cst_46 = arith.constant 3.200000e+01 : f32
    %134 = vector.broadcast %cst_46 : f32 to vector<8x1xf32>
    %135 = arith.divf %133, %134 : vector<8x1xf32>
    %136 = vector.broadcast %128 : vector<8x1xf32> to vector<8x32xf32>
    %137 = arith.subf %122, %136 : vector<8x32xf32>
    %cst_47 = arith.constant 9.99999974E-6 : f32
    %138 = vector.broadcast %cst_47 : f32 to vector<8x1xf32>
    %139 = arith.addf %135, %138 : vector<8x1xf32>
    %140 = math.rsqrt %139 : vector<8x1xf32>
    %141 = vector.broadcast %140 : vector<8x1xf32> to vector<8x32xf32>
    %142 = arith.mulf %137, %141 : vector<8x32xf32>
    %143 = vector.broadcast %123 : vector<1x32xf32> to vector<8x32xf32>
    %144 = arith.mulf %142, %143 : vector<8x32xf32>
    %145 = vector.broadcast %124 : vector<1x32xf32> to vector<8x32xf32>
    %146 = arith.addf %144, %145 : vector<8x32xf32>
    %c0_48 = arith.constant 0 : index
    %c0_49 = arith.constant 0 : index
    %147 = vector.load %arg9[%c0_48, %c0_49] : memref<32x64xbf16, #tpu.memory_space<vmem>>, vector<32x64xbf16>
    %148 = arith.truncf %146 : vector<8x32xf32> to vector<8x32xbf16>
    %cst_50 = arith.constant dense<0.000000e+00> : vector<8x64xf32>
    %149 = tpu.matmul %148, %147, %cst_50 {dimension_numbers = #tpu.dot_dimension_numbers<[1], [0], [0], [1], [0, 0, 1, 1], [], []>} : vector<8x32xbf16>, vector<32x64xbf16>, vector<8x64xf32> -> vector<8x64xf32>
    %c0_51 = arith.constant 0 : index
    %c0_52 = arith.constant 0 : index
    %150 = vector.load %arg10[%c0_51, %c0_52] : memref<1x64xf32, #tpu.memory_space<vmem>>, vector<1x64xf32>
    %151 = vector.broadcast %150 : vector<1x64xf32> to vector<8x64xf32>
    %152 = arith.addf %149, %151 : vector<8x64xf32>
    %cst_53 = arith.constant 0.000000e+00 : f32
    %153 = vector.broadcast %cst_53 : f32 to vector<8x64xf32>
    %154 = arith.maximumf %152, %153 : vector<8x64xf32>
    %c0_54 = arith.constant 0 : index
    %c0_55 = arith.constant 0 : index
    %155 = vector.load %arg11[%c0_54, %c0_55] : memref<64x32xbf16, #tpu.memory_space<vmem>>, vector<64x32xbf16>
    %156 = arith.truncf %154 : vector<8x64xf32> to vector<8x64xbf16>
    %cst_56 = arith.constant dense<0.000000e+00> : vector<8x32xf32>
    %157 = tpu.matmul %156, %155, %cst_56 {dimension_numbers = #tpu.dot_dimension_numbers<[1], [0], [0], [1], [0, 0, 1, 1], [], []>} : vector<8x64xbf16>, vector<64x32xbf16>, vector<8x32xf32> -> vector<8x32xf32>
    %c0_57 = arith.constant 0 : index
    %c0_58 = arith.constant 0 : index
    %158 = vector.load %arg12[%c0_57, %c0_58] : memref<1x32xf32, #tpu.memory_space<vmem>>, vector<1x32xf32>
    %159 = vector.broadcast %158 : vector<1x32xf32> to vector<8x32xf32>
    %160 = arith.addf %157, %159 : vector<8x32xf32>
    %161 = arith.addf %146, %160 : vector<8x32xf32>
    %c0_59 = arith.constant 0 : index
    %c0_60 = arith.constant 0 : index
    %162 = vector.load %arg13[%c0_59, %c0_60] : memref<1x32xf32, #tpu.memory_space<vmem>>, vector<1x32xf32>
    %c0_61 = arith.constant 0 : index
    %c0_62 = arith.constant 0 : index
    %163 = vector.load %arg14[%c0_61, %c0_62] : memref<1x32xf32, #tpu.memory_space<vmem>>, vector<1x32xf32>
    %cst_63 = arith.constant dense<0.000000e+00> : vector<8xf32>
    %164 = vector.multi_reduction <add>, %161, %cst_63 [1] : vector<8x32xf32> to vector<8xf32>
    %165 = vector.shape_cast %164 : vector<8xf32> to vector<8x1xf32>
    %cst_64 = arith.constant 3.200000e+01 : f32
    %166 = vector.broadcast %cst_64 : f32 to vector<8x1xf32>
    %167 = arith.divf %165, %166 : vector<8x1xf32>
    %168 = vector.broadcast %167 : vector<8x1xf32> to vector<8x32xf32>
    %169 = arith.subf %161, %168 : vector<8x32xf32>
    %170 = arith.mulf %169, %169 : vector<8x32xf32>
    %cst_65 = arith.constant dense<0.000000e+00> : vector<8xf32>
    %171 = vector.multi_reduction <add>, %170, %cst_65 [1] : vector<8x32xf32> to vector<8xf32>
    %172 = vector.shape_cast %171 : vector<8xf32> to vector<8x1xf32>
    %cst_66 = arith.constant 3.200000e+01 : f32
    %173 = vector.broadcast %cst_66 : f32 to vector<8x1xf32>
    %174 = arith.divf %172, %173 : vector<8x1xf32>
    %175 = vector.broadcast %167 : vector<8x1xf32> to vector<8x32xf32>
    %176 = arith.subf %161, %175 : vector<8x32xf32>
    %cst_67 = arith.constant 9.99999974E-6 : f32
    %177 = vector.broadcast %cst_67 : f32 to vector<8x1xf32>
    %178 = arith.addf %174, %177 : vector<8x1xf32>
    %179 = math.rsqrt %178 : vector<8x1xf32>
    %180 = vector.broadcast %179 : vector<8x1xf32> to vector<8x32xf32>
    %181 = arith.mulf %176, %180 : vector<8x32xf32>
    %182 = vector.broadcast %162 : vector<1x32xf32> to vector<8x32xf32>
    %183 = arith.mulf %181, %182 : vector<8x32xf32>
    %184 = vector.broadcast %163 : vector<1x32xf32> to vector<8x32xf32>
    %185 = arith.addf %183, %184 : vector<8x32xf32>
    %c0_68 = arith.constant 0 : index
    %c0_69 = arith.constant 0 : index
    %c0_70 = arith.constant 0 : index
    %186 = vector.load %arg15[%c0_68, %c0_69, %c0_70] : memref<1x8x32xf32, #tpu.memory_space<vmem>>, vector<1x8x32xf32>
    %187 = vector.shape_cast %186 : vector<1x8x32xf32> to vector<8x32xf32>
    %188 = vector.shape_cast %185 : vector<8x32xf32> to vector<1x8x32xf32>
    tpu.vector_store %arg15[%c0_68, %c0_69, %c0_70], %188 {strides = array<i32>} : memref<1x8x32xf32, #tpu.memory_space<vmem>>, vector<1x8x32xf32>,
    return
  }
  func.func @transform_0(%arg0: i32) -> (i32, i32, i32) {
    %c0_i32 = arith.constant 0 : i32
    %c0_i32_0 = arith.constant 0 : i32
    %c0_i32_1 = arith.constant 0 : i32
    return %arg0, %c0_i32, %c0_i32_0 : i32, i32, i32
  }
  func.func @transform_1(%arg0: i32) -> (i32, i32, i32) {
    %c0_i32 = arith.constant 0 : i32
    %c0_i32_0 = arith.constant 0 : i32
    %c0_i32_1 = arith.constant 0 : i32
    return %arg0, %c0_i32, %c0_i32_0 : i32, i32, i32
  }
  func.func @transform_2(%arg0: i32) -> (i32, i32) {
    %c0_i32 = arith.constant 0 : i32
    %c0_i32_0 = arith.constant 0 : i32
    %c0_i32_1 = arith.constant 0 : i32
    return %c0_i32, %c0_i32_0 : i32, i32
  }
  func.func @transform_3(%arg0: i32) -> (i32, i32) {
    %c0_i32 = arith.constant 0 : i32
    %c0_i32_0 = arith.constant 0 : i32
    %c0_i32_1 = arith.constant 0 : i32
    return %c0_i32, %c0_i32_0 : i32, i32
  }
  func.func @transform_4(%arg0: i32) -> (i32, i32) {
    %c0_i32 = arith.constant 0 : i32
    %c0_i32_0 = arith.constant 0 : i32
    %c0_i32_1 = arith.constant 0 : i32
    return %c0_i32, %c0_i32_0 : i32, i32
  }
  func.func @transform_5(%arg0: i32) -> (i32, i32) {
    %c0_i32 = arith.constant 0 : i32
    %c0_i32_0 = arith.constant 0 : i32
    %c0_i32_1 = arith.constant 0 : i32
    return %c0_i32, %c0_i32_0 : i32, i32
  }
  func.func @transform_6(%arg0: i32) -> (i32, i32) {
    %c0_i32 = arith.constant 0 : i32
    %c0_i32_0 = arith.constant 0 : i32
    %c0_i32_1 = arith.constant 0 : i32
    return %c0_i32, %c0_i32_0 : i32, i32
  }
  func.func @transform_7(%arg0: i32) -> (i32, i32) {
    %c0_i32 = arith.constant 0 : i32
    %c0_i32_0 = arith.constant 0 : i32
    %c0_i32_1 = arith.constant 0 : i32
    return %c0_i32, %c0_i32_0 : i32, i32
  }
  func.func @transform_8(%arg0: i32) -> (i32, i32) {
    %c0_i32 = arith.constant 0 : i32
    %c0_i32_0 = arith.constant 0 : i32
    %c0_i32_1 = arith.constant 0 : i32
    return %c0_i32, %c0_i32_0 : i32, i32
  }
  func.func @transform_9(%arg0: i32) -> (i32, i32) {
    %c0_i32 = arith.constant 0 : i32
    %c0_i32_0 = arith.constant 0 : i32
    %c0_i32_1 = arith.constant 0 : i32
    return %c0_i32, %c0_i32_0 : i32, i32
  }
  func.func @transform_10(%arg0: i32) -> (i32, i32) {
    %c0_i32 = arith.constant 0 : i32
    %c0_i32_0 = arith.constant 0 : i32
    %c0_i32_1 = arith.constant 0 : i32
    return %c0_i32, %c0_i32_0 : i32, i32
  }
  func.func @transform_11(%arg0: i32) -> (i32, i32) {
    %c0_i32 = arith.constant 0 : i32
    %c0_i32_0 = arith.constant 0 : i32
    %c0_i32_1 = arith.constant 0 : i32
    return %c0_i32, %c0_i32_0 : i32, i32
  }
  func.func @transform_12(%arg0: i32) -> (i32, i32) {
    %c0_i32 = arith.constant 0 : i32
    %c0_i32_0 = arith.constant 0 : i32
    %c0_i32_1 = arith.constant 0 : i32
    return %c0_i32, %c0_i32_0 : i32, i32
  }
  func.func @transform_13(%arg0: i32) -> (i32, i32) {
    %c0_i32 = arith.constant 0 : i32
    %c0_i32_0 = arith.constant 0 : i32
    %c0_i32_1 = arith.constant 0 : i32
    return %c0_i32, %c0_i32_0 : i32, i32
  }
  func.func @transform_14(%arg0: i32) -> (i32, i32, i32) {
    %c0_i32 = arith.constant 0 : i32
    %c0_i32_0 = arith.constant 0 : i32
    %c0_i32_1 = arith.constant 0 : i32
    return %arg0, %c0_i32, %c0_i32_0 : i32, i32, i32
  }
}

module attributes {stable_mosaic.version = 11 : i64} {
  func.func @_decoder_layer_kernel_noattn(%arg0: i32, %arg1: memref<1x8x32xf32, #tpu.memory_space<vmem>>, %arg2: memref<1x8x32xf32, #tpu.memory_space<vmem>>, %arg3: memref<1x1x8xf32, #tpu.memory_space<vmem>>, %arg4: memref<1x1x8xf32, #tpu.memory_space<vmem>>, %arg5: memref<32x96xbf16, #tpu.memory_space<vmem>>, %arg6: memref<1x96xf32, #tpu.memory_space<vmem>>, %arg7: memref<32x32xbf16, #tpu.memory_space<vmem>>, %arg8: memref<1x32xf32, #tpu.memory_space<vmem>>, %arg9: memref<1x32xf32, #tpu.memory_space<vmem>>, %arg10: memref<1x32xf32, #tpu.memory_space<vmem>>, %arg11: memref<32x32xbf16, #tpu.memory_space<vmem>>, %arg12: memref<1x32xf32, #tpu.memory_space<vmem>>, %arg13: memref<32x64xbf16, #tpu.memory_space<vmem>>, %arg14: memref<1x64xf32, #tpu.memory_space<vmem>>, %arg15: memref<32x32xbf16, #tpu.memory_space<vmem>>, %arg16: memref<1x32xf32, #tpu.memory_space<vmem>>, %arg17: memref<1x32xf32, #tpu.memory_space<vmem>>, %arg18: memref<1x32xf32, #tpu.memory_space<vmem>>, %arg19: memref<32x64xbf16, #tpu.memory_space<vmem>>, %arg20: memref<1x64xf32, #tpu.memory_space<vmem>>, %arg21: memref<64x32xbf16, #tpu.memory_space<vmem>>, %arg22: memref<1x32xf32, #tpu.memory_space<vmem>>, %arg23: memref<1x32xf32, #tpu.memory_space<vmem>>, %arg24: memref<1x32xf32, #tpu.memory_space<vmem>>, %arg25: memref<1x8x32xf32, #tpu.memory_space<vmem>>) attributes {dimension_semantics = [#tpu.dimension_semantics<parallel>], iteration_bounds = array<i64: 2>, scalar_prefetch = 0 : i64, scratch_operands = 0 : i64, tpu.core_type = #tpu.core_type<tc>, window_params = [{transform_indices = @transform_0, window_bounds = array<i64: 1, 8, 32>}, {transform_indices = @transform_1, window_bounds = array<i64: 1, 8, 32>}, {transform_indices = @transform_2, window_bounds = array<i64: 1, 1, 8>}, {transform_indices = @transform_3, window_bounds = array<i64: 1, 1, 8>}, {pipeline_mode = #tpu.pipeline_mode<synchronous>, transform_indices = @transform_4, window_bounds = array<i64: 32, 96>}, {pipeline_mode = #tpu.pipeline_mode<synchronous>, transform_indices = @transform_5, window_bounds = array<i64: 1, 96>}, {pipeline_mode = #tpu.pipeline_mode<synchronous>, transform_indices = @transform_6, window_bounds = array<i64: 32, 32>}, {pipeline_mode = #tpu.pipeline_mode<synchronous>, transform_indices = @transform_7, window_bounds = array<i64: 1, 32>}, {pipeline_mode = #tpu.pipeline_mode<synchronous>, transform_indices = @transform_8, window_bounds = array<i64: 1, 32>}, {pipeline_mode = #tpu.pipeline_mode<synchronous>, transform_indices = @transform_9, window_bounds = array<i64: 1, 32>}, {pipeline_mode = #tpu.pipeline_mode<synchronous>, transform_indices = @transform_10, window_bounds = array<i64: 32, 32>}, {pipeline_mode = #tpu.pipeline_mode<synchronous>, transform_indices = @transform_11, window_bounds = array<i64: 1, 32>}, {pipeline_mode = #tpu.pipeline_mode<synchronous>, transform_indices = @transform_12, window_bounds = array<i64: 32, 64>}, {pipeline_mode = #tpu.pipeline_mode<synchronous>, transform_indices = @transform_13, window_bounds = array<i64: 1, 64>}, {pipeline_mode = #tpu.pipeline_mode<synchronous>, transform_indices = @transform_14, window_bounds = array<i64: 32, 32>}, {pipeline_mode = #tpu.pipeline_mode<synchronous>, transform_indices = @transform_15, window_bounds = array<i64: 1, 32>}, {pipeline_mode = #tpu.pipeline_mode<synchronous>, transform_indices = @transform_16, window_bounds = array<i64: 1, 32>}, {pipeline_mode = #tpu.pipeline_mode<synchronous>, transform_indices = @transform_17, window_bounds = array<i64: 1, 32>}, {pipeline_mode = #tpu.pipeline_mode<synchronous>, transform_indices = @transform_18, window_bounds = array<i64: 32, 64>}, {pipeline_mode = #tpu.pipeline_mode<synchronous>, transform_indices = @transform_19, window_bounds = array<i64: 1, 64>}, {pipeline_mode = #tpu.pipeline_mode<synchronous>, transform_indices = @transform_20, window_bounds = array<i64: 64, 32>}, {pipeline_mode = #tpu.pipeline_mode<synchronous>, transform_indices = @transform_21, window_bounds = array<i64: 1, 32>}, {pipeline_mode = #tpu.pipeline_mode<synchronous>, transform_indices = @transform_22, window_bounds = array<i64: 1, 32>}, {pipeline_mode = #tpu.pipeline_mode<synchronous>, transform_indices = @transform_23, window_bounds = array<i64: 1, 32>}, {transform_indices = @transform_24, window_bounds = array<i64: 1, 8, 32>}]} {
    %c0 = arith.constant 0 : index
    %c0_0 = arith.constant 0 : index
    %c0_1 = arith.constant 0 : index
    %0 = vector.load %arg1[%c0, %c0_0, %c0_1] : memref<1x8x32xf32, #tpu.memory_space<vmem>>, vector<1x8x32xf32>
    %1 = vector.shape_cast %0 : vector<1x8x32xf32> to vector<8x32xf32>
    %c0_2 = arith.constant 0 : index
    %c0_3 = arith.constant 0 : index
    %c0_4 = arith.constant 0 : index
    %2 = vector.load %arg2[%c0_2, %c0_3, %c0_4] : memref<1x8x32xf32, #tpu.memory_space<vmem>>, vector<1x8x32xf32>
    %3 = vector.shape_cast %2 : vector<1x8x32xf32> to vector<8x32xf32>
    %c0_5 = arith.constant 0 : index
    %c0_6 = arith.constant 0 : index
    %c0_7 = arith.constant 0 : index
    %4 = vector.load %arg3[%c0_5, %c0_6, %c0_7] : memref<1x1x8xf32, #tpu.memory_space<vmem>>, vector<1x1x8xf32>
    %5 = vector.shape_cast %4 : vector<1x1x8xf32> to vector<1x8xf32>
    %cst = arith.constant 0.000000e+00 : f32
    %6 = vector.broadcast %cst : f32 to vector<1x8xf32>
    %7 = arith.cmpf ogt, %5, %6 : vector<1x8xf32>
    %c0_8 = arith.constant 0 : index
    %c0_9 = arith.constant 0 : index
    %c0_10 = arith.constant 0 : index
    %8 = vector.load %arg4[%c0_8, %c0_9, %c0_10] : memref<1x1x8xf32, #tpu.memory_space<vmem>>, vector<1x1x8xf32>
    %9 = vector.shape_cast %8 : vector<1x1x8xf32> to vector<1x8xf32>
    %cst_11 = arith.constant 0.000000e+00 : f32
    %10 = vector.broadcast %cst_11 : f32 to vector<1x8xf32>
    %11 = arith.cmpf ogt, %9, %10 : vector<1x8xf32>
    %12 = tpu.iota {dimensions = array<i32: 0>} : vector<8x8xi32>
    %13 = tpu.iota {dimensions = array<i32: 1>} : vector<8x8xi32>
    %14 = arith.cmpi sle, %13, %12 : vector<8x8xi32>
    %15 = vector.broadcast %7 : vector<1x8xi1> to vector<8x8xi1>
    %16 = arith.andi %14, %15 : vector<8x8xi1>
    %c0_12 = arith.constant 0 : index
    %c0_13 = arith.constant 0 : index
    %17 = vector.load %arg5[%c0_12, %c0_13] : memref<32x96xbf16, #tpu.memory_space<vmem>>, vector<32x96xbf16>
    %18 = arith.truncf %1 : vector<8x32xf32> to vector<8x32xbf16>
    %cst_14 = arith.constant dense<0.000000e+00> : vector<8x96xf32>
    %19 = tpu.matmul %18, %17, %cst_14 {dimension_numbers = #tpu.dot_dimension_numbers<[1], [0], [0], [1], [0, 0, 1, 1], [], []>} : vector<8x32xbf16>, vector<32x96xbf16>, vector<8x96xf32> -> vector<8x96xf32>
    %c0_15 = arith.constant 0 : index
    %c0_16 = arith.constant 0 : index
    %20 = vector.load %arg6[%c0_15, %c0_16] : memref<1x96xf32, #tpu.memory_space<vmem>>, vector<1x96xf32>
    %21 = vector.broadcast %20 : vector<1x96xf32> to vector<8x96xf32>
    %22 = arith.addf %19, %21 : vector<8x96xf32>
    %23 = vector.extract_strided_slice %22 {offsets = [0, 0], sizes = [8, 32], strides = [1, 1]} : vector<8x96xf32> to vector<8x32xf32>
    %24 = vector.extract_strided_slice %22 {offsets = [0, 32], sizes = [8, 32], strides = [1, 1]} : vector<8x96xf32> to vector<8x32xf32>
    %25 = vector.extract_strided_slice %22 {offsets = [0, 64], sizes = [8, 32], strides = [1, 1]} : vector<8x96xf32> to vector<8x32xf32>
    %26 = vector.extract_strided_slice %23 {offsets = [0, 0], sizes = [8, 8], strides = [1, 1]} : vector<8x32xf32> to vector<8x8xf32>
    %27 = arith.truncf %26 : vector<8x8xf32> to vector<8x8xbf16>
    %28 = vector.extract_strided_slice %24 {offsets = [0, 0], sizes = [8, 8], strides = [1, 1]} : vector<8x32xf32> to vector<8x8xf32>
    %29 = arith.truncf %28 : vector<8x8xf32> to vector<8x8xbf16>
    %30 = vector.extract_strided_slice %25 {offsets = [0, 0], sizes = [8, 8], strides = [1, 1]} : vector<8x32xf32> to vector<8x8xf32>
    %31 = arith.truncf %30 : vector<8x8xf32> to vector<8x8xbf16>
    %cst_17 = arith.constant dense<0.000000e+00> : vector<8x8xf32>
    %32 = tpu.matmul %27, %29, %cst_17 {dimension_numbers = #tpu.dot_dimension_numbers<[1], [1], [0], [0], [0, 0, 1, 0], [], []>} : vector<8x8xbf16>, vector<8x8xbf16>, vector<8x8xf32> -> vector<8x8xf32>
    %cst_18 = arith.constant 0.353553385 : f32
    %33 = vector.broadcast %cst_18 : f32 to vector<8x8xf32>
    %34 = arith.mulf %32, %33 : vector<8x8xf32>
    %cst_19 = arith.constant -1.000000e+10 : f32
    %35 = vector.broadcast %cst_19 : f32 to vector<8x8xf32>
    %36 = arith.select %16, %34, %35 : vector<8x8xi1>, vector<8x8xf32>
    %cst_20 = arith.constant dense<0xFF800000> : vector<8xf32>
    %37 = vector.multi_reduction <maximumf>, %36, %cst_20 [1] : vector<8x8xf32> to vector<8xf32>
    %38 = vector.shape_cast %37 : vector<8xf32> to vector<8x1xf32>
    %39 = vector.broadcast %38 : vector<8x1xf32> to vector<8x8xf32>
    %40 = arith.subf %36, %39 : vector<8x8xf32>
    %41 = math.exp %40 : vector<8x8xf32>
    %cst_21 = arith.constant dense<0.000000e+00> : vector<8xf32>
    %42 = vector.multi_reduction <add>, %41, %cst_21 [1] : vector<8x8xf32> to vector<8xf32>
    %43 = vector.shape_cast %42 : vector<8xf32> to vector<8x1xf32>
    %44 = tpu.reciprocal %43 {approx = true} : vector<8x1xf32> -> vector<8x1xf32>
    %45 = vector.broadcast %44 : vector<8x1xf32> to vector<8x8xf32>
    %46 = arith.mulf %41, %45 : vector<8x8xf32>
    %47 = arith.truncf %46 : vector<8x8xf32> to vector<8x8xbf16>
    %cst_22 = arith.constant dense<0.000000e+00> : vector<8x8xf32>
    %48 = tpu.matmul %47, %31, %cst_22 {dimension_numbers = #tpu.dot_dimension_numbers<[1], [0], [0], [1], [0, 0, 1, 1], [], []>} : vector<8x8xbf16>, vector<8x8xbf16>, vector<8x8xf32> -> vector<8x8xf32>
    %49 = vector.extract_strided_slice %23 {offsets = [0, 8], sizes = [8, 8], strides = [1, 1]} : vector<8x32xf32> to vector<8x8xf32>
    %50 = arith.truncf %49 : vector<8x8xf32> to vector<8x8xbf16>
    %51 = vector.extract_strided_slice %24 {offsets = [0, 8], sizes = [8, 8], strides = [1, 1]} : vector<8x32xf32> to vector<8x8xf32>
    %52 = arith.truncf %51 : vector<8x8xf32> to vector<8x8xbf16>
    %53 = vector.extract_strided_slice %25 {offsets = [0, 8], sizes = [8, 8], strides = [1, 1]} : vector<8x32xf32> to vector<8x8xf32>
    %54 = arith.truncf %53 : vector<8x8xf32> to vector<8x8xbf16>
    %cst_23 = arith.constant dense<0.000000e+00> : vector<8x8xf32>
    %55 = tpu.matmul %50, %52, %cst_23 {dimension_numbers = #tpu.dot_dimension_numbers<[1], [1], [0], [0], [0, 0, 1, 0], [], []>} : vector<8x8xbf16>, vector<8x8xbf16>, vector<8x8xf32> -> vector<8x8xf32>
    %cst_24 = arith.constant 0.353553385 : f32
    %56 = vector.broadcast %cst_24 : f32 to vector<8x8xf32>
    %57 = arith.mulf %55, %56 : vector<8x8xf32>
    %cst_25 = arith.constant -1.000000e+10 : f32
    %58 = vector.broadcast %cst_25 : f32 to vector<8x8xf32>
    %59 = arith.select %16, %57, %58 : vector<8x8xi1>, vector<8x8xf32>
    %cst_26 = arith.constant dense<0xFF800000> : vector<8xf32>
    %60 = vector.multi_reduction <maximumf>, %59, %cst_26 [1] : vector<8x8xf32> to vector<8xf32>
    %61 = vector.shape_cast %60 : vector<8xf32> to vector<8x1xf32>
    %62 = vector.broadcast %61 : vector<8x1xf32> to vector<8x8xf32>
    %63 = arith.subf %59, %62 : vector<8x8xf32>
    %64 = math.exp %63 : vector<8x8xf32>
    %cst_27 = arith.constant dense<0.000000e+00> : vector<8xf32>
    %65 = vector.multi_reduction <add>, %64, %cst_27 [1] : vector<8x8xf32> to vector<8xf32>
    %66 = vector.shape_cast %65 : vector<8xf32> to vector<8x1xf32>
    %67 = tpu.reciprocal %66 {approx = true} : vector<8x1xf32> -> vector<8x1xf32>
    %68 = vector.broadcast %67 : vector<8x1xf32> to vector<8x8xf32>
    %69 = arith.mulf %64, %68 : vector<8x8xf32>
    %70 = arith.truncf %69 : vector<8x8xf32> to vector<8x8xbf16>
    %cst_28 = arith.constant dense<0.000000e+00> : vector<8x8xf32>
    %71 = tpu.matmul %70, %54, %cst_28 {dimension_numbers = #tpu.dot_dimension_numbers<[1], [0], [0], [1], [0, 0, 1, 1], [], []>} : vector<8x8xbf16>, vector<8x8xbf16>, vector<8x8xf32> -> vector<8x8xf32>
    %72 = vector.extract_strided_slice %23 {offsets = [0, 16], sizes = [8, 8], strides = [1, 1]} : vector<8x32xf32> to vector<8x8xf32>
    %73 = arith.truncf %72 : vector<8x8xf32> to vector<8x8xbf16>
    %74 = vector.extract_strided_slice %24 {offsets = [0, 16], sizes = [8, 8], strides = [1, 1]} : vector<8x32xf32> to vector<8x8xf32>
    %75 = arith.truncf %74 : vector<8x8xf32> to vector<8x8xbf16>
    %76 = vector.extract_strided_slice %25 {offsets = [0, 16], sizes = [8, 8], strides = [1, 1]} : vector<8x32xf32> to vector<8x8xf32>
    %77 = arith.truncf %76 : vector<8x8xf32> to vector<8x8xbf16>
    %cst_29 = arith.constant dense<0.000000e+00> : vector<8x8xf32>
    %78 = tpu.matmul %73, %75, %cst_29 {dimension_numbers = #tpu.dot_dimension_numbers<[1], [1], [0], [0], [0, 0, 1, 0], [], []>} : vector<8x8xbf16>, vector<8x8xbf16>, vector<8x8xf32> -> vector<8x8xf32>
    %cst_30 = arith.constant 0.353553385 : f32
    %79 = vector.broadcast %cst_30 : f32 to vector<8x8xf32>
    %80 = arith.mulf %78, %79 : vector<8x8xf32>
    %cst_31 = arith.constant -1.000000e+10 : f32
    %81 = vector.broadcast %cst_31 : f32 to vector<8x8xf32>
    %82 = arith.select %16, %80, %81 : vector<8x8xi1>, vector<8x8xf32>
    %cst_32 = arith.constant dense<0xFF800000> : vector<8xf32>
    %83 = vector.multi_reduction <maximumf>, %82, %cst_32 [1] : vector<8x8xf32> to vector<8xf32>
    %84 = vector.shape_cast %83 : vector<8xf32> to vector<8x1xf32>
    %85 = vector.broadcast %84 : vector<8x1xf32> to vector<8x8xf32>
    %86 = arith.subf %82, %85 : vector<8x8xf32>
    %87 = math.exp %86 : vector<8x8xf32>
    %cst_33 = arith.constant dense<0.000000e+00> : vector<8xf32>
    %88 = vector.multi_reduction <add>, %87, %cst_33 [1] : vector<8x8xf32> to vector<8xf32>
    %89 = vector.shape_cast %88 : vector<8xf32> to vector<8x1xf32>
    %90 = tpu.reciprocal %89 {approx = true} : vector<8x1xf32> -> vector<8x1xf32>
    %91 = vector.broadcast %90 : vector<8x1xf32> to vector<8x8xf32>
    %92 = arith.mulf %87, %91 : vector<8x8xf32>
    %93 = arith.truncf %92 : vector<8x8xf32> to vector<8x8xbf16>
    %cst_34 = arith.constant dense<0.000000e+00> : vector<8x8xf32>
    %94 = tpu.matmul %93, %77, %cst_34 {dimension_numbers = #tpu.dot_dimension_numbers<[1], [0], [0], [1], [0, 0, 1, 1], [], []>} : vector<8x8xbf16>, vector<8x8xbf16>, vector<8x8xf32> -> vector<8x8xf32>
    %95 = vector.extract_strided_slice %23 {offsets = [0, 24], sizes = [8, 8], strides = [1, 1]} : vector<8x32xf32> to vector<8x8xf32>
    %96 = arith.truncf %95 : vector<8x8xf32> to vector<8x8xbf16>
    %97 = vector.extract_strided_slice %24 {offsets = [0, 24], sizes = [8, 8], strides = [1, 1]} : vector<8x32xf32> to vector<8x8xf32>
    %98 = arith.truncf %97 : vector<8x8xf32> to vector<8x8xbf16>
    %99 = vector.extract_strided_slice %25 {offsets = [0, 24], sizes = [8, 8], strides = [1, 1]} : vector<8x32xf32> to vector<8x8xf32>
    %100 = arith.truncf %99 : vector<8x8xf32> to vector<8x8xbf16>
    %cst_35 = arith.constant dense<0.000000e+00> : vector<8x8xf32>
    %101 = tpu.matmul %96, %98, %cst_35 {dimension_numbers = #tpu.dot_dimension_numbers<[1], [1], [0], [0], [0, 0, 1, 0], [], []>} : vector<8x8xbf16>, vector<8x8xbf16>, vector<8x8xf32> -> vector<8x8xf32>
    %cst_36 = arith.constant 0.353553385 : f32
    %102 = vector.broadcast %cst_36 : f32 to vector<8x8xf32>
    %103 = arith.mulf %101, %102 : vector<8x8xf32>
    %cst_37 = arith.constant -1.000000e+10 : f32
    %104 = vector.broadcast %cst_37 : f32 to vector<8x8xf32>
    %105 = arith.select %16, %103, %104 : vector<8x8xi1>, vector<8x8xf32>
    %cst_38 = arith.constant dense<0xFF800000> : vector<8xf32>
    %106 = vector.multi_reduction <maximumf>, %105, %cst_38 [1] : vector<8x8xf32> to vector<8xf32>
    %107 = vector.shape_cast %106 : vector<8xf32> to vector<8x1xf32>
    %108 = vector.broadcast %107 : vector<8x1xf32> to vector<8x8xf32>
    %109 = arith.subf %105, %108 : vector<8x8xf32>
    %110 = math.exp %109 : vector<8x8xf32>
    %cst_39 = arith.constant dense<0.000000e+00> : vector<8xf32>
    %111 = vector.multi_reduction <add>, %110, %cst_39 [1] : vector<8x8xf32> to vector<8xf32>
    %112 = vector.shape_cast %111 : vector<8xf32> to vector<8x1xf32>
    %113 = tpu.reciprocal %112 {approx = true} : vector<8x1xf32> -> vector<8x1xf32>
    %114 = vector.broadcast %113 : vector<8x1xf32> to vector<8x8xf32>
    %115 = arith.mulf %110, %114 : vector<8x8xf32>
    %116 = arith.truncf %115 : vector<8x8xf32> to vector<8x8xbf16>
    %cst_40 = arith.constant dense<0.000000e+00> : vector<8x8xf32>
    %117 = tpu.matmul %116, %100, %cst_40 {dimension_numbers = #tpu.dot_dimension_numbers<[1], [0], [0], [1], [0, 0, 1, 1], [], []>} : vector<8x8xbf16>, vector<8x8xbf16>, vector<8x8xf32> -> vector<8x8xf32>
    %118 = tpu.concatenate %48, %71, %94, %117 in 1 : vector<8x8xf32>, vector<8x8xf32>, vector<8x8xf32>, vector<8x8xf32> -> vector<8x32xf32>
    %c0_41 = arith.constant 0 : index
    %c0_42 = arith.constant 0 : index
    %119 = vector.load %arg7[%c0_41, %c0_42] : memref<32x32xbf16, #tpu.memory_space<vmem>>, vector<32x32xbf16>
    %120 = arith.truncf %118 : vector<8x32xf32> to vector<8x32xbf16>
    %cst_43 = arith.constant dense<0.000000e+00> : vector<8x32xf32>
    %121 = tpu.matmul %120, %119, %cst_43 {dimension_numbers = #tpu.dot_dimension_numbers<[1], [0], [0], [1], [0, 0, 1, 1], [], []>} : vector<8x32xbf16>, vector<32x32xbf16>, vector<8x32xf32> -> vector<8x32xf32>
    %c0_44 = arith.constant 0 : index
    %c0_45 = arith.constant 0 : index
    %122 = vector.load %arg8[%c0_44, %c0_45] : memref<1x32xf32, #tpu.memory_space<vmem>>, vector<1x32xf32>
    %123 = vector.broadcast %122 : vector<1x32xf32> to vector<8x32xf32>
    %124 = arith.addf %121, %123 : vector<8x32xf32>
    %125 = arith.addf %1, %124 : vector<8x32xf32>
    %c0_46 = arith.constant 0 : index
    %c0_47 = arith.constant 0 : index
    %126 = vector.load %arg9[%c0_46, %c0_47] : memref<1x32xf32, #tpu.memory_space<vmem>>, vector<1x32xf32>
    %c0_48 = arith.constant 0 : index
    %c0_49 = arith.constant 0 : index
    %127 = vector.load %arg10[%c0_48, %c0_49] : memref<1x32xf32, #tpu.memory_space<vmem>>, vector<1x32xf32>
    %cst_50 = arith.constant dense<0.000000e+00> : vector<8xf32>
    %128 = vector.multi_reduction <add>, %125, %cst_50 [1] : vector<8x32xf32> to vector<8xf32>
    %129 = vector.shape_cast %128 : vector<8xf32> to vector<8x1xf32>
    %cst_51 = arith.constant 3.200000e+01 : f32
    %130 = vector.broadcast %cst_51 : f32 to vector<8x1xf32>
    %131 = arith.divf %129, %130 : vector<8x1xf32>
    %132 = vector.broadcast %131 : vector<8x1xf32> to vector<8x32xf32>
    %133 = arith.subf %125, %132 : vector<8x32xf32>
    %134 = arith.mulf %133, %133 : vector<8x32xf32>
    %cst_52 = arith.constant dense<0.000000e+00> : vector<8xf32>
    %135 = vector.multi_reduction <add>, %134, %cst_52 [1] : vector<8x32xf32> to vector<8xf32>
    %136 = vector.shape_cast %135 : vector<8xf32> to vector<8x1xf32>
    %cst_53 = arith.constant 3.200000e+01 : f32
    %137 = vector.broadcast %cst_53 : f32 to vector<8x1xf32>
    %138 = arith.divf %136, %137 : vector<8x1xf32>
    %139 = vector.broadcast %131 : vector<8x1xf32> to vector<8x32xf32>
    %140 = arith.subf %125, %139 : vector<8x32xf32>
    %cst_54 = arith.constant 9.99999974E-6 : f32
    %141 = vector.broadcast %cst_54 : f32 to vector<8x1xf32>
    %142 = arith.addf %138, %141 : vector<8x1xf32>
    %143 = math.rsqrt %142 : vector<8x1xf32>
    %144 = vector.broadcast %143 : vector<8x1xf32> to vector<8x32xf32>
    %145 = arith.mulf %140, %144 : vector<8x32xf32>
    %146 = vector.broadcast %126 : vector<1x32xf32> to vector<8x32xf32>
    %147 = arith.mulf %145, %146 : vector<8x32xf32>
    %148 = vector.broadcast %127 : vector<1x32xf32> to vector<8x32xf32>
    %149 = arith.addf %147, %148 : vector<8x32xf32>
    %c0_55 = arith.constant 0 : index
    %c0_56 = arith.constant 0 : index
    %150 = vector.load %arg11[%c0_55, %c0_56] : memref<32x32xbf16, #tpu.memory_space<vmem>>, vector<32x32xbf16>
    %151 = arith.truncf %149 : vector<8x32xf32> to vector<8x32xbf16>
    %cst_57 = arith.constant dense<0.000000e+00> : vector<8x32xf32>
    %152 = tpu.matmul %151, %150, %cst_57 {dimension_numbers = #tpu.dot_dimension_numbers<[1], [0], [0], [1], [0, 0, 1, 1], [], []>} : vector<8x32xbf16>, vector<32x32xbf16>, vector<8x32xf32> -> vector<8x32xf32>
    %c0_58 = arith.constant 0 : index
    %c0_59 = arith.constant 0 : index
    %153 = vector.load %arg12[%c0_58, %c0_59] : memref<1x32xf32, #tpu.memory_space<vmem>>, vector<1x32xf32>
    %154 = vector.broadcast %153 : vector<1x32xf32> to vector<8x32xf32>
    %155 = arith.addf %152, %154 : vector<8x32xf32>
    %c0_60 = arith.constant 0 : index
    %c0_61 = arith.constant 0 : index
    %156 = vector.load %arg13[%c0_60, %c0_61] : memref<32x64xbf16, #tpu.memory_space<vmem>>, vector<32x64xbf16>
    %157 = arith.truncf %3 : vector<8x32xf32> to vector<8x32xbf16>
    %cst_62 = arith.constant dense<0.000000e+00> : vector<8x64xf32>
    %158 = tpu.matmul %157, %156, %cst_62 {dimension_numbers = #tpu.dot_dimension_numbers<[1], [0], [0], [1], [0, 0, 1, 1], [], []>} : vector<8x32xbf16>, vector<32x64xbf16>, vector<8x64xf32> -> vector<8x64xf32>
    %c0_63 = arith.constant 0 : index
    %c0_64 = arith.constant 0 : index
    %159 = vector.load %arg14[%c0_63, %c0_64] : memref<1x64xf32, #tpu.memory_space<vmem>>, vector<1x64xf32>
    %160 = vector.broadcast %159 : vector<1x64xf32> to vector<8x64xf32>
    %161 = arith.addf %158, %160 : vector<8x64xf32>
    %162 = vector.extract_strided_slice %161 {offsets = [0, 0], sizes = [8, 32], strides = [1, 1]} : vector<8x64xf32> to vector<8x32xf32>
    %163 = vector.extract_strided_slice %161 {offsets = [0, 32], sizes = [8, 32], strides = [1, 1]} : vector<8x64xf32> to vector<8x32xf32>
    %164 = vector.extract_strided_slice %155 {offsets = [0, 0], sizes = [8, 8], strides = [1, 1]} : vector<8x32xf32> to vector<8x8xf32>
    %165 = arith.truncf %164 : vector<8x8xf32> to vector<8x8xbf16>
    %166 = vector.extract_strided_slice %162 {offsets = [0, 0], sizes = [8, 8], strides = [1, 1]} : vector<8x32xf32> to vector<8x8xf32>
    %167 = arith.truncf %166 : vector<8x8xf32> to vector<8x8xbf16>
    %168 = vector.extract_strided_slice %163 {offsets = [0, 0], sizes = [8, 8], strides = [1, 1]} : vector<8x32xf32> to vector<8x8xf32>
    %169 = arith.truncf %168 : vector<8x8xf32> to vector<8x8xbf16>
    %cst_65 = arith.constant dense<0.000000e+00> : vector<8x8xf32>
    %170 = tpu.matmul %165, %167, %cst_65 {dimension_numbers = #tpu.dot_dimension_numbers<[1], [1], [0], [0], [0, 0, 1, 0], [], []>} : vector<8x8xbf16>, vector<8x8xbf16>, vector<8x8xf32> -> vector<8x8xf32>
    %cst_66 = arith.constant 0.353553385 : f32
    %171 = vector.broadcast %cst_66 : f32 to vector<8x8xf32>
    %172 = arith.mulf %170, %171 : vector<8x8xf32>
    %cst_67 = arith.constant -1.000000e+10 : f32
    %173 = vector.shape_cast %11 : vector<1x8xi1> to vector<1x8xi1>
    %174 = vector.broadcast %173 : vector<1x8xi1> to vector<8x8xi1>
    %175 = vector.broadcast %cst_67 : f32 to vector<8x8xf32>
    %176 = arith.select %174, %172, %175 : vector<8x8xi1>, vector<8x8xf32>
    %cst_68 = arith.constant dense<0xFF800000> : vector<8xf32>
    %177 = vector.multi_reduction <maximumf>, %176, %cst_68 [1] : vector<8x8xf32> to vector<8xf32>
    %178 = vector.shape_cast %177 : vector<8xf32> to vector<8x1xf32>
    %179 = vector.broadcast %178 : vector<8x1xf32> to vector<8x8xf32>
    %180 = arith.subf %176, %179 : vector<8x8xf32>
    %181 = math.exp %180 : vector<8x8xf32>
    %cst_69 = arith.constant dense<0.000000e+00> : vector<8xf32>
    %182 = vector.multi_reduction <add>, %181, %cst_69 [1] : vector<8x8xf32> to vector<8xf32>
    %183 = vector.shape_cast %182 : vector<8xf32> to vector<8x1xf32>
    %184 = tpu.reciprocal %183 {approx = true} : vector<8x1xf32> -> vector<8x1xf32>
    %185 = vector.broadcast %184 : vector<8x1xf32> to vector<8x8xf32>
    %186 = arith.mulf %181, %185 : vector<8x8xf32>
    %187 = arith.truncf %186 : vector<8x8xf32> to vector<8x8xbf16>
    %cst_70 = arith.constant dense<0.000000e+00> : vector<8x8xf32>
    %188 = tpu.matmul %187, %169, %cst_70 {dimension_numbers = #tpu.dot_dimension_numbers<[1], [0], [0], [1], [0, 0, 1, 1], [], []>} : vector<8x8xbf16>, vector<8x8xbf16>, vector<8x8xf32> -> vector<8x8xf32>
    %189 = vector.extract_strided_slice %155 {offsets = [0, 8], sizes = [8, 8], strides = [1, 1]} : vector<8x32xf32> to vector<8x8xf32>
    %190 = arith.truncf %189 : vector<8x8xf32> to vector<8x8xbf16>
    %191 = vector.extract_strided_slice %162 {offsets = [0, 8], sizes = [8, 8], strides = [1, 1]} : vector<8x32xf32> to vector<8x8xf32>
    %192 = arith.truncf %191 : vector<8x8xf32> to vector<8x8xbf16>
    %193 = vector.extract_strided_slice %163 {offsets = [0, 8], sizes = [8, 8], strides = [1, 1]} : vector<8x32xf32> to vector<8x8xf32>
    %194 = arith.truncf %193 : vector<8x8xf32> to vector<8x8xbf16>
    %cst_71 = arith.constant dense<0.000000e+00> : vector<8x8xf32>
    %195 = tpu.matmul %190, %192, %cst_71 {dimension_numbers = #tpu.dot_dimension_numbers<[1], [1], [0], [0], [0, 0, 1, 0], [], []>} : vector<8x8xbf16>, vector<8x8xbf16>, vector<8x8xf32> -> vector<8x8xf32>
    %cst_72 = arith.constant 0.353553385 : f32
    %196 = vector.broadcast %cst_72 : f32 to vector<8x8xf32>
    %197 = arith.mulf %195, %196 : vector<8x8xf32>
    %cst_73 = arith.constant -1.000000e+10 : f32
    %198 = vector.shape_cast %11 : vector<1x8xi1> to vector<1x8xi1>
    %199 = vector.broadcast %198 : vector<1x8xi1> to vector<8x8xi1>
    %200 = vector.broadcast %cst_73 : f32 to vector<8x8xf32>
    %201 = arith.select %199, %197, %200 : vector<8x8xi1>, vector<8x8xf32>
    %cst_74 = arith.constant dense<0xFF800000> : vector<8xf32>
    %202 = vector.multi_reduction <maximumf>, %201, %cst_74 [1] : vector<8x8xf32> to vector<8xf32>
    %203 = vector.shape_cast %202 : vector<8xf32> to vector<8x1xf32>
    %204 = vector.broadcast %203 : vector<8x1xf32> to vector<8x8xf32>
    %205 = arith.subf %201, %204 : vector<8x8xf32>
    %206 = math.exp %205 : vector<8x8xf32>
    %cst_75 = arith.constant dense<0.000000e+00> : vector<8xf32>
    %207 = vector.multi_reduction <add>, %206, %cst_75 [1] : vector<8x8xf32> to vector<8xf32>
    %208 = vector.shape_cast %207 : vector<8xf32> to vector<8x1xf32>
    %209 = tpu.reciprocal %208 {approx = true} : vector<8x1xf32> -> vector<8x1xf32>
    %210 = vector.broadcast %209 : vector<8x1xf32> to vector<8x8xf32>
    %211 = arith.mulf %206, %210 : vector<8x8xf32>
    %212 = arith.truncf %211 : vector<8x8xf32> to vector<8x8xbf16>
    %cst_76 = arith.constant dense<0.000000e+00> : vector<8x8xf32>
    %213 = tpu.matmul %212, %194, %cst_76 {dimension_numbers = #tpu.dot_dimension_numbers<[1], [0], [0], [1], [0, 0, 1, 1], [], []>} : vector<8x8xbf16>, vector<8x8xbf16>, vector<8x8xf32> -> vector<8x8xf32>
    %214 = vector.extract_strided_slice %155 {offsets = [0, 16], sizes = [8, 8], strides = [1, 1]} : vector<8x32xf32> to vector<8x8xf32>
    %215 = arith.truncf %214 : vector<8x8xf32> to vector<8x8xbf16>
    %216 = vector.extract_strided_slice %162 {offsets = [0, 16], sizes = [8, 8], strides = [1, 1]} : vector<8x32xf32> to vector<8x8xf32>
    %217 = arith.truncf %216 : vector<8x8xf32> to vector<8x8xbf16>
    %218 = vector.extract_strided_slice %163 {offsets = [0, 16], sizes = [8, 8], strides = [1, 1]} : vector<8x32xf32> to vector<8x8xf32>
    %219 = arith.truncf %218 : vector<8x8xf32> to vector<8x8xbf16>
    %cst_77 = arith.constant dense<0.000000e+00> : vector<8x8xf32>
    %220 = tpu.matmul %215, %217, %cst_77 {dimension_numbers = #tpu.dot_dimension_numbers<[1], [1], [0], [0], [0, 0, 1, 0], [], []>} : vector<8x8xbf16>, vector<8x8xbf16>, vector<8x8xf32> -> vector<8x8xf32>
    %cst_78 = arith.constant 0.353553385 : f32
    %221 = vector.broadcast %cst_78 : f32 to vector<8x8xf32>
    %222 = arith.mulf %220, %221 : vector<8x8xf32>
    %cst_79 = arith.constant -1.000000e+10 : f32
    %223 = vector.shape_cast %11 : vector<1x8xi1> to vector<1x8xi1>
    %224 = vector.broadcast %223 : vector<1x8xi1> to vector<8x8xi1>
    %225 = vector.broadcast %cst_79 : f32 to vector<8x8xf32>
    %226 = arith.select %224, %222, %225 : vector<8x8xi1>, vector<8x8xf32>
    %cst_80 = arith.constant dense<0xFF800000> : vector<8xf32>
    %227 = vector.multi_reduction <maximumf>, %226, %cst_80 [1] : vector<8x8xf32> to vector<8xf32>
    %228 = vector.shape_cast %227 : vector<8xf32> to vector<8x1xf32>
    %229 = vector.broadcast %228 : vector<8x1xf32> to vector<8x8xf32>
    %230 = arith.subf %226, %229 : vector<8x8xf32>
    %231 = math.exp %230 : vector<8x8xf32>
    %cst_81 = arith.constant dense<0.000000e+00> : vector<8xf32>
    %232 = vector.multi_reduction <add>, %231, %cst_81 [1] : vector<8x8xf32> to vector<8xf32>
    %233 = vector.shape_cast %232 : vector<8xf32> to vector<8x1xf32>
    %234 = tpu.reciprocal %233 {approx = true} : vector<8x1xf32> -> vector<8x1xf32>
    %235 = vector.broadcast %234 : vector<8x1xf32> to vector<8x8xf32>
    %236 = arith.mulf %231, %235 : vector<8x8xf32>
    %237 = arith.truncf %236 : vector<8x8xf32> to vector<8x8xbf16>
    %cst_82 = arith.constant dense<0.000000e+00> : vector<8x8xf32>
    %238 = tpu.matmul %237, %219, %cst_82 {dimension_numbers = #tpu.dot_dimension_numbers<[1], [0], [0], [1], [0, 0, 1, 1], [], []>} : vector<8x8xbf16>, vector<8x8xbf16>, vector<8x8xf32> -> vector<8x8xf32>
    %239 = vector.extract_strided_slice %155 {offsets = [0, 24], sizes = [8, 8], strides = [1, 1]} : vector<8x32xf32> to vector<8x8xf32>
    %240 = arith.truncf %239 : vector<8x8xf32> to vector<8x8xbf16>
    %241 = vector.extract_strided_slice %162 {offsets = [0, 24], sizes = [8, 8], strides = [1, 1]} : vector<8x32xf32> to vector<8x8xf32>
    %242 = arith.truncf %241 : vector<8x8xf32> to vector<8x8xbf16>
    %243 = vector.extract_strided_slice %163 {offsets = [0, 24], sizes = [8, 8], strides = [1, 1]} : vector<8x32xf32> to vector<8x8xf32>
    %244 = arith.truncf %243 : vector<8x8xf32> to vector<8x8xbf16>
    %cst_83 = arith.constant dense<0.000000e+00> : vector<8x8xf32>
    %245 = tpu.matmul %240, %242, %cst_83 {dimension_numbers = #tpu.dot_dimension_numbers<[1], [1], [0], [0], [0, 0, 1, 0], [], []>} : vector<8x8xbf16>, vector<8x8xbf16>, vector<8x8xf32> -> vector<8x8xf32>
    %cst_84 = arith.constant 0.353553385 : f32
    %246 = vector.broadcast %cst_84 : f32 to vector<8x8xf32>
    %247 = arith.mulf %245, %246 : vector<8x8xf32>
    %cst_85 = arith.constant -1.000000e+10 : f32
    %248 = vector.shape_cast %11 : vector<1x8xi1> to vector<1x8xi1>
    %249 = vector.broadcast %248 : vector<1x8xi1> to vector<8x8xi1>
    %250 = vector.broadcast %cst_85 : f32 to vector<8x8xf32>
    %251 = arith.select %249, %247, %250 : vector<8x8xi1>, vector<8x8xf32>
    %cst_86 = arith.constant dense<0xFF800000> : vector<8xf32>
    %252 = vector.multi_reduction <maximumf>, %251, %cst_86 [1] : vector<8x8xf32> to vector<8xf32>
    %253 = vector.shape_cast %252 : vector<8xf32> to vector<8x1xf32>
    %254 = vector.broadcast %253 : vector<8x1xf32> to vector<8x8xf32>
    %255 = arith.subf %251, %254 : vector<8x8xf32>
    %256 = math.exp %255 : vector<8x8xf32>
    %cst_87 = arith.constant dense<0.000000e+00> : vector<8xf32>
    %257 = vector.multi_reduction <add>, %256, %cst_87 [1] : vector<8x8xf32> to vector<8xf32>
    %258 = vector.shape_cast %257 : vector<8xf32> to vector<8x1xf32>
    %259 = tpu.reciprocal %258 {approx = true} : vector<8x1xf32> -> vector<8x1xf32>
    %260 = vector.broadcast %259 : vector<8x1xf32> to vector<8x8xf32>
    %261 = arith.mulf %256, %260 : vector<8x8xf32>
    %262 = arith.truncf %261 : vector<8x8xf32> to vector<8x8xbf16>
    %cst_88 = arith.constant dense<0.000000e+00> : vector<8x8xf32>
    %263 = tpu.matmul %262, %244, %cst_88 {dimension_numbers = #tpu.dot_dimension_numbers<[1], [0], [0], [1], [0, 0, 1, 1], [], []>} : vector<8x8xbf16>, vector<8x8xbf16>, vector<8x8xf32> -> vector<8x8xf32>
    %264 = tpu.concatenate %188, %213, %238, %263 in 1 : vector<8x8xf32>, vector<8x8xf32>, vector<8x8xf32>, vector<8x8xf32> -> vector<8x32xf32>
    %c0_89 = arith.constant 0 : index
    %c0_90 = arith.constant 0 : index
    %265 = vector.load %arg15[%c0_89, %c0_90] : memref<32x32xbf16, #tpu.memory_space<vmem>>, vector<32x32xbf16>
    %266 = arith.truncf %264 : vector<8x32xf32> to vector<8x32xbf16>
    %cst_91 = arith.constant dense<0.000000e+00> : vector<8x32xf32>
    %267 = tpu.matmul %266, %265, %cst_91 {dimension_numbers = #tpu.dot_dimension_numbers<[1], [0], [0], [1], [0, 0, 1, 1], [], []>} : vector<8x32xbf16>, vector<32x32xbf16>, vector<8x32xf32> -> vector<8x32xf32>
    %c0_92 = arith.constant 0 : index
    %c0_93 = arith.constant 0 : index
    %268 = vector.load %arg16[%c0_92, %c0_93] : memref<1x32xf32, #tpu.memory_space<vmem>>, vector<1x32xf32>
    %269 = vector.broadcast %268 : vector<1x32xf32> to vector<8x32xf32>
    %270 = arith.addf %267, %269 : vector<8x32xf32>
    %271 = arith.addf %149, %270 : vector<8x32xf32>
    %c0_94 = arith.constant 0 : index
    %c0_95 = arith.constant 0 : index
    %272 = vector.load %arg17[%c0_94, %c0_95] : memref<1x32xf32, #tpu.memory_space<vmem>>, vector<1x32xf32>
    %c0_96 = arith.constant 0 : index
    %c0_97 = arith.constant 0 : index
    %273 = vector.load %arg18[%c0_96, %c0_97] : memref<1x32xf32, #tpu.memory_space<vmem>>, vector<1x32xf32>
    %cst_98 = arith.constant dense<0.000000e+00> : vector<8xf32>
    %274 = vector.multi_reduction <add>, %271, %cst_98 [1] : vector<8x32xf32> to vector<8xf32>
    %275 = vector.shape_cast %274 : vector<8xf32> to vector<8x1xf32>
    %cst_99 = arith.constant 3.200000e+01 : f32
    %276 = vector.broadcast %cst_99 : f32 to vector<8x1xf32>
    %277 = arith.divf %275, %276 : vector<8x1xf32>
    %278 = vector.broadcast %277 : vector<8x1xf32> to vector<8x32xf32>
    %279 = arith.subf %271, %278 : vector<8x32xf32>
    %280 = arith.mulf %279, %279 : vector<8x32xf32>
    %cst_100 = arith.constant dense<0.000000e+00> : vector<8xf32>
    %281 = vector.multi_reduction <add>, %280, %cst_100 [1] : vector<8x32xf32> to vector<8xf32>
    %282 = vector.shape_cast %281 : vector<8xf32> to vector<8x1xf32>
    %cst_101 = arith.constant 3.200000e+01 : f32
    %283 = vector.broadcast %cst_101 : f32 to vector<8x1xf32>
    %284 = arith.divf %282, %283 : vector<8x1xf32>
    %285 = vector.broadcast %277 : vector<8x1xf32> to vector<8x32xf32>
    %286 = arith.subf %271, %285 : vector<8x32xf32>
    %cst_102 = arith.constant 9.99999974E-6 : f32
    %287 = vector.broadcast %cst_102 : f32 to vector<8x1xf32>
    %288 = arith.addf %284, %287 : vector<8x1xf32>
    %289 = math.rsqrt %288 : vector<8x1xf32>
    %290 = vector.broadcast %289 : vector<8x1xf32> to vector<8x32xf32>
    %291 = arith.mulf %286, %290 : vector<8x32xf32>
    %292 = vector.broadcast %272 : vector<1x32xf32> to vector<8x32xf32>
    %293 = arith.mulf %291, %292 : vector<8x32xf32>
    %294 = vector.broadcast %273 : vector<1x32xf32> to vector<8x32xf32>
    %295 = arith.addf %293, %294 : vector<8x32xf32>
    %c0_103 = arith.constant 0 : index
    %c0_104 = arith.constant 0 : index
    %296 = vector.load %arg19[%c0_103, %c0_104] : memref<32x64xbf16, #tpu.memory_space<vmem>>, vector<32x64xbf16>
    %297 = arith.truncf %295 : vector<8x32xf32> to vector<8x32xbf16>
    %cst_105 = arith.constant dense<0.000000e+00> : vector<8x64xf32>
    %298 = tpu.matmul %297, %296, %cst_105 {dimension_numbers = #tpu.dot_dimension_numbers<[1], [0], [0], [1], [0, 0, 1, 1], [], []>} : vector<8x32xbf16>, vector<32x64xbf16>, vector<8x64xf32> -> vector<8x64xf32>
    %c0_106 = arith.constant 0 : index
    %c0_107 = arith.constant 0 : index
    %299 = vector.load %arg20[%c0_106, %c0_107] : memref<1x64xf32, #tpu.memory_space<vmem>>, vector<1x64xf32>
    %300 = vector.broadcast %299 : vector<1x64xf32> to vector<8x64xf32>
    %301 = arith.addf %298, %300 : vector<8x64xf32>
    %cst_108 = arith.constant 0.000000e+00 : f32
    %302 = vector.broadcast %cst_108 : f32 to vector<8x64xf32>
    %303 = arith.maximumf %301, %302 : vector<8x64xf32>
    %c0_109 = arith.constant 0 : index
    %c0_110 = arith.constant 0 : index
    %304 = vector.load %arg21[%c0_109, %c0_110] : memref<64x32xbf16, #tpu.memory_space<vmem>>, vector<64x32xbf16>
    %305 = arith.truncf %303 : vector<8x64xf32> to vector<8x64xbf16>
    %cst_111 = arith.constant dense<0.000000e+00> : vector<8x32xf32>
    %306 = tpu.matmul %305, %304, %cst_111 {dimension_numbers = #tpu.dot_dimension_numbers<[1], [0], [0], [1], [0, 0, 1, 1], [], []>} : vector<8x64xbf16>, vector<64x32xbf16>, vector<8x32xf32> -> vector<8x32xf32>
    %c0_112 = arith.constant 0 : index
    %c0_113 = arith.constant 0 : index
    %307 = vector.load %arg22[%c0_112, %c0_113] : memref<1x32xf32, #tpu.memory_space<vmem>>, vector<1x32xf32>
    %308 = vector.broadcast %307 : vector<1x32xf32> to vector<8x32xf32>
    %309 = arith.addf %306, %308 : vector<8x32xf32>
    %310 = arith.addf %295, %309 : vector<8x32xf32>
    %c0_114 = arith.constant 0 : index
    %c0_115 = arith.constant 0 : index
    %311 = vector.load %arg23[%c0_114, %c0_115] : memref<1x32xf32, #tpu.memory_space<vmem>>, vector<1x32xf32>
    %c0_116 = arith.constant 0 : index
    %c0_117 = arith.constant 0 : index
    %312 = vector.load %arg24[%c0_116, %c0_117] : memref<1x32xf32, #tpu.memory_space<vmem>>, vector<1x32xf32>
    %cst_118 = arith.constant dense<0.000000e+00> : vector<8xf32>
    %313 = vector.multi_reduction <add>, %310, %cst_118 [1] : vector<8x32xf32> to vector<8xf32>
    %314 = vector.shape_cast %313 : vector<8xf32> to vector<8x1xf32>
    %cst_119 = arith.constant 3.200000e+01 : f32
    %315 = vector.broadcast %cst_119 : f32 to vector<8x1xf32>
    %316 = arith.divf %314, %315 : vector<8x1xf32>
    %317 = vector.broadcast %316 : vector<8x1xf32> to vector<8x32xf32>
    %318 = arith.subf %310, %317 : vector<8x32xf32>
    %319 = arith.mulf %318, %318 : vector<8x32xf32>
    %cst_120 = arith.constant dense<0.000000e+00> : vector<8xf32>
    %320 = vector.multi_reduction <add>, %319, %cst_120 [1] : vector<8x32xf32> to vector<8xf32>
    %321 = vector.shape_cast %320 : vector<8xf32> to vector<8x1xf32>
    %cst_121 = arith.constant 3.200000e+01 : f32
    %322 = vector.broadcast %cst_121 : f32 to vector<8x1xf32>
    %323 = arith.divf %321, %322 : vector<8x1xf32>
    %324 = vector.broadcast %316 : vector<8x1xf32> to vector<8x32xf32>
    %325 = arith.subf %310, %324 : vector<8x32xf32>
    %cst_122 = arith.constant 9.99999974E-6 : f32
    %326 = vector.broadcast %cst_122 : f32 to vector<8x1xf32>
    %327 = arith.addf %323, %326 : vector<8x1xf32>
    %328 = math.rsqrt %327 : vector<8x1xf32>
    %329 = vector.broadcast %328 : vector<8x1xf32> to vector<8x32xf32>
    %330 = arith.mulf %325, %329 : vector<8x32xf32>
    %331 = vector.broadcast %311 : vector<1x32xf32> to vector<8x32xf32>
    %332 = arith.mulf %330, %331 : vector<8x32xf32>
    %333 = vector.broadcast %312 : vector<1x32xf32> to vector<8x32xf32>
    %334 = arith.addf %332, %333 : vector<8x32xf32>
    %c0_123 = arith.constant 0 : index
    %c0_124 = arith.constant 0 : index
    %c0_125 = arith.constant 0 : index
    %335 = vector.load %arg25[%c0_123, %c0_124, %c0_125] : memref<1x8x32xf32, #tpu.memory_space<vmem>>, vector<1x8x32xf32>
    %336 = vector.shape_cast %335 : vector<1x8x32xf32> to vector<8x32xf32>
    %337 = vector.shape_cast %334 : vector<8x32xf32> to vector<1x8x32xf32>
    tpu.vector_store %arg25[%c0_123, %c0_124, %c0_125], %337 {strides = array<i32>} : memref<1x8x32xf32, #tpu.memory_space<vmem>>, vector<1x8x32xf32>,
    return
  }
  func.func @transform_0(%arg0: i32) -> (i32, i32, i32) {
    %c0_i32 = arith.constant 0 : i32
    %c0_i32_0 = arith.constant 0 : i32
    %c0_i32_1 = arith.constant 0 : i32
    return %arg0, %c0_i32, %c0_i32_0 : i32, i32, i32
  }
  func.func @transform_1(%arg0: i32) -> (i32, i32, i32) {
    %c0_i32 = arith.constant 0 : i32
    %c0_i32_0 = arith.constant 0 : i32
    %c0_i32_1 = arith.constant 0 : i32
    return %arg0, %c0_i32, %c0_i32_0 : i32, i32, i32
  }
  func.func @transform_2(%arg0: i32) -> (i32, i32, i32) {
    %c0_i32 = arith.constant 0 : i32
    %c0_i32_0 = arith.constant 0 : i32
    %c0_i32_1 = arith.constant 0 : i32
    return %arg0, %c0_i32, %c0_i32_0 : i32, i32, i32
  }
  func.func @transform_3(%arg0: i32) -> (i32, i32, i32) {
    %c0_i32 = arith.constant 0 : i32
    %c0_i32_0 = arith.constant 0 : i32
    %c0_i32_1 = arith.constant 0 : i32
    return %arg0, %c0_i32, %c0_i32_0 : i32, i32, i32
  }
  func.func @transform_4(%arg0: i32) -> (i32, i32) {
    %c0_i32 = arith.constant 0 : i32
    %c0_i32_0 = arith.constant 0 : i32
    %c0_i32_1 = arith.constant 0 : i32
    return %c0_i32, %c0_i32_0 : i32, i32
  }
  func.func @transform_5(%arg0: i32) -> (i32, i32) {
    %c0_i32 = arith.constant 0 : i32
    %c0_i32_0 = arith.constant 0 : i32
    %c0_i32_1 = arith.constant 0 : i32
    return %c0_i32, %c0_i32_0 : i32, i32
  }
  func.func @transform_6(%arg0: i32) -> (i32, i32) {
    %c0_i32 = arith.constant 0 : i32
    %c0_i32_0 = arith.constant 0 : i32
    %c0_i32_1 = arith.constant 0 : i32
    return %c0_i32, %c0_i32_0 : i32, i32
  }
  func.func @transform_7(%arg0: i32) -> (i32, i32) {
    %c0_i32 = arith.constant 0 : i32
    %c0_i32_0 = arith.constant 0 : i32
    %c0_i32_1 = arith.constant 0 : i32
    return %c0_i32, %c0_i32_0 : i32, i32
  }
  func.func @transform_8(%arg0: i32) -> (i32, i32) {
    %c0_i32 = arith.constant 0 : i32
    %c0_i32_0 = arith.constant 0 : i32
    %c0_i32_1 = arith.constant 0 : i32
    return %c0_i32, %c0_i32_0 : i32, i32
  }
  func.func @transform_9(%arg0: i32) -> (i32, i32) {
    %c0_i32 = arith.constant 0 : i32
    %c0_i32_0 = arith.constant 0 : i32
    %c0_i32_1 = arith.constant 0 : i32
    return %c0_i32, %c0_i32_0 : i32, i32
  }
  func.func @transform_10(%arg0: i32) -> (i32, i32) {
    %c0_i32 = arith.constant 0 : i32
    %c0_i32_0 = arith.constant 0 : i32
    %c0_i32_1 = arith.constant 0 : i32
    return %c0_i32, %c0_i32_0 : i32, i32
  }
  func.func @transform_11(%arg0: i32) -> (i32, i32) {
    %c0_i32 = arith.constant 0 : i32
    %c0_i32_0 = arith.constant 0 : i32
    %c0_i32_1 = arith.constant 0 : i32
    return %c0_i32, %c0_i32_0 : i32, i32
  }
  func.func @transform_12(%arg0: i32) -> (i32, i32) {
    %c0_i32 = arith.constant 0 : i32
    %c0_i32_0 = arith.constant 0 : i32
    %c0_i32_1 = arith.constant 0 : i32
    return %c0_i32, %c0_i32_0 : i32, i32
  }
  func.func @transform_13(%arg0: i32) -> (i32, i32) {
    %c0_i32 = arith.constant 0 : i32
    %c0_i32_0 = arith.constant 0 : i32
    %c0_i32_1 = arith.constant 0 : i32
    return %c0_i32, %c0_i32_0 : i32, i32
  }
  func.func @transform_14(%arg0: i32) -> (i32, i32) {
    %c0_i32 = arith.constant 0 : i32
    %c0_i32_0 = arith.constant 0 : i32
    %c0_i32_1 = arith.constant 0 : i32
    return %c0_i32, %c0_i32_0 : i32, i32
  }
  func.func @transform_15(%arg0: i32) -> (i32, i32) {
    %c0_i32 = arith.constant 0 : i32
    %c0_i32_0 = arith.constant 0 : i32
    %c0_i32_1 = arith.constant 0 : i32
    return %c0_i32, %c0_i32_0 : i32, i32
  }
  func.func @transform_16(%arg0: i32) -> (i32, i32) {
    %c0_i32 = arith.constant 0 : i32
    %c0_i32_0 = arith.constant 0 : i32
    %c0_i32_1 = arith.constant 0 : i32
    return %c0_i32, %c0_i32_0 : i32, i32
  }
  func.func @transform_17(%arg0: i32) -> (i32, i32) {
    %c0_i32 = arith.constant 0 : i32
    %c0_i32_0 = arith.constant 0 : i32
    %c0_i32_1 = arith.constant 0 : i32
    return %c0_i32, %c0_i32_0 : i32, i32
  }
  func.func @transform_18(%arg0: i32) -> (i32, i32) {
    %c0_i32 = arith.constant 0 : i32
    %c0_i32_0 = arith.constant 0 : i32
    %c0_i32_1 = arith.constant 0 : i32
    return %c0_i32, %c0_i32_0 : i32, i32
  }
  func.func @transform_19(%arg0: i32) -> (i32, i32) {
    %c0_i32 = arith.constant 0 : i32
    %c0_i32_0 = arith.constant 0 : i32
    %c0_i32_1 = arith.constant 0 : i32
    return %c0_i32, %c0_i32_0 : i32, i32
  }
  func.func @transform_20(%arg0: i32) -> (i32, i32) {
    %c0_i32 = arith.constant 0 : i32
    %c0_i32_0 = arith.constant 0 : i32
    %c0_i32_1 = arith.constant 0 : i32
    return %c0_i32, %c0_i32_0 : i32, i32
  }
  func.func @transform_21(%arg0: i32) -> (i32, i32) {
    %c0_i32 = arith.constant 0 : i32
    %c0_i32_0 = arith.constant 0 : i32
    %c0_i32_1 = arith.constant 0 : i32
    return %c0_i32, %c0_i32_0 : i32, i32
  }
  func.func @transform_22(%arg0: i32) -> (i32, i32) {
    %c0_i32 = arith.constant 0 : i32
    %c0_i32_0 = arith.constant 0 : i32
    %c0_i32_1 = arith.constant 0 : i32
    return %c0_i32, %c0_i32_0 : i32, i32
  }
  func.func @transform_23(%arg0: i32) -> (i32, i32) {
    %c0_i32 = arith.constant 0 : i32
    %c0_i32_0 = arith.constant 0 : i32
    %c0_i32_1 = arith.constant 0 : i32
    return %c0_i32, %c0_i32_0 : i32, i32
  }
  func.func @transform_24(%arg0: i32) -> (i32, i32, i32) {
    %c0_i32 = arith.constant 0 : i32
    %c0_i32_0 = arith.constant 0 : i32
    %c0_i32_1 = arith.constant 0 : i32
    return %arg0, %c0_i32, %c0_i32_0 : i32, i32, i32
  }
}

module attributes {stable_mosaic.version = 11 : i64} {
  func.func @_decoder_layer_kernel_attn(%arg0: i32, %arg1: memref<1x8x32xf32, #tpu.memory_space<vmem>>, %arg2: memref<1x8x32xf32, #tpu.memory_space<vmem>>, %arg3: memref<1x1x8xf32, #tpu.memory_space<vmem>>, %arg4: memref<1x1x8xf32, #tpu.memory_space<vmem>>, %arg5: memref<32x96xbf16, #tpu.memory_space<vmem>>, %arg6: memref<1x96xf32, #tpu.memory_space<vmem>>, %arg7: memref<32x32xbf16, #tpu.memory_space<vmem>>, %arg8: memref<1x32xf32, #tpu.memory_space<vmem>>, %arg9: memref<1x32xf32, #tpu.memory_space<vmem>>, %arg10: memref<1x32xf32, #tpu.memory_space<vmem>>, %arg11: memref<32x32xbf16, #tpu.memory_space<vmem>>, %arg12: memref<1x32xf32, #tpu.memory_space<vmem>>, %arg13: memref<32x64xbf16, #tpu.memory_space<vmem>>, %arg14: memref<1x64xf32, #tpu.memory_space<vmem>>, %arg15: memref<32x32xbf16, #tpu.memory_space<vmem>>, %arg16: memref<1x32xf32, #tpu.memory_space<vmem>>, %arg17: memref<1x32xf32, #tpu.memory_space<vmem>>, %arg18: memref<1x32xf32, #tpu.memory_space<vmem>>, %arg19: memref<32x64xbf16, #tpu.memory_space<vmem>>, %arg20: memref<1x64xf32, #tpu.memory_space<vmem>>, %arg21: memref<64x32xbf16, #tpu.memory_space<vmem>>, %arg22: memref<1x32xf32, #tpu.memory_space<vmem>>, %arg23: memref<1x32xf32, #tpu.memory_space<vmem>>, %arg24: memref<1x32xf32, #tpu.memory_space<vmem>>, %arg25: memref<1x8x32xf32, #tpu.memory_space<vmem>>, %arg26: memref<1x4x8x8xf32, #tpu.memory_space<vmem>>) attributes {dimension_semantics = [#tpu.dimension_semantics<parallel>], iteration_bounds = array<i64: 2>, scalar_prefetch = 0 : i64, scratch_operands = 0 : i64, tpu.core_type = #tpu.core_type<tc>, window_params = [{transform_indices = @transform_0, window_bounds = array<i64: 1, 8, 32>}, {transform_indices = @transform_1, window_bounds = array<i64: 1, 8, 32>}, {transform_indices = @transform_2, window_bounds = array<i64: 1, 1, 8>}, {transform_indices = @transform_3, window_bounds = array<i64: 1, 1, 8>}, {pipeline_mode = #tpu.pipeline_mode<synchronous>, transform_indices = @transform_4, window_bounds = array<i64: 32, 96>}, {pipeline_mode = #tpu.pipeline_mode<synchronous>, transform_indices = @transform_5, window_bounds = array<i64: 1, 96>}, {pipeline_mode = #tpu.pipeline_mode<synchronous>, transform_indices = @transform_6, window_bounds = array<i64: 32, 32>}, {pipeline_mode = #tpu.pipeline_mode<synchronous>, transform_indices = @transform_7, window_bounds = array<i64: 1, 32>}, {pipeline_mode = #tpu.pipeline_mode<synchronous>, transform_indices = @transform_8, window_bounds = array<i64: 1, 32>}, {pipeline_mode = #tpu.pipeline_mode<synchronous>, transform_indices = @transform_9, window_bounds = array<i64: 1, 32>}, {pipeline_mode = #tpu.pipeline_mode<synchronous>, transform_indices = @transform_10, window_bounds = array<i64: 32, 32>}, {pipeline_mode = #tpu.pipeline_mode<synchronous>, transform_indices = @transform_11, window_bounds = array<i64: 1, 32>}, {pipeline_mode = #tpu.pipeline_mode<synchronous>, transform_indices = @transform_12, window_bounds = array<i64: 32, 64>}, {pipeline_mode = #tpu.pipeline_mode<synchronous>, transform_indices = @transform_13, window_bounds = array<i64: 1, 64>}, {pipeline_mode = #tpu.pipeline_mode<synchronous>, transform_indices = @transform_14, window_bounds = array<i64: 32, 32>}, {pipeline_mode = #tpu.pipeline_mode<synchronous>, transform_indices = @transform_15, window_bounds = array<i64: 1, 32>}, {pipeline_mode = #tpu.pipeline_mode<synchronous>, transform_indices = @transform_16, window_bounds = array<i64: 1, 32>}, {pipeline_mode = #tpu.pipeline_mode<synchronous>, transform_indices = @transform_17, window_bounds = array<i64: 1, 32>}, {pipeline_mode = #tpu.pipeline_mode<synchronous>, transform_indices = @transform_18, window_bounds = array<i64: 32, 64>}, {pipeline_mode = #tpu.pipeline_mode<synchronous>, transform_indices = @transform_19, window_bounds = array<i64: 1, 64>}, {pipeline_mode = #tpu.pipeline_mode<synchronous>, transform_indices = @transform_20, window_bounds = array<i64: 64, 32>}, {pipeline_mode = #tpu.pipeline_mode<synchronous>, transform_indices = @transform_21, window_bounds = array<i64: 1, 32>}, {pipeline_mode = #tpu.pipeline_mode<synchronous>, transform_indices = @transform_22, window_bounds = array<i64: 1, 32>}, {pipeline_mode = #tpu.pipeline_mode<synchronous>, transform_indices = @transform_23, window_bounds = array<i64: 1, 32>}, {transform_indices = @transform_24, window_bounds = array<i64: 1, 8, 32>}, {transform_indices = @transform_25, window_bounds = array<i64: 1, 4, 8, 8>}]} {
    %c0 = arith.constant 0 : index
    %c0_0 = arith.constant 0 : index
    %c0_1 = arith.constant 0 : index
    %0 = vector.load %arg1[%c0, %c0_0, %c0_1] : memref<1x8x32xf32, #tpu.memory_space<vmem>>, vector<1x8x32xf32>
    %1 = vector.shape_cast %0 : vector<1x8x32xf32> to vector<8x32xf32>
    %c0_2 = arith.constant 0 : index
    %c0_3 = arith.constant 0 : index
    %c0_4 = arith.constant 0 : index
    %2 = vector.load %arg2[%c0_2, %c0_3, %c0_4] : memref<1x8x32xf32, #tpu.memory_space<vmem>>, vector<1x8x32xf32>
    %3 = vector.shape_cast %2 : vector<1x8x32xf32> to vector<8x32xf32>
    %c0_5 = arith.constant 0 : index
    %c0_6 = arith.constant 0 : index
    %c0_7 = arith.constant 0 : index
    %4 = vector.load %arg3[%c0_5, %c0_6, %c0_7] : memref<1x1x8xf32, #tpu.memory_space<vmem>>, vector<1x1x8xf32>
    %5 = vector.shape_cast %4 : vector<1x1x8xf32> to vector<1x8xf32>
    %cst = arith.constant 0.000000e+00 : f32
    %6 = vector.broadcast %cst : f32 to vector<1x8xf32>
    %7 = arith.cmpf ogt, %5, %6 : vector<1x8xf32>
    %c0_8 = arith.constant 0 : index
    %c0_9 = arith.constant 0 : index
    %c0_10 = arith.constant 0 : index
    %8 = vector.load %arg4[%c0_8, %c0_9, %c0_10] : memref<1x1x8xf32, #tpu.memory_space<vmem>>, vector<1x1x8xf32>
    %9 = vector.shape_cast %8 : vector<1x1x8xf32> to vector<1x8xf32>
    %cst_11 = arith.constant 0.000000e+00 : f32
    %10 = vector.broadcast %cst_11 : f32 to vector<1x8xf32>
    %11 = arith.cmpf ogt, %9, %10 : vector<1x8xf32>
    %12 = tpu.iota {dimensions = array<i32: 0>} : vector<8x8xi32>
    %13 = tpu.iota {dimensions = array<i32: 1>} : vector<8x8xi32>
    %14 = arith.cmpi sle, %13, %12 : vector<8x8xi32>
    %15 = vector.broadcast %7 : vector<1x8xi1> to vector<8x8xi1>
    %16 = arith.andi %14, %15 : vector<8x8xi1>
    %c0_12 = arith.constant 0 : index
    %c0_13 = arith.constant 0 : index
    %17 = vector.load %arg5[%c0_12, %c0_13] : memref<32x96xbf16, #tpu.memory_space<vmem>>, vector<32x96xbf16>
    %18 = arith.truncf %1 : vector<8x32xf32> to vector<8x32xbf16>
    %cst_14 = arith.constant dense<0.000000e+00> : vector<8x96xf32>
    %19 = tpu.matmul %18, %17, %cst_14 {dimension_numbers = #tpu.dot_dimension_numbers<[1], [0], [0], [1], [0, 0, 1, 1], [], []>} : vector<8x32xbf16>, vector<32x96xbf16>, vector<8x96xf32> -> vector<8x96xf32>
    %c0_15 = arith.constant 0 : index
    %c0_16 = arith.constant 0 : index
    %20 = vector.load %arg6[%c0_15, %c0_16] : memref<1x96xf32, #tpu.memory_space<vmem>>, vector<1x96xf32>
    %21 = vector.broadcast %20 : vector<1x96xf32> to vector<8x96xf32>
    %22 = arith.addf %19, %21 : vector<8x96xf32>
    %23 = vector.extract_strided_slice %22 {offsets = [0, 0], sizes = [8, 32], strides = [1, 1]} : vector<8x96xf32> to vector<8x32xf32>
    %24 = vector.extract_strided_slice %22 {offsets = [0, 32], sizes = [8, 32], strides = [1, 1]} : vector<8x96xf32> to vector<8x32xf32>
    %25 = vector.extract_strided_slice %22 {offsets = [0, 64], sizes = [8, 32], strides = [1, 1]} : vector<8x96xf32> to vector<8x32xf32>
    %26 = vector.extract_strided_slice %23 {offsets = [0, 0], sizes = [8, 8], strides = [1, 1]} : vector<8x32xf32> to vector<8x8xf32>
    %27 = arith.truncf %26 : vector<8x8xf32> to vector<8x8xbf16>
    %28 = vector.extract_strided_slice %24 {offsets = [0, 0], sizes = [8, 8], strides = [1, 1]} : vector<8x32xf32> to vector<8x8xf32>
    %29 = arith.truncf %28 : vector<8x8xf32> to vector<8x8xbf16>
    %30 = vector.extract_strided_slice %25 {offsets = [0, 0], sizes = [8, 8], strides = [1, 1]} : vector<8x32xf32> to vector<8x8xf32>
    %31 = arith.truncf %30 : vector<8x8xf32> to vector<8x8xbf16>
    %cst_17 = arith.constant dense<0.000000e+00> : vector<8x8xf32>
    %32 = tpu.matmul %27, %29, %cst_17 {dimension_numbers = #tpu.dot_dimension_numbers<[1], [1], [0], [0], [0, 0, 1, 0], [], []>} : vector<8x8xbf16>, vector<8x8xbf16>, vector<8x8xf32> -> vector<8x8xf32>
    %cst_18 = arith.constant 0.353553385 : f32
    %33 = vector.broadcast %cst_18 : f32 to vector<8x8xf32>
    %34 = arith.mulf %32, %33 : vector<8x8xf32>
    %cst_19 = arith.constant -1.000000e+10 : f32
    %35 = vector.broadcast %cst_19 : f32 to vector<8x8xf32>
    %36 = arith.select %16, %34, %35 : vector<8x8xi1>, vector<8x8xf32>
    %cst_20 = arith.constant dense<0xFF800000> : vector<8xf32>
    %37 = vector.multi_reduction <maximumf>, %36, %cst_20 [1] : vector<8x8xf32> to vector<8xf32>
    %38 = vector.shape_cast %37 : vector<8xf32> to vector<8x1xf32>
    %39 = vector.broadcast %38 : vector<8x1xf32> to vector<8x8xf32>
    %40 = arith.subf %36, %39 : vector<8x8xf32>
    %41 = math.exp %40 : vector<8x8xf32>
    %cst_21 = arith.constant dense<0.000000e+00> : vector<8xf32>
    %42 = vector.multi_reduction <add>, %41, %cst_21 [1] : vector<8x8xf32> to vector<8xf32>
    %43 = vector.shape_cast %42 : vector<8xf32> to vector<8x1xf32>
    %44 = tpu.reciprocal %43 {approx = true} : vector<8x1xf32> -> vector<8x1xf32>
    %45 = vector.broadcast %44 : vector<8x1xf32> to vector<8x8xf32>
    %46 = arith.mulf %41, %45 : vector<8x8xf32>
    %47 = arith.truncf %46 : vector<8x8xf32> to vector<8x8xbf16>
    %cst_22 = arith.constant dense<0.000000e+00> : vector<8x8xf32>
    %48 = tpu.matmul %47, %31, %cst_22 {dimension_numbers = #tpu.dot_dimension_numbers<[1], [0], [0], [1], [0, 0, 1, 1], [], []>} : vector<8x8xbf16>, vector<8x8xbf16>, vector<8x8xf32> -> vector<8x8xf32>
    %49 = vector.extract_strided_slice %23 {offsets = [0, 8], sizes = [8, 8], strides = [1, 1]} : vector<8x32xf32> to vector<8x8xf32>
    %50 = arith.truncf %49 : vector<8x8xf32> to vector<8x8xbf16>
    %51 = vector.extract_strided_slice %24 {offsets = [0, 8], sizes = [8, 8], strides = [1, 1]} : vector<8x32xf32> to vector<8x8xf32>
    %52 = arith.truncf %51 : vector<8x8xf32> to vector<8x8xbf16>
    %53 = vector.extract_strided_slice %25 {offsets = [0, 8], sizes = [8, 8], strides = [1, 1]} : vector<8x32xf32> to vector<8x8xf32>
    %54 = arith.truncf %53 : vector<8x8xf32> to vector<8x8xbf16>
    %cst_23 = arith.constant dense<0.000000e+00> : vector<8x8xf32>
    %55 = tpu.matmul %50, %52, %cst_23 {dimension_numbers = #tpu.dot_dimension_numbers<[1], [1], [0], [0], [0, 0, 1, 0], [], []>} : vector<8x8xbf16>, vector<8x8xbf16>, vector<8x8xf32> -> vector<8x8xf32>
    %cst_24 = arith.constant 0.353553385 : f32
    %56 = vector.broadcast %cst_24 : f32 to vector<8x8xf32>
    %57 = arith.mulf %55, %56 : vector<8x8xf32>
    %cst_25 = arith.constant -1.000000e+10 : f32
    %58 = vector.broadcast %cst_25 : f32 to vector<8x8xf32>
    %59 = arith.select %16, %57, %58 : vector<8x8xi1>, vector<8x8xf32>
    %cst_26 = arith.constant dense<0xFF800000> : vector<8xf32>
    %60 = vector.multi_reduction <maximumf>, %59, %cst_26 [1] : vector<8x8xf32> to vector<8xf32>
    %61 = vector.shape_cast %60 : vector<8xf32> to vector<8x1xf32>
    %62 = vector.broadcast %61 : vector<8x1xf32> to vector<8x8xf32>
    %63 = arith.subf %59, %62 : vector<8x8xf32>
    %64 = math.exp %63 : vector<8x8xf32>
    %cst_27 = arith.constant dense<0.000000e+00> : vector<8xf32>
    %65 = vector.multi_reduction <add>, %64, %cst_27 [1] : vector<8x8xf32> to vector<8xf32>
    %66 = vector.shape_cast %65 : vector<8xf32> to vector<8x1xf32>
    %67 = tpu.reciprocal %66 {approx = true} : vector<8x1xf32> -> vector<8x1xf32>
    %68 = vector.broadcast %67 : vector<8x1xf32> to vector<8x8xf32>
    %69 = arith.mulf %64, %68 : vector<8x8xf32>
    %70 = arith.truncf %69 : vector<8x8xf32> to vector<8x8xbf16>
    %cst_28 = arith.constant dense<0.000000e+00> : vector<8x8xf32>
    %71 = tpu.matmul %70, %54, %cst_28 {dimension_numbers = #tpu.dot_dimension_numbers<[1], [0], [0], [1], [0, 0, 1, 1], [], []>} : vector<8x8xbf16>, vector<8x8xbf16>, vector<8x8xf32> -> vector<8x8xf32>
    %72 = vector.extract_strided_slice %23 {offsets = [0, 16], sizes = [8, 8], strides = [1, 1]} : vector<8x32xf32> to vector<8x8xf32>
    %73 = arith.truncf %72 : vector<8x8xf32> to vector<8x8xbf16>
    %74 = vector.extract_strided_slice %24 {offsets = [0, 16], sizes = [8, 8], strides = [1, 1]} : vector<8x32xf32> to vector<8x8xf32>
    %75 = arith.truncf %74 : vector<8x8xf32> to vector<8x8xbf16>
    %76 = vector.extract_strided_slice %25 {offsets = [0, 16], sizes = [8, 8], strides = [1, 1]} : vector<8x32xf32> to vector<8x8xf32>
    %77 = arith.truncf %76 : vector<8x8xf32> to vector<8x8xbf16>
    %cst_29 = arith.constant dense<0.000000e+00> : vector<8x8xf32>
    %78 = tpu.matmul %73, %75, %cst_29 {dimension_numbers = #tpu.dot_dimension_numbers<[1], [1], [0], [0], [0, 0, 1, 0], [], []>} : vector<8x8xbf16>, vector<8x8xbf16>, vector<8x8xf32> -> vector<8x8xf32>
    %cst_30 = arith.constant 0.353553385 : f32
    %79 = vector.broadcast %cst_30 : f32 to vector<8x8xf32>
    %80 = arith.mulf %78, %79 : vector<8x8xf32>
    %cst_31 = arith.constant -1.000000e+10 : f32
    %81 = vector.broadcast %cst_31 : f32 to vector<8x8xf32>
    %82 = arith.select %16, %80, %81 : vector<8x8xi1>, vector<8x8xf32>
    %cst_32 = arith.constant dense<0xFF800000> : vector<8xf32>
    %83 = vector.multi_reduction <maximumf>, %82, %cst_32 [1] : vector<8x8xf32> to vector<8xf32>
    %84 = vector.shape_cast %83 : vector<8xf32> to vector<8x1xf32>
    %85 = vector.broadcast %84 : vector<8x1xf32> to vector<8x8xf32>
    %86 = arith.subf %82, %85 : vector<8x8xf32>
    %87 = math.exp %86 : vector<8x8xf32>
    %cst_33 = arith.constant dense<0.000000e+00> : vector<8xf32>
    %88 = vector.multi_reduction <add>, %87, %cst_33 [1] : vector<8x8xf32> to vector<8xf32>
    %89 = vector.shape_cast %88 : vector<8xf32> to vector<8x1xf32>
    %90 = tpu.reciprocal %89 {approx = true} : vector<8x1xf32> -> vector<8x1xf32>
    %91 = vector.broadcast %90 : vector<8x1xf32> to vector<8x8xf32>
    %92 = arith.mulf %87, %91 : vector<8x8xf32>
    %93 = arith.truncf %92 : vector<8x8xf32> to vector<8x8xbf16>
    %cst_34 = arith.constant dense<0.000000e+00> : vector<8x8xf32>
    %94 = tpu.matmul %93, %77, %cst_34 {dimension_numbers = #tpu.dot_dimension_numbers<[1], [0], [0], [1], [0, 0, 1, 1], [], []>} : vector<8x8xbf16>, vector<8x8xbf16>, vector<8x8xf32> -> vector<8x8xf32>
    %95 = vector.extract_strided_slice %23 {offsets = [0, 24], sizes = [8, 8], strides = [1, 1]} : vector<8x32xf32> to vector<8x8xf32>
    %96 = arith.truncf %95 : vector<8x8xf32> to vector<8x8xbf16>
    %97 = vector.extract_strided_slice %24 {offsets = [0, 24], sizes = [8, 8], strides = [1, 1]} : vector<8x32xf32> to vector<8x8xf32>
    %98 = arith.truncf %97 : vector<8x8xf32> to vector<8x8xbf16>
    %99 = vector.extract_strided_slice %25 {offsets = [0, 24], sizes = [8, 8], strides = [1, 1]} : vector<8x32xf32> to vector<8x8xf32>
    %100 = arith.truncf %99 : vector<8x8xf32> to vector<8x8xbf16>
    %cst_35 = arith.constant dense<0.000000e+00> : vector<8x8xf32>
    %101 = tpu.matmul %96, %98, %cst_35 {dimension_numbers = #tpu.dot_dimension_numbers<[1], [1], [0], [0], [0, 0, 1, 0], [], []>} : vector<8x8xbf16>, vector<8x8xbf16>, vector<8x8xf32> -> vector<8x8xf32>
    %cst_36 = arith.constant 0.353553385 : f32
    %102 = vector.broadcast %cst_36 : f32 to vector<8x8xf32>
    %103 = arith.mulf %101, %102 : vector<8x8xf32>
    %cst_37 = arith.constant -1.000000e+10 : f32
    %104 = vector.broadcast %cst_37 : f32 to vector<8x8xf32>
    %105 = arith.select %16, %103, %104 : vector<8x8xi1>, vector<8x8xf32>
    %cst_38 = arith.constant dense<0xFF800000> : vector<8xf32>
    %106 = vector.multi_reduction <maximumf>, %105, %cst_38 [1] : vector<8x8xf32> to vector<8xf32>
    %107 = vector.shape_cast %106 : vector<8xf32> to vector<8x1xf32>
    %108 = vector.broadcast %107 : vector<8x1xf32> to vector<8x8xf32>
    %109 = arith.subf %105, %108 : vector<8x8xf32>
    %110 = math.exp %109 : vector<8x8xf32>
    %cst_39 = arith.constant dense<0.000000e+00> : vector<8xf32>
    %111 = vector.multi_reduction <add>, %110, %cst_39 [1] : vector<8x8xf32> to vector<8xf32>
    %112 = vector.shape_cast %111 : vector<8xf32> to vector<8x1xf32>
    %113 = tpu.reciprocal %112 {approx = true} : vector<8x1xf32> -> vector<8x1xf32>
    %114 = vector.broadcast %113 : vector<8x1xf32> to vector<8x8xf32>
    %115 = arith.mulf %110, %114 : vector<8x8xf32>
    %116 = arith.truncf %115 : vector<8x8xf32> to vector<8x8xbf16>
    %cst_40 = arith.constant dense<0.000000e+00> : vector<8x8xf32>
    %117 = tpu.matmul %116, %100, %cst_40 {dimension_numbers = #tpu.dot_dimension_numbers<[1], [0], [0], [1], [0, 0, 1, 1], [], []>} : vector<8x8xbf16>, vector<8x8xbf16>, vector<8x8xf32> -> vector<8x8xf32>
    %118 = tpu.concatenate %48, %71, %94, %117 in 1 : vector<8x8xf32>, vector<8x8xf32>, vector<8x8xf32>, vector<8x8xf32> -> vector<8x32xf32>
    %c0_41 = arith.constant 0 : index
    %c0_42 = arith.constant 0 : index
    %119 = vector.load %arg7[%c0_41, %c0_42] : memref<32x32xbf16, #tpu.memory_space<vmem>>, vector<32x32xbf16>
    %120 = arith.truncf %118 : vector<8x32xf32> to vector<8x32xbf16>
    %cst_43 = arith.constant dense<0.000000e+00> : vector<8x32xf32>
    %121 = tpu.matmul %120, %119, %cst_43 {dimension_numbers = #tpu.dot_dimension_numbers<[1], [0], [0], [1], [0, 0, 1, 1], [], []>} : vector<8x32xbf16>, vector<32x32xbf16>, vector<8x32xf32> -> vector<8x32xf32>
    %c0_44 = arith.constant 0 : index
    %c0_45 = arith.constant 0 : index
    %122 = vector.load %arg8[%c0_44, %c0_45] : memref<1x32xf32, #tpu.memory_space<vmem>>, vector<1x32xf32>
    %123 = vector.broadcast %122 : vector<1x32xf32> to vector<8x32xf32>
    %124 = arith.addf %121, %123 : vector<8x32xf32>
    %125 = arith.addf %1, %124 : vector<8x32xf32>
    %c0_46 = arith.constant 0 : index
    %c0_47 = arith.constant 0 : index
    %126 = vector.load %arg9[%c0_46, %c0_47] : memref<1x32xf32, #tpu.memory_space<vmem>>, vector<1x32xf32>
    %c0_48 = arith.constant 0 : index
    %c0_49 = arith.constant 0 : index
    %127 = vector.load %arg10[%c0_48, %c0_49] : memref<1x32xf32, #tpu.memory_space<vmem>>, vector<1x32xf32>
    %cst_50 = arith.constant dense<0.000000e+00> : vector<8xf32>
    %128 = vector.multi_reduction <add>, %125, %cst_50 [1] : vector<8x32xf32> to vector<8xf32>
    %129 = vector.shape_cast %128 : vector<8xf32> to vector<8x1xf32>
    %cst_51 = arith.constant 3.200000e+01 : f32
    %130 = vector.broadcast %cst_51 : f32 to vector<8x1xf32>
    %131 = arith.divf %129, %130 : vector<8x1xf32>
    %132 = vector.broadcast %131 : vector<8x1xf32> to vector<8x32xf32>
    %133 = arith.subf %125, %132 : vector<8x32xf32>
    %134 = arith.mulf %133, %133 : vector<8x32xf32>
    %cst_52 = arith.constant dense<0.000000e+00> : vector<8xf32>
    %135 = vector.multi_reduction <add>, %134, %cst_52 [1] : vector<8x32xf32> to vector<8xf32>
    %136 = vector.shape_cast %135 : vector<8xf32> to vector<8x1xf32>
    %cst_53 = arith.constant 3.200000e+01 : f32
    %137 = vector.broadcast %cst_53 : f32 to vector<8x1xf32>
    %138 = arith.divf %136, %137 : vector<8x1xf32>
    %139 = vector.broadcast %131 : vector<8x1xf32> to vector<8x32xf32>
    %140 = arith.subf %125, %139 : vector<8x32xf32>
    %cst_54 = arith.constant 9.99999974E-6 : f32
    %141 = vector.broadcast %cst_54 : f32 to vector<8x1xf32>
    %142 = arith.addf %138, %141 : vector<8x1xf32>
    %143 = math.rsqrt %142 : vector<8x1xf32>
    %144 = vector.broadcast %143 : vector<8x1xf32> to vector<8x32xf32>
    %145 = arith.mulf %140, %144 : vector<8x32xf32>
    %146 = vector.broadcast %126 : vector<1x32xf32> to vector<8x32xf32>
    %147 = arith.mulf %145, %146 : vector<8x32xf32>
    %148 = vector.broadcast %127 : vector<1x32xf32> to vector<8x32xf32>
    %149 = arith.addf %147, %148 : vector<8x32xf32>
    %c0_55 = arith.constant 0 : index
    %c0_56 = arith.constant 0 : index
    %150 = vector.load %arg11[%c0_55, %c0_56] : memref<32x32xbf16, #tpu.memory_space<vmem>>, vector<32x32xbf16>
    %151 = arith.truncf %149 : vector<8x32xf32> to vector<8x32xbf16>
    %cst_57 = arith.constant dense<0.000000e+00> : vector<8x32xf32>
    %152 = tpu.matmul %151, %150, %cst_57 {dimension_numbers = #tpu.dot_dimension_numbers<[1], [0], [0], [1], [0, 0, 1, 1], [], []>} : vector<8x32xbf16>, vector<32x32xbf16>, vector<8x32xf32> -> vector<8x32xf32>
    %c0_58 = arith.constant 0 : index
    %c0_59 = arith.constant 0 : index
    %153 = vector.load %arg12[%c0_58, %c0_59] : memref<1x32xf32, #tpu.memory_space<vmem>>, vector<1x32xf32>
    %154 = vector.broadcast %153 : vector<1x32xf32> to vector<8x32xf32>
    %155 = arith.addf %152, %154 : vector<8x32xf32>
    %c0_60 = arith.constant 0 : index
    %c0_61 = arith.constant 0 : index
    %156 = vector.load %arg13[%c0_60, %c0_61] : memref<32x64xbf16, #tpu.memory_space<vmem>>, vector<32x64xbf16>
    %157 = arith.truncf %3 : vector<8x32xf32> to vector<8x32xbf16>
    %cst_62 = arith.constant dense<0.000000e+00> : vector<8x64xf32>
    %158 = tpu.matmul %157, %156, %cst_62 {dimension_numbers = #tpu.dot_dimension_numbers<[1], [0], [0], [1], [0, 0, 1, 1], [], []>} : vector<8x32xbf16>, vector<32x64xbf16>, vector<8x64xf32> -> vector<8x64xf32>
    %c0_63 = arith.constant 0 : index
    %c0_64 = arith.constant 0 : index
    %159 = vector.load %arg14[%c0_63, %c0_64] : memref<1x64xf32, #tpu.memory_space<vmem>>, vector<1x64xf32>
    %160 = vector.broadcast %159 : vector<1x64xf32> to vector<8x64xf32>
    %161 = arith.addf %158, %160 : vector<8x64xf32>
    %162 = vector.extract_strided_slice %161 {offsets = [0, 0], sizes = [8, 32], strides = [1, 1]} : vector<8x64xf32> to vector<8x32xf32>
    %163 = vector.extract_strided_slice %161 {offsets = [0, 32], sizes = [8, 32], strides = [1, 1]} : vector<8x64xf32> to vector<8x32xf32>
    %164 = vector.extract_strided_slice %155 {offsets = [0, 0], sizes = [8, 8], strides = [1, 1]} : vector<8x32xf32> to vector<8x8xf32>
    %165 = arith.truncf %164 : vector<8x8xf32> to vector<8x8xbf16>
    %166 = vector.extract_strided_slice %162 {offsets = [0, 0], sizes = [8, 8], strides = [1, 1]} : vector<8x32xf32> to vector<8x8xf32>
    %167 = arith.truncf %166 : vector<8x8xf32> to vector<8x8xbf16>
    %168 = vector.extract_strided_slice %163 {offsets = [0, 0], sizes = [8, 8], strides = [1, 1]} : vector<8x32xf32> to vector<8x8xf32>
    %169 = arith.truncf %168 : vector<8x8xf32> to vector<8x8xbf16>
    %cst_65 = arith.constant dense<0.000000e+00> : vector<8x8xf32>
    %170 = tpu.matmul %165, %167, %cst_65 {dimension_numbers = #tpu.dot_dimension_numbers<[1], [1], [0], [0], [0, 0, 1, 0], [], []>} : vector<8x8xbf16>, vector<8x8xbf16>, vector<8x8xf32> -> vector<8x8xf32>
    %cst_66 = arith.constant 0.353553385 : f32
    %171 = vector.broadcast %cst_66 : f32 to vector<8x8xf32>
    %172 = arith.mulf %170, %171 : vector<8x8xf32>
    %cst_67 = arith.constant -1.000000e+10 : f32
    %173 = vector.shape_cast %11 : vector<1x8xi1> to vector<1x8xi1>
    %174 = vector.broadcast %173 : vector<1x8xi1> to vector<8x8xi1>
    %175 = vector.broadcast %cst_67 : f32 to vector<8x8xf32>
    %176 = arith.select %174, %172, %175 : vector<8x8xi1>, vector<8x8xf32>
    %cst_68 = arith.constant dense<0xFF800000> : vector<8xf32>
    %177 = vector.multi_reduction <maximumf>, %176, %cst_68 [1] : vector<8x8xf32> to vector<8xf32>
    %178 = vector.shape_cast %177 : vector<8xf32> to vector<8x1xf32>
    %179 = vector.broadcast %178 : vector<8x1xf32> to vector<8x8xf32>
    %180 = arith.subf %176, %179 : vector<8x8xf32>
    %181 = math.exp %180 : vector<8x8xf32>
    %cst_69 = arith.constant dense<0.000000e+00> : vector<8xf32>
    %182 = vector.multi_reduction <add>, %181, %cst_69 [1] : vector<8x8xf32> to vector<8xf32>
    %183 = vector.shape_cast %182 : vector<8xf32> to vector<8x1xf32>
    %184 = tpu.reciprocal %183 {approx = true} : vector<8x1xf32> -> vector<8x1xf32>
    %185 = vector.broadcast %184 : vector<8x1xf32> to vector<8x8xf32>
    %186 = arith.mulf %181, %185 : vector<8x8xf32>
    %c0_70 = arith.constant 0 : index
    %c0_71 = arith.constant 0 : index
    %c0_72 = arith.constant 0 : index
    %c0_73 = arith.constant 0 : index
    %187 = vector.load %arg26[%c0_70, %c0_71, %c0_72, %c0_73] : memref<1x4x8x8xf32, #tpu.memory_space<vmem>>, vector<1x1x8x8xf32>
    %188 = vector.shape_cast %187 : vector<1x1x8x8xf32> to vector<8x8xf32>
    %189 = vector.shape_cast %186 : vector<8x8xf32> to vector<1x1x8x8xf32>
    tpu.vector_store %arg26[%c0_70, %c0_71, %c0_72, %c0_73], %189 {strides = array<i32>} : memref<1x4x8x8xf32, #tpu.memory_space<vmem>>, vector<1x1x8x8xf32>,
    %190 = arith.truncf %186 : vector<8x8xf32> to vector<8x8xbf16>
    %cst_74 = arith.constant dense<0.000000e+00> : vector<8x8xf32>
    %191 = tpu.matmul %190, %169, %cst_74 {dimension_numbers = #tpu.dot_dimension_numbers<[1], [0], [0], [1], [0, 0, 1, 1], [], []>} : vector<8x8xbf16>, vector<8x8xbf16>, vector<8x8xf32> -> vector<8x8xf32>
    %192 = vector.extract_strided_slice %155 {offsets = [0, 8], sizes = [8, 8], strides = [1, 1]} : vector<8x32xf32> to vector<8x8xf32>
    %193 = arith.truncf %192 : vector<8x8xf32> to vector<8x8xbf16>
    %194 = vector.extract_strided_slice %162 {offsets = [0, 8], sizes = [8, 8], strides = [1, 1]} : vector<8x32xf32> to vector<8x8xf32>
    %195 = arith.truncf %194 : vector<8x8xf32> to vector<8x8xbf16>
    %196 = vector.extract_strided_slice %163 {offsets = [0, 8], sizes = [8, 8], strides = [1, 1]} : vector<8x32xf32> to vector<8x8xf32>
    %197 = arith.truncf %196 : vector<8x8xf32> to vector<8x8xbf16>
    %cst_75 = arith.constant dense<0.000000e+00> : vector<8x8xf32>
    %198 = tpu.matmul %193, %195, %cst_75 {dimension_numbers = #tpu.dot_dimension_numbers<[1], [1], [0], [0], [0, 0, 1, 0], [], []>} : vector<8x8xbf16>, vector<8x8xbf16>, vector<8x8xf32> -> vector<8x8xf32>
    %cst_76 = arith.constant 0.353553385 : f32
    %199 = vector.broadcast %cst_76 : f32 to vector<8x8xf32>
    %200 = arith.mulf %198, %199 : vector<8x8xf32>
    %cst_77 = arith.constant -1.000000e+10 : f32
    %201 = vector.shape_cast %11 : vector<1x8xi1> to vector<1x8xi1>
    %202 = vector.broadcast %201 : vector<1x8xi1> to vector<8x8xi1>
    %203 = vector.broadcast %cst_77 : f32 to vector<8x8xf32>
    %204 = arith.select %202, %200, %203 : vector<8x8xi1>, vector<8x8xf32>
    %cst_78 = arith.constant dense<0xFF800000> : vector<8xf32>
    %205 = vector.multi_reduction <maximumf>, %204, %cst_78 [1] : vector<8x8xf32> to vector<8xf32>
    %206 = vector.shape_cast %205 : vector<8xf32> to vector<8x1xf32>
    %207 = vector.broadcast %206 : vector<8x1xf32> to vector<8x8xf32>
    %208 = arith.subf %204, %207 : vector<8x8xf32>
    %209 = math.exp %208 : vector<8x8xf32>
    %cst_79 = arith.constant dense<0.000000e+00> : vector<8xf32>
    %210 = vector.multi_reduction <add>, %209, %cst_79 [1] : vector<8x8xf32> to vector<8xf32>
    %211 = vector.shape_cast %210 : vector<8xf32> to vector<8x1xf32>
    %212 = tpu.reciprocal %211 {approx = true} : vector<8x1xf32> -> vector<8x1xf32>
    %213 = vector.broadcast %212 : vector<8x1xf32> to vector<8x8xf32>
    %214 = arith.mulf %209, %213 : vector<8x8xf32>
    %c0_80 = arith.constant 0 : index
    %c1 = arith.constant 1 : index
    %c0_81 = arith.constant 0 : index
    %c0_82 = arith.constant 0 : index
    %215 = vector.load %arg26[%c0_80, %c1, %c0_81, %c0_82] : memref<1x4x8x8xf32, #tpu.memory_space<vmem>>, vector<1x1x8x8xf32>
    %216 = vector.shape_cast %215 : vector<1x1x8x8xf32> to vector<8x8xf32>
    %217 = vector.shape_cast %214 : vector<8x8xf32> to vector<1x1x8x8xf32>
    tpu.vector_store %arg26[%c0_80, %c1, %c0_81, %c0_82], %217 {strides = array<i32>} : memref<1x4x8x8xf32, #tpu.memory_space<vmem>>, vector<1x1x8x8xf32>,
    %218 = arith.truncf %214 : vector<8x8xf32> to vector<8x8xbf16>
    %cst_83 = arith.constant dense<0.000000e+00> : vector<8x8xf32>
    %219 = tpu.matmul %218, %197, %cst_83 {dimension_numbers = #tpu.dot_dimension_numbers<[1], [0], [0], [1], [0, 0, 1, 1], [], []>} : vector<8x8xbf16>, vector<8x8xbf16>, vector<8x8xf32> -> vector<8x8xf32>
    %220 = vector.extract_strided_slice %155 {offsets = [0, 16], sizes = [8, 8], strides = [1, 1]} : vector<8x32xf32> to vector<8x8xf32>
    %221 = arith.truncf %220 : vector<8x8xf32> to vector<8x8xbf16>
    %222 = vector.extract_strided_slice %162 {offsets = [0, 16], sizes = [8, 8], strides = [1, 1]} : vector<8x32xf32> to vector<8x8xf32>
    %223 = arith.truncf %222 : vector<8x8xf32> to vector<8x8xbf16>
    %224 = vector.extract_strided_slice %163 {offsets = [0, 16], sizes = [8, 8], strides = [1, 1]} : vector<8x32xf32> to vector<8x8xf32>
    %225 = arith.truncf %224 : vector<8x8xf32> to vector<8x8xbf16>
    %cst_84 = arith.constant dense<0.000000e+00> : vector<8x8xf32>
    %226 = tpu.matmul %221, %223, %cst_84 {dimension_numbers = #tpu.dot_dimension_numbers<[1], [1], [0], [0], [0, 0, 1, 0], [], []>} : vector<8x8xbf16>, vector<8x8xbf16>, vector<8x8xf32> -> vector<8x8xf32>
    %cst_85 = arith.constant 0.353553385 : f32
    %227 = vector.broadcast %cst_85 : f32 to vector<8x8xf32>
    %228 = arith.mulf %226, %227 : vector<8x8xf32>
    %cst_86 = arith.constant -1.000000e+10 : f32
    %229 = vector.shape_cast %11 : vector<1x8xi1> to vector<1x8xi1>
    %230 = vector.broadcast %229 : vector<1x8xi1> to vector<8x8xi1>
    %231 = vector.broadcast %cst_86 : f32 to vector<8x8xf32>
    %232 = arith.select %230, %228, %231 : vector<8x8xi1>, vector<8x8xf32>
    %cst_87 = arith.constant dense<0xFF800000> : vector<8xf32>
    %233 = vector.multi_reduction <maximumf>, %232, %cst_87 [1] : vector<8x8xf32> to vector<8xf32>
    %234 = vector.shape_cast %233 : vector<8xf32> to vector<8x1xf32>
    %235 = vector.broadcast %234 : vector<8x1xf32> to vector<8x8xf32>
    %236 = arith.subf %232, %235 : vector<8x8xf32>
    %237 = math.exp %236 : vector<8x8xf32>
    %cst_88 = arith.constant dense<0.000000e+00> : vector<8xf32>
    %238 = vector.multi_reduction <add>, %237, %cst_88 [1] : vector<8x8xf32> to vector<8xf32>
    %239 = vector.shape_cast %238 : vector<8xf32> to vector<8x1xf32>
    %240 = tpu.reciprocal %239 {approx = true} : vector<8x1xf32> -> vector<8x1xf32>
    %241 = vector.broadcast %240 : vector<8x1xf32> to vector<8x8xf32>
    %242 = arith.mulf %237, %241 : vector<8x8xf32>
    %c0_89 = arith.constant 0 : index
    %c2 = arith.constant 2 : index
    %c0_90 = arith.constant 0 : index
    %c0_91 = arith.constant 0 : index
    %243 = vector.load %arg26[%c0_89, %c2, %c0_90, %c0_91] : memref<1x4x8x8xf32, #tpu.memory_space<vmem>>, vector<1x1x8x8xf32>
    %244 = vector.shape_cast %243 : vector<1x1x8x8xf32> to vector<8x8xf32>
    %245 = vector.shape_cast %242 : vector<8x8xf32> to vector<1x1x8x8xf32>
    tpu.vector_store %arg26[%c0_89, %c2, %c0_90, %c0_91], %245 {strides = array<i32>} : memref<1x4x8x8xf32, #tpu.memory_space<vmem>>, vector<1x1x8x8xf32>,
    %246 = arith.truncf %242 : vector<8x8xf32> to vector<8x8xbf16>
    %cst_92 = arith.constant dense<0.000000e+00> : vector<8x8xf32>
    %247 = tpu.matmul %246, %225, %cst_92 {dimension_numbers = #tpu.dot_dimension_numbers<[1], [0], [0], [1], [0, 0, 1, 1], [], []>} : vector<8x8xbf16>, vector<8x8xbf16>, vector<8x8xf32> -> vector<8x8xf32>
    %248 = vector.extract_strided_slice %155 {offsets = [0, 24], sizes = [8, 8], strides = [1, 1]} : vector<8x32xf32> to vector<8x8xf32>
    %249 = arith.truncf %248 : vector<8x8xf32> to vector<8x8xbf16>
    %250 = vector.extract_strided_slice %162 {offsets = [0, 24], sizes = [8, 8], strides = [1, 1]} : vector<8x32xf32> to vector<8x8xf32>
    %251 = arith.truncf %250 : vector<8x8xf32> to vector<8x8xbf16>
    %252 = vector.extract_strided_slice %163 {offsets = [0, 24], sizes = [8, 8], strides = [1, 1]} : vector<8x32xf32> to vector<8x8xf32>
    %253 = arith.truncf %252 : vector<8x8xf32> to vector<8x8xbf16>
    %cst_93 = arith.constant dense<0.000000e+00> : vector<8x8xf32>
    %254 = tpu.matmul %249, %251, %cst_93 {dimension_numbers = #tpu.dot_dimension_numbers<[1], [1], [0], [0], [0, 0, 1, 0], [], []>} : vector<8x8xbf16>, vector<8x8xbf16>, vector<8x8xf32> -> vector<8x8xf32>
    %cst_94 = arith.constant 0.353553385 : f32
    %255 = vector.broadcast %cst_94 : f32 to vector<8x8xf32>
    %256 = arith.mulf %254, %255 : vector<8x8xf32>
    %cst_95 = arith.constant -1.000000e+10 : f32
    %257 = vector.shape_cast %11 : vector<1x8xi1> to vector<1x8xi1>
    %258 = vector.broadcast %257 : vector<1x8xi1> to vector<8x8xi1>
    %259 = vector.broadcast %cst_95 : f32 to vector<8x8xf32>
    %260 = arith.select %258, %256, %259 : vector<8x8xi1>, vector<8x8xf32>
    %cst_96 = arith.constant dense<0xFF800000> : vector<8xf32>
    %261 = vector.multi_reduction <maximumf>, %260, %cst_96 [1] : vector<8x8xf32> to vector<8xf32>
    %262 = vector.shape_cast %261 : vector<8xf32> to vector<8x1xf32>
    %263 = vector.broadcast %262 : vector<8x1xf32> to vector<8x8xf32>
    %264 = arith.subf %260, %263 : vector<8x8xf32>
    %265 = math.exp %264 : vector<8x8xf32>
    %cst_97 = arith.constant dense<0.000000e+00> : vector<8xf32>
    %266 = vector.multi_reduction <add>, %265, %cst_97 [1] : vector<8x8xf32> to vector<8xf32>
    %267 = vector.shape_cast %266 : vector<8xf32> to vector<8x1xf32>
    %268 = tpu.reciprocal %267 {approx = true} : vector<8x1xf32> -> vector<8x1xf32>
    %269 = vector.broadcast %268 : vector<8x1xf32> to vector<8x8xf32>
    %270 = arith.mulf %265, %269 : vector<8x8xf32>
    %c0_98 = arith.constant 0 : index
    %c3 = arith.constant 3 : index
    %c0_99 = arith.constant 0 : index
    %c0_100 = arith.constant 0 : index
    %271 = vector.load %arg26[%c0_98, %c3, %c0_99, %c0_100] : memref<1x4x8x8xf32, #tpu.memory_space<vmem>>, vector<1x1x8x8xf32>
    %272 = vector.shape_cast %271 : vector<1x1x8x8xf32> to vector<8x8xf32>
    %273 = vector.shape_cast %270 : vector<8x8xf32> to vector<1x1x8x8xf32>
    tpu.vector_store %arg26[%c0_98, %c3, %c0_99, %c0_100], %273 {strides = array<i32>} : memref<1x4x8x8xf32, #tpu.memory_space<vmem>>, vector<1x1x8x8xf32>,
    %274 = arith.truncf %270 : vector<8x8xf32> to vector<8x8xbf16>
    %cst_101 = arith.constant dense<0.000000e+00> : vector<8x8xf32>
    %275 = tpu.matmul %274, %253, %cst_101 {dimension_numbers = #tpu.dot_dimension_numbers<[1], [0], [0], [1], [0, 0, 1, 1], [], []>} : vector<8x8xbf16>, vector<8x8xbf16>, vector<8x8xf32> -> vector<8x8xf32>
    %276 = tpu.concatenate %191, %219, %247, %275 in 1 : vector<8x8xf32>, vector<8x8xf32>, vector<8x8xf32>, vector<8x8xf32> -> vector<8x32xf32>
    %c0_102 = arith.constant 0 : index
    %c0_103 = arith.constant 0 : index
    %277 = vector.load %arg15[%c0_102, %c0_103] : memref<32x32xbf16, #tpu.memory_space<vmem>>, vector<32x32xbf16>
    %278 = arith.truncf %276 : vector<8x32xf32> to vector<8x32xbf16>
    %cst_104 = arith.constant dense<0.000000e+00> : vector<8x32xf32>
    %279 = tpu.matmul %278, %277, %cst_104 {dimension_numbers = #tpu.dot_dimension_numbers<[1], [0], [0], [1], [0, 0, 1, 1], [], []>} : vector<8x32xbf16>, vector<32x32xbf16>, vector<8x32xf32> -> vector<8x32xf32>
    %c0_105 = arith.constant 0 : index
    %c0_106 = arith.constant 0 : index
    %280 = vector.load %arg16[%c0_105, %c0_106] : memref<1x32xf32, #tpu.memory_space<vmem>>, vector<1x32xf32>
    %281 = vector.broadcast %280 : vector<1x32xf32> to vector<8x32xf32>
    %282 = arith.addf %279, %281 : vector<8x32xf32>
    %283 = arith.addf %149, %282 : vector<8x32xf32>
    %c0_107 = arith.constant 0 : index
    %c0_108 = arith.constant 0 : index
    %284 = vector.load %arg17[%c0_107, %c0_108] : memref<1x32xf32, #tpu.memory_space<vmem>>, vector<1x32xf32>
    %c0_109 = arith.constant 0 : index
    %c0_110 = arith.constant 0 : index
    %285 = vector.load %arg18[%c0_109, %c0_110] : memref<1x32xf32, #tpu.memory_space<vmem>>, vector<1x32xf32>
    %cst_111 = arith.constant dense<0.000000e+00> : vector<8xf32>
    %286 = vector.multi_reduction <add>, %283, %cst_111 [1] : vector<8x32xf32> to vector<8xf32>
    %287 = vector.shape_cast %286 : vector<8xf32> to vector<8x1xf32>
    %cst_112 = arith.constant 3.200000e+01 : f32
    %288 = vector.broadcast %cst_112 : f32 to vector<8x1xf32>
    %289 = arith.divf %287, %288 : vector<8x1xf32>
    %290 = vector.broadcast %289 : vector<8x1xf32> to vector<8x32xf32>
    %291 = arith.subf %283, %290 : vector<8x32xf32>
    %292 = arith.mulf %291, %291 : vector<8x32xf32>
    %cst_113 = arith.constant dense<0.000000e+00> : vector<8xf32>
    %293 = vector.multi_reduction <add>, %292, %cst_113 [1] : vector<8x32xf32> to vector<8xf32>
    %294 = vector.shape_cast %293 : vector<8xf32> to vector<8x1xf32>
    %cst_114 = arith.constant 3.200000e+01 : f32
    %295 = vector.broadcast %cst_114 : f32 to vector<8x1xf32>
    %296 = arith.divf %294, %295 : vector<8x1xf32>
    %297 = vector.broadcast %289 : vector<8x1xf32> to vector<8x32xf32>
    %298 = arith.subf %283, %297 : vector<8x32xf32>
    %cst_115 = arith.constant 9.99999974E-6 : f32
    %299 = vector.broadcast %cst_115 : f32 to vector<8x1xf32>
    %300 = arith.addf %296, %299 : vector<8x1xf32>
    %301 = math.rsqrt %300 : vector<8x1xf32>
    %302 = vector.broadcast %301 : vector<8x1xf32> to vector<8x32xf32>
    %303 = arith.mulf %298, %302 : vector<8x32xf32>
    %304 = vector.broadcast %284 : vector<1x32xf32> to vector<8x32xf32>
    %305 = arith.mulf %303, %304 : vector<8x32xf32>
    %306 = vector.broadcast %285 : vector<1x32xf32> to vector<8x32xf32>
    %307 = arith.addf %305, %306 : vector<8x32xf32>
    %c0_116 = arith.constant 0 : index
    %c0_117 = arith.constant 0 : index
    %308 = vector.load %arg19[%c0_116, %c0_117] : memref<32x64xbf16, #tpu.memory_space<vmem>>, vector<32x64xbf16>
    %309 = arith.truncf %307 : vector<8x32xf32> to vector<8x32xbf16>
    %cst_118 = arith.constant dense<0.000000e+00> : vector<8x64xf32>
    %310 = tpu.matmul %309, %308, %cst_118 {dimension_numbers = #tpu.dot_dimension_numbers<[1], [0], [0], [1], [0, 0, 1, 1], [], []>} : vector<8x32xbf16>, vector<32x64xbf16>, vector<8x64xf32> -> vector<8x64xf32>
    %c0_119 = arith.constant 0 : index
    %c0_120 = arith.constant 0 : index
    %311 = vector.load %arg20[%c0_119, %c0_120] : memref<1x64xf32, #tpu.memory_space<vmem>>, vector<1x64xf32>
    %312 = vector.broadcast %311 : vector<1x64xf32> to vector<8x64xf32>
    %313 = arith.addf %310, %312 : vector<8x64xf32>
    %cst_121 = arith.constant 0.000000e+00 : f32
    %314 = vector.broadcast %cst_121 : f32 to vector<8x64xf32>
    %315 = arith.maximumf %313, %314 : vector<8x64xf32>
    %c0_122 = arith.constant 0 : index
    %c0_123 = arith.constant 0 : index
    %316 = vector.load %arg21[%c0_122, %c0_123] : memref<64x32xbf16, #tpu.memory_space<vmem>>, vector<64x32xbf16>
    %317 = arith.truncf %315 : vector<8x64xf32> to vector<8x64xbf16>
    %cst_124 = arith.constant dense<0.000000e+00> : vector<8x32xf32>
    %318 = tpu.matmul %317, %316, %cst_124 {dimension_numbers = #tpu.dot_dimension_numbers<[1], [0], [0], [1], [0, 0, 1, 1], [], []>} : vector<8x64xbf16>, vector<64x32xbf16>, vector<8x32xf32> -> vector<8x32xf32>
    %c0_125 = arith.constant 0 : index
    %c0_126 = arith.constant 0 : index
    %319 = vector.load %arg22[%c0_125, %c0_126] : memref<1x32xf32, #tpu.memory_space<vmem>>, vector<1x32xf32>
    %320 = vector.broadcast %319 : vector<1x32xf32> to vector<8x32xf32>
    %321 = arith.addf %318, %320 : vector<8x32xf32>
    %322 = arith.addf %307, %321 : vector<8x32xf32>
    %c0_127 = arith.constant 0 : index
    %c0_128 = arith.constant 0 : index
    %323 = vector.load %arg23[%c0_127, %c0_128] : memref<1x32xf32, #tpu.memory_space<vmem>>, vector<1x32xf32>
    %c0_129 = arith.constant 0 : index
    %c0_130 = arith.constant 0 : index
    %324 = vector.load %arg24[%c0_129, %c0_130] : memref<1x32xf32, #tpu.memory_space<vmem>>, vector<1x32xf32>
    %cst_131 = arith.constant dense<0.000000e+00> : vector<8xf32>
    %325 = vector.multi_reduction <add>, %322, %cst_131 [1] : vector<8x32xf32> to vector<8xf32>
    %326 = vector.shape_cast %325 : vector<8xf32> to vector<8x1xf32>
    %cst_132 = arith.constant 3.200000e+01 : f32
    %327 = vector.broadcast %cst_132 : f32 to vector<8x1xf32>
    %328 = arith.divf %326, %327 : vector<8x1xf32>
    %329 = vector.broadcast %328 : vector<8x1xf32> to vector<8x32xf32>
    %330 = arith.subf %322, %329 : vector<8x32xf32>
    %331 = arith.mulf %330, %330 : vector<8x32xf32>
    %cst_133 = arith.constant dense<0.000000e+00> : vector<8xf32>
    %332 = vector.multi_reduction <add>, %331, %cst_133 [1] : vector<8x32xf32> to vector<8xf32>
    %333 = vector.shape_cast %332 : vector<8xf32> to vector<8x1xf32>
    %cst_134 = arith.constant 3.200000e+01 : f32
    %334 = vector.broadcast %cst_134 : f32 to vector<8x1xf32>
    %335 = arith.divf %333, %334 : vector<8x1xf32>
    %336 = vector.broadcast %328 : vector<8x1xf32> to vector<8x32xf32>
    %337 = arith.subf %322, %336 : vector<8x32xf32>
    %cst_135 = arith.constant 9.99999974E-6 : f32
    %338 = vector.broadcast %cst_135 : f32 to vector<8x1xf32>
    %339 = arith.addf %335, %338 : vector<8x1xf32>
    %340 = math.rsqrt %339 : vector<8x1xf32>
    %341 = vector.broadcast %340 : vector<8x1xf32> to vector<8x32xf32>
    %342 = arith.mulf %337, %341 : vector<8x32xf32>
    %343 = vector.broadcast %323 : vector<1x32xf32> to vector<8x32xf32>
    %344 = arith.mulf %342, %343 : vector<8x32xf32>
    %345 = vector.broadcast %324 : vector<1x32xf32> to vector<8x32xf32>
    %346 = arith.addf %344, %345 : vector<8x32xf32>
    %c0_136 = arith.constant 0 : index
    %c0_137 = arith.constant 0 : index
    %c0_138 = arith.constant 0 : index
    %347 = vector.load %arg25[%c0_136, %c0_137, %c0_138] : memref<1x8x32xf32, #tpu.memory_space<vmem>>, vector<1x8x32xf32>
    %348 = vector.shape_cast %347 : vector<1x8x32xf32> to vector<8x32xf32>
    %349 = vector.shape_cast %346 : vector<8x32xf32> to vector<1x8x32xf32>
    tpu.vector_store %arg25[%c0_136, %c0_137, %c0_138], %349 {strides = array<i32>} : memref<1x8x32xf32, #tpu.memory_space<vmem>>, vector<1x8x32xf32>,
    return
  }
  func.func @transform_0(%arg0: i32) -> (i32, i32, i32) {
    %c0_i32 = arith.constant 0 : i32
    %c0_i32_0 = arith.constant 0 : i32
    %c0_i32_1 = arith.constant 0 : i32
    return %arg0, %c0_i32, %c0_i32_0 : i32, i32, i32
  }
  func.func @transform_1(%arg0: i32) -> (i32, i32, i32) {
    %c0_i32 = arith.constant 0 : i32
    %c0_i32_0 = arith.constant 0 : i32
    %c0_i32_1 = arith.constant 0 : i32
    return %arg0, %c0_i32, %c0_i32_0 : i32, i32, i32
  }
  func.func @transform_2(%arg0: i32) -> (i32, i32, i32) {
    %c0_i32 = arith.constant 0 : i32
    %c0_i32_0 = arith.constant 0 : i32
    %c0_i32_1 = arith.constant 0 : i32
    return %arg0, %c0_i32, %c0_i32_0 : i32, i32, i32
  }
  func.func @transform_3(%arg0: i32) -> (i32, i32, i32) {
    %c0_i32 = arith.constant 0 : i32
    %c0_i32_0 = arith.constant 0 : i32
    %c0_i32_1 = arith.constant 0 : i32
    return %arg0, %c0_i32, %c0_i32_0 : i32, i32, i32
  }
  func.func @transform_4(%arg0: i32) -> (i32, i32) {
    %c0_i32 = arith.constant 0 : i32
    %c0_i32_0 = arith.constant 0 : i32
    %c0_i32_1 = arith.constant 0 : i32
    return %c0_i32, %c0_i32_0 : i32, i32
  }
  func.func @transform_5(%arg0: i32) -> (i32, i32) {
    %c0_i32 = arith.constant 0 : i32
    %c0_i32_0 = arith.constant 0 : i32
    %c0_i32_1 = arith.constant 0 : i32
    return %c0_i32, %c0_i32_0 : i32, i32
  }
  func.func @transform_6(%arg0: i32) -> (i32, i32) {
    %c0_i32 = arith.constant 0 : i32
    %c0_i32_0 = arith.constant 0 : i32
    %c0_i32_1 = arith.constant 0 : i32
    return %c0_i32, %c0_i32_0 : i32, i32
  }
  func.func @transform_7(%arg0: i32) -> (i32, i32) {
    %c0_i32 = arith.constant 0 : i32
    %c0_i32_0 = arith.constant 0 : i32
    %c0_i32_1 = arith.constant 0 : i32
    return %c0_i32, %c0_i32_0 : i32, i32
  }
  func.func @transform_8(%arg0: i32) -> (i32, i32) {
    %c0_i32 = arith.constant 0 : i32
    %c0_i32_0 = arith.constant 0 : i32
    %c0_i32_1 = arith.constant 0 : i32
    return %c0_i32, %c0_i32_0 : i32, i32
  }
  func.func @transform_9(%arg0: i32) -> (i32, i32) {
    %c0_i32 = arith.constant 0 : i32
    %c0_i32_0 = arith.constant 0 : i32
    %c0_i32_1 = arith.constant 0 : i32
    return %c0_i32, %c0_i32_0 : i32, i32
  }
  func.func @transform_10(%arg0: i32) -> (i32, i32) {
    %c0_i32 = arith.constant 0 : i32
    %c0_i32_0 = arith.constant 0 : i32
    %c0_i32_1 = arith.constant 0 : i32
    return %c0_i32, %c0_i32_0 : i32, i32
  }
  func.func @transform_11(%arg0: i32) -> (i32, i32) {
    %c0_i32 = arith.constant 0 : i32
    %c0_i32_0 = arith.constant 0 : i32
    %c0_i32_1 = arith.constant 0 : i32
    return %c0_i32, %c0_i32_0 : i32, i32
  }
  func.func @transform_12(%arg0: i32) -> (i32, i32) {
    %c0_i32 = arith.constant 0 : i32
    %c0_i32_0 = arith.constant 0 : i32
    %c0_i32_1 = arith.constant 0 : i32
    return %c0_i32, %c0_i32_0 : i32, i32
  }
  func.func @transform_13(%arg0: i32) -> (i32, i32) {
    %c0_i32 = arith.constant 0 : i32
    %c0_i32_0 = arith.constant 0 : i32
    %c0_i32_1 = arith.constant 0 : i32
    return %c0_i32, %c0_i32_0 : i32, i32
  }
  func.func @transform_14(%arg0: i32) -> (i32, i32) {
    %c0_i32 = arith.constant 0 : i32
    %c0_i32_0 = arith.constant 0 : i32
    %c0_i32_1 = arith.constant 0 : i32
    return %c0_i32, %c0_i32_0 : i32, i32
  }
  func.func @transform_15(%arg0: i32) -> (i32, i32) {
    %c0_i32 = arith.constant 0 : i32
    %c0_i32_0 = arith.constant 0 : i32
    %c0_i32_1 = arith.constant 0 : i32
    return %c0_i32, %c0_i32_0 : i32, i32
  }
  func.func @transform_16(%arg0: i32) -> (i32, i32) {
    %c0_i32 = arith.constant 0 : i32
    %c0_i32_0 = arith.constant 0 : i32
    %c0_i32_1 = arith.constant 0 : i32
    return %c0_i32, %c0_i32_0 : i32, i32
  }
  func.func @transform_17(%arg0: i32) -> (i32, i32) {
    %c0_i32 = arith.constant 0 : i32
    %c0_i32_0 = arith.constant 0 : i32
    %c0_i32_1 = arith.constant 0 : i32
    return %c0_i32, %c0_i32_0 : i32, i32
  }
  func.func @transform_18(%arg0: i32) -> (i32, i32) {
    %c0_i32 = arith.constant 0 : i32
    %c0_i32_0 = arith.constant 0 : i32
    %c0_i32_1 = arith.constant 0 : i32
    return %c0_i32, %c0_i32_0 : i32, i32
  }
  func.func @transform_19(%arg0: i32) -> (i32, i32) {
    %c0_i32 = arith.constant 0 : i32
    %c0_i32_0 = arith.constant 0 : i32
    %c0_i32_1 = arith.constant 0 : i32
    return %c0_i32, %c0_i32_0 : i32, i32
  }
  func.func @transform_20(%arg0: i32) -> (i32, i32) {
    %c0_i32 = arith.constant 0 : i32
    %c0_i32_0 = arith.constant 0 : i32
    %c0_i32_1 = arith.constant 0 : i32
    return %c0_i32, %c0_i32_0 : i32, i32
  }
  func.func @transform_21(%arg0: i32) -> (i32, i32) {
    %c0_i32 = arith.constant 0 : i32
    %c0_i32_0 = arith.constant 0 : i32
    %c0_i32_1 = arith.constant 0 : i32
    return %c0_i32, %c0_i32_0 : i32, i32
  }
  func.func @transform_22(%arg0: i32) -> (i32, i32) {
    %c0_i32 = arith.constant 0 : i32
    %c0_i32_0 = arith.constant 0 : i32
    %c0_i32_1 = arith.constant 0 : i32
    return %c0_i32, %c0_i32_0 : i32, i32
  }
  func.func @transform_23(%arg0: i32) -> (i32, i32) {
    %c0_i32 = arith.constant 0 : i32
    %c0_i32_0 = arith.constant 0 : i32
    %c0_i32_1 = arith.constant 0 : i32
    return %c0_i32, %c0_i32_0 : i32, i32
  }
  func.func @transform_24(%arg0: i32) -> (i32, i32, i32) {
    %c0_i32 = arith.constant 0 : i32
    %c0_i32_0 = arith.constant 0 : i32
    %c0_i32_1 = arith.constant 0 : i32
    return %arg0, %c0_i32, %c0_i32_0 : i32, i32, i32
  }
  func.func @transform_25(%arg0: i32) -> (i32, i32, i32, i32) {
    %c0_i32 = arith.constant 0 : i32
    %c0_i32_0 = arith.constant 0 : i32
    %c0_i32_1 = arith.constant 0 : i32
    %c0_i32_2 = arith.constant 0 : i32
    return %arg0, %c0_i32, %c0_i32_0, %c0_i32_1 : i32, i32, i32, i32
  }
}

module attributes {stable_mosaic.version = 11 : i64} {
  func.func @_linear_kernel(%arg0: i32, %arg1: memref<16x32xf32, #tpu.memory_space<vmem>>, %arg2: memref<32x128xbf16, #tpu.memory_space<vmem>>, %arg3: memref<1x128xf32, #tpu.memory_space<vmem>>, %arg4: memref<16x128xf32, #tpu.memory_space<vmem>>) attributes {dimension_semantics = [#tpu.dimension_semantics<arbitrary>], iteration_bounds = array<i64: 1>, scalar_prefetch = 0 : i64, scratch_operands = 0 : i64, tpu.core_type = #tpu.core_type<tc>, window_params = [{pipeline_mode = #tpu.pipeline_mode<synchronous>, transform_indices = @transform_0, window_bounds = array<i64: 16, 32>}, {pipeline_mode = #tpu.pipeline_mode<synchronous>, transform_indices = @transform_1, window_bounds = array<i64: 32, 128>}, {pipeline_mode = #tpu.pipeline_mode<synchronous>, transform_indices = @transform_2, window_bounds = array<i64: 1, 128>}, {pipeline_mode = #tpu.pipeline_mode<synchronous>, transform_indices = @transform_3, window_bounds = array<i64: 16, 128>}]} {
    %c0 = arith.constant 0 : index
    %c0_0 = arith.constant 0 : index
    %0 = vector.load %arg1[%c0, %c0_0] : memref<16x32xf32, #tpu.memory_space<vmem>>, vector<16x32xf32>
    %c0_1 = arith.constant 0 : index
    %c0_2 = arith.constant 0 : index
    %1 = vector.load %arg2[%c0_1, %c0_2] : memref<32x128xbf16, #tpu.memory_space<vmem>>, vector<32x128xbf16>
    %2 = arith.truncf %0 : vector<16x32xf32> to vector<16x32xbf16>
    %cst = arith.constant dense<0.000000e+00> : vector<16x128xf32>
    %3 = tpu.matmul %2, %1, %cst {dimension_numbers = #tpu.dot_dimension_numbers<[1], [0], [0], [1], [0, 0, 1, 1], [], []>} : vector<16x32xbf16>, vector<32x128xbf16>, vector<16x128xf32> -> vector<16x128xf32>
    %c0_3 = arith.constant 0 : index
    %c0_4 = arith.constant 0 : index
    %4 = vector.load %arg3[%c0_3, %c0_4] : memref<1x128xf32, #tpu.memory_space<vmem>>, vector<1x128xf32>
    %5 = vector.broadcast %4 : vector<1x128xf32> to vector<16x128xf32>
    %6 = arith.addf %3, %5 : vector<16x128xf32>
    %c0_5 = arith.constant 0 : index
    %c0_6 = arith.constant 0 : index
    %7 = vector.load %arg4[%c0_5, %c0_6] : memref<16x128xf32, #tpu.memory_space<vmem>>, vector<16x128xf32>
    tpu.vector_store %arg4[%c0_5, %c0_6], %6 {strides = array<i32>} : memref<16x128xf32, #tpu.memory_space<vmem>>, vector<16x128xf32>,
    return
  }
  func.func @transform_0(%arg0: i32) -> (i32, i32) {
    %c0_i32 = arith.constant 0 : i32
    %c0_i32_0 = arith.constant 0 : i32
    %c0_i32_1 = arith.constant 0 : i32
    return %c0_i32, %c0_i32_0 : i32, i32
  }
  func.func @transform_1(%arg0: i32) -> (i32, i32) {
    %c0_i32 = arith.constant 0 : i32
    %c0_i32_0 = arith.constant 0 : i32
    %c0_i32_1 = arith.constant 0 : i32
    return %c0_i32, %c0_i32_0 : i32, i32
  }
  func.func @transform_2(%arg0: i32) -> (i32, i32) {
    %c0_i32 = arith.constant 0 : i32
    %c0_i32_0 = arith.constant 0 : i32
    %c0_i32_1 = arith.constant 0 : i32
    return %c0_i32, %c0_i32_0 : i32, i32
  }
  func.func @transform_3(%arg0: i32) -> (i32, i32) {
    %c0_i32 = arith.constant 0 : i32
    %c0_i32_0 = arith.constant 0 : i32
    %c0_i32_1 = arith.constant 0 : i32
    return %c0_i32, %c0_i32_0 : i32, i32
  }
}

</mosaic_0001>

<llo_original>
// kernel: _lambda_.9
$region0: #{_lambda_.9}
  #allocation0 [shape = 'u32[]', space=smem, size = 0x4, offset = 0x4, fixed_abs, tag = 'smem constant byte address 0x4 - core index']
  #allocation1 [shape = 'u32[144,128]{1,0:T(1,128)}', space=vmem, size = 0x12000, scoped, tag = 'internal scratch']
  %s0 = inlined_call_operand.vmem [shape: f32[16,32], index: 0, kind: input, shape index: {}]
  %s1 = inlined_call_operand.vmem [shape: bf16[32,128], index: 1, kind: input, shape index: {}]
  %s2 = inlined_call_operand.vmem [shape: f32[1,128], index: 2, kind: input, shape index: {}]
  %s3 = inlined_call_operand.vmem [shape: f32[16,128], index: 3, kind: output, shape index: {}]
  %s4 = sld [smem:[#allocation0]]
  $region22: #{_lambda_.9} parent=0
    _
  %s6 = ssub.s32 1, %s4
  %s7 = scalar_select 0, %s6, %s4
  // Predicated region
  $region2: #{_lambda_.9} parent=0 // pred_check
    _
  $region3: #{_lambda_.9} parent=0 // pred_check_branch
    %9 = sbr.rel (0) target = $region5
  $region4: #{_lambda_.9} parent=0 // pred_region
    _
  $region5: #{_lambda_.9} parent=0 // pred_fallthru
    _
  // Predicated region
  $region6: #{_lambda_.9} parent=0 // pred_check
    _
  $region7: #{_lambda_.9} parent=0 // pred_check_branch
    %11 = sbr.rel (0) target = $region9
  $region8: #{_lambda_.9} parent=0 // pred_region
    _
  $region9: #{_lambda_.9} parent=0 // pred_fallthru
    _
  // Predicated region
  $region10: #{_lambda_.9} parent=0 // pred_check
    _
  $region11: #{_lambda_.9} parent=0 // pred_check_branch
    %13 = sbr.rel (0) target = $region13
  $region12: #{_lambda_.9} parent=0 // pred_region
    _
  $region13: #{_lambda_.9} parent=0 // pred_fallthru
    _
  %v15 = vld [vmem:[%s0] sm:$0xff]
  %v16 = vld [vmem:[%s0 + $0x8] sm:$0xff]
  %v17 = vld [vmem:[%s1] sm:$0xf]
  %v18 = vld [vmem:[%s1 + $0x4] sm:$0xf]
  %v19 = vld [vmem:[%s1 + $0x8] sm:$0xf]
  %v20 = vld [vmem:[%s1 + $0xc] sm:$0xf]
  %v21 = vpack.c.bf16 %v16, %v15
  %v22 = vld [vmem:[%s2] sm:$0x1]
  %v24 = vlaneseq
  %v25 = vshrl.u32 %v24, 7
  %v26 = vsub.s32 0, %v25
  %v27 = vrot.slane %v22, %v26
  %v33 = vunpack.c.l.b16 %v17
  %v34 = vunpack.c.l.b16 %v18
  %v35 = vunpack.c.l.b16 %v19
  %v36 = vunpack.c.l.b16 %v20
  %v37 = vpack.c.b16 %v34, %v33
  %v38 = vpack.c.b16 %v36, %v35
  %vm41 = vcmask 261120
  %v43 = vsel %vm41, %v21, 0
  %45 = vmatprep.subr.bf16.mxu0 0
  %46 = vmatpush1.bf16.msra.mxu0 %v37
  %47 = vmatprep.subr.bf16.mxu0 0
  %48 = vmatpush1.bf16.msra.mxu0 %v38
  %49 = vmatprep.subr.bf16.mxu0 0
  %50 = vmatpush1.bf16.msra.mxu0 0
  %51 = vmatprep.subr.bf16.mxu0 0
  %52 = vmatpush1.bf16.msra.mxu0 0
  %53 = vmatprep.subr.bf16.mxu0 0
  %54 = vmatpush1.bf16.msra.mxu0 0
  %55 = vmatprep.subr.bf16.mxu0 0
  %56 = vmatpush1.bf16.msra.mxu0 0
  %57 = vmatprep.subr.bf16.mxu0 0
  %58 = vmatpush1.bf16.msra.mxu0 0
  %59 = vmatprep.subr.bf16.mxu0 0
  %60 = vmatpush1.bf16.msra.mxu0 0
  %61 = vmatprep.subr.bf16.mxu0 0
  %62 = vmatpush1.bf16.msra.mxu0 0
  %63 = vmatprep.subr.bf16.mxu0 0
  %64 = vmatpush1.bf16.msra.mxu0 0
  %65 = vmatprep.subr.bf16.mxu0 0
  %66 = vmatpush1.bf16.msra.mxu0 0
  %67 = vmatprep.subr.bf16.mxu0 0
  %68 = vmatpush1.bf16.msra.mxu0 0
  %69 = vmatprep.subr.bf16.mxu0 0
  %70 = vmatpush1.bf16.msra.mxu0 0
  %71 = vmatprep.subr.bf16.mxu0 0
  %72 = vmatpush1.bf16.msra.mxu0 0
  %73 = vmatprep.subr.bf16.mxu0 0
  %74 = vmatpush1.bf16.msra.mxu0 0
  %75 = vmatprep.subr.bf16.mxu0 0
  %76 = vmatpush1.bf16.msra.mxu0 0
  %77 = vmatprep.mubr.bf16.mxu0 0
  %78 = vmatmul.mubr.bf16.gmra.mrb[0].mxu0 %v43
  %v79 = vpop.f32.mrb[0].mxu0
  %v80 = vadd.f32 %v27, %v79
  %v81 = vpop.f32.mrb[0].mxu0
  %v82 = vpop.f32.mrb[0].mxu0
  %v83 = vadd.f32 %v27, %v82
  %v84 = vpop.f32.mrb[0].mxu0
  %85 = vdwg.mxu0
  %86 = vst [vmem:[%s3] sm:$0xff] %v80
  %87 = vst [vmem:[%s3 + $0x8] sm:$0xff] %v83
  // Predicated region
  $region14: #{_lambda_.9} parent=0 // pred_check
    _
  $region15: #{_lambda_.9} parent=0 // pred_check_branch
    %89 = sbr.rel (0) target = $region17
  $region16: #{_lambda_.9} parent=0 // pred_region
    _
  $region17: #{_lambda_.9} parent=0 // pred_fallthru
    _
  // Predicated region
  $region18: #{_lambda_.9} parent=0 // pred_check
    _
  $region19: #{_lambda_.9} parent=0 // pred_check_branch
    %91 = sbr.rel (0) target = $region21
  $region20: #{_lambda_.9} parent=0 // pred_region
    _
  $region21: #{_lambda_.9} parent=0 // pred_fallthru
    _

// kernel: _lambda_.5
$region0: #{_lambda_.5}
  #allocation0 [shape = 'u32[]', space=smem, size = 0x4, offset = 0x4, fixed_abs, tag = 'smem constant byte address 0x4 - core index']
  #allocation1 [shape = 'u32[144,128]{1,0:T(1,128)}', space=vmem, size = 0x12000, scoped, tag = 'internal scratch']
  %s0 = inlined_call_operand.vmem [shape: f32[2,8,32], index: 0, kind: input, shape index: {}]
  %s1 = inlined_call_operand.vmem [shape: f32[2,1,8], index: 1, kind: input, shape index: {}]
  %s2 = inlined_call_operand.vmem [shape: bf16[32,96], index: 2, kind: input, shape index: {}]
  %s3 = inlined_call_operand.vmem [shape: f32[1,96], index: 3, kind: input, shape index: {}]
  %s4 = inlined_call_operand.vmem [shape: bf16[32,32], index: 4, kind: input, shape index: {}]
  %s5 = inlined_call_operand.vmem [shape: f32[1,32], index: 5, kind: input, shape index: {}]
  %s6 = inlined_call_operand.vmem [shape: f32[1,32], index: 6, kind: input, shape index: {}]
  %s7 = inlined_call_operand.vmem [shape: f32[1,32], index: 7, kind: input, shape index: {}]
  %s8 = inlined_call_operand.vmem [shape: bf16[32,64], index: 8, kind: input, shape index: {}]
  %s9 = inlined_call_operand.vmem [shape: f32[1,64], index: 9, kind: input, shape index: {}]
  %s10 = inlined_call_operand.vmem [shape: bf16[64,32], index: 10, kind: input, shape index: {}]
  %s11 = inlined_call_operand.vmem [shape: f32[1,32], index: 11, kind: input, shape index: {}]
  %s12 = inlined_call_operand.vmem [shape: f32[1,32], index: 12, kind: input, shape index: {}]
  %s13 = inlined_call_operand.vmem [shape: f32[1,32], index: 13, kind: input, shape index: {}]
  %s14 = inlined_call_operand.vmem [shape: f32[2,8,32], index: 14, kind: output, shape index: {}]
  %s15 = sld [smem:[#allocation0]]
  $region89: #{_lambda_.5} parent=0
    _
  %s17 = ssub.s32 1, %s15
  %s18 = scalar_select 0, %s17, %s15
  loop: start=0, step=1, limit=4
  $region2: #{_lambda_.5} parent=0 // loop_pre_header
    _
  $region3: #{_lambda_.5} parent=0 // loop_header
    %s20 = sphi 0, %s24
    %p21 = scmp.ge.s32.totalorder %s20, 4
    %s30 = sphi 0, %s32
    %s33 = sphi 0, %s30
    %s34 = sphi 0, %s33
    %s50 = sphi 0, %s34
    %s56 = sphi 0, %s58
    %s59 = sphi 0, %s56
    %s60 = sphi 0, %s59
    %s76 = sphi 0, %s60
    %s80 = sphi 0, %s80
    %s82 = sphi 0, %s80
    %s83 = sphi 0, %s82
    %s97 = sphi 0, %s83
    %s101 = sphi 0, %s101
    %s103 = sphi 0, %s101
    %s104 = sphi 0, %s103
    %s118 = sphi 0, %s104
    %s122 = sphi 0, %s122
    %s124 = sphi 0, %s122
    %s125 = sphi 0, %s124
    %s139 = sphi 0, %s125
    %s143 = sphi 0, %s143
    %s145 = sphi 0, %s143
    %s146 = sphi 0, %s145
    %s160 = sphi 0, %s146
    %s164 = sphi 0, %s164
    %s166 = sphi 0, %s164
    %s167 = sphi 0, %s166
    %s181 = sphi 0, %s167
    %s185 = sphi 0, %s185
    %s187 = sphi 0, %s185
    %s188 = sphi 0, %s187
    %s202 = sphi 0, %s188
    %s206 = sphi 0, %s206
    %s208 = sphi 0, %s206
    %s209 = sphi 0, %s208
    %s223 = sphi 0, %s209
    %s227 = sphi 0, %s227
    %s229 = sphi 0, %s227
    %s230 = sphi 0, %s229
    %s244 = sphi 0, %s230
    %s248 = sphi 0, %s248
    %s250 = sphi 0, %s248
    %s251 = sphi 0, %s250
    %s265 = sphi 0, %s251
    %s269 = sphi 0, %s269
    %s271 = sphi 0, %s269
    %s272 = sphi 0, %s271
    %s286 = sphi 0, %s272
    %s290 = sphi 0, %s290
    %s292 = sphi 0, %s290
    %s293 = sphi 0, %s292
    %s307 = sphi 0, %s293
    %s311 = sphi 0, %s311
    %s313 = sphi 0, %s311
    %s314 = sphi 0, %s313
    %s328 = sphi 0, %s314
    %s334 = sphi 0, %s336
    %s337 = sphi 0, %s334
    %s338 = sphi 0, %s337
    %s354 = sphi 0, %s338
  $region4: #{_lambda_.5} parent=0 // loop_header_branch
    %23 = sbr.rel (%p21) target = $region8
  $region5: #{_lambda_.5} parent=0 // loop_body
    %s25 = ssub.s32 %s20, 1
    %s26 = ssub.s32 %s20, 2
    %s27 = sadd.s32 %s20, 1
    %s28 = ssub.s32 %s20, %s27
    %p29 = scmp.eq.s32.totalorder %s28, 0
    %s31 = sadd.s32 %s30, 1
    %s32 = scalar_select %p29, %s30, %s31
    %p35 = pneg %p29
    %p36 = scmp.eq.s32.totalorder %s20, 1
    %p37 = por %p35, %p36
    %p38 = scmp.ne.s32.totalorder %s30, %s33
    %p39 = scmp.eq.s32.totalorder %s20, 0
    %p40 = por %p38, %p39
    %p41 = scmp.ne.s32.totalorder %s30, %s33
    %p42 = scmp.eq.s32.totalorder %s25, 1
    %p43 = por %p41, %p42
    %p44 = scmp.ne.s32.totalorder %s33, %s34
    %p45 = scmp.eq.s32.totalorder %s25, 0
    %p46 = por %p44, %p45
    %p47 = scmp.ne.s32.totalorder %s33, %s34
    %p48 = scmp.eq.s32.totalorder %s26, 1
    %p49 = por %p47, %p48
    %p51 = scmp.ne.s32.totalorder %s34, %s50
    %p52 = scmp.eq.s32.totalorder %s26, 0
    %p53 = por %p51, %p52
    %s54 = ssub.s32 %s20, %s27
    %p55 = scmp.eq.s32.totalorder %s54, 0
    %s57 = sadd.s32 %s56, 1
    %s58 = scalar_select %p55, %s56, %s57
    %p61 = pneg %p55
    %p62 = scmp.eq.s32.totalorder %s20, 1
    %p63 = por %p61, %p62
    %p64 = scmp.ne.s32.totalorder %s56, %s59
    %p65 = scmp.eq.s32.totalorder %s20, 0
    %p66 = por %p64, %p65
    %p67 = scmp.ne.s32.totalorder %s56, %s59
    %p68 = scmp.eq.s32.totalorder %s25, 1
    %p69 = por %p67, %p68
    %p70 = scmp.ne.s32.totalorder %s59, %s60
    %p71 = scmp.eq.s32.totalorder %s25, 0
    %p72 = por %p70, %p71
    %p73 = scmp.ne.s32.totalorder %s59, %s60
    %p74 = scmp.eq.s32.totalorder %s26, 1
    %p75 = por %p73, %p74
    %p77 = scmp.ne.s32.totalorder %s60, %s76
    %p78 = scmp.eq.s32.totalorder %s26, 0
    %p79 = por %p77, %p78
    %s81 = sadd.s32 %s80, 1
    %p84 = scmp.eq.s32.totalorder %s20, 1
    %p85 = scmp.ne.s32.totalorder %s80, %s82
    %p86 = scmp.eq.s32.totalorder %s20, 0
    %p87 = por %p85, %p86
    %p88 = scmp.ne.s32.totalorder %s80, %s82
    %p89 = scmp.eq.s32.totalorder %s25, 1
    %p90 = por %p88, %p89
    %p91 = scmp.ne.s32.totalorder %s82, %s83
    %p92 = scmp.eq.s32.totalorder %s25, 0
    %p93 = por %p91, %p92
    %p94 = scmp.ne.s32.totalorder %s82, %s83
    %p95 = scmp.eq.s32.totalorder %s26, 1
    %p96 = por %p94, %p95
    %p98 = scmp.ne.s32.totalorder %s83, %s97
    %p99 = scmp.eq.s32.totalorder %s26, 0
    %p100 = por %p98, %p99
    %s102 = sadd.s32 %s101, 1
    %p105 = scmp.eq.s32.totalorder %s20, 1
    %p106 = scmp.ne.s32.totalorder %s101, %s103
    %p107 = scmp.eq.s32.totalorder %s20, 0
    %p108 = por %p106, %p107
    %p109 = scmp.ne.s32.totalorder %s101, %s103
    %p110 = scmp.eq.s32.totalorder %s25, 1
    %p111 = por %p109, %p110
    %p112 = scmp.ne.s32.totalorder %s103, %s104
    %p113 = scmp.eq.s32.totalorder %s25, 0
    %p114 = por %p112, %p113
    %p115 = scmp.ne.s32.totalorder %s103, %s104
    %p116 = scmp.eq.s32.totalorder %s26, 1
    %p117 = por %p115, %p116
    %p119 = scmp.ne.s32.totalorder %s104, %s118
    %p120 = scmp.eq.s32.totalorder %s26, 0
    %p121 = por %p119, %p120
    %s123 = sadd.s32 %s122, 1
    %p126 = scmp.eq.s32.totalorder %s20, 1
    %p127 = scmp.ne.s32.totalorder %s122, %s124
    %p128 = scmp.eq.s32.totalorder %s20, 0
    %p129 = por %p127, %p128
    %p130 = scmp.ne.s32.totalorder %s122, %s124
    %p131 = scmp.eq.s32.totalorder %s25, 1
    %p132 = por %p130, %p131
    %p133 = scmp.ne.s32.totalorder %s124, %s125
    %p134 = scmp.eq.s32.totalorder %s25, 0
    %p135 = por %p133, %p134
    %p136 = scmp.ne.s32.totalorder %s124, %s125
    %p137 = scmp.eq.s32.totalorder %s26, 1
    %p138 = por %p136, %p137
    %p140 = scmp.ne.s32.totalorder %s125, %s139
    %p141 = scmp.eq.s32.totalorder %s26, 0
    %p142 = por %p140, %p141
    %s144 = sadd.s32 %s143, 1
    %p147 = scmp.eq.s32.totalorder %s20, 1
    %p148 = scmp.ne.s32.totalorder %s143, %s145
    %p149 = scmp.eq.s32.totalorder %s20, 0
    %p150 = por %p148, %p149
    %p151 = scmp.ne.s32.totalorder %s143, %s145
    %p152 = scmp.eq.s32.totalorder %s25, 1
    %p153 = por %p151, %p152
    %p154 = scmp.ne.s32.totalorder %s145, %s146
    %p155 = scmp.eq.s32.totalorder %s25, 0
    %p156 = por %p154, %p155
    %p157 = scmp.ne.s32.totalorder %s145, %s146
    %p158 = scmp.eq.s32.totalorder %s26, 1
    %p159 = por %p157, %p158
    %p161 = scmp.ne.s32.totalorder %s146, %s160
    %p162 = scmp.eq.s32.totalorder %s26, 0
    %p163 = por %p161, %p162
    %s165 = sadd.s32 %s164, 1
    %p168 = scmp.eq.s32.totalorder %s20, 1
    %p169 = scmp.ne.s32.totalorder %s164, %s166
    %p170 = scmp.eq.s32.totalorder %s20, 0
    %p171 = por %p169, %p170
    %p172 = scmp.ne.s32.totalorder %s164, %s166
    %p173 = scmp.eq.s32.totalorder %s25, 1
    %p174 = por %p172, %p173
    %p175 = scmp.ne.s32.totalorder %s166, %s167
    %p176 = scmp.eq.s32.totalorder %s25, 0
    %p177 = por %p175, %p176
    %p178 = scmp.ne.s32.totalorder %s166, %s167
    %p179 = scmp.eq.s32.totalorder %s26, 1
    %p180 = por %p178, %p179
    %p182 = scmp.ne.s32.totalorder %s167, %s181
    %p183 = scmp.eq.s32.totalorder %s26, 0
    %p184 = por %p182, %p183
    %s186 = sadd.s32 %s185, 1
    %p189 = scmp.eq.s32.totalorder %s20, 1
    %p190 = scmp.ne.s32.totalorder %s185, %s187
    %p191 = scmp.eq.s32.totalorder %s20, 0
    %p192 = por %p190, %p191
    %p193 = scmp.ne.s32.totalorder %s185, %s187
    %p194 = scmp.eq.s32.totalorder %s25, 1
    %p195 = por %p193, %p194
    %p196 = scmp.ne.s32.totalorder %s187, %s188
    %p197 = scmp.eq.s32.totalorder %s25, 0
    %p198 = por %p196, %p197
    %p199 = scmp.ne.s32.totalorder %s187, %s188
    %p200 = scmp.eq.s32.totalorder %s26, 1
    %p201 = por %p199, %p200
    %p203 = scmp.ne.s32.totalorder %s188, %s202
    %p204 = scmp.eq.s32.totalorder %s26, 0
    %p205 = por %p203, %p204
    %s207 = sadd.s32 %s206, 1
    %p210 = scmp.eq.s32.totalorder %s20, 1
    %p211 = scmp.ne.s32.totalorder %s206, %s208
    %p212 = scmp.eq.s32.totalorder %s20, 0
    %p213 = por %p211, %p212
    %p214 = scmp.ne.s32.totalorder %s206, %s208
    %p215 = scmp.eq.s32.totalorder %s25, 1
    %p216 = por %p214, %p215
    %p217 = scmp.ne.s32.totalorder %s208, %s209
    %p218 = scmp.eq.s32.totalorder %s25, 0
    %p219 = por %p217, %p218
    %p220 = scmp.ne.s32.totalorder %s208, %s209
    %p221 = scmp.eq.s32.totalorder %s26, 1
    %p222 = por %p220, %p221
    %p224 = scmp.ne.s32.totalorder %s209, %s223
    %p225 = scmp.eq.s32.totalorder %s26, 0
    %p226 = por %p224, %p225
    %s228 = sadd.s32 %s227, 1
    %p231 = scmp.eq.s32.totalorder %s20, 1
    %p232 = scmp.ne.s32.totalorder %s227, %s229
    %p233 = scmp.eq.s32.totalorder %s20, 0
    %p234 = por %p232, %p233
    %p235 = scmp.ne.s32.totalorder %s227, %s229
    %p236 = scmp.eq.s32.totalorder %s25, 1
    %p237 = por %p235, %p236
    %p238 = scmp.ne.s32.totalorder %s229, %s230
    %p239 = scmp.eq.s32.totalorder %s25, 0
    %p240 = por %p238, %p239
    %p241 = scmp.ne.s32.totalorder %s229, %s230
    %p242 = scmp.eq.s32.totalorder %s26, 1
    %p243 = por %p241, %p242
    %p245 = scmp.ne.s32.totalorder %s230, %s244
    %p246 = scmp.eq.s32.totalorder %s26, 0
    %p247 = por %p245, %p246
    %s249 = sadd.s32 %s248, 1
    %p252 = scmp.eq.s32.totalorder %s20, 1
    %p253 = scmp.ne.s32.totalorder %s248, %s250
    %p254 = scmp.eq.s32.totalorder %s20, 0
    %p255 = por %p253, %p254
    %p256 = scmp.ne.s32.totalorder %s248, %s250
    %p257 = scmp.eq.s32.totalorder %s25, 1
    %p258 = por %p256, %p257
    %p259 = scmp.ne.s32.totalorder %s250, %s251
    %p260 = scmp.eq.s32.totalorder %s25, 0
    %p261 = por %p259, %p260
    %p262 = scmp.ne.s32.totalorder %s250, %s251
    %p263 = scmp.eq.s32.totalorder %s26, 1
    %p264 = por %p262, %p263
    %p266 = scmp.ne.s32.totalorder %s251, %s265
    %p267 = scmp.eq.s32.totalorder %s26, 0
    %p268 = por %p266, %p267
    %s270 = sadd.s32 %s269, 1
    %p273 = scmp.eq.s32.totalorder %s20, 1
    %p274 = scmp.ne.s32.totalorder %s269, %s271
    %p275 = scmp.eq.s32.totalorder %s20, 0
    %p276 = por %p274, %p275
    %p277 = scmp.ne.s32.totalorder %s269, %s271
    %p278 = scmp.eq.s32.totalorder %s25, 1
    %p279 = por %p277, %p278
    %p280 = scmp.ne.s32.totalorder %s271, %s272
    %p281 = scmp.eq.s32.totalorder %s25, 0
    %p282 = por %p280, %p281
    %p283 = scmp.ne.s32.totalorder %s271, %s272
    %p284 = scmp.eq.s32.totalorder %s26, 1
    %p285 = por %p283, %p284
    %p287 = scmp.ne.s32.totalorder %s272, %s286
    %p288 = scmp.eq.s32.totalorder %s26, 0
    %p289 = por %p287, %p288
    %s291 = sadd.s32 %s290, 1
    %p294 = scmp.eq.s32.totalorder %s20, 1
    %p295 = scmp.ne.s32.totalorder %s290, %s292
    %p296 = scmp.eq.s32.totalorder %s20, 0
    %p297 = por %p295, %p296
    %p298 = scmp.ne.s32.totalorder %s290, %s292
    %p299 = scmp.eq.s32.totalorder %s25, 1
    %p300 = por %p298, %p299
    %p301 = scmp.ne.s32.totalorder %s292, %s293
    %p302 = scmp.eq.s32.totalorder %s25, 0
    %p303 = por %p301, %p302
    %p304 = scmp.ne.s32.totalorder %s292, %s293
    %p305 = scmp.eq.s32.totalorder %s26, 1
    %p306 = por %p304, %p305
    %p308 = scmp.ne.s32.totalorder %s293, %s307
    %p309 = scmp.eq.s32.totalorder %s26, 0
    %p310 = por %p308, %p309
    %s312 = sadd.s32 %s311, 1
    %p315 = scmp.eq.s32.totalorder %s20, 1
    %p316 = scmp.ne.s32.totalorder %s311, %s313
    %p317 = scmp.eq.s32.totalorder %s20, 0
    %p318 = por %p316, %p317
    %p319 = scmp.ne.s32.totalorder %s311, %s313
    %p320 = scmp.eq.s32.totalorder %s25, 1
    %p321 = por %p319, %p320
    %p322 = scmp.ne.s32.totalorder %s313, %s314
    %p323 = scmp.eq.s32.totalorder %s25, 0
    %p324 = por %p322, %p323
    %p325 = scmp.ne.s32.totalorder %s313, %s314
    %p326 = scmp.eq.s32.totalorder %s26, 1
    %p327 = por %p325, %p326
    %p329 = scmp.ne.s32.totalorder %s314, %s328
    %p330 = scmp.eq.s32.totalorder %s26, 0
    %p331 = por %p329, %p330
    %s332 = ssub.s32 %s20, %s27
    %p333 = scmp.eq.s32.totalorder %s332, 0
    %s335 = sadd.s32 %s334, 1
    %s336 = scalar_select %p333, %s334, %s335
    %p339 = pneg %p333
    %p340 = scmp.eq.s32.totalorder %s20, 1
    %p341 = por %p339, %p340
    %p342 = scmp.ne.s32.totalorder %s334, %s337
    %p343 = scmp.eq.s32.totalorder %s20, 0
    %p344 = por %p342, %p343
    %p345 = scmp.ne.s32.totalorder %s334, %s337
    %p346 = scmp.eq.s32.totalorder %s25, 1
    %p347 = por %p345, %p346
    %p348 = scmp.ne.s32.totalorder %s337, %s338
    %p349 = scmp.eq.s32.totalorder %s25, 0
    %p350 = por %p348, %p349
    %p351 = scmp.ne.s32.totalorder %s337, %s338
    %p352 = scmp.eq.s32.totalorder %s26, 1
    %p353 = por %p351, %p352
    %p355 = scmp.ne.s32.totalorder %s338, %s354
    %p356 = scmp.eq.s32.totalorder %s26, 0
    %p357 = por %p355, %p356
    %p358 = scmp.le.s32.totalorder 1, %s20
    %p359 = scmp.lt.s32.totalorder %s20, 3
    %p360 = pnand %p358, %p359
    %p361 = pneg %p360
    // Predicated region
    $region9: #{_lambda_.5} parent=5 // pred_check
      _
    $region10: #{_lambda_.5} parent=5 // pred_check_branch
      %363 = sbr.rel (%p360) target = $region12
    $region11: #{_lambda_.5} parent=5 // pred_region
      %s364 = ssub.s32 %s20, 1
      // Predicated region
      $region13: #{_lambda_.5} parent=11 // pred_check
        %p365 = pneg %p93
      $region14: #{_lambda_.5} parent=11 // pred_check_branch
        %367 = sbr.rel (%p365) target = $region16
      $region15: #{_lambda_.5} parent=11 // pred_region
        _
      $region16: #{_lambda_.5} parent=11 // pred_fallthru
        _
      // Predicated region
      $region17: #{_lambda_.5} parent=11 // pred_check
        %p368 = pneg %p114
      $region18: #{_lambda_.5} parent=11 // pred_check_branch
        %370 = sbr.rel (%p368) target = $region20
      $region19: #{_lambda_.5} parent=11 // pred_region
        _
      $region20: #{_lambda_.5} parent=11 // pred_fallthru
        _
      // Predicated region
      $region21: #{_lambda_.5} parent=11 // pred_check
        %p371 = pneg %p135
      $region22: #{_lambda_.5} parent=11 // pred_check_branch
        %373 = sbr.rel (%p371) target = $region24
      $region23: #{_lambda_.5} parent=11 // pred_region
        _
      $region24: #{_lambda_.5} parent=11 // pred_fallthru
        _
      // Predicated region
      $region25: #{_lambda_.5} parent=11 // pred_check
        %p374 = pneg %p156
      $region26: #{_lambda_.5} parent=11 // pred_check_branch
        %376 = sbr.rel (%p374) target = $region28
      $region27: #{_lambda_.5} parent=11 // pred_region
        _
      $region28: #{_lambda_.5} parent=11 // pred_fallthru
        _
      // Predicated region
      $region29: #{_lambda_.5} parent=11 // pred_check
        %p377 = pneg %p177
      $region30: #{_lambda_.5} parent=11 // pred_check_branch
        %379 = sbr.rel (%p377) target = $region32
      $region31: #{_lambda_.5} parent=11 // pred_region
        _
      $region32: #{_lambda_.5} parent=11 // pred_fallthru
        _
      // Predicated region
      $region33: #{_lambda_.5} parent=11 // pred_check
        %p380 = pneg %p198
      $region34: #{_lambda_.5} parent=11 // pred_check_branch
        %382 = sbr.rel (%p380) target = $region36
      $region35: #{_lambda_.5} parent=11 // pred_region
        _
      $region36: #{_lambda_.5} parent=11 // pred_fallthru
        _
      // Predicated region
      $region37: #{_lambda_.5} parent=11 // pred_check
        %p383 = pneg %p219
      $region38: #{_lambda_.5} parent=11 // pred_check_branch
        %385 = sbr.rel (%p383) target = $region40
      $region39: #{_lambda_.5} parent=11 // pred_region
        _
      $region40: #{_lambda_.5} parent=11 // pred_fallthru
        _
      // Predicated region
      $region41: #{_lambda_.5} parent=11 // pred_check
        %p386 = pneg %p240
      $region42: #{_lambda_.5} parent=11 // pred_check_branch
        %388 = sbr.rel (%p386) target = $region44
      $region43: #{_lambda_.5} parent=11 // pred_region
        _
      $region44: #{_lambda_.5} parent=11 // pred_fallthru
        _
      // Predicated region
      $region45: #{_lambda_.5} parent=11 // pred_check
        %p389 = pneg %p261
      $region46: #{_lambda_.5} parent=11 // pred_check_branch
        %391 = sbr.rel (%p389) target = $region48
      $region47: #{_lambda_.5} parent=11 // pred_region
        _
      $region48: #{_lambda_.5} parent=11 // pred_fallthru
        _
      // Predicated region
      $region49: #{_lambda_.5} parent=11 // pred_check
        %p392 = pneg %p282
      $region50: #{_lambda_.5} parent=11 // pred_check_branch
        %394 = sbr.rel (%p392) target = $region52
      $region51: #{_lambda_.5} parent=11 // pred_region
        _
      $region52: #{_lambda_.5} parent=11 // pred_fallthru
        _
      // Predicated region
      $region53: #{_lambda_.5} parent=11 // pred_check
        %p395 = pneg %p303
      $region54: #{_lambda_.5} parent=11 // pred_check_branch
        %397 = sbr.rel (%p395) target = $region56
      $region55: #{_lambda_.5} parent=11 // pred_region
        _
      $region56: #{_lambda_.5} parent=11 // pred_fallthru
        _
      // Predicated region
      $region57: #{_lambda_.5} parent=11 // pred_check
        %p398 = pneg %p324
      $region58: #{_lambda_.5} parent=11 // pred_check_branch
        %400 = sbr.rel (%p398) target = $region60
      $region59: #{_lambda_.5} parent=11 // pred_region
        _
      $region60: #{_lambda_.5} parent=11 // pred_fallthru
        _
    $region12: #{_lambda_.5} parent=5 // pred_fallthru
      _
    %p401 = scmp.lt.s32.totalorder %s20, 2
    // Predicated region
    $region61: #{_lambda_.5} parent=5 // pred_check
      %p402 = pneg %p401
    $region62: #{_lambda_.5} parent=5 // pred_check_branch
      %404 = sbr.rel (%p402) target = $region64
    $region63: #{_lambda_.5} parent=5 // pred_region
      // Predicated region
      $region65: #{_lambda_.5} parent=63 // pred_check
        %p405 = pneg %p40
      $region66: #{_lambda_.5} parent=63 // pred_check_branch
        %407 = sbr.rel (%p405) target = $region68
      $region67: #{_lambda_.5} parent=63 // pred_region
        %p408 = scmp.lt.s32.totalorder %s20, 1
        %s409 = scalar_select %p408, %s20, 1
        %s410 = smul.addr %s409, 8
        %s411 = scalar_lea.vmem %s0, %s410
      $region68: #{_lambda_.5} parent=63 // pred_fallthru
        _
      // Predicated region
      $region69: #{_lambda_.5} parent=63 // pred_check
        %p412 = pneg %p66
      $region70: #{_lambda_.5} parent=63 // pred_check_branch
        %414 = sbr.rel (%p412) target = $region72
      $region71: #{_lambda_.5} parent=63 // pred_region
        %p415 = scmp.lt.s32.totalorder %s20, 1
        %s416 = scalar_select %p415, %s20, 1
        %s417 = scalar_lea.vmem %s1, %s416
      $region72: #{_lambda_.5} parent=63 // pred_fallthru
        _
    $region64: #{_lambda_.5} parent=5 // pred_fallthru
      _
    %p418 = scmp.le.s32.totalorder 1, %s20
    %p419 = scmp.lt.s32.totalorder %s20, 3
    %p420 = pnand %p418, %p419
    %p421 = pneg %p420
    // Predicated region
    $region73: #{_lambda_.5} parent=5 // pred_check
      _
    $region74: #{_lambda_.5} parent=5 // pred_check_branch
      %423 = sbr.rel (%p420) target = $region76
    $region75: #{_lambda_.5} parent=5 // pred_region
      %s424 = ssub.s32 %s20, 1
      %p425 = scmp.lt.s32.totalorder %s25, 1
      %s426 = scalar_select %p425, %s25, 1
      %s427 = smul.addr %s426, 8
      %s428 = scalar_lea.vmem %s0, %s427
      %p429 = pneg %p46
      %p430 = pneg %p43
      %p431 = scmp.lt.s32.totalorder %s25, 1
      %s432 = scalar_select %p431, %s25, 1
      %s433 = scalar_lea.vmem %s1, %s432
      %p434 = pneg %p72
      %p435 = pneg %p69
      %p436 = pneg %p93
      %p437 = pneg %p90
      %p438 = pneg %p114
      %p439 = pneg %p111
      %p440 = pneg %p135
      %p441 = pneg %p132
      %p442 = pneg %p156
      %p443 = pneg %p153
      %p444 = pneg %p177
      %p445 = pneg %p174
      %p446 = pneg %p198
      %p447 = pneg %p195
      %p448 = pneg %p219
      %p449 = pneg %p216
      %p450 = pneg %p240
      %p451 = pneg %p237
      %p452 = pneg %p261
      %p453 = pneg %p258
      %p454 = pneg %p282
      %p455 = pneg %p279
      %p456 = pneg %p303
      %p457 = pneg %p300
      %p458 = pneg %p324
      %p459 = pneg %p321
      %p460 = pneg %p350
      %p461 = pneg %p347
      %p462 = scmp.lt.s32.totalorder %s25, 1
      %s463 = scalar_select %p462, %s25, 1
      %s464 = smul.addr %s463, 8
      %s465 = scalar_lea.vmem %s14, %s464
      %p466 = scmp.lt.s32.totalorder %s25, 1
      %s467 = scalar_select %p466, %s25, 1
      %s468 = smul.addr %s467, 8
      %s469 = scalar_lea.vmem %s0, %s468
      %p470 = scmp.lt.s32.totalorder %s25, 1
      %s471 = scalar_select %p470, %s25, 1
      %s472 = scalar_lea.vmem %s1, %s471
      %p473 = scmp.lt.s32.totalorder %s25, 1
      %s474 = scalar_select %p473, %s25, 1
      %s475 = smul.addr %s474, 8
      %s476 = scalar_lea.vmem %s14, %s475
      %v478 = vld [vmem:[%s469] sm:$0xff]
      %v479 = vld [vmem:[%s472] sm:$0x1]
      %vm480 = vcmp.gt.f32.partialorder %v479, 0.0
      %v481 = vld [vmem:[%s2] sm:$0xf]
      %v482 = vld [vmem:[%s2 + $0x4] sm:$0xf]
      %v483 = vld [vmem:[%s2 + $0x8] sm:$0xf]
      %v484 = vld [vmem:[%s2 + $0xc] sm:$0xf]
      %v485 = vpack.c.bf16 %v478, %v478
      %v486 = vld [vmem:[%s3] sm:$0x1]
      %v488 = vlaneseq
      %v489 = vshrl.u32 %v488, 7
      %v490 = vsub.s32 0, %v489
      %v491 = vrot.slane %v486, %v490
      %v497 = vunpack.c.l.b16 %v481
      %v498 = vunpack.c.l.b16 %v482
      %v499 = vunpack.c.l.b16 %v483
      %v500 = vunpack.c.l.b16 %v484
      %v501 = vpack.c.b16 %v498, %v497
      %v502 = vpack.c.b16 %v500, %v499
      %vm505 = vcmask 261120
      %v507 = vsel %vm505, %v485, 0
      %509 = vmatprep.subr.bf16.mxu0 0
      %510 = vmatpush1.bf16.msra.mxu0 %v501
      %511 = vmatprep.subr.bf16.mxu0 0
      %512 = vmatpush1.bf16.msra.mxu0 %v502
      %513 = vmatprep.subr.bf16.mxu0 0
      %514 = vmatpush1.bf16.msra.mxu0 0
      %515 = vmatprep.subr.bf16.mxu0 0
      %516 = vmatpush1.bf16.msra.mxu0 0
      %517 = vmatprep.subr.bf16.mxu0 0
      %518 = vmatpush1.bf16.msra.mxu0 0
      %519 = vmatprep.subr.bf16.mxu0 0
      %520 = vmatpush1.bf16.msra.mxu0 0
      %521 = vmatprep.subr.bf16.mxu0 0
      %522 = vmatpush1.bf16.msra.mxu0 0
      %523 = vmatprep.subr.bf16.mxu0 0
      %524 = vmatpush1.bf16.msra.mxu0 0
      %525 = vmatprep.subr.bf16.mxu0 0
      %526 = vmatpush1.bf16.msra.mxu0 0
      %527 = vmatprep.subr.bf16.mxu0 0
      %528 = vmatpush1.bf16.msra.mxu0 0
      %529 = vmatprep.subr.bf16.mxu0 0
      %530 = vmatpush1.bf16.msra.mxu0 0
      %531 = vmatprep.subr.bf16.mxu0 0
      %532 = vmatpush1.bf16.msra.mxu0 0
      %533 = vmatprep.subr.bf16.mxu0 0
      %534 = vmatpush1.bf16.msra.mxu0 0
      %535 = vmatprep.subr.bf16.mxu0 0
      %536 = vmatpush1.bf16.msra.mxu0 0
      %537 = vmatprep.subr.bf16.mxu0 0
      %538 = vmatpush1.bf16.msra.mxu0 0
      %539 = vmatprep.subr.bf16.mxu0 0
      %540 = vmatpush1.bf16.msra.mxu0 0
      %541 = vmatprep.mubr.bf16.mxu0 0
      %542 = vmatmul.mubr.bf16.gmra.mrb[0].mxu0 %v507
      %v543 = vpop.f32.mrb[0].mxu0
      %v544 = vadd.f32 %v491, %v543
      %v545 = vpop.f32.mrb[0].mxu0
      %v546 = vpop.f32.mrb[0].mxu0
      %v547 = vpop.f32.mrb[0].mxu0
      %548 = vdwg.mxu0
      %v549 = vpack.c.bf16 %v544, %v544
      %551 = vrot.lane.b32.xlu0 %v549, 96
      %v552 = vpop.permute.xlu0 %551
      %vm553 = vcmask 64512
      %v555 = vsel %vm553, %v549, 0
      %v558 = vsel %vm553, %v552, 0
      %560 = vmatprep.subr.bf16.mxu0 0
      %561 = vmatpush1.bf16.xpose.msra.mxu0 %v558
      %562 = vmatprep.subr.bf16.mxu0 0
      %563 = vmatpush1.bf16.xpose.msra.mxu0 0
      %564 = vmatprep.subr.bf16.mxu0 0
      %565 = vmatpush1.bf16.xpose.msra.mxu0 0
      %566 = vmatprep.subr.bf16.mxu0 0
      %567 = vmatpush1.bf16.xpose.msra.mxu0 0
      %568 = vmatprep.subr.bf16.mxu0 0
      %569 = vmatpush1.bf16.xpose.msra.mxu0 0
      %570 = vmatprep.subr.bf16.mxu0 0
      %571 = vmatpush1.bf16.xpose.msra.mxu0 0
      %572 = vmatprep.subr.bf16.mxu0 0
      %573 = vmatpush1.bf16.xpose.msra.mxu0 0
      %574 = vmatprep.subr.bf16.mxu0 0
      %575 = vmatpush1.bf16.xpose.msra.mxu0 0
      %576 = vmatprep.subr.bf16.mxu0 0
      %577 = vmatpush1.bf16.xpose.msra.mxu0 0
      %578 = vmatprep.subr.bf16.mxu0 0
      %579 = vmatpush1.bf16.xpose.msra.mxu0 0
      %580 = vmatprep.subr.bf16.mxu0 0
      %581 = vmatpush1.bf16.xpose.msra.mxu0 0
      %582 = vmatprep.subr.bf16.mxu0 0
      %583 = vmatpush1.bf16.xpose.msra.mxu0 0
      %584 = vmatprep.subr.bf16.mxu0 0
      %585 = vmatpush1.bf16.xpose.msra.mxu0 0
      %586 = vmatprep.subr.bf16.mxu0 0
      %587 = vmatpush1.bf16.xpose.msra.mxu0 0
      %588 = vmatprep.subr.bf16.mxu0 0
      %589 = vmatpush1.bf16.xpose.msra.mxu0 0
      %590 = vmatprep.subr.bf16.mxu0 0
      %591 = vmatpush1.bf16.xpose.msra.mxu0 0
      %592 = vmatprep.mubr.bf16.mxu0 0
      %593 = vmatmul.mubr.bf16.gmra.mrb[0].mxu0 %v555
      %v594 = vpop.f32.mrb[0].mxu0
      %v595 = vadd.f32 0.0, %v594
      %v596 = vpop.f32.mrb[0].mxu0
      %v597 = vpop.f32.mrb[0].mxu0
      %v598 = vpop.f32.mrb[0].mxu0
      %599 = vdwg.mxu0
      %v600 = vmul.f32 %v595, 0.35355338
      %v601 = vsel %vm480, 1, 0
      %v602 = vlaneseq
      %v603 = vshrl.u32 %v602, 7
      %v604 = vsub.s32 0, %v603
      %v605 = vrot.slane %v601, %v604
      %vm606 = vcmp.eq.s32.totalorder %v605, 1
      %v607 = vsel %vm606, %v600, -1e+10
      %v608 = vsel %vm553, %v607, -inf
      %609 = vmax.xlane.f32.xlu0 %v608
      %v610 = vpop.xlane.xlu0 %609
      %v611 = vsub.f32 %v607, %v610
      %v612 = vmul.f32 %v611, 1.442695
      %v613 = vpow.pop %v612
      %v614 = vsel %vm553, %v613, 0.0
      %615 = vadd.xlane.f32.xlu0 %v614
      %v616 = vpop.xlane.xlu0 %615
      %v617 = vrcp.pop %v616
      %v618 = vmul.f32 %v613, %v617
      %v619 = vpack.c.bf16 %v618, %v618
      %620 = vrot.lane.b32.xlu0 %v549, 64
      %v621 = vpop.permute.xlu0 %620
      %v623 = vsel %vm553, %v619, 0
      %vm625 = vcmask 1043456
      %v627 = vsel %vm625, %v621, 0
      %629 = vmatprep.subr.bf16.mxu0 0
      %630 = vmatpush1.bf16.msra.mxu0 %v627
      %631 = vmatprep.subr.bf16.mxu0 0
      %632 = vmatpush1.bf16.msra.mxu0 0
      %633 = vmatprep.subr.bf16.mxu0 0
      %634 = vmatpush1.bf16.msra.mxu0 0
      %635 = vmatprep.subr.bf16.mxu0 0
      %636 = vmatpush1.bf16.msra.mxu0 0
      %637 = vmatprep.subr.bf16.mxu0 0
      %638 = vmatpush1.bf16.msra.mxu0 0
      %639 = vmatprep.subr.bf16.mxu0 0
      %640 = vmatpush1.bf16.msra.mxu0 0
      %641 = vmatprep.subr.bf16.mxu0 0
      %642 = vmatpush1.bf16.msra.mxu0 0
      %643 = vmatprep.subr.bf16.mxu0 0
      %644 = vmatpush1.bf16.msra.mxu0 0
      %645 = vmatprep.subr.bf16.mxu0 0
      %646 = vmatpush1.bf16.msra.mxu0 0
      %647 = vmatprep.subr.bf16.mxu0 0
      %648 = vmatpush1.bf16.msra.mxu0 0
      %649 = vmatprep.subr.bf16.mxu0 0
      %650 = vmatpush1.bf16.msra.mxu0 0
      %651 = vmatprep.subr.bf16.mxu0 0
      %652 = vmatpush1.bf16.msra.mxu0 0
      %653 = vmatprep.subr.bf16.mxu0 0
      %654 = vmatpush1.bf16.msra.mxu0 0
      %655 = vmatprep.subr.bf16.mxu0 0
      %656 = vmatpush1.bf16.msra.mxu0 0
      %657 = vmatprep.subr.bf16.mxu0 0
      %658 = vmatpush1.bf16.msra.mxu0 0
      %659 = vmatprep.subr.bf16.mxu0 0
      %660 = vmatpush1.bf16.msra.mxu0 0
      %661 = vmatprep.mubr.bf16.mxu0 0
      %662 = vmatmul.mubr.bf16.gmra.mrb[0].mxu0 %v623
      %v663 = vpop.f32.mrb[0].mxu0
      %v664 = vadd.f32 0.0, %v663
      %v665 = vpop.f32.mrb[0].mxu0
      %v666 = vpop.f32.mrb[0].mxu0
      %v667 = vpop.f32.mrb[0].mxu0
      %668 = vdwg.mxu0
      %669 = vrot.lane.b32.xlu0 %v549, 120
      %v670 = vpop.permute.xlu0 %669
      %671 = vrot.lane.b32.xlu0 %v549, 88
      %v672 = vpop.permute.xlu0 %671
      %v674 = vsel %vm553, %v670, 0
      %v677 = vsel %vm553, %v672, 0
      %679 = vmatprep.subr.bf16.mxu0 0
      %680 = vmatpush1.bf16.xpose.msra.mxu0 %v677
      %681 = vmatprep.subr.bf16.mxu0 0
      %682 = vmatpush1.bf16.xpose.msra.mxu0 0
      %683 = vmatprep.subr.bf16.mxu0 0
      %684 = vmatpush1.bf16.xpose.msra.mxu0 0
      %685 = vmatprep.subr.bf16.mxu0 0
      %686 = vmatpush1.bf16.xpose.msra.mxu0 0
      %687 = vmatprep.subr.bf16.mxu0 0
      %688 = vmatpush1.bf16.xpose.msra.mxu0 0
      %689 = vmatprep.subr.bf16.mxu0 0
      %690 = vmatpush1.bf16.xpose.msra.mxu0 0
      %691 = vmatprep.subr.bf16.mxu0 0
      %692 = vmatpush1.bf16.xpose.msra.mxu0 0
      %693 = vmatprep.subr.bf16.mxu0 0
      %694 = vmatpush1.bf16.xpose.msra.mxu0 0
      %695 = vmatprep.subr.bf16.mxu0 0
      %696 = vmatpush1.bf16.xpose.msra.mxu0 0
      %697 = vmatprep.subr.bf16.mxu0 0
      %698 = vmatpush1.bf16.xpose.msra.mxu0 0
      %699 = vmatprep.subr.bf16.mxu0 0
      %700 = vmatpush1.bf16.xpose.msra.mxu0 0
      %701 = vmatprep.subr.bf16.mxu0 0
      %702 = vmatpush1.bf16.xpose.msra.mxu0 0
      %703 = vmatprep.subr.bf16.mxu0 0
      %704 = vmatpush1.bf16.xpose.msra.mxu0 0
      %705 = vmatprep.subr.bf16.mxu0 0
      %706 = vmatpush1.bf16.xpose.msra.mxu0 0
      %707 = vmatprep.subr.bf16.mxu0 0
      %708 = vmatpush1.bf16.xpose.msra.mxu0 0
      %709 = vmatprep.subr.bf16.mxu0 0
      %710 = vmatpush1.bf16.xpose.msra.mxu0 0
      %711 = vmatprep.mubr.bf16.mxu0 0
      %712 = vmatmul.mubr.bf16.gmra.mrb[0].mxu0 %v674
      %v713 = vpop.f32.mrb[0].mxu0
      %v714 = vadd.f32 0.0, %v713
      %v715 = vpop.f32.mrb[0].mxu0
      %v716 = vpop.f32.mrb[0].mxu0
      %v717 = vpop.f32.mrb[0].mxu0
      %718 = vdwg.mxu0
      %v719 = vmul.f32 %v714, 0.35355338
      %v720 = vsel %vm606, %v719, -1e+10
      %v721 = vsel %vm553, %v720, -inf
      %722 = vmax.xlane.f32.xlu0 %v721
      %v723 = vpop.xlane.xlu0 %722
      %v724 = vsub.f32 %v720, %v723
      %v725 = vmul.f32 %v724, 1.442695
      %v726 = vpow.pop %v725
      %v727 = vsel %vm553, %v726, 0.0
      %728 = vadd.xlane.f32.xlu0 %v727
      %v729 = vpop.xlane.xlu0 %728
      %v730 = vrcp.pop %v729
      %v731 = vmul.f32 %v726, %v730
      %v732 = vpack.c.bf16 %v731, %v731
      %733 = vrot.lane.b32.xlu0 %v549, 56
      %v734 = vpop.permute.xlu0 %733
      %v736 = vsel %vm553, %v732, 0
      %v739 = vsel %vm625, %v734, 0
      %741 = vmatprep.subr.bf16.mxu0 0
      %742 = vmatpush1.bf16.msra.mxu0 %v739
      %743 = vmatprep.subr.bf16.mxu0 0
      %744 = vmatpush1.bf16.msra.mxu0 0
      %745 = vmatprep.subr.bf16.mxu0 0
      %746 = vmatpush1.bf16.msra.mxu0 0
      %747 = vmatprep.subr.bf16.mxu0 0
      %748 = vmatpush1.bf16.msra.mxu0 0
      %749 = vmatprep.subr.bf16.mxu0 0
      %750 = vmatpush1.bf16.msra.mxu0 0
      %751 = vmatprep.subr.bf16.mxu0 0
      %752 = vmatpush1.bf16.msra.mxu0 0
      %753 = vmatprep.subr.bf16.mxu0 0
      %754 = vmatpush1.bf16.msra.mxu0 0
      %755 = vmatprep.subr.bf16.mxu0 0
      %756 = vmatpush1.bf16.msra.mxu0 0
      %757 = vmatprep.subr.bf16.mxu0 0
      %758 = vmatpush1.bf16.msra.mxu0 0
      %759 = vmatprep.subr.bf16.mxu0 0
      %760 = vmatpush1.bf16.msra.mxu0 0
      %761 = vmatprep.subr.bf16.mxu0 0
      %762 = vmatpush1.bf16.msra.mxu0 0
      %763 = vmatprep.subr.bf16.mxu0 0
      %764 = vmatpush1.bf16.msra.mxu0 0
      %765 = vmatprep.subr.bf16.mxu0 0
      %766 = vmatpush1.bf16.msra.mxu0 0
      %767 = vmatprep.subr.bf16.mxu0 0
      %768 = vmatpush1.bf16.msra.mxu0 0
      %769 = vmatprep.subr.bf16.mxu0 0
      %770 = vmatpush1.bf16.msra.mxu0 0
      %771 = vmatprep.subr.bf16.mxu0 0
      %772 = vmatpush1.bf16.msra.mxu0 0
      %773 = vmatprep.mubr.bf16.mxu0 0
      %774 = vmatmul.mubr.bf16.gmra.mrb[0].mxu0 %v736
      %v775 = vpop.f32.mrb[0].mxu0
      %v776 = vadd.f32 0.0, %v775
      %v777 = vpop.f32.mrb[0].mxu0
      %v778 = vpop.f32.mrb[0].mxu0
      %v779 = vpop.f32.mrb[0].mxu0
      %780 = vdwg.mxu0
      %781 = vrot.lane.b32.xlu0 %v549, 112
      %v782 = vpop.permute.xlu0 %781
      %783 = vrot.lane.b32.xlu0 %v549, 80
      %v784 = vpop.permute.xlu0 %783
      %v786 = vsel %vm553, %v782, 0
      %v789 = vsel %vm553, %v784, 0
      %791 = vmatprep.subr.bf16.mxu0 0
      %792 = vmatpush1.bf16.xpose.msra.mxu0 %v789
      %793 = vmatprep.subr.bf16.mxu0 0
      %794 = vmatpush1.bf16.xpose.msra.mxu0 0
      %795 = vmatprep.subr.bf16.mxu0 0
      %796 = vmatpush1.bf16.xpose.msra.mxu0 0
      %797 = vmatprep.subr.bf16.mxu0 0
      %798 = vmatpush1.bf16.xpose.msra.mxu0 0
      %799 = vmatprep.subr.bf16.mxu0 0
      %800 = vmatpush1.bf16.xpose.msra.mxu0 0
      %801 = vmatprep.subr.bf16.mxu0 0
      %802 = vmatpush1.bf16.xpose.msra.mxu0 0
      %803 = vmatprep.subr.bf16.mxu0 0
      %804 = vmatpush1.bf16.xpose.msra.mxu0 0
      %805 = vmatprep.subr.bf16.mxu0 0
      %806 = vmatpush1.bf16.xpose.msra.mxu0 0
      %807 = vmatprep.subr.bf16.mxu0 0
      %808 = vmatpush1.bf16.xpose.msra.mxu0 0
      %809 = vmatprep.subr.bf16.mxu0 0
      %810 = vmatpush1.bf16.xpose.msra.mxu0 0
      %811 = vmatprep.subr.bf16.mxu0 0
      %812 = vmatpush1.bf16.xpose.msra.mxu0 0
      %813 = vmatprep.subr.bf16.mxu0 0
      %814 = vmatpush1.bf16.xpose.msra.mxu0 0
      %815 = vmatprep.subr.bf16.mxu0 0
      %816 = vmatpush1.bf16.xpose.msra.mxu0 0
      %817 = vmatprep.subr.bf16.mxu0 0
      %818 = vmatpush1.bf16.xpose.msra.mxu0 0
      %819 = vmatprep.subr.bf16.mxu0 0
      %820 = vmatpush1.bf16.xpose.msra.mxu0 0
      %821 = vmatprep.subr.bf16.mxu0 0
      %822 = vmatpush1.bf16.xpose.msra.mxu0 0
      %823 = vmatprep.mubr.bf16.mxu0 0
      %824 = vmatmul.mubr.bf16.gmra.mrb[0].mxu0 %v786
      %v825 = vpop.f32.mrb[0].mxu0
      %v826 = vadd.f32 0.0, %v825
      %v827 = vpop.f32.mrb[0].mxu0
      %v828 = vpop.f32.mrb[0].mxu0
      %v829 = vpop.f32.mrb[0].mxu0
      %830 = vdwg.mxu0
      %v831 = vmul.f32 %v826, 0.35355338
      %v832 = vsel %vm606, %v831, -1e+10
      %v833 = vsel %vm553, %v832, -inf
      %834 = vmax.xlane.f32.xlu0 %v833
      %v835 = vpop.xlane.xlu0 %834
      %v836 = vsub.f32 %v832, %v835
      %v837 = vmul.f32 %v836, 1.442695
      %v838 = vpow.pop %v837
      %v839 = vsel %vm553, %v838, 0.0
      %840 = vadd.xlane.f32.xlu0 %v839
      %v841 = vpop.xlane.xlu0 %840
      %v842 = vrcp.pop %v841
      %v843 = vmul.f32 %v838, %v842
      %v844 = vpack.c.bf16 %v843, %v843
      %845 = vrot.lane.b32.xlu0 %v549, 48
      %v846 = vpop.permute.xlu0 %845
      %v848 = vsel %vm553, %v844, 0
      %v851 = vsel %vm625, %v846, 0
      %853 = vmatprep.subr.bf16.mxu0 0
      %854 = vmatpush1.bf16.msra.mxu0 %v851
      %855 = vmatprep.subr.bf16.mxu0 0
      %856 = vmatpush1.bf16.msra.mxu0 0
      %857 = vmatprep.subr.bf16.mxu0 0
      %858 = vmatpush1.bf16.msra.mxu0 0
      %859 = vmatprep.subr.bf16.mxu0 0
      %860 = vmatpush1.bf16.msra.mxu0 0
      %861 = vmatprep.subr.bf16.mxu0 0
      %862 = vmatpush1.bf16.msra.mxu0 0
      %863 = vmatprep.subr.bf16.mxu0 0
      %864 = vmatpush1.bf16.msra.mxu0 0
      %865 = vmatprep.subr.bf16.mxu0 0
      %866 = vmatpush1.bf16.msra.mxu0 0
      %867 = vmatprep.subr.bf16.mxu0 0
      %868 = vmatpush1.bf16.msra.mxu0 0
      %869 = vmatprep.subr.bf16.mxu0 0
      %870 = vmatpush1.bf16.msra.mxu0 0
      %871 = vmatprep.subr.bf16.mxu0 0
      %872 = vmatpush1.bf16.msra.mxu0 0
      %873 = vmatprep.subr.bf16.mxu0 0
      %874 = vmatpush1.bf16.msra.mxu0 0
      %875 = vmatprep.subr.bf16.mxu0 0
      %876 = vmatpush1.bf16.msra.mxu0 0
      %877 = vmatprep.subr.bf16.mxu0 0
      %878 = vmatpush1.bf16.msra.mxu0 0
      %879 = vmatprep.subr.bf16.mxu0 0
      %880 = vmatpush1.bf16.msra.mxu0 0
      %881 = vmatprep.subr.bf16.mxu0 0
      %882 = vmatpush1.bf16.msra.mxu0 0
      %883 = vmatprep.subr.bf16.mxu0 0
      %884 = vmatpush1.bf16.msra.mxu0 0
      %885 = vmatprep.mubr.bf16.mxu0 0
      %886 = vmatmul.mubr.bf16.gmra.mrb[0].mxu0 %v848
      %v887 = vpop.f32.mrb[0].mxu0
      %v888 = vadd.f32 0.0, %v887
      %v889 = vpop.f32.mrb[0].mxu0
      %v890 = vpop.f32.mrb[0].mxu0
      %v891 = vpop.f32.mrb[0].mxu0
      %892 = vdwg.mxu0
      %893 = vrot.lane.b32.xlu0 %v549, 104
      %v894 = vpop.permute.xlu0 %893
      %895 = vrot.lane.b32.xlu0 %v549, 72
      %v896 = vpop.permute.xlu0 %895
      %v898 = vsel %vm553, %v894, 0
      %v901 = vsel %vm553, %v896, 0
      %903 = vmatprep.subr.bf16.mxu0 0
      %904 = vmatpush1.bf16.xpose.msra.mxu0 %v901
      %905 = vmatprep.subr.bf16.mxu0 0
      %906 = vmatpush1.bf16.xpose.msra.mxu0 0
      %907 = vmatprep.subr.bf16.mxu0 0
      %908 = vmatpush1.bf16.xpose.msra.mxu0 0
      %909 = vmatprep.subr.bf16.mxu0 0
      %910 = vmatpush1.bf16.xpose.msra.mxu0 0
      %911 = vmatprep.subr.bf16.mxu0 0
      %912 = vmatpush1.bf16.xpose.msra.mxu0 0
      %913 = vmatprep.subr.bf16.mxu0 0
      %914 = vmatpush1.bf16.xpose.msra.mxu0 0
      %915 = vmatprep.subr.bf16.mxu0 0
      %916 = vmatpush1.bf16.xpose.msra.mxu0 0
      %917 = vmatprep.subr.bf16.mxu0 0
      %918 = vmatpush1.bf16.xpose.msra.mxu0 0
      %919 = vmatprep.subr.bf16.mxu0 0
      %920 = vmatpush1.bf16.xpose.msra.mxu0 0
      %921 = vmatprep.subr.bf16.mxu0 0
      %922 = vmatpush1.bf16.xpose.msra.mxu0 0
      %923 = vmatprep.subr.bf16.mxu0 0
      %924 = vmatpush1.bf16.xpose.msra.mxu0 0
      %925 = vmatprep.subr.bf16.mxu0 0
      %926 = vmatpush1.bf16.xpose.msra.mxu0 0
      %927 = vmatprep.subr.bf16.mxu0 0
      %928 = vmatpush1.bf16.xpose.msra.mxu0 0
      %929 = vmatprep.subr.bf16.mxu0 0
      %930 = vmatpush1.bf16.xpose.msra.mxu0 0
      %931 = vmatprep.subr.bf16.mxu0 0
      %932 = vmatpush1.bf16.xpose.msra.mxu0 0
      %933 = vmatprep.subr.bf16.mxu0 0
      %934 = vmatpush1.bf16.xpose.msra.mxu0 0
      %935 = vmatprep.mubr.bf16.mxu0 0
      %936 = vmatmul.mubr.bf16.gmra.mrb[0].mxu0 %v898
      %v937 = vpop.f32.mrb[0].mxu0
      %v938 = vadd.f32 0.0, %v937
      %v939 = vpop.f32.mrb[0].mxu0
      %v940 = vpop.f32.mrb[0].mxu0
      %v941 = vpop.f32.mrb[0].mxu0
      %942 = vdwg.mxu0
      %v943 = vmul.f32 %v938, 0.35355338
      %v944 = vsel %vm606, %v943, -1e+10
      %v945 = vsel %vm553, %v944, -inf
      %946 = vmax.xlane.f32.xlu0 %v945
      %v947 = vpop.xlane.xlu0 %946
      %v948 = vsub.f32 %v944, %v947
      %v949 = vmul.f32 %v948, 1.442695
      %v950 = vpow.pop %v949
      %v951 = vsel %vm553, %v950, 0.0
      %952 = vadd.xlane.f32.xlu0 %v951
      %v953 = vpop.xlane.xlu0 %952
      %v954 = vrcp.pop %v953
      %v955 = vmul.f32 %v950, %v954
      %v956 = vpack.c.bf16 %v955, %v955
      %957 = vrot.lane.b32.xlu0 %v549, 40
      %v958 = vpop.permute.xlu0 %957
      %v960 = vsel %vm553, %v956, 0
      %v963 = vsel %vm625, %v958, 0
      %965 = vmatprep.subr.bf16.mxu0 0
      %966 = vmatpush1.bf16.msra.mxu0 %v963
      %967 = vmatprep.subr.bf16.mxu0 0
      %968 = vmatpush1.bf16.msra.mxu0 0
      %969 = vmatprep.subr.bf16.mxu0 0
      %970 = vmatpush1.bf16.msra.mxu0 0
      %971 = vmatprep.subr.bf16.mxu0 0
      %972 = vmatpush1.bf16.msra.mxu0 0
      %973 = vmatprep.subr.bf16.mxu0 0
      %974 = vmatpush1.bf16.msra.mxu0 0
      %975 = vmatprep.subr.bf16.mxu0 0
      %976 = vmatpush1.bf16.msra.mxu0 0
      %977 = vmatprep.subr.bf16.mxu0 0
      %978 = vmatpush1.bf16.msra.mxu0 0
      %979 = vmatprep.subr.bf16.mxu0 0
      %980 = vmatpush1.bf16.msra.mxu0 0
      %981 = vmatprep.subr.bf16.mxu0 0
      %982 = vmatpush1.bf16.msra.mxu0 0
      %983 = vmatprep.subr.bf16.mxu0 0
      %984 = vmatpush1.bf16.msra.mxu0 0
      %985 = vmatprep.subr.bf16.mxu0 0
      %986 = vmatpush1.bf16.msra.mxu0 0
      %987 = vmatprep.subr.bf16.mxu0 0
      %988 = vmatpush1.bf16.msra.mxu0 0
      %989 = vmatprep.subr.bf16.mxu0 0
      %990 = vmatpush1.bf16.msra.mxu0 0
      %991 = vmatprep.subr.bf16.mxu0 0
      %992 = vmatpush1.bf16.msra.mxu0 0
      %993 = vmatprep.subr.bf16.mxu0 0
      %994 = vmatpush1.bf16.msra.mxu0 0
      %995 = vmatprep.subr.bf16.mxu0 0
      %996 = vmatpush1.bf16.msra.mxu0 0
      %997 = vmatprep.mubr.bf16.mxu0 0
      %998 = vmatmul.mubr.bf16.gmra.mrb[0].mxu0 %v960
      %v999 = vpop.f32.mrb[0].mxu0
      %v1000 = vadd.f32 0.0, %v999
      %v1001 = vpop.f32.mrb[0].mxu0
      %v1002 = vpop.f32.mrb[0].mxu0
      %v1003 = vpop.f32.mrb[0].mxu0
      %1004 = vdwg.mxu0
      %1006 = vrot.lane.b32.xlu0 %v776, 8
      %v1007 = vpop.permute.xlu0 %1006
      %1010 = vrot.lane.b32.xlu0 %v888, 16
      %v1011 = vpop.permute.xlu0 %1010
      %1014 = vrot.lane.b32.xlu0 %v1000, 24
      %v1015 = vpop.permute.xlu0 %1014
      %v1017 = vsel %vm553, %v664, %v1007
      %vm1018 = vcmask 130048
      %v1019 = vsel %vm1018, %v1017, %v1011
      %vm1020 = vcmask 195584
      %v1021 = vsel %vm1020, %v1019, %v1015
      %v1022 = vld [vmem:[%s4] sm:$0xf]
      %v1023 = vld [vmem:[%s4 + $0x4] sm:$0xf]
      %v1024 = vld [vmem:[%s4 + $0x8] sm:$0xf]
      %v1025 = vld [vmem:[%s4 + $0xc] sm:$0xf]
      %v1026 = vpack.c.bf16 %v1021, %v1021
      %v1027 = vld [vmem:[%s5] sm:$0x1]
      %v1029 = vlaneseq
      %v1030 = vshrl.u32 %v1029, 7
      %v1031 = vsub.s32 0, %v1030
      %v1032 = vrot.slane %v1027, %v1031
      %v1038 = vunpack.c.l.b16 %v1022
      %v1039 = vunpack.c.l.b16 %v1023
      %v1040 = vunpack.c.l.b16 %v1024
      %v1041 = vunpack.c.l.b16 %v1025
      %v1042 = vpack.c.b16 %v1039, %v1038
      %v1043 = vpack.c.b16 %v1041, %v1040
      %v1047 = vsel %vm505, %v1026, 0
      %1049 = vmatprep.subr.bf16.mxu0 0
      %1050 = vmatpush1.bf16.msra.mxu0 %v1042
      %1051 = vmatprep.subr.bf16.mxu0 0
      %1052 = vmatpush1.bf16.msra.mxu0 %v1043
      %1053 = vmatprep.subr.bf16.mxu0 0
      %1054 = vmatpush1.bf16.msra.mxu0 0
      %1055 = vmatprep.subr.bf16.mxu0 0
      %1056 = vmatpush1.bf16.msra.mxu0 0
      %1057 = vmatprep.subr.bf16.mxu0 0
      %1058 = vmatpush1.bf16.msra.mxu0 0
      %1059 = vmatprep.subr.bf16.mxu0 0
      %1060 = vmatpush1.bf16.msra.mxu0 0
      %1061 = vmatprep.subr.bf16.mxu0 0
      %1062 = vmatpush1.bf16.msra.mxu0 0
      %1063 = vmatprep.subr.bf16.mxu0 0
      %1064 = vmatpush1.bf16.msra.mxu0 0
      %1065 = vmatprep.subr.bf16.mxu0 0
      %1066 = vmatpush1.bf16.msra.mxu0 0
      %1067 = vmatprep.subr.bf16.mxu0 0
      %1068 = vmatpush1.bf16.msra.mxu0 0
      %1069 = vmatprep.subr.bf16.mxu0 0
      %1070 = vmatpush1.bf16.msra.mxu0 0
      %1071 = vmatprep.subr.bf16.mxu0 0
      %1072 = vmatpush1.bf16.msra.mxu0 0
      %1073 = vmatprep.subr.bf16.mxu0 0
      %1074 = vmatpush1.bf16.msra.mxu0 0
      %1075 = vmatprep.subr.bf16.mxu0 0
      %1076 = vmatpush1.bf16.msra.mxu0 0
      %1077 = vmatprep.subr.bf16.mxu0 0
      %1078 = vmatpush1.bf16.msra.mxu0 0
      %1079 = vmatprep.subr.bf16.mxu0 0
      %1080 = vmatpush1.bf16.msra.mxu0 0
      %1081 = vmatprep.mubr.bf16.mxu0 0
      %1082 = vmatmul.mubr.bf16.gmra.mrb[0].mxu0 %v1047
      %v1083 = vpop.f32.mrb[0].mxu0
      %v1084 = vadd.f32 %v1032, %v1083
      %v1085 = vpop.f32.mrb[0].mxu0
      %v1086 = vpop.f32.mrb[0].mxu0
      %v1087 = vpop.f32.mrb[0].mxu0
      %1088 = vdwg.mxu0
      %v1089 = vadd.f32 %v478, %v1084
      %v1090 = vld [vmem:[%s6] sm:$0x1]
      %v1091 = vld [vmem:[%s7] sm:$0x1]
      %v1092 = vsel %vm505, %v1089, 0.0
      %1093 = vadd.xlane.f32.xlu0 %v1092
      %v1094 = vpop.xlane.xlu0 %1093
      %v1095 = vrcp.pop 32.0
      %v1096 = vmul.f32 %v1094, %v1095
      %v1097 = vsub.f32 %v1089, %v1096
      %v1098 = vmul.f32 %v1097, %v1097
      %v1099 = vsel %vm505, %v1098, 0.0
      %1100 = vadd.xlane.f32.xlu0 %v1099
      %v1101 = vpop.xlane.xlu0 %1100
      %v1102 = vmul.f32 %v1101, %v1095
      %v1103 = vadd.f32 %v1102, 1e-05
      %v1104 = vrsqrt.pop %v1103
      %v1105 = vmul.f32 %v1097, %v1104
      %v1107 = vlaneseq
      %v1108 = vshrl.u32 %v1107, 7
      %v1109 = vsub.s32 0, %v1108
      %v1110 = vrot.slane %v1090, %v1109
      %v1112 = vmul.f32 %v1105, %v1110
      %v1114 = vlaneseq
      %v1115 = vshrl.u32 %v1114, 7
      %v1116 = vsub.s32 0, %v1115
      %v1117 = vrot.slane %v1091, %v1116
      %v1119 = vadd.f32 %v1112, %v1117
      %v1120 = vld [vmem:[%s8] sm:$0xf]
      %v1121 = vld [vmem:[%s8 + $0x4] sm:$0xf]
      %v1122 = vld [vmem:[%s8 + $0x8] sm:$0xf]
      %v1123 = vld [vmem:[%s8 + $0xc] sm:$0xf]
      %v1124 = vpack.c.bf16 %v1119, %v1119
      %v1125 = vld [vmem:[%s9] sm:$0x1]
      %v1127 = vlaneseq
      %v1128 = vshrl.u32 %v1127, 7
      %v1129 = vsub.s32 0, %v1128
      %v1130 = vrot.slane %v1125, %v1129
      %v1136 = vunpack.c.l.b16 %v1120
      %v1137 = vunpack.c.l.b16 %v1121
      %v1138 = vunpack.c.l.b16 %v1122
      %v1139 = vunpack.c.l.b16 %v1123
      %v1140 = vpack.c.b16 %v1137, %v1136
      %v1141 = vpack.c.b16 %v1139, %v1138
      %v1145 = vsel %vm505, %v1124, 0
      %1147 = vmatprep.subr.bf16.mxu0 0
      %1148 = vmatpush1.bf16.msra.mxu0 %v1140
      %1149 = vmatprep.subr.bf16.mxu0 0
      %1150 = vmatpush1.bf16.msra.mxu0 %v1141
      %1151 = vmatprep.subr.bf16.mxu0 0
      %1152 = vmatpush1.bf16.msra.mxu0 0
      %1153 = vmatprep.subr.bf16.mxu0 0
      %1154 = vmatpush1.bf16.msra.mxu0 0
      %1155 = vmatprep.subr.bf16.mxu0 0
      %1156 = vmatpush1.bf16.msra.mxu0 0
      %1157 = vmatprep.subr.bf16.mxu0 0
      %1158 = vmatpush1.bf16.msra.mxu0 0
      %1159 = vmatprep.subr.bf16.mxu0 0
      %1160 = vmatpush1.bf16.msra.mxu0 0
      %1161 = vmatprep.subr.bf16.mxu0 0
      %1162 = vmatpush1.bf16.msra.mxu0 0
      %1163 = vmatprep.subr.bf16.mxu0 0
      %1164 = vmatpush1.bf16.msra.mxu0 0
      %1165 = vmatprep.subr.bf16.mxu0 0
      %1166 = vmatpush1.bf16.msra.mxu0 0
      %1167 = vmatprep.subr.bf16.mxu0 0
      %1168 = vmatpush1.bf16.msra.mxu0 0
      %1169 = vmatprep.subr.bf16.mxu0 0
      %1170 = vmatpush1.bf16.msra.mxu0 0
      %1171 = vmatprep.subr.bf16.mxu0 0
      %1172 = vmatpush1.bf16.msra.mxu0 0
      %1173 = vmatprep.subr.bf16.mxu0 0
      %1174 = vmatpush1.bf16.msra.mxu0 0
      %1175 = vmatprep.subr.bf16.mxu0 0
      %1176 = vmatpush1.bf16.msra.mxu0 0
      %1177 = vmatprep.subr.bf16.mxu0 0
      %1178 = vmatpush1.bf16.msra.mxu0 0
      %1179 = vmatprep.mubr.bf16.mxu0 0
      %1180 = vmatmul.mubr.bf16.gmra.mrb[0].mxu0 %v1145
      %v1181 = vpop.f32.mrb[0].mxu0
      %v1182 = vadd.f32 %v1130, %v1181
      %v1183 = vpop.f32.mrb[0].mxu0
      %v1184 = vpop.f32.mrb[0].mxu0
      %v1185 = vpop.f32.mrb[0].mxu0
      %1186 = vdwg.mxu0
      %v1187 = vmax.f32 %v1182, 0.0
      %v1188 = vld [vmem:[%s10] sm:$0xf]
      %v1189 = vld [vmem:[%s10 + $0x4] sm:$0xf]
      %v1190 = vld [vmem:[%s10 + $0x8] sm:$0xf]
      %v1191 = vld [vmem:[%s10 + $0xc] sm:$0xf]
      %v1192 = vld [vmem:[%s10 + $0x10] sm:$0xf]
      %v1193 = vld [vmem:[%s10 + $0x14] sm:$0xf]
      %v1194 = vld [vmem:[%s10 + $0x18] sm:$0xf]
      %v1195 = vld [vmem:[%s10 + $0x1c] sm:$0xf]
      %v1196 = vpack.c.bf16 %v1187, %v1187
      %v1197 = vld [vmem:[%s11] sm:$0x1]
      %v1199 = vlaneseq
      %v1200 = vshrl.u32 %v1199, 7
      %v1201 = vsub.s32 0, %v1200
      %v1202 = vrot.slane %v1197, %v1201
      %v1212 = vunpack.c.l.b16 %v1188
      %v1213 = vunpack.c.l.b16 %v1189
      %v1214 = vunpack.c.l.b16 %v1190
      %v1215 = vunpack.c.l.b16 %v1191
      %v1216 = vunpack.c.l.b16 %v1192
      %v1217 = vunpack.c.l.b16 %v1193
      %v1218 = vunpack.c.l.b16 %v1194
      %v1219 = vunpack.c.l.b16 %v1195
      %v1220 = vpack.c.b16 %v1213, %v1212
      %v1221 = vpack.c.b16 %v1215, %v1214
      %v1222 = vpack.c.b16 %v1217, %v1216
      %v1223 = vpack.c.b16 %v1219, %v1218
      %vm1228 = vcmask 523264
      %v1230 = vsel %vm1228, %v1196, 0
      %1232 = vmatprep.subr.bf16.mxu0 0
      %1233 = vmatpush1.bf16.msra.mxu0 %v1220
      %1234 = vmatprep.subr.bf16.mxu0 0
      %1235 = vmatpush1.bf16.msra.mxu0 %v1221
      %1236 = vmatprep.subr.bf16.mxu0 0
      %1237 = vmatpush1.bf16.msra.mxu0 %v1222
      %1238 = vmatprep.subr.bf16.mxu0 0
      %1239 = vmatpush1.bf16.msra.mxu0 %v1223
      %1240 = vmatprep.subr.bf16.mxu0 0
      %1241 = vmatpush1.bf16.msra.mxu0 0
      %1242 = vmatprep.subr.bf16.mxu0 0
      %1243 = vmatpush1.bf16.msra.mxu0 0
      %1244 = vmatprep.subr.bf16.mxu0 0
      %1245 = vmatpush1.bf16.msra.mxu0 0
      %1246 = vmatprep.subr.bf16.mxu0 0
      %1247 = vmatpush1.bf16.msra.mxu0 0
      %1248 = vmatprep.subr.bf16.mxu0 0
      %1249 = vmatpush1.bf16.msra.mxu0 0
      %1250 = vmatprep.subr.bf16.mxu0 0
      %1251 = vmatpush1.bf16.msra.mxu0 0
      %1252 = vmatprep.subr.bf16.mxu0 0
      %1253 = vmatpush1.bf16.msra.mxu0 0
      %1254 = vmatprep.subr.bf16.mxu0 0
      %1255 = vmatpush1.bf16.msra.mxu0 0
      %1256 = vmatprep.subr.bf16.mxu0 0
      %1257 = vmatpush1.bf16.msra.mxu0 0
      %1258 = vmatprep.subr.bf16.mxu0 0
      %1259 = vmatpush1.bf16.msra.mxu0 0
      %1260 = vmatprep.subr.bf16.mxu0 0
      %1261 = vmatpush1.bf16.msra.mxu0 0
      %1262 = vmatprep.subr.bf16.mxu0 0
      %1263 = vmatpush1.bf16.msra.mxu0 0
      %1264 = vmatprep.mubr.bf16.mxu0 0
      %1265 = vmatmul.mubr.bf16.gmra.mrb[0].mxu0 %v1230
      %v1266 = vpop.f32.mrb[0].mxu0
      %v1267 = vadd.f32 %v1202, %v1266
      %v1268 = vpop.f32.mrb[0].mxu0
      %v1269 = vpop.f32.mrb[0].mxu0
      %v1270 = vpop.f32.mrb[0].mxu0
      %1271 = vdwg.mxu0
      %v1272 = vadd.f32 %v1119, %v1267
      %v1273 = vld [vmem:[%s12] sm:$0x1]
      %v1274 = vld [vmem:[%s13] sm:$0x1]
      %v1275 = vsel %vm505, %v1272, 0.0
      %1276 = vadd.xlane.f32.xlu0 %v1275
      %v1277 = vpop.xlane.xlu0 %1276
      %v1278 = vmul.f32 %v1277, %v1095
      %v1279 = vsub.f32 %v1272, %v1278
      %v1280 = vmul.f32 %v1279, %v1279
      %v1281 = vsel %vm505, %v1280, 0.0
      %1282 = vadd.xlane.f32.xlu0 %v1281
      %v1283 = vpop.xlane.xlu0 %1282
      %v1284 = vmul.f32 %v1283, %v1095
      %v1285 = vadd.f32 %v1284, 1e-05
      %v1286 = vrsqrt.pop %v1285
      %v1287 = vmul.f32 %v1279, %v1286
      %v1289 = vlaneseq
      %v1290 = vshrl.u32 %v1289, 7
      %v1291 = vsub.s32 0, %v1290
      %v1292 = vrot.slane %v1273, %v1291
      %v1294 = vmul.f32 %v1287, %v1292
      %v1296 = vlaneseq
      %v1297 = vshrl.u32 %v1296, 7
      %v1298 = vsub.s32 0, %v1297
      %v1299 = vrot.slane %v1274, %v1298
      %v1301 = vadd.f32 %v1294, %v1299
      %1302 = vst.msk [vmem:[%s476] sm:$0xff] %vm505, %v1301
      %p1303 = scmp.lt.s32.totalorder %s25, 1
      %s1304 = scalar_select %p1303, %s25, 1
      %s1305 = smul.addr %s1304, 8
      %s1306 = scalar_lea.vmem %s14, %s1305
      // Predicated region
      $region77: #{_lambda_.5} parent=75 // pred_check
        %p1307 = pneg %p347
      $region78: #{_lambda_.5} parent=75 // pred_check_branch
        %1309 = sbr.rel (%p1307) target = $region80
      $region79: #{_lambda_.5} parent=75 // pred_region
        _
      $region80: #{_lambda_.5} parent=75 // pred_fallthru
        _
    $region76: #{_lambda_.5} parent=5 // pred_fallthru
      _
    %p1310 = scmp.le.s32.totalorder 2, %s20
    // Predicated region
    $region81: #{_lambda_.5} parent=5 // pred_check
      %p1311 = pneg %p1310
    $region82: #{_lambda_.5} parent=5 // pred_check_branch
      %1313 = sbr.rel (%p1311) target = $region84
    $region83: #{_lambda_.5} parent=5 // pred_region
      %s1314 = ssub.s32 %s20, 2
      // Predicated region
      $region85: #{_lambda_.5} parent=83 // pred_check
        %p1315 = pneg %p353
      $region86: #{_lambda_.5} parent=83 // pred_check_branch
        %1317 = sbr.rel (%p1315) target = $region88
      $region87: #{_lambda_.5} parent=83 // pred_region
        %p1318 = scmp.lt.s32.totalorder %s26, 1
        %s1319 = scalar_select %p1318, %s26, 1
        %s1320 = smul.addr %s1319, 8
        %s1321 = scalar_lea.vmem %s14, %s1320
      $region88: #{_lambda_.5} parent=83 // pred_fallthru
        _
    $region84: #{_lambda_.5} parent=5 // pred_fallthru
      _
  $region6: #{_lambda_.5} parent=0 // loop_footer
    %s24 = sadd.s32 1, %s20
  $region7: #{_lambda_.5} parent=0 // loop_footer_branch
    %19 = sbr.rel target = $region3
  $region8: #{_lambda_.5} parent=0 // loop_exit
    _

// kernel: _lambda_.8
$region0: #{_lambda_.8}
  #allocation0 [shape = 'u32[]', space=smem, size = 0x4, offset = 0x4, fixed_abs, tag = 'smem constant byte address 0x4 - core index']
  #allocation1 [shape = 'u32[144,128]{1,0:T(1,128)}', space=vmem, size = 0x12000, scoped, tag = 'internal scratch']
  %s0 = inlined_call_operand.vmem [shape: f32[2,8,32], index: 0, kind: input, shape index: {}]
  %s1 = inlined_call_operand.vmem [shape: f32[2,8,32], index: 1, kind: input, shape index: {}]
  %s2 = inlined_call_operand.vmem [shape: f32[2,1,8], index: 2, kind: input, shape index: {}]
  %s3 = inlined_call_operand.vmem [shape: f32[2,1,8], index: 3, kind: input, shape index: {}]
  %s4 = inlined_call_operand.vmem [shape: bf16[32,96], index: 4, kind: input, shape index: {}]
  %s5 = inlined_call_operand.vmem [shape: f32[1,96], index: 5, kind: input, shape index: {}]
  %s6 = inlined_call_operand.vmem [shape: bf16[32,32], index: 6, kind: input, shape index: {}]
  %s7 = inlined_call_operand.vmem [shape: f32[1,32], index: 7, kind: input, shape index: {}]
  %s8 = inlined_call_operand.vmem [shape: f32[1,32], index: 8, kind: input, shape index: {}]
  %s9 = inlined_call_operand.vmem [shape: f32[1,32], index: 9, kind: input, shape index: {}]
  %s10 = inlined_call_operand.vmem [shape: bf16[32,32], index: 10, kind: input, shape index: {}]
  %s11 = inlined_call_operand.vmem [shape: f32[1,32], index: 11, kind: input, shape index: {}]
  %s12 = inlined_call_operand.vmem [shape: bf16[32,64], index: 12, kind: input, shape index: {}]
  %s13 = inlined_call_operand.vmem [shape: f32[1,64], index: 13, kind: input, shape index: {}]
  %s14 = inlined_call_operand.vmem [shape: bf16[32,32], index: 14, kind: input, shape index: {}]
  %s15 = inlined_call_operand.vmem [shape: f32[1,32], index: 15, kind: input, shape index: {}]
  %s16 = inlined_call_operand.vmem [shape: f32[1,32], index: 16, kind: input, shape index: {}]
  %s17 = inlined_call_operand.vmem [shape: f32[1,32], index: 17, kind: input, shape index: {}]
  %s18 = inlined_call_operand.vmem [shape: bf16[32,64], index: 18, kind: input, shape index: {}]
  %s19 = inlined_call_operand.vmem [shape: f32[1,64], index: 19, kind: input, shape index: {}]
  %s20 = inlined_call_operand.vmem [shape: bf16[64,32], index: 20, kind: input, shape index: {}]
  %s21 = inlined_call_operand.vmem [shape: f32[1,32], index: 21, kind: input, shape index: {}]
  %s22 = inlined_call_operand.vmem [shape: f32[1,32], index: 22, kind: input, shape index: {}]
  %s23 = inlined_call_operand.vmem [shape: f32[1,32], index: 23, kind: input, shape index: {}]
  %s24 = inlined_call_operand.vmem [shape: f32[2,8,32], index: 24, kind: output, shape index: {0}]
  %s25 = inlined_call_operand.hbm [shape: f32[2,4,8,8], index: 25, kind: output, shape index: {1}]
  %26 = xla_tuple %s24, %s25
  %s27 = sld [smem:[#allocation0]]
  $region137: #{_lambda_.8} parent=0
    _
  %s29 = ssub.s32 1, %s27
  %s30 = scalar_select 0, %s29, %s27
  $region1: #{_lambda_.8} parent=0
    #allocation2 [shape = 'u8[32768]{0}', space=vmem, size = 0x8000, scoped, tag = 'output window, operand 1']
    #allocation3 [shape = 's32[2]{0}', space=sflag, size = 0x8, scoped, tag = 'scoped memory for _lambda_.8']
    %31 = vsyncpa [#allocation3], 0
    %s32 = scalar_lea.sflag [#allocation3], 1
    %33 = vsyncpa %s32, 0
    loop: start=0, step=1, limit=4
    $region2: #{_lambda_.8} parent=1 // loop_pre_header
      _
    $region3: #{_lambda_.8} parent=1 // loop_header
      %s35 = sphi 0, %s39
      %p36 = scmp.ge.s32.totalorder %s35, 4
      %s45 = sphi 0, %s47
      %s48 = sphi 0, %s45
      %s49 = sphi 0, %s48
      %s65 = sphi 0, %s49
      %s71 = sphi 0, %s73
      %s74 = sphi 0, %s71
      %s75 = sphi 0, %s74
      %s91 = sphi 0, %s75
      %s97 = sphi 0, %s99
      %s100 = sphi 0, %s97
      %s101 = sphi 0, %s100
      %s117 = sphi 0, %s101
      %s123 = sphi 0, %s125
      %s126 = sphi 0, %s123
      %s127 = sphi 0, %s126
      %s143 = sphi 0, %s127
      %s147 = sphi 0, %s147
      %s149 = sphi 0, %s147
      %s150 = sphi 0, %s149
      %s164 = sphi 0, %s150
      %s168 = sphi 0, %s168
      %s170 = sphi 0, %s168
      %s171 = sphi 0, %s170
      %s185 = sphi 0, %s171
      %s189 = sphi 0, %s189
      %s191 = sphi 0, %s189
      %s192 = sphi 0, %s191
      %s206 = sphi 0, %s192
      %s210 = sphi 0, %s210
      %s212 = sphi 0, %s210
      %s213 = sphi 0, %s212
      %s227 = sphi 0, %s213
      %s231 = sphi 0, %s231
      %s233 = sphi 0, %s231
      %s234 = sphi 0, %s233
      %s248 = sphi 0, %s234
      %s252 = sphi 0, %s252
      %s254 = sphi 0, %s252
      %s255 = sphi 0, %s254
      %s269 = sphi 0, %s255
      %s273 = sphi 0, %s273
      %s275 = sphi 0, %s273
      %s276 = sphi 0, %s275
      %s290 = sphi 0, %s276
      %s294 = sphi 0, %s294
      %s296 = sphi 0, %s294
      %s297 = sphi 0, %s296
      %s311 = sphi 0, %s297
      %s315 = sphi 0, %s315
      %s317 = sphi 0, %s315
      %s318 = sphi 0, %s317
      %s332 = sphi 0, %s318
      %s336 = sphi 0, %s336
      %s338 = sphi 0, %s336
      %s339 = sphi 0, %s338
      %s353 = sphi 0, %s339
      %s357 = sphi 0, %s357
      %s359 = sphi 0, %s357
      %s360 = sphi 0, %s359
      %s374 = sphi 0, %s360
      %s378 = sphi 0, %s378
      %s380 = sphi 0, %s378
      %s381 = sphi 0, %s380
      %s395 = sphi 0, %s381
      %s399 = sphi 0, %s399
      %s401 = sphi 0, %s399
      %s402 = sphi 0, %s401
      %s416 = sphi 0, %s402
      %s420 = sphi 0, %s420
      %s422 = sphi 0, %s420
      %s423 = sphi 0, %s422
      %s437 = sphi 0, %s423
      %s441 = sphi 0, %s441
      %s443 = sphi 0, %s441
      %s444 = sphi 0, %s443
      %s458 = sphi 0, %s444
      %s462 = sphi 0, %s462
      %s464 = sphi 0, %s462
      %s465 = sphi 0, %s464
      %s479 = sphi 0, %s465
      %s483 = sphi 0, %s483
      %s485 = sphi 0, %s483
      %s486 = sphi 0, %s485
      %s500 = sphi 0, %s486
      %s504 = sphi 0, %s504
      %s506 = sphi 0, %s504
      %s507 = sphi 0, %s506
      %s521 = sphi 0, %s507
      %s525 = sphi 0, %s525
      %s527 = sphi 0, %s525
      %s528 = sphi 0, %s527
      %s542 = sphi 0, %s528
      %s546 = sphi 0, %s546
      %s548 = sphi 0, %s546
      %s549 = sphi 0, %s548
      %s563 = sphi 0, %s549
      %s569 = sphi 0, %s571
      %s572 = sphi 0, %s569
      %s573 = sphi 0, %s572
      %s589 = sphi 0, %s573
      %s595 = sphi 0, %s597
      %s598 = sphi 0, %s595
      %s599 = sphi 0, %s598
      %s615 = sphi 0, %s599
    $region4: #{_lambda_.8} parent=1 // loop_header_branch
      %38 = sbr.rel (%p36) target = $region8
    $region5: #{_lambda_.8} parent=1 // loop_body
      %s40 = ssub.s32 %s35, 1
      %s41 = ssub.s32 %s35, 2
      %s42 = sadd.s32 %s35, 1
      %s43 = ssub.s32 %s35, %s42
      %p44 = scmp.eq.s32.totalorder %s43, 0
      %s46 = sadd.s32 %s45, 1
      %s47 = scalar_select %p44, %s45, %s46
      %p50 = pneg %p44
      %p51 = scmp.eq.s32.totalorder %s35, 1
      %p52 = por %p50, %p51
      %p53 = scmp.ne.s32.totalorder %s45, %s48
      %p54 = scmp.eq.s32.totalorder %s35, 0
      %p55 = por %p53, %p54
      %p56 = scmp.ne.s32.totalorder %s45, %s48
      %p57 = scmp.eq.s32.totalorder %s40, 1
      %p58 = por %p56, %p57
      %p59 = scmp.ne.s32.totalorder %s48, %s49
      %p60 = scmp.eq.s32.totalorder %s40, 0
      %p61 = por %p59, %p60
      %p62 = scmp.ne.s32.totalorder %s48, %s49
      %p63 = scmp.eq.s32.totalorder %s41, 1
      %p64 = por %p62, %p63
      %p66 = scmp.ne.s32.totalorder %s49, %s65
      %p67 = scmp.eq.s32.totalorder %s41, 0
      %p68 = por %p66, %p67
      %s69 = ssub.s32 %s35, %s42
      %p70 = scmp.eq.s32.totalorder %s69, 0
      %s72 = sadd.s32 %s71, 1
      %s73 = scalar_select %p70, %s71, %s72
      %p76 = pneg %p70
      %p77 = scmp.eq.s32.totalorder %s35, 1
      %p78 = por %p76, %p77
      %p79 = scmp.ne.s32.totalorder %s71, %s74
      %p80 = scmp.eq.s32.totalorder %s35, 0
      %p81 = por %p79, %p80
      %p82 = scmp.ne.s32.totalorder %s71, %s74
      %p83 = scmp.eq.s32.totalorder %s40, 1
      %p84 = por %p82, %p83
      %p85 = scmp.ne.s32.totalorder %s74, %s75
      %p86 = scmp.eq.s32.totalorder %s40, 0
      %p87 = por %p85, %p86
      %p88 = scmp.ne.s32.totalorder %s74, %s75
      %p89 = scmp.eq.s32.totalorder %s41, 1
      %p90 = por %p88, %p89
      %p92 = scmp.ne.s32.totalorder %s75, %s91
      %p93 = scmp.eq.s32.totalorder %s41, 0
      %p94 = por %p92, %p93
      %s95 = ssub.s32 %s35, %s42
      %p96 = scmp.eq.s32.totalorder %s95, 0
      %s98 = sadd.s32 %s97, 1
      %s99 = scalar_select %p96, %s97, %s98
      %p102 = pneg %p96
      %p103 = scmp.eq.s32.totalorder %s35, 1
      %p104 = por %p102, %p103
      %p105 = scmp.ne.s32.totalorder %s97, %s100
      %p106 = scmp.eq.s32.totalorder %s35, 0
      %p107 = por %p105, %p106
      %p108 = scmp.ne.s32.totalorder %s97, %s100
      %p109 = scmp.eq.s32.totalorder %s40, 1
      %p110 = por %p108, %p109
      %p111 = scmp.ne.s32.totalorder %s100, %s101
      %p112 = scmp.eq.s32.totalorder %s40, 0
      %p113 = por %p111, %p112
      %p114 = scmp.ne.s32.totalorder %s100, %s101
      %p115 = scmp.eq.s32.totalorder %s41, 1
      %p116 = por %p114, %p115
      %p118 = scmp.ne.s32.totalorder %s101, %s117
      %p119 = scmp.eq.s32.totalorder %s41, 0
      %p120 = por %p118, %p119
      %s121 = ssub.s32 %s35, %s42
      %p122 = scmp.eq.s32.totalorder %s121, 0
      %s124 = sadd.s32 %s123, 1
      %s125 = scalar_select %p122, %s123, %s124
      %p128 = pneg %p122
      %p129 = scmp.eq.s32.totalorder %s35, 1
      %p130 = por %p128, %p129
      %p131 = scmp.ne.s32.totalorder %s123, %s126
      %p132 = scmp.eq.s32.totalorder %s35, 0
      %p133 = por %p131, %p132
      %p134 = scmp.ne.s32.totalorder %s123, %s126
      %p135 = scmp.eq.s32.totalorder %s40, 1
      %p136 = por %p134, %p135
      %p137 = scmp.ne.s32.totalorder %s126, %s127
      %p138 = scmp.eq.s32.totalorder %s40, 0
      %p139 = por %p137, %p138
      %p140 = scmp.ne.s32.totalorder %s126, %s127
      %p141 = scmp.eq.s32.totalorder %s41, 1
      %p142 = por %p140, %p141
      %p144 = scmp.ne.s32.totalorder %s127, %s143
      %p145 = scmp.eq.s32.totalorder %s41, 0
      %p146 = por %p144, %p145
      %s148 = sadd.s32 %s147, 1
      %p151 = scmp.eq.s32.totalorder %s35, 1
      %p152 = scmp.ne.s32.totalorder %s147, %s149
      %p153 = scmp.eq.s32.totalorder %s35, 0
      %p154 = por %p152, %p153
      %p155 = scmp.ne.s32.totalorder %s147, %s149
      %p156 = scmp.eq.s32.totalorder %s40, 1
      %p157 = por %p155, %p156
      %p158 = scmp.ne.s32.totalorder %s149, %s150
      %p159 = scmp.eq.s32.totalorder %s40, 0
      %p160 = por %p158, %p159
      %p161 = scmp.ne.s32.totalorder %s149, %s150
      %p162 = scmp.eq.s32.totalorder %s41, 1
      %p163 = por %p161, %p162
      %p165 = scmp.ne.s32.totalorder %s150, %s164
      %p166 = scmp.eq.s32.totalorder %s41, 0
      %p167 = por %p165, %p166
      %s169 = sadd.s32 %s168, 1
      %p172 = scmp.eq.s32.totalorder %s35, 1
      %p173 = scmp.ne.s32.totalorder %s168, %s170
      %p174 = scmp.eq.s32.totalorder %s35, 0
      %p175 = por %p173, %p174
      %p176 = scmp.ne.s32.totalorder %s168, %s170
      %p177 = scmp.eq.s32.totalorder %s40, 1
      %p178 = por %p176, %p177
      %p179 = scmp.ne.s32.totalorder %s170, %s171
      %p180 = scmp.eq.s32.totalorder %s40, 0
      %p181 = por %p179, %p180
      %p182 = scmp.ne.s32.totalorder %s170, %s171
      %p183 = scmp.eq.s32.totalorder %s41, 1
      %p184 = por %p182, %p183
      %p186 = scmp.ne.s32.totalorder %s171, %s185
      %p187 = scmp.eq.s32.totalorder %s41, 0
      %p188 = por %p186, %p187
      %s190 = sadd.s32 %s189, 1
      %p193 = scmp.eq.s32.totalorder %s35, 1
      %p194 = scmp.ne.s32.totalorder %s189, %s191
      %p195 = scmp.eq.s32.totalorder %s35, 0
      %p196 = por %p194, %p195
      %p197 = scmp.ne.s32.totalorder %s189, %s191
      %p198 = scmp.eq.s32.totalorder %s40, 1
      %p199 = por %p197, %p198
      %p200 = scmp.ne.s32.totalorder %s191, %s192
      %p201 = scmp.eq.s32.totalorder %s40, 0
      %p202 = por %p200, %p201
      %p203 = scmp.ne.s32.totalorder %s191, %s192
      %p204 = scmp.eq.s32.totalorder %s41, 1
      %p205 = por %p203, %p204
      %p207 = scmp.ne.s32.totalorder %s192, %s206
      %p208 = scmp.eq.s32.totalorder %s41, 0
      %p209 = por %p207, %p208
      %s211 = sadd.s32 %s210, 1
      %p214 = scmp.eq.s32.totalorder %s35, 1
      %p215 = scmp.ne.s32.totalorder %s210, %s212
      %p216 = scmp.eq.s32.totalorder %s35, 0
      %p217 = por %p215, %p216
      %p218 = scmp.ne.s32.totalorder %s210, %s212
      %p219 = scmp.eq.s32.totalorder %s40, 1
      %p220 = por %p218, %p219
      %p221 = scmp.ne.s32.totalorder %s212, %s213
      %p222 = scmp.eq.s32.totalorder %s40, 0
      %p223 = por %p221, %p222
      %p224 = scmp.ne.s32.totalorder %s212, %s213
      %p225 = scmp.eq.s32.totalorder %s41, 1
      %p226 = por %p224, %p225
      %p228 = scmp.ne.s32.totalorder %s213, %s227
      %p229 = scmp.eq.s32.totalorder %s41, 0
      %p230 = por %p228, %p229
      %s232 = sadd.s32 %s231, 1
      %p235 = scmp.eq.s32.totalorder %s35, 1
      %p236 = scmp.ne.s32.totalorder %s231, %s233
      %p237 = scmp.eq.s32.totalorder %s35, 0
      %p238 = por %p236, %p237
      %p239 = scmp.ne.s32.totalorder %s231, %s233
      %p240 = scmp.eq.s32.totalorder %s40, 1
      %p241 = por %p239, %p240
      %p242 = scmp.ne.s32.totalorder %s233, %s234
      %p243 = scmp.eq.s32.totalorder %s40, 0
      %p244 = por %p242, %p243
      %p245 = scmp.ne.s32.totalorder %s233, %s234
      %p246 = scmp.eq.s32.totalorder %s41, 1
      %p247 = por %p245, %p246
      %p249 = scmp.ne.s32.totalorder %s234, %s248
      %p250 = scmp.eq.s32.totalorder %s41, 0
      %p251 = por %p249, %p250
      %s253 = sadd.s32 %s252, 1
      %p256 = scmp.eq.s32.totalorder %s35, 1
      %p257 = scmp.ne.s32.totalorder %s252, %s254
      %p258 = scmp.eq.s32.totalorder %s35, 0
      %p259 = por %p257, %p258
      %p260 = scmp.ne.s32.totalorder %s252, %s254
      %p261 = scmp.eq.s32.totalorder %s40, 1
      %p262 = por %p260, %p261
      %p263 = scmp.ne.s32.totalorder %s254, %s255
      %p264 = scmp.eq.s32.totalorder %s40, 0
      %p265 = por %p263, %p264
      %p266 = scmp.ne.s32.totalorder %s254, %s255
      %p267 = scmp.eq.s32.totalorder %s41, 1
      %p268 = por %p266, %p267
      %p270 = scmp.ne.s32.totalorder %s255, %s269
      %p271 = scmp.eq.s32.totalorder %s41, 0
      %p272 = por %p270, %p271
      %s274 = sadd.s32 %s273, 1
      %p277 = scmp.eq.s32.totalorder %s35, 1
      %p278 = scmp.ne.s32.totalorder %s273, %s275
      %p279 = scmp.eq.s32.totalorder %s35, 0
      %p280 = por %p278, %p279
      %p281 = scmp.ne.s32.totalorder %s273, %s275
      %p282 = scmp.eq.s32.totalorder %s40, 1
      %p283 = por %p281, %p282
      %p284 = scmp.ne.s32.totalorder %s275, %s276
      %p285 = scmp.eq.s32.totalorder %s40, 0
      %p286 = por %p284, %p285
      %p287 = scmp.ne.s32.totalorder %s275, %s276
      %p288 = scmp.eq.s32.totalorder %s41, 1
      %p289 = por %p287, %p288
      %p291 = scmp.ne.s32.totalorder %s276, %s290
      %p292 = scmp.eq.s32.totalorder %s41, 0
      %p293 = por %p291, %p292
      %s295 = sadd.s32 %s294, 1
      %p298 = scmp.eq.s32.totalorder %s35, 1
      %p299 = scmp.ne.s32.totalorder %s294, %s296
      %p300 = scmp.eq.s32.totalorder %s35, 0
      %p301 = por %p299, %p300
      %p302 = scmp.ne.s32.totalorder %s294, %s296
      %p303 = scmp.eq.s32.totalorder %s40, 1
      %p304 = por %p302, %p303
      %p305 = scmp.ne.s32.totalorder %s296, %s297
      %p306 = scmp.eq.s32.totalorder %s40, 0
      %p307 = por %p305, %p306
      %p308 = scmp.ne.s32.totalorder %s296, %s297
      %p309 = scmp.eq.s32.totalorder %s41, 1
      %p310 = por %p308, %p309
      %p312 = scmp.ne.s32.totalorder %s297, %s311
      %p313 = scmp.eq.s32.totalorder %s41, 0
      %p314 = por %p312, %p313
      %s316 = sadd.s32 %s315, 1
      %p319 = scmp.eq.s32.totalorder %s35, 1
      %p320 = scmp.ne.s32.totalorder %s315, %s317
      %p321 = scmp.eq.s32.totalorder %s35, 0
      %p322 = por %p320, %p321
      %p323 = scmp.ne.s32.totalorder %s315, %s317
      %p324 = scmp.eq.s32.totalorder %s40, 1
      %p325 = por %p323, %p324
      %p326 = scmp.ne.s32.totalorder %s317, %s318
      %p327 = scmp.eq.s32.totalorder %s40, 0
      %p328 = por %p326, %p327
      %p329 = scmp.ne.s32.totalorder %s317, %s318
      %p330 = scmp.eq.s32.totalorder %s41, 1
      %p331 = por %p329, %p330
      %p333 = scmp.ne.s32.totalorder %s318, %s332
      %p334 = scmp.eq.s32.totalorder %s41, 0
      %p335 = por %p333, %p334
      %s337 = sadd.s32 %s336, 1
      %p340 = scmp.eq.s32.totalorder %s35, 1
      %p341 = scmp.ne.s32.totalorder %s336, %s338
      %p342 = scmp.eq.s32.totalorder %s35, 0
      %p343 = por %p341, %p342
      %p344 = scmp.ne.s32.totalorder %s336, %s338
      %p345 = scmp.eq.s32.totalorder %s40, 1
      %p346 = por %p344, %p345
      %p347 = scmp.ne.s32.totalorder %s338, %s339
      %p348 = scmp.eq.s32.totalorder %s40, 0
      %p349 = por %p347, %p348
      %p350 = scmp.ne.s32.totalorder %s338, %s339
      %p351 = scmp.eq.s32.totalorder %s41, 1
      %p352 = por %p350, %p351
      %p354 = scmp.ne.s32.totalorder %s339, %s353
      %p355 = scmp.eq.s32.totalorder %s41, 0
      %p356 = por %p354, %p355
      %s358 = sadd.s32 %s357, 1
      %p361 = scmp.eq.s32.totalorder %s35, 1
      %p362 = scmp.ne.s32.totalorder %s357, %s359
      %p363 = scmp.eq.s32.totalorder %s35, 0
      %p364 = por %p362, %p363
      %p365 = scmp.ne.s32.totalorder %s357, %s359
      %p366 = scmp.eq.s32.totalorder %s40, 1
      %p367 = por %p365, %p366
      %p368 = scmp.ne.s32.totalorder %s359, %s360
      %p369 = scmp.eq.s32.totalorder %s40, 0
      %p370 = por %p368, %p369
      %p371 = scmp.ne.s32.totalorder %s359, %s360
      %p372 = scmp.eq.s32.totalorder %s41, 1
      %p373 = por %p371, %p372
      %p375 = scmp.ne.s32.totalorder %s360, %s374
      %p376 = scmp.eq.s32.totalorder %s41, 0
      %p377 = por %p375, %p376
      %s379 = sadd.s32 %s378, 1
      %p382 = scmp.eq.s32.totalorder %s35, 1
      %p383 = scmp.ne.s32.totalorder %s378, %s380
      %p384 = scmp.eq.s32.totalorder %s35, 0
      %p385 = por %p383, %p384
      %p386 = scmp.ne.s32.totalorder %s378, %s380
      %p387 = scmp.eq.s32.totalorder %s40, 1
      %p388 = por %p386, %p387
      %p389 = scmp.ne.s32.totalorder %s380, %s381
      %p390 = scmp.eq.s32.totalorder %s40, 0
      %p391 = por %p389, %p390
      %p392 = scmp.ne.s32.totalorder %s380, %s381
      %p393 = scmp.eq.s32.totalorder %s41, 1
      %p394 = por %p392, %p393
      %p396 = scmp.ne.s32.totalorder %s381, %s395
      %p397 = scmp.eq.s32.totalorder %s41, 0
      %p398 = por %p396, %p397
      %s400 = sadd.s32 %s399, 1
      %p403 = scmp.eq.s32.totalorder %s35, 1
      %p404 = scmp.ne.s32.totalorder %s399, %s401
      %p405 = scmp.eq.s32.totalorder %s35, 0
      %p406 = por %p404, %p405
      %p407 = scmp.ne.s32.totalorder %s399, %s401
      %p408 = scmp.eq.s32.totalorder %s40, 1
      %p409 = por %p407, %p408
      %p410 = scmp.ne.s32.totalorder %s401, %s402
      %p411 = scmp.eq.s32.totalorder %s40, 0
      %p412 = por %p410, %p411
      %p413 = scmp.ne.s32.totalorder %s401, %s402
      %p414 = scmp.eq.s32.totalorder %s41, 1
      %p415 = por %p413, %p414
      %p417 = scmp.ne.s32.totalorder %s402, %s416
      %p418 = scmp.eq.s32.totalorder %s41, 0
      %p419 = por %p417, %p418
      %s421 = sadd.s32 %s420, 1
      %p424 = scmp.eq.s32.totalorder %s35, 1
      %p425 = scmp.ne.s32.totalorder %s420, %s422
      %p426 = scmp.eq.s32.totalorder %s35, 0
      %p427 = por %p425, %p426
      %p428 = scmp.ne.s32.totalorder %s420, %s422
      %p429 = scmp.eq.s32.totalorder %s40, 1
      %p430 = por %p428, %p429
      %p431 = scmp.ne.s32.totalorder %s422, %s423
      %p432 = scmp.eq.s32.totalorder %s40, 0
      %p433 = por %p431, %p432
      %p434 = scmp.ne.s32.totalorder %s422, %s423
      %p435 = scmp.eq.s32.totalorder %s41, 1
      %p436 = por %p434, %p435
      %p438 = scmp.ne.s32.totalorder %s423, %s437
      %p439 = scmp.eq.s32.totalorder %s41, 0
      %p440 = por %p438, %p439
      %s442 = sadd.s32 %s441, 1
      %p445 = scmp.eq.s32.totalorder %s35, 1
      %p446 = scmp.ne.s32.totalorder %s441, %s443
      %p447 = scmp.eq.s32.totalorder %s35, 0
      %p448 = por %p446, %p447
      %p449 = scmp.ne.s32.totalorder %s441, %s443
      %p450 = scmp.eq.s32.totalorder %s40, 1
      %p451 = por %p449, %p450
      %p452 = scmp.ne.s32.totalorder %s443, %s444
      %p453 = scmp.eq.s32.totalorder %s40, 0
      %p454 = por %p452, %p453
      %p455 = scmp.ne.s32.totalorder %s443, %s444
      %p456 = scmp.eq.s32.totalorder %s41, 1
      %p457 = por %p455, %p456
      %p459 = scmp.ne.s32.totalorder %s444, %s458
      %p460 = scmp.eq.s32.totalorder %s41, 0
      %p461 = por %p459, %p460
      %s463 = sadd.s32 %s462, 1
      %p466 = scmp.eq.s32.totalorder %s35, 1
      %p467 = scmp.ne.s32.totalorder %s462, %s464
      %p468 = scmp.eq.s32.totalorder %s35, 0
      %p469 = por %p467, %p468
      %p470 = scmp.ne.s32.totalorder %s462, %s464
      %p471 = scmp.eq.s32.totalorder %s40, 1
      %p472 = por %p470, %p471
      %p473 = scmp.ne.s32.totalorder %s464, %s465
      %p474 = scmp.eq.s32.totalorder %s40, 0
      %p475 = por %p473, %p474
      %p476 = scmp.ne.s32.totalorder %s464, %s465
      %p477 = scmp.eq.s32.totalorder %s41, 1
      %p478 = por %p476, %p477
      %p480 = scmp.ne.s32.totalorder %s465, %s479
      %p481 = scmp.eq.s32.totalorder %s41, 0
      %p482 = por %p480, %p481
      %s484 = sadd.s32 %s483, 1
      %p487 = scmp.eq.s32.totalorder %s35, 1
      %p488 = scmp.ne.s32.totalorder %s483, %s485
      %p489 = scmp.eq.s32.totalorder %s35, 0
      %p490 = por %p488, %p489
      %p491 = scmp.ne.s32.totalorder %s483, %s485
      %p492 = scmp.eq.s32.totalorder %s40, 1
      %p493 = por %p491, %p492
      %p494 = scmp.ne.s32.totalorder %s485, %s486
      %p495 = scmp.eq.s32.totalorder %s40, 0
      %p496 = por %p494, %p495
      %p497 = scmp.ne.s32.totalorder %s485, %s486
      %p498 = scmp.eq.s32.totalorder %s41, 1
      %p499 = por %p497, %p498
      %p501 = scmp.ne.s32.totalorder %s486, %s500
      %p502 = scmp.eq.s32.totalorder %s41, 0
      %p503 = por %p501, %p502
      %s505 = sadd.s32 %s504, 1
      %p508 = scmp.eq.s32.totalorder %s35, 1
      %p509 = scmp.ne.s32.totalorder %s504, %s506
      %p510 = scmp.eq.s32.totalorder %s35, 0
      %p511 = por %p509, %p510
      %p512 = scmp.ne.s32.totalorder %s504, %s506
      %p513 = scmp.eq.s32.totalorder %s40, 1
      %p514 = por %p512, %p513
      %p515 = scmp.ne.s32.totalorder %s506, %s507
      %p516 = scmp.eq.s32.totalorder %s40, 0
      %p517 = por %p515, %p516
      %p518 = scmp.ne.s32.totalorder %s506, %s507
      %p519 = scmp.eq.s32.totalorder %s41, 1
      %p520 = por %p518, %p519
      %p522 = scmp.ne.s32.totalorder %s507, %s521
      %p523 = scmp.eq.s32.totalorder %s41, 0
      %p524 = por %p522, %p523
      %s526 = sadd.s32 %s525, 1
      %p529 = scmp.eq.s32.totalorder %s35, 1
      %p530 = scmp.ne.s32.totalorder %s525, %s527
      %p531 = scmp.eq.s32.totalorder %s35, 0
      %p532 = por %p530, %p531
      %p533 = scmp.ne.s32.totalorder %s525, %s527
      %p534 = scmp.eq.s32.totalorder %s40, 1
      %p535 = por %p533, %p534
      %p536 = scmp.ne.s32.totalorder %s527, %s528
      %p537 = scmp.eq.s32.totalorder %s40, 0
      %p538 = por %p536, %p537
      %p539 = scmp.ne.s32.totalorder %s527, %s528
      %p540 = scmp.eq.s32.totalorder %s41, 1
      %p541 = por %p539, %p540
      %p543 = scmp.ne.s32.totalorder %s528, %s542
      %p544 = scmp.eq.s32.totalorder %s41, 0
      %p545 = por %p543, %p544
      %s547 = sadd.s32 %s546, 1
      %p550 = scmp.eq.s32.totalorder %s35, 1
      %p551 = scmp.ne.s32.totalorder %s546, %s548
      %p552 = scmp.eq.s32.totalorder %s35, 0
      %p553 = por %p551, %p552
      %p554 = scmp.ne.s32.totalorder %s546, %s548
      %p555 = scmp.eq.s32.totalorder %s40, 1
      %p556 = por %p554, %p555
      %p557 = scmp.ne.s32.totalorder %s548, %s549
      %p558 = scmp.eq.s32.totalorder %s40, 0
      %p559 = por %p557, %p558
      %p560 = scmp.ne.s32.totalorder %s548, %s549
      %p561 = scmp.eq.s32.totalorder %s41, 1
      %p562 = por %p560, %p561
      %p564 = scmp.ne.s32.totalorder %s549, %s563
      %p565 = scmp.eq.s32.totalorder %s41, 0
      %p566 = por %p564, %p565
      %s567 = ssub.s32 %s35, %s42
      %p568 = scmp.eq.s32.totalorder %s567, 0
      %s570 = sadd.s32 %s569, 1
      %s571 = scalar_select %p568, %s569, %s570
      %p574 = pneg %p568
      %p575 = scmp.eq.s32.totalorder %s35, 1
      %p576 = por %p574, %p575
      %p577 = scmp.ne.s32.totalorder %s569, %s572
      %p578 = scmp.eq.s32.totalorder %s35, 0
      %p579 = por %p577, %p578
      %p580 = scmp.ne.s32.totalorder %s569, %s572
      %p581 = scmp.eq.s32.totalorder %s40, 1
      %p582 = por %p580, %p581
      %p583 = scmp.ne.s32.totalorder %s572, %s573
      %p584 = scmp.eq.s32.totalorder %s40, 0
      %p585 = por %p583, %p584
      %p586 = scmp.ne.s32.totalorder %s572, %s573
      %p587 = scmp.eq.s32.totalorder %s41, 1
      %p588 = por %p586, %p587
      %p590 = scmp.ne.s32.totalorder %s573, %s589
      %p591 = scmp.eq.s32.totalorder %s41, 0
      %p592 = por %p590, %p591
      %s593 = ssub.s32 %s35, %s42
      %p594 = scmp.eq.s32.totalorder %s593, 0
      %s596 = sadd.s32 %s595, 1
      %s597 = scalar_select %p594, %s595, %s596
      %p600 = pneg %p594
      %p601 = scmp.eq.s32.totalorder %s35, 1
      %p602 = por %p600, %p601
      %p603 = scmp.ne.s32.totalorder %s595, %s598
      %p604 = scmp.eq.s32.totalorder %s35, 0
      %p605 = por %p603, %p604
      %p606 = scmp.ne.s32.totalorder %s595, %s598
      %p607 = scmp.eq.s32.totalorder %s40, 1
      %p608 = por %p606, %p607
      %p609 = scmp.ne.s32.totalorder %s598, %s599
      %p610 = scmp.eq.s32.totalorder %s40, 0
      %p611 = por %p609, %p610
      %p612 = scmp.ne.s32.totalorder %s598, %s599
      %p613 = scmp.eq.s32.totalorder %s41, 1
      %p614 = por %p612, %p613
      %p616 = scmp.ne.s32.totalorder %s599, %s615
      %p617 = scmp.eq.s32.totalorder %s41, 0
      %p618 = por %p616, %p617
      %p619 = scmp.le.s32.totalorder 1, %s35
      %p620 = scmp.lt.s32.totalorder %s35, 3
      %p621 = pnand %p619, %p620
      %p622 = pneg %p621
      // Predicated region
      $region9: #{_lambda_.8} parent=5 // pred_check
        _
      $region10: #{_lambda_.8} parent=5 // pred_check_branch
        %624 = sbr.rel (%p621) target = $region12
      $region11: #{_lambda_.8} parent=5 // pred_region
        %s625 = ssub.s32 %s35, 1
        // Predicated region
        $region13: #{_lambda_.8} parent=11 // pred_check
          %p626 = pneg %p160
        $region14: #{_lambda_.8} parent=11 // pred_check_branch
          %628 = sbr.rel (%p626) target = $region16
        $region15: #{_lambda_.8} parent=11 // pred_region
          _
        $region16: #{_lambda_.8} parent=11 // pred_fallthru
          _
        // Predicated region
        $region17: #{_lambda_.8} parent=11 // pred_check
          %p629 = pneg %p181
        $region18: #{_lambda_.8} parent=11 // pred_check_branch
          %631 = sbr.rel (%p629) target = $region20
        $region19: #{_lambda_.8} parent=11 // pred_region
          _
        $region20: #{_lambda_.8} parent=11 // pred_fallthru
          _
        // Predicated region
        $region21: #{_lambda_.8} parent=11 // pred_check
          %p632 = pneg %p202
        $region22: #{_lambda_.8} parent=11 // pred_check_branch
          %634 = sbr.rel (%p632) target = $region24
        $region23: #{_lambda_.8} parent=11 // pred_region
          _
        $region24: #{_lambda_.8} parent=11 // pred_fallthru
          _
        // Predicated region
        $region25: #{_lambda_.8} parent=11 // pred_check
          %p635 = pneg %p223
        $region26: #{_lambda_.8} parent=11 // pred_check_branch
          %637 = sbr.rel (%p635) target = $region28
        $region27: #{_lambda_.8} parent=11 // pred_region
          _
        $region28: #{_lambda_.8} parent=11 // pred_fallthru
          _
        // Predicated region
        $region29: #{_lambda_.8} parent=11 // pred_check
          %p638 = pneg %p244
        $region30: #{_lambda_.8} parent=11 // pred_check_branch
          %640 = sbr.rel (%p638) target = $region32
        $region31: #{_lambda_.8} parent=11 // pred_region
          _
        $region32: #{_lambda_.8} parent=11 // pred_fallthru
          _
        // Predicated region
        $region33: #{_lambda_.8} parent=11 // pred_check
          %p641 = pneg %p265
        $region34: #{_lambda_.8} parent=11 // pred_check_branch
          %643 = sbr.rel (%p641) target = $region36
        $region35: #{_lambda_.8} parent=11 // pred_region
          _
        $region36: #{_lambda_.8} parent=11 // pred_fallthru
          _
        // Predicated region
        $region37: #{_lambda_.8} parent=11 // pred_check
          %p644 = pneg %p286
        $region38: #{_lambda_.8} parent=11 // pred_check_branch
          %646 = sbr.rel (%p644) target = $region40
        $region39: #{_lambda_.8} parent=11 // pred_region
          _
        $region40: #{_lambda_.8} parent=11 // pred_fallthru
          _
        // Predicated region
        $region41: #{_lambda_.8} parent=11 // pred_check
          %p647 = pneg %p307
        $region42: #{_lambda_.8} parent=11 // pred_check_branch
          %649 = sbr.rel (%p647) target = $region44
        $region43: #{_lambda_.8} parent=11 // pred_region
          _
        $region44: #{_lambda_.8} parent=11 // pred_fallthru
          _
        // Predicated region
        $region45: #{_lambda_.8} parent=11 // pred_check
          %p650 = pneg %p328
        $region46: #{_lambda_.8} parent=11 // pred_check_branch
          %652 = sbr.rel (%p650) target = $region48
        $region47: #{_lambda_.8} parent=11 // pred_region
          _
        $region48: #{_lambda_.8} parent=11 // pred_fallthru
          _
        // Predicated region
        $region49: #{_lambda_.8} parent=11 // pred_check
          %p653 = pneg %p349
        $region50: #{_lambda_.8} parent=11 // pred_check_branch
          %655 = sbr.rel (%p653) target = $region52
        $region51: #{_lambda_.8} parent=11 // pred_region
          _
        $region52: #{_lambda_.8} parent=11 // pred_fallthru
          _
        // Predicated region
        $region53: #{_lambda_.8} parent=11 // pred_check
          %p656 = pneg %p370
        $region54: #{_lambda_.8} parent=11 // pred_check_branch
          %658 = sbr.rel (%p656) target = $region56
        $region55: #{_lambda_.8} parent=11 // pred_region
          _
        $region56: #{_lambda_.8} parent=11 // pred_fallthru
          _
        // Predicated region
        $region57: #{_lambda_.8} parent=11 // pred_check
          %p659 = pneg %p391
        $region58: #{_lambda_.8} parent=11 // pred_check_branch
          %661 = sbr.rel (%p659) target = $region60
        $region59: #{_lambda_.8} parent=11 // pred_region
          _
        $region60: #{_lambda_.8} parent=11 // pred_fallthru
          _
        // Predicated region
        $region61: #{_lambda_.8} parent=11 // pred_check
          %p662 = pneg %p412
        $region62: #{_lambda_.8} parent=11 // pred_check_branch
          %664 = sbr.rel (%p662) target = $region64
        $region63: #{_lambda_.8} parent=11 // pred_region
          _
        $region64: #{_lambda_.8} parent=11 // pred_fallthru
          _
        // Predicated region
        $region65: #{_lambda_.8} parent=11 // pred_check
          %p665 = pneg %p433
        $region66: #{_lambda_.8} parent=11 // pred_check_branch
          %667 = sbr.rel (%p665) target = $region68
        $region67: #{_lambda_.8} parent=11 // pred_region
          _
        $region68: #{_lambda_.8} parent=11 // pred_fallthru
          _
        // Predicated region
        $region69: #{_lambda_.8} parent=11 // pred_check
          %p668 = pneg %p454
        $region70: #{_lambda_.8} parent=11 // pred_check_branch
          %670 = sbr.rel (%p668) target = $region72
        $region71: #{_lambda_.8} parent=11 // pred_region
          _
        $region72: #{_lambda_.8} parent=11 // pred_fallthru
          _
        // Predicated region
        $region73: #{_lambda_.8} parent=11 // pred_check
          %p671 = pneg %p475
        $region74: #{_lambda_.8} parent=11 // pred_check_branch
          %673 = sbr.rel (%p671) target = $region76
        $region75: #{_lambda_.8} parent=11 // pred_region
          _
        $region76: #{_lambda_.8} parent=11 // pred_fallthru
          _
        // Predicated region
        $region77: #{_lambda_.8} parent=11 // pred_check
          %p674 = pneg %p496
        $region78: #{_lambda_.8} parent=11 // pred_check_branch
          %676 = sbr.rel (%p674) target = $region80
        $region79: #{_lambda_.8} parent=11 // pred_region
          _
        $region80: #{_lambda_.8} parent=11 // pred_fallthru
          _
        // Predicated region
        $region81: #{_lambda_.8} parent=11 // pred_check
          %p677 = pneg %p517
        $region82: #{_lambda_.8} parent=11 // pred_check_branch
          %679 = sbr.rel (%p677) target = $region84
        $region83: #{_lambda_.8} parent=11 // pred_region
          _
        $region84: #{_lambda_.8} parent=11 // pred_fallthru
          _
        // Predicated region
        $region85: #{_lambda_.8} parent=11 // pred_check
          %p680 = pneg %p538
        $region86: #{_lambda_.8} parent=11 // pred_check_branch
          %682 = sbr.rel (%p680) target = $region88
        $region87: #{_lambda_.8} parent=11 // pred_region
          _
        $region88: #{_lambda_.8} parent=11 // pred_fallthru
          _
        // Predicated region
        $region89: #{_lambda_.8} parent=11 // pred_check
          %p683 = pneg %p559
        $region90: #{_lambda_.8} parent=11 // pred_check_branch
          %685 = sbr.rel (%p683) target = $region92
        $region91: #{_lambda_.8} parent=11 // pred_region
          _
        $region92: #{_lambda_.8} parent=11 // pred_fallthru
          _
      $region12: #{_lambda_.8} parent=5 // pred_fallthru
        _
      %p686 = scmp.lt.s32.totalorder %s35, 2
      // Predicated region
      $region93: #{_lambda_.8} parent=5 // pred_check
        %p687 = pneg %p686
      $region94: #{_lambda_.8} parent=5 // pred_check_branch
        %689 = sbr.rel (%p687) target = $region96
      $region95: #{_lambda_.8} parent=5 // pred_region
        // Predicated region
        $region97: #{_lambda_.8} parent=95 // pred_check
          %p690 = pneg %p55
        $region98: #{_lambda_.8} parent=95 // pred_check_branch
          %692 = sbr.rel (%p690) target = $region100
        $region99: #{_lambda_.8} parent=95 // pred_region
          %p693 = scmp.lt.s32.totalorder %s35, 1
          %s694 = scalar_select %p693, %s35, 1
          %s695 = smul.addr %s694, 8
          %s696 = scalar_lea.vmem %s0, %s695
        $region100: #{_lambda_.8} parent=95 // pred_fallthru
          _
        // Predicated region
        $region101: #{_lambda_.8} parent=95 // pred_check
          %p697 = pneg %p81
        $region102: #{_lambda_.8} parent=95 // pred_check_branch
          %699 = sbr.rel (%p697) target = $region104
        $region103: #{_lambda_.8} parent=95 // pred_region
          %p700 = scmp.lt.s32.totalorder %s35, 1
          %s701 = scalar_select %p700, %s35, 1
          %s702 = smul.addr %s701, 8
          %s703 = scalar_lea.vmem %s1, %s702
        $region104: #{_lambda_.8} parent=95 // pred_fallthru
          _
        // Predicated region
        $region105: #{_lambda_.8} parent=95 // pred_check
          %p704 = pneg %p107
        $region106: #{_lambda_.8} parent=95 // pred_check_branch
          %706 = sbr.rel (%p704) target = $region108
        $region107: #{_lambda_.8} parent=95 // pred_region
          %p707 = scmp.lt.s32.totalorder %s35, 1
          %s708 = scalar_select %p707, %s35, 1
          %s709 = scalar_lea.vmem %s2, %s708
        $region108: #{_lambda_.8} parent=95 // pred_fallthru
          _
        // Predicated region
        $region109: #{_lambda_.8} parent=95 // pred_check
          %p710 = pneg %p133
        $region110: #{_lambda_.8} parent=95 // pred_check_branch
          %712 = sbr.rel (%p710) target = $region112
        $region111: #{_lambda_.8} parent=95 // pred_region
          %p713 = scmp.lt.s32.totalorder %s35, 1
          %s714 = scalar_select %p713, %s35, 1
          %s715 = scalar_lea.vmem %s3, %s714
        $region112: #{_lambda_.8} parent=95 // pred_fallthru
          _
      $region96: #{_lambda_.8} parent=5 // pred_fallthru
        _
      %p716 = scmp.le.s32.totalorder 1, %s35
      %p717 = scmp.lt.s32.totalorder %s35, 3
      %p718 = pnand %p716, %p717
      %p719 = pneg %p718
      // Predicated region
      $region113: #{_lambda_.8} parent=5 // pred_check
        _
      $region114: #{_lambda_.8} parent=5 // pred_check_branch
        %721 = sbr.rel (%p718) target = $region116
      $region115: #{_lambda_.8} parent=5 // pred_region
        %s722 = ssub.s32 %s35, 1
        %p723 = scmp.lt.s32.totalorder %s40, 1
        %s724 = scalar_select %p723, %s40, 1
        %s725 = smul.addr %s724, 8
        %s726 = scalar_lea.vmem %s0, %s725
        %p727 = pneg %p61
        %p728 = pneg %p58
        %p729 = scmp.lt.s32.totalorder %s40, 1
        %s730 = scalar_select %p729, %s40, 1
        %s731 = smul.addr %s730, 8
        %s732 = scalar_lea.vmem %s1, %s731
        %p733 = pneg %p87
        %p734 = pneg %p84
        %p735 = scmp.lt.s32.totalorder %s40, 1
        %s736 = scalar_select %p735, %s40, 1
        %s737 = scalar_lea.vmem %s2, %s736
        %p738 = pneg %p113
        %p739 = pneg %p110
        %p740 = scmp.lt.s32.totalorder %s40, 1
        %s741 = scalar_select %p740, %s40, 1
        %s742 = scalar_lea.vmem %s3, %s741
        %p743 = pneg %p139
        %p744 = pneg %p136
        %p745 = pneg %p160
        %p746 = pneg %p157
        %p747 = pneg %p181
        %p748 = pneg %p178
        %p749 = pneg %p202
        %p750 = pneg %p199
        %p751 = pneg %p223
        %p752 = pneg %p220
        %p753 = pneg %p244
        %p754 = pneg %p241
        %p755 = pneg %p265
        %p756 = pneg %p262
        %p757 = pneg %p286
        %p758 = pneg %p283
        %p759 = pneg %p307
        %p760 = pneg %p304
        %p761 = pneg %p328
        %p762 = pneg %p325
        %p763 = pneg %p349
        %p764 = pneg %p346
        %p765 = pneg %p370
        %p766 = pneg %p367
        %p767 = pneg %p391
        %p768 = pneg %p388
        %p769 = pneg %p412
        %p770 = pneg %p409
        %p771 = pneg %p433
        %p772 = pneg %p430
        %p773 = pneg %p454
        %p774 = pneg %p451
        %p775 = pneg %p475
        %p776 = pneg %p472
        %p777 = pneg %p496
        %p778 = pneg %p493
        %p779 = pneg %p517
        %p780 = pneg %p514
        %p781 = pneg %p538
        %p782 = pneg %p535
        %p783 = pneg %p559
        %p784 = pneg %p556
        %p785 = pneg %p585
        %p786 = pneg %p582
        %p787 = scmp.lt.s32.totalorder %s40, 1
        %s788 = scalar_select %p787, %s40, 1
        %s789 = smul.addr %s788, 8
        %s790 = scalar_lea.vmem %s24, %s789
        %p791 = pneg %p611
        %p792 = pneg %p608
        %s793 = sand.u32 %s598, 1
        %s794 = scalar_lea.sflag [#allocation3], %s793
        %s795 = sand.u32 %s598, 1
        %s796 = smul.addr %s795, 32
        %s797 = scalar_lea.vmem [#allocation2], %s796
        %p798 = scmp.lt.s32.totalorder %s40, 1
        %s799 = scalar_select %p798, %s40, 1
        %s800 = smul.addr %s799, 8
        %s801 = scalar_lea.vmem %s0, %s800
        %p802 = scmp.lt.s32.totalorder %s40, 1
        %s803 = scalar_select %p802, %s40, 1
        %s804 = smul.addr %s803, 8
        %s805 = scalar_lea.vmem %s1, %s804
        %p806 = scmp.lt.s32.totalorder %s40, 1
        %s807 = scalar_select %p806, %s40, 1
        %s808 = scalar_lea.vmem %s2, %s807
        %p809 = scmp.lt.s32.totalorder %s40, 1
        %s810 = scalar_select %p809, %s40, 1
        %s811 = scalar_lea.vmem %s3, %s810
        %p812 = scmp.lt.s32.totalorder %s40, 1
        %s813 = scalar_select %p812, %s40, 1
        %s814 = smul.addr %s813, 8
        %s815 = scalar_lea.vmem %s24, %s814
        %v817 = vld [vmem:[%s801] sm:$0xff]
        %v818 = vld [vmem:[%s805] sm:$0xff]
        %v819 = vld [vmem:[%s808] sm:$0x1]
        %vm820 = vcmp.gt.f32.partialorder %v819, 0.0
        %v821 = vld [vmem:[%s811] sm:$0x1]
        %vm822 = vcmp.gt.f32.partialorder %v821, 0.0
        %v823 = vlaneseq
        %v824 = vshrl.u32 %v823, 7
        %v825 = vlaneseq
        %v826 = vand.u32 %v825, 127
        %vm827 = vcmp.le.s32.totalorder %v826, %v824
        %v828 = vsel %vm820, 1, 0
        %v829 = vlaneseq
        %v830 = vshrl.u32 %v829, 7
        %v831 = vsub.s32 0, %v830
        %v832 = vrot.slane %v828, %v831
        %vm833 = vcmp.eq.s32.totalorder %v832, 1
        %vm834 = vmand %vm827, %vm833
        %v835 = vld [vmem:[%s4] sm:$0xf]
        %v836 = vld [vmem:[%s4 + $0x4] sm:$0xf]
        %v837 = vld [vmem:[%s4 + $0x8] sm:$0xf]
        %v838 = vld [vmem:[%s4 + $0xc] sm:$0xf]
        %v839 = vpack.c.bf16 %v817, %v817
        %v840 = vld [vmem:[%s5] sm:$0x1]
        %v842 = vlaneseq
        %v843 = vshrl.u32 %v842, 7
        %v844 = vsub.s32 0, %v843
        %v845 = vrot.slane %v840, %v844
        %v851 = vunpack.c.l.b16 %v835
        %v852 = vunpack.c.l.b16 %v836
        %v853 = vunpack.c.l.b16 %v837
        %v854 = vunpack.c.l.b16 %v838
        %v855 = vpack.c.b16 %v852, %v851
        %v856 = vpack.c.b16 %v854, %v853
        %vm859 = vcmask 261120
        %v861 = vsel %vm859, %v839, 0
        %863 = vmatprep.subr.bf16.mxu0 0
        %864 = vmatpush1.bf16.msra.mxu0 %v855
        %865 = vmatprep.subr.bf16.mxu0 0
        %866 = vmatpush1.bf16.msra.mxu0 %v856
        %867 = vmatprep.subr.bf16.mxu0 0
        %868 = vmatpush1.bf16.msra.mxu0 0
        %869 = vmatprep.subr.bf16.mxu0 0
        %870 = vmatpush1.bf16.msra.mxu0 0
        %871 = vmatprep.subr.bf16.mxu0 0
        %872 = vmatpush1.bf16.msra.mxu0 0
        %873 = vmatprep.subr.bf16.mxu0 0
        %874 = vmatpush1.bf16.msra.mxu0 0
        %875 = vmatprep.subr.bf16.mxu0 0
        %876 = vmatpush1.bf16.msra.mxu0 0
        %877 = vmatprep.subr.bf16.mxu0 0
        %878 = vmatpush1.bf16.msra.mxu0 0
        %879 = vmatprep.subr.bf16.mxu0 0
        %880 = vmatpush1.bf16.msra.mxu0 0
        %881 = vmatprep.subr.bf16.mxu0 0
        %882 = vmatpush1.bf16.msra.mxu0 0
        %883 = vmatprep.subr.bf16.mxu0 0
        %884 = vmatpush1.bf16.msra.mxu0 0
        %885 = vmatprep.subr.bf16.mxu0 0
        %886 = vmatpush1.bf16.msra.mxu0 0
        %887 = vmatprep.subr.bf16.mxu0 0
        %888 = vmatpush1.bf16.msra.mxu0 0
        %889 = vmatprep.subr.bf16.mxu0 0
        %890 = vmatpush1.bf16.msra.mxu0 0
        %891 = vmatprep.subr.bf16.mxu0 0
        %892 = vmatpush1.bf16.msra.mxu0 0
        %893 = vmatprep.subr.bf16.mxu0 0
        %894 = vmatpush1.bf16.msra.mxu0 0
        %895 = vmatprep.mubr.bf16.mxu0 0
        %896 = vmatmul.mubr.bf16.gmra.mrb[0].mxu0 %v861
        %v897 = vpop.f32.mrb[0].mxu0
        %v898 = vadd.f32 %v845, %v897
        %v899 = vpop.f32.mrb[0].mxu0
        %v900 = vpop.f32.mrb[0].mxu0
        %v901 = vpop.f32.mrb[0].mxu0
        %902 = vdwg.mxu0
        %v903 = vpack.c.bf16 %v898, %v898
        %905 = vrot.lane.b32.xlu0 %v903, 96
        %v906 = vpop.permute.xlu0 %905
        %vm907 = vcmask 64512
        %v909 = vsel %vm907, %v903, 0
        %v912 = vsel %vm907, %v906, 0
        %914 = vmatprep.subr.bf16.mxu0 0
        %915 = vmatpush1.bf16.xpose.msra.mxu0 %v912
        %916 = vmatprep.subr.bf16.mxu0 0
        %917 = vmatpush1.bf16.xpose.msra.mxu0 0
        %918 = vmatprep.subr.bf16.mxu0 0
        %919 = vmatpush1.bf16.xpose.msra.mxu0 0
        %920 = vmatprep.subr.bf16.mxu0 0
        %921 = vmatpush1.bf16.xpose.msra.mxu0 0
        %922 = vmatprep.subr.bf16.mxu0 0
        %923 = vmatpush1.bf16.xpose.msra.mxu0 0
        %924 = vmatprep.subr.bf16.mxu0 0
        %925 = vmatpush1.bf16.xpose.msra.mxu0 0
        %926 = vmatprep.subr.bf16.mxu0 0
        %927 = vmatpush1.bf16.xpose.msra.mxu0 0
        %928 = vmatprep.subr.bf16.mxu0 0
        %929 = vmatpush1.bf16.xpose.msra.mxu0 0
        %930 = vmatprep.subr.bf16.mxu0 0
        %931 = vmatpush1.bf16.xpose.msra.mxu0 0
        %932 = vmatprep.subr.bf16.mxu0 0
        %933 = vmatpush1.bf16.xpose.msra.mxu0 0
        %934 = vmatprep.subr.bf16.mxu0 0
        %935 = vmatpush1.bf16.xpose.msra.mxu0 0
        %936 = vmatprep.subr.bf16.mxu0 0
        %937 = vmatpush1.bf16.xpose.msra.mxu0 0
        %938 = vmatprep.subr.bf16.mxu0 0
        %939 = vmatpush1.bf16.xpose.msra.mxu0 0
        %940 = vmatprep.subr.bf16.mxu0 0
        %941 = vmatpush1.bf16.xpose.msra.mxu0 0
        %942 = vmatprep.subr.bf16.mxu0 0
        %943 = vmatpush1.bf16.xpose.msra.mxu0 0
        %944 = vmatprep.subr.bf16.mxu0 0
        %945 = vmatpush1.bf16.xpose.msra.mxu0 0
        %946 = vmatprep.mubr.bf16.mxu0 0
        %947 = vmatmul.mubr.bf16.gmra.mrb[0].mxu0 %v909
        %v948 = vpop.f32.mrb[0].mxu0
        %v949 = vadd.f32 0.0, %v948
        %v950 = vpop.f32.mrb[0].mxu0
        %v951 = vpop.f32.mrb[0].mxu0
        %v952 = vpop.f32.mrb[0].mxu0
        %953 = vdwg.mxu0
        %v954 = vmul.f32 %v949, 0.35355338
        %v955 = vsel %vm834, %v954, -1e+10
        %v956 = vsel %vm907, %v955, -inf
        %957 = vmax.xlane.f32.xlu0 %v956
        %v958 = vpop.xlane.xlu0 %957
        %v959 = vsub.f32 %v955, %v958
        %v960 = vmul.f32 %v959, 1.442695
        %v961 = vpow.pop %v960
        %v962 = vsel %vm907, %v961, 0.0
        %963 = vadd.xlane.f32.xlu0 %v962
        %v964 = vpop.xlane.xlu0 %963
        %v965 = vrcp.pop %v964
        %v966 = vmul.f32 %v961, %v965
        %v967 = vpack.c.bf16 %v966, %v966
        %968 = vrot.lane.b32.xlu0 %v903, 64
        %v969 = vpop.permute.xlu0 %968
        %v971 = vsel %vm907, %v967, 0
        %vm973 = vcmask 1043456
        %v975 = vsel %vm973, %v969, 0
        %977 = vmatprep.subr.bf16.mxu0 0
        %978 = vmatpush1.bf16.msra.mxu0 %v975
        %979 = vmatprep.subr.bf16.mxu0 0
        %980 = vmatpush1.bf16.msra.mxu0 0
        %981 = vmatprep.subr.bf16.mxu0 0
        %982 = vmatpush1.bf16.msra.mxu0 0
        %983 = vmatprep.subr.bf16.mxu0 0
        %984 = vmatpush1.bf16.msra.mxu0 0
        %985 = vmatprep.subr.bf16.mxu0 0
        %986 = vmatpush1.bf16.msra.mxu0 0
        %987 = vmatprep.subr.bf16.mxu0 0
        %988 = vmatpush1.bf16.msra.mxu0 0
        %989 = vmatprep.subr.bf16.mxu0 0
        %990 = vmatpush1.bf16.msra.mxu0 0
        %991 = vmatprep.subr.bf16.mxu0 0
        %992 = vmatpush1.bf16.msra.mxu0 0
        %993 = vmatprep.subr.bf16.mxu0 0
        %994 = vmatpush1.bf16.msra.mxu0 0
        %995 = vmatprep.subr.bf16.mxu0 0
        %996 = vmatpush1.bf16.msra.mxu0 0
        %997 = vmatprep.subr.bf16.mxu0 0
        %998 = vmatpush1.bf16.msra.mxu0 0
        %999 = vmatprep.subr.bf16.mxu0 0
        %1000 = vmatpush1.bf16.msra.mxu0 0
        %1001 = vmatprep.subr.bf16.mxu0 0
        %1002 = vmatpush1.bf16.msra.mxu0 0
        %1003 = vmatprep.subr.bf16.mxu0 0
        %1004 = vmatpush1.bf16.msra.mxu0 0
        %1005 = vmatprep.subr.bf16.mxu0 0
        %1006 = vmatpush1.bf16.msra.mxu0 0
        %1007 = vmatprep.subr.bf16.mxu0 0
        %1008 = vmatpush1.bf16.msra.mxu0 0
        %1009 = vmatprep.mubr.bf16.mxu0 0
        %1010 = vmatmul.mubr.bf16.gmra.mrb[0].mxu0 %v971
        %v1011 = vpop.f32.mrb[0].mxu0
        %v1012 = vadd.f32 0.0, %v1011
        %v1013 = vpop.f32.mrb[0].mxu0
        %v1014 = vpop.f32.mrb[0].mxu0
        %v1015 = vpop.f32.mrb[0].mxu0
        %1016 = vdwg.mxu0
        %1017 = vrot.lane.b32.xlu0 %v903, 120
        %v1018 = vpop.permute.xlu0 %1017
        %1019 = vrot.lane.b32.xlu0 %v903, 88
        %v1020 = vpop.permute.xlu0 %1019
        %v1022 = vsel %vm907, %v1018, 0
        %v1025 = vsel %vm907, %v1020, 0
        %1027 = vmatprep.subr.bf16.mxu0 0
        %1028 = vmatpush1.bf16.xpose.msra.mxu0 %v1025
        %1029 = vmatprep.subr.bf16.mxu0 0
        %1030 = vmatpush1.bf16.xpose.msra.mxu0 0
        %1031 = vmatprep.subr.bf16.mxu0 0
        %1032 = vmatpush1.bf16.xpose.msra.mxu0 0
        %1033 = vmatprep.subr.bf16.mxu0 0
        %1034 = vmatpush1.bf16.xpose.msra.mxu0 0
        %1035 = vmatprep.subr.bf16.mxu0 0
        %1036 = vmatpush1.bf16.xpose.msra.mxu0 0
        %1037 = vmatprep.subr.bf16.mxu0 0
        %1038 = vmatpush1.bf16.xpose.msra.mxu0 0
        %1039 = vmatprep.subr.bf16.mxu0 0
        %1040 = vmatpush1.bf16.xpose.msra.mxu0 0
        %1041 = vmatprep.subr.bf16.mxu0 0
        %1042 = vmatpush1.bf16.xpose.msra.mxu0 0
        %1043 = vmatprep.subr.bf16.mxu0 0
        %1044 = vmatpush1.bf16.xpose.msra.mxu0 0
        %1045 = vmatprep.subr.bf16.mxu0 0
        %1046 = vmatpush1.bf16.xpose.msra.mxu0 0
        %1047 = vmatprep.subr.bf16.mxu0 0
        %1048 = vmatpush1.bf16.xpose.msra.mxu0 0
        %1049 = vmatprep.subr.bf16.mxu0 0
        %1050 = vmatpush1.bf16.xpose.msra.mxu0 0
        %1051 = vmatprep.subr.bf16.mxu0 0
        %1052 = vmatpush1.bf16.xpose.msra.mxu0 0
        %1053 = vmatprep.subr.bf16.mxu0 0
        %1054 = vmatpush1.bf16.xpose.msra.mxu0 0
        %1055 = vmatprep.subr.bf16.mxu0 0
        %1056 = vmatpush1.bf16.xpose.msra.mxu0 0
        %1057 = vmatprep.subr.bf16.mxu0 0
        %1058 = vmatpush1.bf16.xpose.msra.mxu0 0
        %1059 = vmatprep.mubr.bf16.mxu0 0
        %1060 = vmatmul.mubr.bf16.gmra.mrb[0].mxu0 %v1022
        %v1061 = vpop.f32.mrb[0].mxu0
        %v1062 = vadd.f32 0.0, %v1061
        %v1063 = vpop.f32.mrb[0].mxu0
        %v1064 = vpop.f32.mrb[0].mxu0
        %v1065 = vpop.f32.mrb[0].mxu0
        %1066 = vdwg.mxu0
        %v1067 = vmul.f32 %v1062, 0.35355338
        %v1068 = vsel %vm834, %v1067, -1e+10
        %v1069 = vsel %vm907, %v1068, -inf
        %1070 = vmax.xlane.f32.xlu0 %v1069
        %v1071 = vpop.xlane.xlu0 %1070
        %v1072 = vsub.f32 %v1068, %v1071
        %v1073 = vmul.f32 %v1072, 1.442695
        %v1074 = vpow.pop %v1073
        %v1075 = vsel %vm907, %v1074, 0.0
        %1076 = vadd.xlane.f32.xlu0 %v1075
        %v1077 = vpop.xlane.xlu0 %1076
        %v1078 = vrcp.pop %v1077
        %v1079 = vmul.f32 %v1074, %v1078
        %v1080 = vpack.c.bf16 %v1079, %v1079
        %1081 = vrot.lane.b32.xlu0 %v903, 56
        %v1082 = vpop.permute.xlu0 %1081
        %v1084 = vsel %vm907, %v1080, 0
        %v1087 = vsel %vm973, %v1082, 0
        %1089 = vmatprep.subr.bf16.mxu0 0
        %1090 = vmatpush1.bf16.msra.mxu0 %v1087
        %1091 = vmatprep.subr.bf16.mxu0 0
        %1092 = vmatpush1.bf16.msra.mxu0 0
        %1093 = vmatprep.subr.bf16.mxu0 0
        %1094 = vmatpush1.bf16.msra.mxu0 0
        %1095 = vmatprep.subr.bf16.mxu0 0
        %1096 = vmatpush1.bf16.msra.mxu0 0
        %1097 = vmatprep.subr.bf16.mxu0 0
        %1098 = vmatpush1.bf16.msra.mxu0 0
        %1099 = vmatprep.subr.bf16.mxu0 0
        %1100 = vmatpush1.bf16.msra.mxu0 0
        %1101 = vmatprep.subr.bf16.mxu0 0
        %1102 = vmatpush1.bf16.msra.mxu0 0
        %1103 = vmatprep.subr.bf16.mxu0 0
        %1104 = vmatpush1.bf16.msra.mxu0 0
        %1105 = vmatprep.subr.bf16.mxu0 0
        %1106 = vmatpush1.bf16.msra.mxu0 0
        %1107 = vmatprep.subr.bf16.mxu0 0
        %1108 = vmatpush1.bf16.msra.mxu0 0
        %1109 = vmatprep.subr.bf16.mxu0 0
        %1110 = vmatpush1.bf16.msra.mxu0 0
        %1111 = vmatprep.subr.bf16.mxu0 0
        %1112 = vmatpush1.bf16.msra.mxu0 0
        %1113 = vmatprep.subr.bf16.mxu0 0
        %1114 = vmatpush1.bf16.msra.mxu0 0
        %1115 = vmatprep.subr.bf16.mxu0 0
        %1116 = vmatpush1.bf16.msra.mxu0 0
        %1117 = vmatprep.subr.bf16.mxu0 0
        %1118 = vmatpush1.bf16.msra.mxu0 0
        %1119 = vmatprep.subr.bf16.mxu0 0
        %1120 = vmatpush1.bf16.msra.mxu0 0
        %1121 = vmatprep.mubr.bf16.mxu0 0
        %1122 = vmatmul.mubr.bf16.gmra.mrb[0].mxu0 %v1084
        %v1123 = vpop.f32.mrb[0].mxu0
        %v1124 = vadd.f32 0.0, %v1123
        %v1125 = vpop.f32.mrb[0].mxu0
        %v1126 = vpop.f32.mrb[0].mxu0
        %v1127 = vpop.f32.mrb[0].mxu0
        %1128 = vdwg.mxu0
        %1129 = vrot.lane.b32.xlu0 %v903, 112
        %v1130 = vpop.permute.xlu0 %1129
        %1131 = vrot.lane.b32.xlu0 %v903, 80
        %v1132 = vpop.permute.xlu0 %1131
        %v1134 = vsel %vm907, %v1130, 0
        %v1137 = vsel %vm907, %v1132, 0
        %1139 = vmatprep.subr.bf16.mxu0 0
        %1140 = vmatpush1.bf16.xpose.msra.mxu0 %v1137
        %1141 = vmatprep.subr.bf16.mxu0 0
        %1142 = vmatpush1.bf16.xpose.msra.mxu0 0
        %1143 = vmatprep.subr.bf16.mxu0 0
        %1144 = vmatpush1.bf16.xpose.msra.mxu0 0
        %1145 = vmatprep.subr.bf16.mxu0 0
        %1146 = vmatpush1.bf16.xpose.msra.mxu0 0
        %1147 = vmatprep.subr.bf16.mxu0 0
        %1148 = vmatpush1.bf16.xpose.msra.mxu0 0
        %1149 = vmatprep.subr.bf16.mxu0 0
        %1150 = vmatpush1.bf16.xpose.msra.mxu0 0
        %1151 = vmatprep.subr.bf16.mxu0 0
        %1152 = vmatpush1.bf16.xpose.msra.mxu0 0
        %1153 = vmatprep.subr.bf16.mxu0 0
        %1154 = vmatpush1.bf16.xpose.msra.mxu0 0
        %1155 = vmatprep.subr.bf16.mxu0 0
        %1156 = vmatpush1.bf16.xpose.msra.mxu0 0
        %1157 = vmatprep.subr.bf16.mxu0 0
        %1158 = vmatpush1.bf16.xpose.msra.mxu0 0
        %1159 = vmatprep.subr.bf16.mxu0 0
        %1160 = vmatpush1.bf16.xpose.msra.mxu0 0
        %1161 = vmatprep.subr.bf16.mxu0 0
        %1162 = vmatpush1.bf16.xpose.msra.mxu0 0
        %1163 = vmatprep.subr.bf16.mxu0 0
        %1164 = vmatpush1.bf16.xpose.msra.mxu0 0
        %1165 = vmatprep.subr.bf16.mxu0 0
        %1166 = vmatpush1.bf16.xpose.msra.mxu0 0
        %1167 = vmatprep.subr.bf16.mxu0 0
        %1168 = vmatpush1.bf16.xpose.msra.mxu0 0
        %1169 = vmatprep.subr.bf16.mxu0 0
        %1170 = vmatpush1.bf16.xpose.msra.mxu0 0
        %1171 = vmatprep.mubr.bf16.mxu0 0
        %1172 = vmatmul.mubr.bf16.gmra.mrb[0].mxu0 %v1134
        %v1173 = vpop.f32.mrb[0].mxu0
        %v1174 = vadd.f32 0.0, %v1173
        %v1175 = vpop.f32.mrb[0].mxu0
        %v1176 = vpop.f32.mrb[0].mxu0
        %v1177 = vpop.f32.mrb[0].mxu0
        %1178 = vdwg.mxu0
        %v1179 = vmul.f32 %v1174, 0.35355338
        %v1180 = vsel %vm834, %v1179, -1e+10
        %v1181 = vsel %vm907, %v1180, -inf
        %1182 = vmax.xlane.f32.xlu0 %v1181
        %v1183 = vpop.xlane.xlu0 %1182
        %v1184 = vsub.f32 %v1180, %v1183
        %v1185 = vmul.f32 %v1184, 1.442695
        %v1186 = vpow.pop %v1185
        %v1187 = vsel %vm907, %v1186, 0.0
        %1188 = vadd.xlane.f32.xlu0 %v1187
        %v1189 = vpop.xlane.xlu0 %1188
        %v1190 = vrcp.pop %v1189
        %v1191 = vmul.f32 %v1186, %v1190
        %v1192 = vpack.c.bf16 %v1191, %v1191
        %1193 = vrot.lane.b32.xlu0 %v903, 48
        %v1194 = vpop.permute.xlu0 %1193
        %v1196 = vsel %vm907, %v1192, 0
        %v1199 = vsel %vm973, %v1194, 0
        %1201 = vmatprep.subr.bf16.mxu0 0
        %1202 = vmatpush1.bf16.msra.mxu0 %v1199
        %1203 = vmatprep.subr.bf16.mxu0 0
        %1204 = vmatpush1.bf16.msra.mxu0 0
        %1205 = vmatprep.subr.bf16.mxu0 0
        %1206 = vmatpush1.bf16.msra.mxu0 0
        %1207 = vmatprep.subr.bf16.mxu0 0
        %1208 = vmatpush1.bf16.msra.mxu0 0
        %1209 = vmatprep.subr.bf16.mxu0 0
        %1210 = vmatpush1.bf16.msra.mxu0 0
        %1211 = vmatprep.subr.bf16.mxu0 0
        %1212 = vmatpush1.bf16.msra.mxu0 0
        %1213 = vmatprep.subr.bf16.mxu0 0
        %1214 = vmatpush1.bf16.msra.mxu0 0
        %1215 = vmatprep.subr.bf16.mxu0 0
        %1216 = vmatpush1.bf16.msra.mxu0 0
        %1217 = vmatprep.subr.bf16.mxu0 0
        %1218 = vmatpush1.bf16.msra.mxu0 0
        %1219 = vmatprep.subr.bf16.mxu0 0
        %1220 = vmatpush1.bf16.msra.mxu0 0
        %1221 = vmatprep.subr.bf16.mxu0 0
        %1222 = vmatpush1.bf16.msra.mxu0 0
        %1223 = vmatprep.subr.bf16.mxu0 0
        %1224 = vmatpush1.bf16.msra.mxu0 0
        %1225 = vmatprep.subr.bf16.mxu0 0
        %1226 = vmatpush1.bf16.msra.mxu0 0
        %1227 = vmatprep.subr.bf16.mxu0 0
        %1228 = vmatpush1.bf16.msra.mxu0 0
        %1229 = vmatprep.subr.bf16.mxu0 0
        %1230 = vmatpush1.bf16.msra.mxu0 0
        %1231 = vmatprep.subr.bf16.mxu0 0
        %1232 = vmatpush1.bf16.msra.mxu0 0
        %1233 = vmatprep.mubr.bf16.mxu0 0
        %1234 = vmatmul.mubr.bf16.gmra.mrb[0].mxu0 %v1196
        %v1235 = vpop.f32.mrb[0].mxu0
        %v1236 = vadd.f32 0.0, %v1235
        %v1237 = vpop.f32.mrb[0].mxu0
        %v1238 = vpop.f32.mrb[0].mxu0
        %v1239 = vpop.f32.mrb[0].mxu0
        %1240 = vdwg.mxu0
        %1241 = vrot.lane.b32.xlu0 %v903, 104
        %v1242 = vpop.permute.xlu0 %1241
        %1243 = vrot.lane.b32.xlu0 %v903, 72
        %v1244 = vpop.permute.xlu0 %1243
        %v1246 = vsel %vm907, %v1242, 0
        %v1249 = vsel %vm907, %v1244, 0
        %1251 = vmatprep.subr.bf16.mxu0 0
        %1252 = vmatpush1.bf16.xpose.msra.mxu0 %v1249
        %1253 = vmatprep.subr.bf16.mxu0 0
        %1254 = vmatpush1.bf16.xpose.msra.mxu0 0
        %1255 = vmatprep.subr.bf16.mxu0 0
        %1256 = vmatpush1.bf16.xpose.msra.mxu0 0
        %1257 = vmatprep.subr.bf16.mxu0 0
        %1258 = vmatpush1.bf16.xpose.msra.mxu0 0
        %1259 = vmatprep.subr.bf16.mxu0 0
        %1260 = vmatpush1.bf16.xpose.msra.mxu0 0
        %1261 = vmatprep.subr.bf16.mxu0 0
        %1262 = vmatpush1.bf16.xpose.msra.mxu0 0
        %1263 = vmatprep.subr.bf16.mxu0 0
        %1264 = vmatpush1.bf16.xpose.msra.mxu0 0
        %1265 = vmatprep.subr.bf16.mxu0 0
        %1266 = vmatpush1.bf16.xpose.msra.mxu0 0
        %1267 = vmatprep.subr.bf16.mxu0 0
        %1268 = vmatpush1.bf16.xpose.msra.mxu0 0
        %1269 = vmatprep.subr.bf16.mxu0 0
        %1270 = vmatpush1.bf16.xpose.msra.mxu0 0
        %1271 = vmatprep.subr.bf16.mxu0 0
        %1272 = vmatpush1.bf16.xpose.msra.mxu0 0
        %1273 = vmatprep.subr.bf16.mxu0 0
        %1274 = vmatpush1.bf16.xpose.msra.mxu0 0
        %1275 = vmatprep.subr.bf16.mxu0 0
        %1276 = vmatpush1.bf16.xpose.msra.mxu0 0
        %1277 = vmatprep.subr.bf16.mxu0 0
        %1278 = vmatpush1.bf16.xpose.msra.mxu0 0
        %1279 = vmatprep.subr.bf16.mxu0 0
        %1280 = vmatpush1.bf16.xpose.msra.mxu0 0
        %1281 = vmatprep.subr.bf16.mxu0 0
        %1282 = vmatpush1.bf16.xpose.msra.mxu0 0
        %1283 = vmatprep.mubr.bf16.mxu0 0
        %1284 = vmatmul.mubr.bf16.gmra.mrb[0].mxu0 %v1246
        %v1285 = vpop.f32.mrb[0].mxu0
        %v1286 = vadd.f32 0.0, %v1285
        %v1287 = vpop.f32.mrb[0].mxu0
        %v1288 = vpop.f32.mrb[0].mxu0
        %v1289 = vpop.f32.mrb[0].mxu0
        %1290 = vdwg.mxu0
        %v1291 = vmul.f32 %v1286, 0.35355338
        %v1292 = vsel %vm834, %v1291, -1e+10
        %v1293 = vsel %vm907, %v1292, -inf
        %1294 = vmax.xlane.f32.xlu0 %v1293
        %v1295 = vpop.xlane.xlu0 %1294
        %v1296 = vsub.f32 %v1292, %v1295
        %v1297 = vmul.f32 %v1296, 1.442695
        %v1298 = vpow.pop %v1297
        %v1299 = vsel %vm907, %v1298, 0.0
        %1300 = vadd.xlane.f32.xlu0 %v1299
        %v1301 = vpop.xlane.xlu0 %1300
        %v1302 = vrcp.pop %v1301
        %v1303 = vmul.f32 %v1298, %v1302
        %v1304 = vpack.c.bf16 %v1303, %v1303
        %1305 = vrot.lane.b32.xlu0 %v903, 40
        %v1306 = vpop.permute.xlu0 %1305
        %v1308 = vsel %vm907, %v1304, 0
        %v1311 = vsel %vm973, %v1306, 0
        %1313 = vmatprep.subr.bf16.mxu0 0
        %1314 = vmatpush1.bf16.msra.mxu0 %v1311
        %1315 = vmatprep.subr.bf16.mxu0 0
        %1316 = vmatpush1.bf16.msra.mxu0 0
        %1317 = vmatprep.subr.bf16.mxu0 0
        %1318 = vmatpush1.bf16.msra.mxu0 0
        %1319 = vmatprep.subr.bf16.mxu0 0
        %1320 = vmatpush1.bf16.msra.mxu0 0
        %1321 = vmatprep.subr.bf16.mxu0 0
        %1322 = vmatpush1.bf16.msra.mxu0 0
        %1323 = vmatprep.subr.bf16.mxu0 0
        %1324 = vmatpush1.bf16.msra.mxu0 0
        %1325 = vmatprep.subr.bf16.mxu0 0
        %1326 = vmatpush1.bf16.msra.mxu0 0
        %1327 = vmatprep.subr.bf16.mxu0 0
        %1328 = vmatpush1.bf16.msra.mxu0 0
        %1329 = vmatprep.subr.bf16.mxu0 0
        %1330 = vmatpush1.bf16.msra.mxu0 0
        %1331 = vmatprep.subr.bf16.mxu0 0
        %1332 = vmatpush1.bf16.msra.mxu0 0
        %1333 = vmatprep.subr.bf16.mxu0 0
        %1334 = vmatpush1.bf16.msra.mxu0 0
        %1335 = vmatprep.subr.bf16.mxu0 0
        %1336 = vmatpush1.bf16.msra.mxu0 0
        %1337 = vmatprep.subr.bf16.mxu0 0
        %1338 = vmatpush1.bf16.msra.mxu0 0
        %1339 = vmatprep.subr.bf16.mxu0 0
        %1340 = vmatpush1.bf16.msra.mxu0 0
        %1341 = vmatprep.subr.bf16.mxu0 0
        %1342 = vmatpush1.bf16.msra.mxu0 0
        %1343 = vmatprep.subr.bf16.mxu0 0
        %1344 = vmatpush1.bf16.msra.mxu0 0
        %1345 = vmatprep.mubr.bf16.mxu0 0
        %1346 = vmatmul.mubr.bf16.gmra.mrb[0].mxu0 %v1308
        %v1347 = vpop.f32.mrb[0].mxu0
        %v1348 = vadd.f32 0.0, %v1347
        %v1349 = vpop.f32.mrb[0].mxu0
        %v1350 = vpop.f32.mrb[0].mxu0
        %v1351 = vpop.f32.mrb[0].mxu0
        %1352 = vdwg.mxu0
        %1354 = vrot.lane.b32.xlu0 %v1124, 8
        %v1355 = vpop.permute.xlu0 %1354
        %1358 = vrot.lane.b32.xlu0 %v1236, 16
        %v1359 = vpop.permute.xlu0 %1358
        %1362 = vrot.lane.b32.xlu0 %v1348, 24
        %v1363 = vpop.permute.xlu0 %1362
        %v1365 = vsel %vm907, %v1012, %v1355
        %vm1366 = vcmask 130048
        %v1367 = vsel %vm1366, %v1365, %v1359
        %vm1368 = vcmask 195584
        %v1369 = vsel %vm1368, %v1367, %v1363
        %v1370 = vld [vmem:[%s6] sm:$0xf]
        %v1371 = vld [vmem:[%s6 + $0x4] sm:$0xf]
        %v1372 = vld [vmem:[%s6 + $0x8] sm:$0xf]
        %v1373 = vld [vmem:[%s6 + $0xc] sm:$0xf]
        %v1374 = vpack.c.bf16 %v1369, %v1369
        %v1375 = vld [vmem:[%s7] sm:$0x1]
        %v1377 = vlaneseq
        %v1378 = vshrl.u32 %v1377, 7
        %v1379 = vsub.s32 0, %v1378
        %v1380 = vrot.slane %v1375, %v1379
        %v1386 = vunpack.c.l.b16 %v1370
        %v1387 = vunpack.c.l.b16 %v1371
        %v1388 = vunpack.c.l.b16 %v1372
        %v1389 = vunpack.c.l.b16 %v1373
        %v1390 = vpack.c.b16 %v1387, %v1386
        %v1391 = vpack.c.b16 %v1389, %v1388
        %v1395 = vsel %vm859, %v1374, 0
        %1397 = vmatprep.subr.bf16.mxu0 0
        %1398 = vmatpush1.bf16.msra.mxu0 %v1390
        %1399 = vmatprep.subr.bf16.mxu0 0
        %1400 = vmatpush1.bf16.msra.mxu0 %v1391
        %1401 = vmatprep.subr.bf16.mxu0 0
        %1402 = vmatpush1.bf16.msra.mxu0 0
        %1403 = vmatprep.subr.bf16.mxu0 0
        %1404 = vmatpush1.bf16.msra.mxu0 0
        %1405 = vmatprep.subr.bf16.mxu0 0
        %1406 = vmatpush1.bf16.msra.mxu0 0
        %1407 = vmatprep.subr.bf16.mxu0 0
        %1408 = vmatpush1.bf16.msra.mxu0 0
        %1409 = vmatprep.subr.bf16.mxu0 0
        %1410 = vmatpush1.bf16.msra.mxu0 0
        %1411 = vmatprep.subr.bf16.mxu0 0
        %1412 = vmatpush1.bf16.msra.mxu0 0
        %1413 = vmatprep.subr.bf16.mxu0 0
        %1414 = vmatpush1.bf16.msra.mxu0 0
        %1415 = vmatprep.subr.bf16.mxu0 0
        %1416 = vmatpush1.bf16.msra.mxu0 0
        %1417 = vmatprep.subr.bf16.mxu0 0
        %1418 = vmatpush1.bf16.msra.mxu0 0
        %1419 = vmatprep.subr.bf16.mxu0 0
        %1420 = vmatpush1.bf16.msra.mxu0 0
        %1421 = vmatprep.subr.bf16.mxu0 0
        %1422 = vmatpush1.bf16.msra.mxu0 0
        %1423 = vmatprep.subr.bf16.mxu0 0
        %1424 = vmatpush1.bf16.msra.mxu0 0
        %1425 = vmatprep.subr.bf16.mxu0 0
        %1426 = vmatpush1.bf16.msra.mxu0 0
        %1427 = vmatprep.subr.bf16.mxu0 0
        %1428 = vmatpush1.bf16.msra.mxu0 0
        %1429 = vmatprep.mubr.bf16.mxu0 0
        %1430 = vmatmul.mubr.bf16.gmra.mrb[0].mxu0 %v1395
        %v1431 = vpop.f32.mrb[0].mxu0
        %v1432 = vadd.f32 %v1380, %v1431
        %v1433 = vpop.f32.mrb[0].mxu0
        %v1434 = vpop.f32.mrb[0].mxu0
        %v1435 = vpop.f32.mrb[0].mxu0
        %1436 = vdwg.mxu0
        %v1437 = vadd.f32 %v817, %v1432
        %v1438 = vld [vmem:[%s8] sm:$0x1]
        %v1439 = vld [vmem:[%s9] sm:$0x1]
        %v1440 = vsel %vm859, %v1437, 0.0
        %1441 = vadd.xlane.f32.xlu0 %v1440
        %v1442 = vpop.xlane.xlu0 %1441
        %v1443 = vrcp.pop 32.0
        %v1444 = vmul.f32 %v1442, %v1443
        %v1445 = vsub.f32 %v1437, %v1444
        %v1446 = vmul.f32 %v1445, %v1445
        %v1447 = vsel %vm859, %v1446, 0.0
        %1448 = vadd.xlane.f32.xlu0 %v1447
        %v1449 = vpop.xlane.xlu0 %1448
        %v1450 = vmul.f32 %v1449, %v1443
        %v1451 = vadd.f32 %v1450, 1e-05
        %v1452 = vrsqrt.pop %v1451
        %v1453 = vmul.f32 %v1445, %v1452
        %v1455 = vlaneseq
        %v1456 = vshrl.u32 %v1455, 7
        %v1457 = vsub.s32 0, %v1456
        %v1458 = vrot.slane %v1438, %v1457
        %v1460 = vmul.f32 %v1453, %v1458
        %v1462 = vlaneseq
        %v1463 = vshrl.u32 %v1462, 7
        %v1464 = vsub.s32 0, %v1463
        %v1465 = vrot.slane %v1439, %v1464
        %v1467 = vadd.f32 %v1460, %v1465
        %v1468 = vld [vmem:[%s10] sm:$0xf]
        %v1469 = vld [vmem:[%s10 + $0x4] sm:$0xf]
        %v1470 = vld [vmem:[%s10 + $0x8] sm:$0xf]
        %v1471 = vld [vmem:[%s10 + $0xc] sm:$0xf]
        %v1472 = vpack.c.bf16 %v1467, %v1467
        %v1473 = vld [vmem:[%s11] sm:$0x1]
        %v1475 = vlaneseq
        %v1476 = vshrl.u32 %v1475, 7
        %v1477 = vsub.s32 0, %v1476
        %v1478 = vrot.slane %v1473, %v1477
        %v1484 = vunpack.c.l.b16 %v1468
        %v1485 = vunpack.c.l.b16 %v1469
        %v1486 = vunpack.c.l.b16 %v1470
        %v1487 = vunpack.c.l.b16 %v1471
        %v1488 = vpack.c.b16 %v1485, %v1484
        %v1489 = vpack.c.b16 %v1487, %v1486
        %v1493 = vsel %vm859, %v1472, 0
        %1495 = vmatprep.subr.bf16.mxu0 0
        %1496 = vmatpush1.bf16.msra.mxu0 %v1488
        %1497 = vmatprep.subr.bf16.mxu0 0
        %1498 = vmatpush1.bf16.msra.mxu0 %v1489
        %1499 = vmatprep.subr.bf16.mxu0 0
        %1500 = vmatpush1.bf16.msra.mxu0 0
        %1501 = vmatprep.subr.bf16.mxu0 0
        %1502 = vmatpush1.bf16.msra.mxu0 0
        %1503 = vmatprep.subr.bf16.mxu0 0
        %1504 = vmatpush1.bf16.msra.mxu0 0
        %1505 = vmatprep.subr.bf16.mxu0 0
        %1506 = vmatpush1.bf16.msra.mxu0 0
        %1507 = vmatprep.subr.bf16.mxu0 0
        %1508 = vmatpush1.bf16.msra.mxu0 0
        %1509 = vmatprep.subr.bf16.mxu0 0
        %1510 = vmatpush1.bf16.msra.mxu0 0
        %1511 = vmatprep.subr.bf16.mxu0 0
        %1512 = vmatpush1.bf16.msra.mxu0 0
        %1513 = vmatprep.subr.bf16.mxu0 0
        %1514 = vmatpush1.bf16.msra.mxu0 0
        %1515 = vmatprep.subr.bf16.mxu0 0
        %1516 = vmatpush1.bf16.msra.mxu0 0
        %1517 = vmatprep.subr.bf16.mxu0 0
        %1518 = vmatpush1.bf16.msra.mxu0 0
        %1519 = vmatprep.subr.bf16.mxu0 0
        %1520 = vmatpush1.bf16.msra.mxu0 0
        %1521 = vmatprep.subr.bf16.mxu0 0
        %1522 = vmatpush1.bf16.msra.mxu0 0
        %1523 = vmatprep.subr.bf16.mxu0 0
        %1524 = vmatpush1.bf16.msra.mxu0 0
        %1525 = vmatprep.subr.bf16.mxu0 0
        %1526 = vmatpush1.bf16.msra.mxu0 0
        %1527 = vmatprep.mubr.bf16.mxu0 0
        %1528 = vmatmul.mubr.bf16.gmra.mrb[0].mxu0 %v1493
        %v1529 = vpop.f32.mrb[0].mxu0
        %v1530 = vadd.f32 %v1478, %v1529
        %v1531 = vpop.f32.mrb[0].mxu0
        %v1532 = vpop.f32.mrb[0].mxu0
        %v1533 = vpop.f32.mrb[0].mxu0
        %1534 = vdwg.mxu0
        %v1535 = vld [vmem:[%s12] sm:$0xf]
        %v1536 = vld [vmem:[%s12 + $0x4] sm:$0xf]
        %v1537 = vld [vmem:[%s12 + $0x8] sm:$0xf]
        %v1538 = vld [vmem:[%s12 + $0xc] sm:$0xf]
        %v1539 = vpack.c.bf16 %v818, %v818
        %v1540 = vld [vmem:[%s13] sm:$0x1]
        %v1542 = vlaneseq
        %v1543 = vshrl.u32 %v1542, 7
        %v1544 = vsub.s32 0, %v1543
        %v1545 = vrot.slane %v1540, %v1544
        %v1551 = vunpack.c.l.b16 %v1535
        %v1552 = vunpack.c.l.b16 %v1536
        %v1553 = vunpack.c.l.b16 %v1537
        %v1554 = vunpack.c.l.b16 %v1538
        %v1555 = vpack.c.b16 %v1552, %v1551
        %v1556 = vpack.c.b16 %v1554, %v1553
        %v1560 = vsel %vm859, %v1539, 0
        %1562 = vmatprep.subr.bf16.mxu0 0
        %1563 = vmatpush1.bf16.msra.mxu0 %v1555
        %1564 = vmatprep.subr.bf16.mxu0 0
        %1565 = vmatpush1.bf16.msra.mxu0 %v1556
        %1566 = vmatprep.subr.bf16.mxu0 0
        %1567 = vmatpush1.bf16.msra.mxu0 0
        %1568 = vmatprep.subr.bf16.mxu0 0
        %1569 = vmatpush1.bf16.msra.mxu0 0
        %1570 = vmatprep.subr.bf16.mxu0 0
        %1571 = vmatpush1.bf16.msra.mxu0 0
        %1572 = vmatprep.subr.bf16.mxu0 0
        %1573 = vmatpush1.bf16.msra.mxu0 0
        %1574 = vmatprep.subr.bf16.mxu0 0
        %1575 = vmatpush1.bf16.msra.mxu0 0
        %1576 = vmatprep.subr.bf16.mxu0 0
        %1577 = vmatpush1.bf16.msra.mxu0 0
        %1578 = vmatprep.subr.bf16.mxu0 0
        %1579 = vmatpush1.bf16.msra.mxu0 0
        %1580 = vmatprep.subr.bf16.mxu0 0
        %1581 = vmatpush1.bf16.msra.mxu0 0
        %1582 = vmatprep.subr.bf16.mxu0 0
        %1583 = vmatpush1.bf16.msra.mxu0 0
        %1584 = vmatprep.subr.bf16.mxu0 0
        %1585 = vmatpush1.bf16.msra.mxu0 0
        %1586 = vmatprep.subr.bf16.mxu0 0
        %1587 = vmatpush1.bf16.msra.mxu0 0
        %1588 = vmatprep.subr.bf16.mxu0 0
        %1589 = vmatpush1.bf16.msra.mxu0 0
        %1590 = vmatprep.subr.bf16.mxu0 0
        %1591 = vmatpush1.bf16.msra.mxu0 0
        %1592 = vmatprep.subr.bf16.mxu0 0
        %1593 = vmatpush1.bf16.msra.mxu0 0
        %1594 = vmatprep.mubr.bf16.mxu0 0
        %1595 = vmatmul.mubr.bf16.gmra.mrb[0].mxu0 %v1560
        %v1596 = vpop.f32.mrb[0].mxu0
        %v1597 = vadd.f32 %v1545, %v1596
        %v1598 = vpop.f32.mrb[0].mxu0
        %v1599 = vpop.f32.mrb[0].mxu0
        %v1600 = vpop.f32.mrb[0].mxu0
        %1601 = vdwg.mxu0
        %v1602 = vpack.c.bf16 %v1530, %v1530
        %v1603 = vpack.c.bf16 %v1597, %v1597
        %v1605 = vsel %vm907, %v1602, 0
        %v1608 = vsel %vm907, %v1603, 0
        %1610 = vmatprep.subr.bf16.mxu0 0
        %1611 = vmatpush1.bf16.xpose.msra.mxu0 %v1608
        %1612 = vmatprep.subr.bf16.mxu0 0
        %1613 = vmatpush1.bf16.xpose.msra.mxu0 0
        %1614 = vmatprep.subr.bf16.mxu0 0
        %1615 = vmatpush1.bf16.xpose.msra.mxu0 0
        %1616 = vmatprep.subr.bf16.mxu0 0
        %1617 = vmatpush1.bf16.xpose.msra.mxu0 0
        %1618 = vmatprep.subr.bf16.mxu0 0
        %1619 = vmatpush1.bf16.xpose.msra.mxu0 0
        %1620 = vmatprep.subr.bf16.mxu0 0
        %1621 = vmatpush1.bf16.xpose.msra.mxu0 0
        %1622 = vmatprep.subr.bf16.mxu0 0
        %1623 = vmatpush1.bf16.xpose.msra.mxu0 0
        %1624 = vmatprep.subr.bf16.mxu0 0
        %1625 = vmatpush1.bf16.xpose.msra.mxu0 0
        %1626 = vmatprep.subr.bf16.mxu0 0
        %1627 = vmatpush1.bf16.xpose.msra.mxu0 0
        %1628 = vmatprep.subr.bf16.mxu0 0
        %1629 = vmatpush1.bf16.xpose.msra.mxu0 0
        %1630 = vmatprep.subr.bf16.mxu0 0
        %1631 = vmatpush1.bf16.xpose.msra.mxu0 0
        %1632 = vmatprep.subr.bf16.mxu0 0
        %1633 = vmatpush1.bf16.xpose.msra.mxu0 0
        %1634 = vmatprep.subr.bf16.mxu0 0
        %1635 = vmatpush1.bf16.xpose.msra.mxu0 0
        %1636 = vmatprep.subr.bf16.mxu0 0
        %1637 = vmatpush1.bf16.xpose.msra.mxu0 0
        %1638 = vmatprep.subr.bf16.mxu0 0
        %1639 = vmatpush1.bf16.xpose.msra.mxu0 0
        %1640 = vmatprep.subr.bf16.mxu0 0
        %1641 = vmatpush1.bf16.xpose.msra.mxu0 0
        %1642 = vmatprep.mubr.bf16.mxu0 0
        %1643 = vmatmul.mubr.bf16.gmra.mrb[0].mxu0 %v1605
        %v1644 = vpop.f32.mrb[0].mxu0
        %v1645 = vadd.f32 0.0, %v1644
        %v1646 = vpop.f32.mrb[0].mxu0
        %v1647 = vpop.f32.mrb[0].mxu0
        %v1648 = vpop.f32.mrb[0].mxu0
        %1649 = vdwg.mxu0
        %v1650 = vmul.f32 %v1645, 0.35355338
        %v1651 = vsel %vm822, 1, 0
        %v1652 = vlaneseq
        %v1653 = vshrl.u32 %v1652, 7
        %v1654 = vsub.s32 0, %v1653
        %v1655 = vrot.slane %v1651, %v1654
        %vm1656 = vcmp.eq.s32.totalorder %v1655, 1
        %v1657 = vsel %vm1656, %v1650, -1e+10
        %v1658 = vsel %vm907, %v1657, -inf
        %1659 = vmax.xlane.f32.xlu0 %v1658
        %v1660 = vpop.xlane.xlu0 %1659
        %v1661 = vsub.f32 %v1657, %v1660
        %v1662 = vmul.f32 %v1661, 1.442695
        %v1663 = vpow.pop %v1662
        %v1664 = vsel %vm907, %v1663, 0.0
        %1665 = vadd.xlane.f32.xlu0 %v1664
        %v1666 = vpop.xlane.xlu0 %1665
        %v1667 = vrcp.pop %v1666
        %v1668 = vmul.f32 %v1663, %v1667
        %1669 = vst.msk [vmem:[%s797] sm:$0xff] %vm907, %v1668
        %v1670 = vpack.c.bf16 %v1668, %v1668
        %1672 = vrot.lane.b32.xlu0 %v1603, 96
        %v1673 = vpop.permute.xlu0 %1672
        %v1675 = vsel %vm907, %v1670, 0
        %v1678 = vsel %vm973, %v1673, 0
        %1680 = vmatprep.subr.bf16.mxu0 0
        %1681 = vmatpush1.bf16.msra.mxu0 %v1678
        %1682 = vmatprep.subr.bf16.mxu0 0
        %1683 = vmatpush1.bf16.msra.mxu0 0
        %1684 = vmatprep.subr.bf16.mxu0 0
        %1685 = vmatpush1.bf16.msra.mxu0 0
        %1686 = vmatprep.subr.bf16.mxu0 0
        %1687 = vmatpush1.bf16.msra.mxu0 0
        %1688 = vmatprep.subr.bf16.mxu0 0
        %1689 = vmatpush1.bf16.msra.mxu0 0
        %1690 = vmatprep.subr.bf16.mxu0 0
        %1691 = vmatpush1.bf16.msra.mxu0 0
        %1692 = vmatprep.subr.bf16.mxu0 0
        %1693 = vmatpush1.bf16.msra.mxu0 0
        %1694 = vmatprep.subr.bf16.mxu0 0
        %1695 = vmatpush1.bf16.msra.mxu0 0
        %1696 = vmatprep.subr.bf16.mxu0 0
        %1697 = vmatpush1.bf16.msra.mxu0 0
        %1698 = vmatprep.subr.bf16.mxu0 0
        %1699 = vmatpush1.bf16.msra.mxu0 0
        %1700 = vmatprep.subr.bf16.mxu0 0
        %1701 = vmatpush1.bf16.msra.mxu0 0
        %1702 = vmatprep.subr.bf16.mxu0 0
        %1703 = vmatpush1.bf16.msra.mxu0 0
        %1704 = vmatprep.subr.bf16.mxu0 0
        %1705 = vmatpush1.bf16.msra.mxu0 0
        %1706 = vmatprep.subr.bf16.mxu0 0
        %1707 = vmatpush1.bf16.msra.mxu0 0
        %1708 = vmatprep.subr.bf16.mxu0 0
        %1709 = vmatpush1.bf16.msra.mxu0 0
        %1710 = vmatprep.subr.bf16.mxu0 0
        %1711 = vmatpush1.bf16.msra.mxu0 0
        %1712 = vmatprep.mubr.bf16.mxu0 0
        %1713 = vmatmul.mubr.bf16.gmra.mrb[0].mxu0 %v1675
        %v1714 = vpop.f32.mrb[0].mxu0
        %v1715 = vadd.f32 0.0, %v1714
        %v1716 = vpop.f32.mrb[0].mxu0
        %v1717 = vpop.f32.mrb[0].mxu0
        %v1718 = vpop.f32.mrb[0].mxu0
        %1719 = vdwg.mxu0
        %1721 = vrot.lane.b32.xlu0 %v1602, 120
        %v1722 = vpop.permute.xlu0 %1721
        %1723 = vrot.lane.b32.xlu0 %v1603, 120
        %v1724 = vpop.permute.xlu0 %1723
        %v1726 = vsel %vm907, %v1722, 0
        %v1729 = vsel %vm907, %v1724, 0
        %1731 = vmatprep.subr.bf16.mxu0 0
        %1732 = vmatpush1.bf16.xpose.msra.mxu0 %v1729
        %1733 = vmatprep.subr.bf16.mxu0 0
        %1734 = vmatpush1.bf16.xpose.msra.mxu0 0
        %1735 = vmatprep.subr.bf16.mxu0 0
        %1736 = vmatpush1.bf16.xpose.msra.mxu0 0
        %1737 = vmatprep.subr.bf16.mxu0 0
        %1738 = vmatpush1.bf16.xpose.msra.mxu0 0
        %1739 = vmatprep.subr.bf16.mxu0 0
        %1740 = vmatpush1.bf16.xpose.msra.mxu0 0
        %1741 = vmatprep.subr.bf16.mxu0 0
        %1742 = vmatpush1.bf16.xpose.msra.mxu0 0
        %1743 = vmatprep.subr.bf16.mxu0 0
        %1744 = vmatpush1.bf16.xpose.msra.mxu0 0
        %1745 = vmatprep.subr.bf16.mxu0 0
        %1746 = vmatpush1.bf16.xpose.msra.mxu0 0
        %1747 = vmatprep.subr.bf16.mxu0 0
        %1748 = vmatpush1.bf16.xpose.msra.mxu0 0
        %1749 = vmatprep.subr.bf16.mxu0 0
        %1750 = vmatpush1.bf16.xpose.msra.mxu0 0
        %1751 = vmatprep.subr.bf16.mxu0 0
        %1752 = vmatpush1.bf16.xpose.msra.mxu0 0
        %1753 = vmatprep.subr.bf16.mxu0 0
        %1754 = vmatpush1.bf16.xpose.msra.mxu0 0
        %1755 = vmatprep.subr.bf16.mxu0 0
        %1756 = vmatpush1.bf16.xpose.msra.mxu0 0
        %1757 = vmatprep.subr.bf16.mxu0 0
        %1758 = vmatpush1.bf16.xpose.msra.mxu0 0
        %1759 = vmatprep.subr.bf16.mxu0 0
        %1760 = vmatpush1.bf16.xpose.msra.mxu0 0
        %1761 = vmatprep.subr.bf16.mxu0 0
        %1762 = vmatpush1.bf16.xpose.msra.mxu0 0
        %1763 = vmatprep.mubr.bf16.mxu0 0
        %1764 = vmatmul.mubr.bf16.gmra.mrb[0].mxu0 %v1726
        %v1765 = vpop.f32.mrb[0].mxu0
        %v1766 = vadd.f32 0.0, %v1765
        %v1767 = vpop.f32.mrb[0].mxu0
        %v1768 = vpop.f32.mrb[0].mxu0
        %v1769 = vpop.f32.mrb[0].mxu0
        %1770 = vdwg.mxu0
        %v1771 = vmul.f32 %v1766, 0.35355338
        %v1772 = vsel %vm1656, %v1771, -1e+10
        %v1773 = vsel %vm907, %v1772, -inf
        %1774 = vmax.xlane.f32.xlu0 %v1773
        %v1775 = vpop.xlane.xlu0 %1774
        %v1776 = vsub.f32 %v1772, %v1775
        %v1777 = vmul.f32 %v1776, 1.442695
        %v1778 = vpow.pop %v1777
        %v1779 = vsel %vm907, %v1778, 0.0
        %1780 = vadd.xlane.f32.xlu0 %v1779
        %v1781 = vpop.xlane.xlu0 %1780
        %v1782 = vrcp.pop %v1781
        %v1783 = vmul.f32 %v1778, %v1782
        %s1784 = scalar_lea.vmem %s797, 8 [#allocation2]
        %1785 = vst.msk [vmem:[%s1784] sm:$0xff] %vm907, %v1783
        %v1786 = vpack.c.bf16 %v1783, %v1783
        %1787 = vrot.lane.b32.xlu0 %v1603, 88
        %v1788 = vpop.permute.xlu0 %1787
        %v1790 = vsel %vm907, %v1786, 0
        %v1793 = vsel %vm973, %v1788, 0
        %1795 = vmatprep.subr.bf16.mxu0 0
        %1796 = vmatpush1.bf16.msra.mxu0 %v1793
        %1797 = vmatprep.subr.bf16.mxu0 0
        %1798 = vmatpush1.bf16.msra.mxu0 0
        %1799 = vmatprep.subr.bf16.mxu0 0
        %1800 = vmatpush1.bf16.msra.mxu0 0
        %1801 = vmatprep.subr.bf16.mxu0 0
        %1802 = vmatpush1.bf16.msra.mxu0 0
        %1803 = vmatprep.subr.bf16.mxu0 0
        %1804 = vmatpush1.bf16.msra.mxu0 0
        %1805 = vmatprep.subr.bf16.mxu0 0
        %1806 = vmatpush1.bf16.msra.mxu0 0
        %1807 = vmatprep.subr.bf16.mxu0 0
        %1808 = vmatpush1.bf16.msra.mxu0 0
        %1809 = vmatprep.subr.bf16.mxu0 0
        %1810 = vmatpush1.bf16.msra.mxu0 0
        %1811 = vmatprep.subr.bf16.mxu0 0
        %1812 = vmatpush1.bf16.msra.mxu0 0
        %1813 = vmatprep.subr.bf16.mxu0 0
        %1814 = vmatpush1.bf16.msra.mxu0 0
        %1815 = vmatprep.subr.bf16.mxu0 0
        %1816 = vmatpush1.bf16.msra.mxu0 0
        %1817 = vmatprep.subr.bf16.mxu0 0
        %1818 = vmatpush1.bf16.msra.mxu0 0
        %1819 = vmatprep.subr.bf16.mxu0 0
        %1820 = vmatpush1.bf16.msra.mxu0 0
        %1821 = vmatprep.subr.bf16.mxu0 0
        %1822 = vmatpush1.bf16.msra.mxu0 0
        %1823 = vmatprep.subr.bf16.mxu0 0
        %1824 = vmatpush1.bf16.msra.mxu0 0
        %1825 = vmatprep.subr.bf16.mxu0 0
        %1826 = vmatpush1.bf16.msra.mxu0 0
        %1827 = vmatprep.mubr.bf16.mxu0 0
        %1828 = vmatmul.mubr.bf16.gmra.mrb[0].mxu0 %v1790
        %v1829 = vpop.f32.mrb[0].mxu0
        %v1830 = vadd.f32 0.0, %v1829
        %v1831 = vpop.f32.mrb[0].mxu0
        %v1832 = vpop.f32.mrb[0].mxu0
        %v1833 = vpop.f32.mrb[0].mxu0
        %1834 = vdwg.mxu0
        %1835 = vrot.lane.b32.xlu0 %v1602, 112
        %v1836 = vpop.permute.xlu0 %1835
        %1837 = vrot.lane.b32.xlu0 %v1603, 112
        %v1838 = vpop.permute.xlu0 %1837
        %v1840 = vsel %vm907, %v1836, 0
        %v1843 = vsel %vm907, %v1838, 0
        %1845 = vmatprep.subr.bf16.mxu0 0
        %1846 = vmatpush1.bf16.xpose.msra.mxu0 %v1843
        %1847 = vmatprep.subr.bf16.mxu0 0
        %1848 = vmatpush1.bf16.xpose.msra.mxu0 0
        %1849 = vmatprep.subr.bf16.mxu0 0
        %1850 = vmatpush1.bf16.xpose.msra.mxu0 0
        %1851 = vmatprep.subr.bf16.mxu0 0
        %1852 = vmatpush1.bf16.xpose.msra.mxu0 0
        %1853 = vmatprep.subr.bf16.mxu0 0
        %1854 = vmatpush1.bf16.xpose.msra.mxu0 0
        %1855 = vmatprep.subr.bf16.mxu0 0
        %1856 = vmatpush1.bf16.xpose.msra.mxu0 0
        %1857 = vmatprep.subr.bf16.mxu0 0
        %1858 = vmatpush1.bf16.xpose.msra.mxu0 0
        %1859 = vmatprep.subr.bf16.mxu0 0
        %1860 = vmatpush1.bf16.xpose.msra.mxu0 0
        %1861 = vmatprep.subr.bf16.mxu0 0
        %1862 = vmatpush1.bf16.xpose.msra.mxu0 0
        %1863 = vmatprep.subr.bf16.mxu0 0
        %1864 = vmatpush1.bf16.xpose.msra.mxu0 0
        %1865 = vmatprep.subr.bf16.mxu0 0
        %1866 = vmatpush1.bf16.xpose.msra.mxu0 0
        %1867 = vmatprep.subr.bf16.mxu0 0
        %1868 = vmatpush1.bf16.xpose.msra.mxu0 0
        %1869 = vmatprep.subr.bf16.mxu0 0
        %1870 = vmatpush1.bf16.xpose.msra.mxu0 0
        %1871 = vmatprep.subr.bf16.mxu0 0
        %1872 = vmatpush1.bf16.xpose.msra.mxu0 0
        %1873 = vmatprep.subr.bf16.mxu0 0
        %1874 = vmatpush1.bf16.xpose.msra.mxu0 0
        %1875 = vmatprep.subr.bf16.mxu0 0
        %1876 = vmatpush1.bf16.xpose.msra.mxu0 0
        %1877 = vmatprep.mubr.bf16.mxu0 0
        %1878 = vmatmul.mubr.bf16.gmra.mrb[0].mxu0 %v1840
        %v1879 = vpop.f32.mrb[0].mxu0
        %v1880 = vadd.f32 0.0, %v1879
        %v1881 = vpop.f32.mrb[0].mxu0
        %v1882 = vpop.f32.mrb[0].mxu0
        %v1883 = vpop.f32.mrb[0].mxu0
        %1884 = vdwg.mxu0
        %v1885 = vmul.f32 %v1880, 0.35355338
        %v1886 = vsel %vm1656, %v1885, -1e+10
        %v1887 = vsel %vm907, %v1886, -inf
        %1888 = vmax.xlane.f32.xlu0 %v1887
        %v1889 = vpop.xlane.xlu0 %1888
        %v1890 = vsub.f32 %v1886, %v1889
        %v1891 = vmul.f32 %v1890, 1.442695
        %v1892 = vpow.pop %v1891
        %v1893 = vsel %vm907, %v1892, 0.0
        %1894 = vadd.xlane.f32.xlu0 %v1893
        %v1895 = vpop.xlane.xlu0 %1894
        %v1896 = vrcp.pop %v1895
        %v1897 = vmul.f32 %v1892, %v1896
        %s1898 = scalar_lea.vmem %s797, 16 [#allocation2]
        %1899 = vst.msk [vmem:[%s1898] sm:$0xff] %vm907, %v1897
        %v1900 = vpack.c.bf16 %v1897, %v1897
        %1901 = vrot.lane.b32.xlu0 %v1603, 80
        %v1902 = vpop.permute.xlu0 %1901
        %v1904 = vsel %vm907, %v1900, 0
        %v1907 = vsel %vm973, %v1902, 0
        %1909 = vmatprep.subr.bf16.mxu0 0
        %1910 = vmatpush1.bf16.msra.mxu0 %v1907
        %1911 = vmatprep.subr.bf16.mxu0 0
        %1912 = vmatpush1.bf16.msra.mxu0 0
        %1913 = vmatprep.subr.bf16.mxu0 0
        %1914 = vmatpush1.bf16.msra.mxu0 0
        %1915 = vmatprep.subr.bf16.mxu0 0
        %1916 = vmatpush1.bf16.msra.mxu0 0
        %1917 = vmatprep.subr.bf16.mxu0 0
        %1918 = vmatpush1.bf16.msra.mxu0 0
        %1919 = vmatprep.subr.bf16.mxu0 0
        %1920 = vmatpush1.bf16.msra.mxu0 0
        %1921 = vmatprep.subr.bf16.mxu0 0
        %1922 = vmatpush1.bf16.msra.mxu0 0
        %1923 = vmatprep.subr.bf16.mxu0 0
        %1924 = vmatpush1.bf16.msra.mxu0 0
        %1925 = vmatprep.subr.bf16.mxu0 0
        %1926 = vmatpush1.bf16.msra.mxu0 0
        %1927 = vmatprep.subr.bf16.mxu0 0
        %1928 = vmatpush1.bf16.msra.mxu0 0
        %1929 = vmatprep.subr.bf16.mxu0 0
        %1930 = vmatpush1.bf16.msra.mxu0 0
        %1931 = vmatprep.subr.bf16.mxu0 0
        %1932 = vmatpush1.bf16.msra.mxu0 0
        %1933 = vmatprep.subr.bf16.mxu0 0
        %1934 = vmatpush1.bf16.msra.mxu0 0
        %1935 = vmatprep.subr.bf16.mxu0 0
        %1936 = vmatpush1.bf16.msra.mxu0 0
        %1937 = vmatprep.subr.bf16.mxu0 0
        %1938 = vmatpush1.bf16.msra.mxu0 0
        %1939 = vmatprep.subr.bf16.mxu0 0
        %1940 = vmatpush1.bf16.msra.mxu0 0
        %1941 = vmatprep.mubr.bf16.mxu0 0
        %1942 = vmatmul.mubr.bf16.gmra.mrb[0].mxu0 %v1904
        %v1943 = vpop.f32.mrb[0].mxu0
        %v1944 = vadd.f32 0.0, %v1943
        %v1945 = vpop.f32.mrb[0].mxu0
        %v1946 = vpop.f32.mrb[0].mxu0
        %v1947 = vpop.f32.mrb[0].mxu0
        %1948 = vdwg.mxu0
        %1949 = vrot.lane.b32.xlu0 %v1602, 104
        %v1950 = vpop.permute.xlu0 %1949
        %1951 = vrot.lane.b32.xlu0 %v1603, 104
        %v1952 = vpop.permute.xlu0 %1951
        %v1954 = vsel %vm907, %v1950, 0
        %v1957 = vsel %vm907, %v1952, 0
        %1959 = vmatprep.subr.bf16.mxu0 0
        %1960 = vmatpush1.bf16.xpose.msra.mxu0 %v1957
        %1961 = vmatprep.subr.bf16.mxu0 0
        %1962 = vmatpush1.bf16.xpose.msra.mxu0 0
        %1963 = vmatprep.subr.bf16.mxu0 0
        %1964 = vmatpush1.bf16.xpose.msra.mxu0 0
        %1965 = vmatprep.subr.bf16.mxu0 0
        %1966 = vmatpush1.bf16.xpose.msra.mxu0 0
        %1967 = vmatprep.subr.bf16.mxu0 0
        %1968 = vmatpush1.bf16.xpose.msra.mxu0 0
        %1969 = vmatprep.subr.bf16.mxu0 0
        %1970 = vmatpush1.bf16.xpose.msra.mxu0 0
        %1971 = vmatprep.subr.bf16.mxu0 0
        %1972 = vmatpush1.bf16.xpose.msra.mxu0 0
        %1973 = vmatprep.subr.bf16.mxu0 0
        %1974 = vmatpush1.bf16.xpose.msra.mxu0 0
        %1975 = vmatprep.subr.bf16.mxu0 0
        %1976 = vmatpush1.bf16.xpose.msra.mxu0 0
        %1977 = vmatprep.subr.bf16.mxu0 0
        %1978 = vmatpush1.bf16.xpose.msra.mxu0 0
        %1979 = vmatprep.subr.bf16.mxu0 0
        %1980 = vmatpush1.bf16.xpose.msra.mxu0 0
        %1981 = vmatprep.subr.bf16.mxu0 0
        %1982 = vmatpush1.bf16.xpose.msra.mxu0 0
        %1983 = vmatprep.subr.bf16.mxu0 0
        %1984 = vmatpush1.bf16.xpose.msra.mxu0 0
        %1985 = vmatprep.subr.bf16.mxu0 0
        %1986 = vmatpush1.bf16.xpose.msra.mxu0 0
        %1987 = vmatprep.subr.bf16.mxu0 0
        %1988 = vmatpush1.bf16.xpose.msra.mxu0 0
        %1989 = vmatprep.subr.bf16.mxu0 0
        %1990 = vmatpush1.bf16.xpose.msra.mxu0 0
        %1991 = vmatprep.mubr.bf16.mxu0 0
        %1992 = vmatmul.mubr.bf16.gmra.mrb[0].mxu0 %v1954
        %v1993 = vpop.f32.mrb[0].mxu0
        %v1994 = vadd.f32 0.0, %v1993
        %v1995 = vpop.f32.mrb[0].mxu0
        %v1996 = vpop.f32.mrb[0].mxu0
        %v1997 = vpop.f32.mrb[0].mxu0
        %1998 = vdwg.mxu0
        %v1999 = vmul.f32 %v1994, 0.35355338
        %v2000 = vsel %vm1656, %v1999, -1e+10
        %v2001 = vsel %vm907, %v2000, -inf
        %2002 = vmax.xlane.f32.xlu0 %v2001
        %v2003 = vpop.xlane.xlu0 %2002
        %v2004 = vsub.f32 %v2000, %v2003
        %v2005 = vmul.f32 %v2004, 1.442695
        %v2006 = vpow.pop %v2005
        %v2007 = vsel %vm907, %v2006, 0.0
        %2008 = vadd.xlane.f32.xlu0 %v2007
        %v2009 = vpop.xlane.xlu0 %2008
        %v2010 = vrcp.pop %v2009
        %v2011 = vmul.f32 %v2006, %v2010
        %s2012 = scalar_lea.vmem %s797, 24 [#allocation2]
        %2013 = vst.msk [vmem:[%s2012] sm:$0xff] %vm907, %v2011
        %v2014 = vpack.c.bf16 %v2011, %v2011
        %2015 = vrot.lane.b32.xlu0 %v1603, 72
        %v2016 = vpop.permute.xlu0 %2015
        %v2018 = vsel %vm907, %v2014, 0
        %v2021 = vsel %vm973, %v2016, 0
        %2023 = vmatprep.subr.bf16.mxu0 0
        %2024 = vmatpush1.bf16.msra.mxu0 %v2021
        %2025 = vmatprep.subr.bf16.mxu0 0
        %2026 = vmatpush1.bf16.msra.mxu0 0
        %2027 = vmatprep.subr.bf16.mxu0 0
        %2028 = vmatpush1.bf16.msra.mxu0 0
        %2029 = vmatprep.subr.bf16.mxu0 0
        %2030 = vmatpush1.bf16.msra.mxu0 0
        %2031 = vmatprep.subr.bf16.mxu0 0
        %2032 = vmatpush1.bf16.msra.mxu0 0
        %2033 = vmatprep.subr.bf16.mxu0 0
        %2034 = vmatpush1.bf16.msra.mxu0 0
        %2035 = vmatprep.subr.bf16.mxu0 0
        %2036 = vmatpush1.bf16.msra.mxu0 0
        %2037 = vmatprep.subr.bf16.mxu0 0
        %2038 = vmatpush1.bf16.msra.mxu0 0
        %2039 = vmatprep.subr.bf16.mxu0 0
        %2040 = vmatpush1.bf16.msra.mxu0 0
        %2041 = vmatprep.subr.bf16.mxu0 0
        %2042 = vmatpush1.bf16.msra.mxu0 0
        %2043 = vmatprep.subr.bf16.mxu0 0
        %2044 = vmatpush1.bf16.msra.mxu0 0
        %2045 = vmatprep.subr.bf16.mxu0 0
        %2046 = vmatpush1.bf16.msra.mxu0 0
        %2047 = vmatprep.subr.bf16.mxu0 0
        %2048 = vmatpush1.bf16.msra.mxu0 0
        %2049 = vmatprep.subr.bf16.mxu0 0
        %2050 = vmatpush1.bf16.msra.mxu0 0
        %2051 = vmatprep.subr.bf16.mxu0 0
        %2052 = vmatpush1.bf16.msra.mxu0 0
        %2053 = vmatprep.subr.bf16.mxu0 0
        %2054 = vmatpush1.bf16.msra.mxu0 0
        %2055 = vmatprep.mubr.bf16.mxu0 0
        %2056 = vmatmul.mubr.bf16.gmra.mrb[0].mxu0 %v2018
        %v2057 = vpop.f32.mrb[0].mxu0
        %v2058 = vadd.f32 0.0, %v2057
        %v2059 = vpop.f32.mrb[0].mxu0
        %v2060 = vpop.f32.mrb[0].mxu0
        %v2061 = vpop.f32.mrb[0].mxu0
        %2062 = vdwg.mxu0
        %2064 = vrot.lane.b32.xlu0 %v1830, 8
        %v2065 = vpop.permute.xlu0 %2064
        %2068 = vrot.lane.b32.xlu0 %v1944, 16
        %v2069 = vpop.permute.xlu0 %2068
        %2072 = vrot.lane.b32.xlu0 %v2058, 24
        %v2073 = vpop.permute.xlu0 %2072
        %v2075 = vsel %vm907, %v1715, %v2065
        %v2076 = vsel %vm1366, %v2075, %v2069
        %v2077 = vsel %vm1368, %v2076, %v2073
        %v2078 = vld [vmem:[%s14] sm:$0xf]
        %v2079 = vld [vmem:[%s14 + $0x4] sm:$0xf]
        %v2080 = vld [vmem:[%s14 + $0x8] sm:$0xf]
        %v2081 = vld [vmem:[%s14 + $0xc] sm:$0xf]
        %v2082 = vpack.c.bf16 %v2077, %v2077
        %v2083 = vld [vmem:[%s15] sm:$0x1]
        %v2085 = vlaneseq
        %v2086 = vshrl.u32 %v2085, 7
        %v2087 = vsub.s32 0, %v2086
        %v2088 = vrot.slane %v2083, %v2087
        %v2094 = vunpack.c.l.b16 %v2078
        %v2095 = vunpack.c.l.b16 %v2079
        %v2096 = vunpack.c.l.b16 %v2080
        %v2097 = vunpack.c.l.b16 %v2081
        %v2098 = vpack.c.b16 %v2095, %v2094
        %v2099 = vpack.c.b16 %v2097, %v2096
        %v2103 = vsel %vm859, %v2082, 0
        %2105 = vmatprep.subr.bf16.mxu0 0
        %2106 = vmatpush1.bf16.msra.mxu0 %v2098
        %2107 = vmatprep.subr.bf16.mxu0 0
        %2108 = vmatpush1.bf16.msra.mxu0 %v2099
        %2109 = vmatprep.subr.bf16.mxu0 0
        %2110 = vmatpush1.bf16.msra.mxu0 0
        %2111 = vmatprep.subr.bf16.mxu0 0
        %2112 = vmatpush1.bf16.msra.mxu0 0
        %2113 = vmatprep.subr.bf16.mxu0 0
        %2114 = vmatpush1.bf16.msra.mxu0 0
        %2115 = vmatprep.subr.bf16.mxu0 0
        %2116 = vmatpush1.bf16.msra.mxu0 0
        %2117 = vmatprep.subr.bf16.mxu0 0
        %2118 = vmatpush1.bf16.msra.mxu0 0
        %2119 = vmatprep.subr.bf16.mxu0 0
        %2120 = vmatpush1.bf16.msra.mxu0 0
        %2121 = vmatprep.subr.bf16.mxu0 0
        %2122 = vmatpush1.bf16.msra.mxu0 0
        %2123 = vmatprep.subr.bf16.mxu0 0
        %2124 = vmatpush1.bf16.msra.mxu0 0
        %2125 = vmatprep.subr.bf16.mxu0 0
        %2126 = vmatpush1.bf16.msra.mxu0 0
        %2127 = vmatprep.subr.bf16.mxu0 0
        %2128 = vmatpush1.bf16.msra.mxu0 0
        %2129 = vmatprep.subr.bf16.mxu0 0
        %2130 = vmatpush1.bf16.msra.mxu0 0
        %2131 = vmatprep.subr.bf16.mxu0 0
        %2132 = vmatpush1.bf16.msra.mxu0 0
        %2133 = vmatprep.subr.bf16.mxu0 0
        %2134 = vmatpush1.bf16.msra.mxu0 0
        %2135 = vmatprep.subr.bf16.mxu0 0
        %2136 = vmatpush1.bf16.msra.mxu0 0
        %2137 = vmatprep.mubr.bf16.mxu0 0
        %2138 = vmatmul.mubr.bf16.gmra.mrb[0].mxu0 %v2103
        %v2139 = vpop.f32.mrb[0].mxu0
        %v2140 = vadd.f32 %v2088, %v2139
        %v2141 = vpop.f32.mrb[0].mxu0
        %v2142 = vpop.f32.mrb[0].mxu0
        %v2143 = vpop.f32.mrb[0].mxu0
        %2144 = vdwg.mxu0
        %v2145 = vadd.f32 %v1467, %v2140
        %v2146 = vld [vmem:[%s16] sm:$0x1]
        %v2147 = vld [vmem:[%s17] sm:$0x1]
        %v2148 = vsel %vm859, %v2145, 0.0
        %2149 = vadd.xlane.f32.xlu0 %v2148
        %v2150 = vpop.xlane.xlu0 %2149
        %v2151 = vmul.f32 %v2150, %v1443
        %v2152 = vsub.f32 %v2145, %v2151
        %v2153 = vmul.f32 %v2152, %v2152
        %v2154 = vsel %vm859, %v2153, 0.0
        %2155 = vadd.xlane.f32.xlu0 %v2154
        %v2156 = vpop.xlane.xlu0 %2155
        %v2157 = vmul.f32 %v2156, %v1443
        %v2158 = vadd.f32 %v2157, 1e-05
        %v2159 = vrsqrt.pop %v2158
        %v2160 = vmul.f32 %v2152, %v2159
        %v2162 = vlaneseq
        %v2163 = vshrl.u32 %v2162, 7
        %v2164 = vsub.s32 0, %v2163
        %v2165 = vrot.slane %v2146, %v2164
        %v2167 = vmul.f32 %v2160, %v2165
        %v2169 = vlaneseq
        %v2170 = vshrl.u32 %v2169, 7
        %v2171 = vsub.s32 0, %v2170
        %v2172 = vrot.slane %v2147, %v2171
        %v2174 = vadd.f32 %v2167, %v2172
        %v2175 = vld [vmem:[%s18] sm:$0xf]
        %v2176 = vld [vmem:[%s18 + $0x4] sm:$0xf]
        %v2177 = vld [vmem:[%s18 + $0x8] sm:$0xf]
        %v2178 = vld [vmem:[%s18 + $0xc] sm:$0xf]
        %v2179 = vpack.c.bf16 %v2174, %v2174
        %v2180 = vld [vmem:[%s19] sm:$0x1]
        %v2182 = vlaneseq
        %v2183 = vshrl.u32 %v2182, 7
        %v2184 = vsub.s32 0, %v2183
        %v2185 = vrot.slane %v2180, %v2184
        %v2191 = vunpack.c.l.b16 %v2175
        %v2192 = vunpack.c.l.b16 %v2176
        %v2193 = vunpack.c.l.b16 %v2177
        %v2194 = vunpack.c.l.b16 %v2178
        %v2195 = vpack.c.b16 %v2192, %v2191
        %v2196 = vpack.c.b16 %v2194, %v2193
        %v2200 = vsel %vm859, %v2179, 0
        %2202 = vmatprep.subr.bf16.mxu0 0
        %2203 = vmatpush1.bf16.msra.mxu0 %v2195
        %2204 = vmatprep.subr.bf16.mxu0 0
        %2205 = vmatpush1.bf16.msra.mxu0 %v2196
        %2206 = vmatprep.subr.bf16.mxu0 0
        %2207 = vmatpush1.bf16.msra.mxu0 0
        %2208 = vmatprep.subr.bf16.mxu0 0
        %2209 = vmatpush1.bf16.msra.mxu0 0
        %2210 = vmatprep.subr.bf16.mxu0 0
        %2211 = vmatpush1.bf16.msra.mxu0 0
        %2212 = vmatprep.subr.bf16.mxu0 0
        %2213 = vmatpush1.bf16.msra.mxu0 0
        %2214 = vmatprep.subr.bf16.mxu0 0
        %2215 = vmatpush1.bf16.msra.mxu0 0
        %2216 = vmatprep.subr.bf16.mxu0 0
        %2217 = vmatpush1.bf16.msra.mxu0 0
        %2218 = vmatprep.subr.bf16.mxu0 0
        %2219 = vmatpush1.bf16.msra.mxu0 0
        %2220 = vmatprep.subr.bf16.mxu0 0
        %2221 = vmatpush1.bf16.msra.mxu0 0
        %2222 = vmatprep.subr.bf16.mxu0 0
        %2223 = vmatpush1.bf16.msra.mxu0 0
        %2224 = vmatprep.subr.bf16.mxu0 0
        %2225 = vmatpush1.bf16.msra.mxu0 0
        %2226 = vmatprep.subr.bf16.mxu0 0
        %2227 = vmatpush1.bf16.msra.mxu0 0
        %2228 = vmatprep.subr.bf16.mxu0 0
        %2229 = vmatpush1.bf16.msra.mxu0 0
        %2230 = vmatprep.subr.bf16.mxu0 0
        %2231 = vmatpush1.bf16.msra.mxu0 0
        %2232 = vmatprep.subr.bf16.mxu0 0
        %2233 = vmatpush1.bf16.msra.mxu0 0
        %2234 = vmatprep.mubr.bf16.mxu0 0
        %2235 = vmatmul.mubr.bf16.gmra.mrb[0].mxu0 %v2200
        %v2236 = vpop.f32.mrb[0].mxu0
        %v2237 = vadd.f32 %v2185, %v2236
        %v2238 = vpop.f32.mrb[0].mxu0
        %v2239 = vpop.f32.mrb[0].mxu0
        %v2240 = vpop.f32.mrb[0].mxu0
        %2241 = vdwg.mxu0
        %v2242 = vmax.f32 %v2237, 0.0
        %v2243 = vld [vmem:[%s20] sm:$0xf]
        %v2244 = vld [vmem:[%s20 + $0x4] sm:$0xf]
        %v2245 = vld [vmem:[%s20 + $0x8] sm:$0xf]
        %v2246 = vld [vmem:[%s20 + $0xc] sm:$0xf]
        %v2247 = vld [vmem:[%s20 + $0x10] sm:$0xf]
        %v2248 = vld [vmem:[%s20 + $0x14] sm:$0xf]
        %v2249 = vld [vmem:[%s20 + $0x18] sm:$0xf]
        %v2250 = vld [vmem:[%s20 + $0x1c] sm:$0xf]
        %v2251 = vpack.c.bf16 %v2242, %v2242
        %v2252 = vld [vmem:[%s21] sm:$0x1]
        %v2254 = vlaneseq
        %v2255 = vshrl.u32 %v2254, 7
        %v2256 = vsub.s32 0, %v2255
        %v2257 = vrot.slane %v2252, %v2256
        %v2267 = vunpack.c.l.b16 %v2243
        %v2268 = vunpack.c.l.b16 %v2244
        %v2269 = vunpack.c.l.b16 %v2245
        %v2270 = vunpack.c.l.b16 %v2246
        %v2271 = vunpack.c.l.b16 %v2247
        %v2272 = vunpack.c.l.b16 %v2248
        %v2273 = vunpack.c.l.b16 %v2249
        %v2274 = vunpack.c.l.b16 %v2250
        %v2275 = vpack.c.b16 %v2268, %v2267
        %v2276 = vpack.c.b16 %v2270, %v2269
        %v2277 = vpack.c.b16 %v2272, %v2271
        %v2278 = vpack.c.b16 %v2274, %v2273
        %vm2283 = vcmask 523264
        %v2285 = vsel %vm2283, %v2251, 0
        %2287 = vmatprep.subr.bf16.mxu0 0
        %2288 = vmatpush1.bf16.msra.mxu0 %v2275
        %2289 = vmatprep.subr.bf16.mxu0 0
        %2290 = vmatpush1.bf16.msra.mxu0 %v2276
        %2291 = vmatprep.subr.bf16.mxu0 0
        %2292 = vmatpush1.bf16.msra.mxu0 %v2277
        %2293 = vmatprep.subr.bf16.mxu0 0
        %2294 = vmatpush1.bf16.msra.mxu0 %v2278
        %2295 = vmatprep.subr.bf16.mxu0 0
        %2296 = vmatpush1.bf16.msra.mxu0 0
        %2297 = vmatprep.subr.bf16.mxu0 0
        %2298 = vmatpush1.bf16.msra.mxu0 0
        %2299 = vmatprep.subr.bf16.mxu0 0
        %2300 = vmatpush1.bf16.msra.mxu0 0
        %2301 = vmatprep.subr.bf16.mxu0 0
        %2302 = vmatpush1.bf16.msra.mxu0 0
        %2303 = vmatprep.subr.bf16.mxu0 0
        %2304 = vmatpush1.bf16.msra.mxu0 0
        %2305 = vmatprep.subr.bf16.mxu0 0
        %2306 = vmatpush1.bf16.msra.mxu0 0
        %2307 = vmatprep.subr.bf16.mxu0 0
        %2308 = vmatpush1.bf16.msra.mxu0 0
        %2309 = vmatprep.subr.bf16.mxu0 0
        %2310 = vmatpush1.bf16.msra.mxu0 0
        %2311 = vmatprep.subr.bf16.mxu0 0
        %2312 = vmatpush1.bf16.msra.mxu0 0
        %2313 = vmatprep.subr.bf16.mxu0 0
        %2314 = vmatpush1.bf16.msra.mxu0 0
        %2315 = vmatprep.subr.bf16.mxu0 0
        %2316 = vmatpush1.bf16.msra.mxu0 0
        %2317 = vmatprep.subr.bf16.mxu0 0
        %2318 = vmatpush1.bf16.msra.mxu0 0
        %2319 = vmatprep.mubr.bf16.mxu0 0
        %2320 = vmatmul.mubr.bf16.gmra.mrb[0].mxu0 %v2285
        %v2321 = vpop.f32.mrb[0].mxu0
        %v2322 = vadd.f32 %v2257, %v2321
        %v2323 = vpop.f32.mrb[0].mxu0
        %v2324 = vpop.f32.mrb[0].mxu0
        %v2325 = vpop.f32.mrb[0].mxu0
        %2326 = vdwg.mxu0
        %v2327 = vadd.f32 %v2174, %v2322
        %v2328 = vld [vmem:[%s22] sm:$0x1]
        %v2329 = vld [vmem:[%s23] sm:$0x1]
        %v2330 = vsel %vm859, %v2327, 0.0
        %2331 = vadd.xlane.f32.xlu0 %v2330
        %v2332 = vpop.xlane.xlu0 %2331
        %v2333 = vmul.f32 %v2332, %v1443
        %v2334 = vsub.f32 %v2327, %v2333
        %v2335 = vmul.f32 %v2334, %v2334
        %v2336 = vsel %vm859, %v2335, 0.0
        %2337 = vadd.xlane.f32.xlu0 %v2336
        %v2338 = vpop.xlane.xlu0 %2337
        %v2339 = vmul.f32 %v2338, %v1443
        %v2340 = vadd.f32 %v2339, 1e-05
        %v2341 = vrsqrt.pop %v2340
        %v2342 = vmul.f32 %v2334, %v2341
        %v2344 = vlaneseq
        %v2345 = vshrl.u32 %v2344, 7
        %v2346 = vsub.s32 0, %v2345
        %v2347 = vrot.slane %v2328, %v2346
        %v2349 = vmul.f32 %v2342, %v2347
        %v2351 = vlaneseq
        %v2352 = vshrl.u32 %v2351, 7
        %v2353 = vsub.s32 0, %v2352
        %v2354 = vrot.slane %v2329, %v2353
        %v2356 = vadd.f32 %v2349, %v2354
        %2357 = vst.msk [vmem:[%s815] sm:$0xff] %vm859, %v2356
        %p2358 = scmp.lt.s32.totalorder %s40, 1
        %s2359 = scalar_select %p2358, %s40, 1
        %s2360 = smul.addr %s2359, 8
        %s2361 = scalar_lea.vmem %s24, %s2360
        %s2362 = sand.u32 %s598, 1
        %s2363 = scalar_lea.sflag [#allocation3], %s2362
        %s2364 = sand.u32 %s598, 1
        %s2365 = smul.addr %s2364, 32
        %s2366 = scalar_lea.vmem [#allocation2], %s2365
        // Predicated region
        $region117: #{_lambda_.8} parent=115 // pred_check
          %p2367 = pneg %p582
        $region118: #{_lambda_.8} parent=115 // pred_check_branch
          %2369 = sbr.rel (%p2367) target = $region120
        $region119: #{_lambda_.8} parent=115 // pred_region
          _
        $region120: #{_lambda_.8} parent=115 // pred_fallthru
          _
        // Predicated region
        $region121: #{_lambda_.8} parent=115 // pred_check
          %p2370 = pneg %p608
        $region122: #{_lambda_.8} parent=115 // pred_check_branch
          %2372 = sbr.rel (%p2370) target = $region124
        $region123: #{_lambda_.8} parent=115 // pred_region
          %s2374 = ssub.s32 512, 512
          %2375 = vsyncadd %s2363, %s2374
          %s2376 = smul.addr %s40, 4
          %s2377 = smul.addr %s2376, 128
          %s2378 = scalar_lea.hbm %s25, %s2377
          %s2379 = sshll.u32 %s2366, 4
          %s2380 = int_to_ptr.vmem [resolvable:$true] %s2379
          %2385 = dma.vmem_to_hbm [thread:$0]  %s2380, 512, %s2378, %s2363, 128, 128, 8
        $region124: #{_lambda_.8} parent=115 // pred_fallthru
          _
      $region116: #{_lambda_.8} parent=5 // pred_fallthru
        _
      %p2386 = scmp.le.s32.totalorder 2, %s35
      // Predicated region
      $region125: #{_lambda_.8} parent=5 // pred_check
        %p2387 = pneg %p2386
      $region126: #{_lambda_.8} parent=5 // pred_check_branch
        %2389 = sbr.rel (%p2387) target = $region128
      $region127: #{_lambda_.8} parent=5 // pred_region
        %s2390 = ssub.s32 %s35, 2
        // Predicated region
        $region129: #{_lambda_.8} parent=127 // pred_check
          %p2391 = pneg %p588
        $region130: #{_lambda_.8} parent=127 // pred_check_branch
          %2393 = sbr.rel (%p2391) target = $region132
        $region131: #{_lambda_.8} parent=127 // pred_region
          %p2394 = scmp.lt.s32.totalorder %s41, 1
          %s2395 = scalar_select %p2394, %s41, 1
          %s2396 = smul.addr %s2395, 8
          %s2397 = scalar_lea.vmem %s24, %s2396
        $region132: #{_lambda_.8} parent=127 // pred_fallthru
          _
        // Predicated region
        $region133: #{_lambda_.8} parent=127 // pred_check
          %p2398 = pneg %p614
        $region134: #{_lambda_.8} parent=127 // pred_check_branch
          %2400 = sbr.rel (%p2398) target = $region136
        $region135: #{_lambda_.8} parent=127 // pred_region
          %s2401 = sand.u32 %s599, 1
          %s2402 = scalar_lea.sflag [#allocation3], %s2401
          %s2403 = sand.u32 %s599, 1
          %s2404 = smul.addr %s2403, 32
          %s2405 = scalar_lea.vmem [#allocation2], %s2404
          %2406 = dma.done %s2402, 512
        $region136: #{_lambda_.8} parent=127 // pred_fallthru
          _
      $region128: #{_lambda_.8} parent=5 // pred_fallthru
        _
    $region6: #{_lambda_.8} parent=1 // loop_footer
      %s39 = sadd.s32 1, %s35
    $region7: #{_lambda_.8} parent=1 // loop_footer_branch
      %34 = sbr.rel target = $region3
    $region8: #{_lambda_.8} parent=1 // loop_exit
      _
    %2407 = vsyncpa [#allocation3], 1
    %s2408 = scalar_lea.sflag [#allocation3], 1
    %2409 = vsyncpa %s2408, 1

// kernel: _lambda_.7
$region0: #{_lambda_.7}
  #allocation0 [shape = 'u32[]', space=smem, size = 0x4, offset = 0x4, fixed_abs, tag = 'smem constant byte address 0x4 - core index']
  #allocation1 [shape = 'u32[144,128]{1,0:T(1,128)}', space=vmem, size = 0x12000, scoped, tag = 'internal scratch']
  %s0 = inlined_call_operand.vmem [shape: f32[2,8,32], index: 0, kind: input, shape index: {}]
  %s1 = inlined_call_operand.vmem [shape: f32[2,8,32], index: 1, kind: input, shape index: {}]
  %s2 = inlined_call_operand.vmem [shape: f32[2,1,8], index: 2, kind: input, shape index: {}]
  %s3 = inlined_call_operand.vmem [shape: f32[2,1,8], index: 3, kind: input, shape index: {}]
  %s4 = inlined_call_operand.vmem [shape: bf16[32,96], index: 4, kind: input, shape index: {}]
  %s5 = inlined_call_operand.vmem [shape: f32[1,96], index: 5, kind: input, shape index: {}]
  %s6 = inlined_call_operand.vmem [shape: bf16[32,32], index: 6, kind: input, shape index: {}]
  %s7 = inlined_call_operand.vmem [shape: f32[1,32], index: 7, kind: input, shape index: {}]
  %s8 = inlined_call_operand.vmem [shape: f32[1,32], index: 8, kind: input, shape index: {}]
  %s9 = inlined_call_operand.vmem [shape: f32[1,32], index: 9, kind: input, shape index: {}]
  %s10 = inlined_call_operand.vmem [shape: bf16[32,32], index: 10, kind: input, shape index: {}]
  %s11 = inlined_call_operand.vmem [shape: f32[1,32], index: 11, kind: input, shape index: {}]
  %s12 = inlined_call_operand.vmem [shape: bf16[32,64], index: 12, kind: input, shape index: {}]
  %s13 = inlined_call_operand.vmem [shape: f32[1,64], index: 13, kind: input, shape index: {}]
  %s14 = inlined_call_operand.vmem [shape: bf16[32,32], index: 14, kind: input, shape index: {}]
  %s15 = inlined_call_operand.vmem [shape: f32[1,32], index: 15, kind: input, shape index: {}]
  %s16 = inlined_call_operand.vmem [shape: f32[1,32], index: 16, kind: input, shape index: {}]
  %s17 = inlined_call_operand.vmem [shape: f32[1,32], index: 17, kind: input, shape index: {}]
  %s18 = inlined_call_operand.vmem [shape: bf16[32,64], index: 18, kind: input, shape index: {}]
  %s19 = inlined_call_operand.vmem [shape: f32[1,64], index: 19, kind: input, shape index: {}]
  %s20 = inlined_call_operand.vmem [shape: bf16[64,32], index: 20, kind: input, shape index: {}]
  %s21 = inlined_call_operand.vmem [shape: f32[1,32], index: 21, kind: input, shape index: {}]
  %s22 = inlined_call_operand.vmem [shape: f32[1,32], index: 22, kind: input, shape index: {}]
  %s23 = inlined_call_operand.vmem [shape: f32[1,32], index: 23, kind: input, shape index: {}]
  %s24 = inlined_call_operand.vmem [shape: f32[2,8,32], index: 24, kind: output, shape index: {}]
  %s25 = sld [smem:[#allocation0]]
  $region129: #{_lambda_.7} parent=0
    _
  %s27 = ssub.s32 1, %s25
  %s28 = scalar_select 0, %s27, %s25
  loop: start=0, step=1, limit=4
  $region2: #{_lambda_.7} parent=0 // loop_pre_header
    _
  $region3: #{_lambda_.7} parent=0 // loop_header
    %s30 = sphi 0, %s34
    %p31 = scmp.ge.s32.totalorder %s30, 4
    %s40 = sphi 0, %s42
    %s43 = sphi 0, %s40
    %s44 = sphi 0, %s43
    %s60 = sphi 0, %s44
    %s66 = sphi 0, %s68
    %s69 = sphi 0, %s66
    %s70 = sphi 0, %s69
    %s86 = sphi 0, %s70
    %s92 = sphi 0, %s94
    %s95 = sphi 0, %s92
    %s96 = sphi 0, %s95
    %s112 = sphi 0, %s96
    %s118 = sphi 0, %s120
    %s121 = sphi 0, %s118
    %s122 = sphi 0, %s121
    %s138 = sphi 0, %s122
    %s142 = sphi 0, %s142
    %s144 = sphi 0, %s142
    %s145 = sphi 0, %s144
    %s159 = sphi 0, %s145
    %s163 = sphi 0, %s163
    %s165 = sphi 0, %s163
    %s166 = sphi 0, %s165
    %s180 = sphi 0, %s166
    %s184 = sphi 0, %s184
    %s186 = sphi 0, %s184
    %s187 = sphi 0, %s186
    %s201 = sphi 0, %s187
    %s205 = sphi 0, %s205
    %s207 = sphi 0, %s205
    %s208 = sphi 0, %s207
    %s222 = sphi 0, %s208
    %s226 = sphi 0, %s226
    %s228 = sphi 0, %s226
    %s229 = sphi 0, %s228
    %s243 = sphi 0, %s229
    %s247 = sphi 0, %s247
    %s249 = sphi 0, %s247
    %s250 = sphi 0, %s249
    %s264 = sphi 0, %s250
    %s268 = sphi 0, %s268
    %s270 = sphi 0, %s268
    %s271 = sphi 0, %s270
    %s285 = sphi 0, %s271
    %s289 = sphi 0, %s289
    %s291 = sphi 0, %s289
    %s292 = sphi 0, %s291
    %s306 = sphi 0, %s292
    %s310 = sphi 0, %s310
    %s312 = sphi 0, %s310
    %s313 = sphi 0, %s312
    %s327 = sphi 0, %s313
    %s331 = sphi 0, %s331
    %s333 = sphi 0, %s331
    %s334 = sphi 0, %s333
    %s348 = sphi 0, %s334
    %s352 = sphi 0, %s352
    %s354 = sphi 0, %s352
    %s355 = sphi 0, %s354
    %s369 = sphi 0, %s355
    %s373 = sphi 0, %s373
    %s375 = sphi 0, %s373
    %s376 = sphi 0, %s375
    %s390 = sphi 0, %s376
    %s394 = sphi 0, %s394
    %s396 = sphi 0, %s394
    %s397 = sphi 0, %s396
    %s411 = sphi 0, %s397
    %s415 = sphi 0, %s415
    %s417 = sphi 0, %s415
    %s418 = sphi 0, %s417
    %s432 = sphi 0, %s418
    %s436 = sphi 0, %s436
    %s438 = sphi 0, %s436
    %s439 = sphi 0, %s438
    %s453 = sphi 0, %s439
    %s457 = sphi 0, %s457
    %s459 = sphi 0, %s457
    %s460 = sphi 0, %s459
    %s474 = sphi 0, %s460
    %s478 = sphi 0, %s478
    %s480 = sphi 0, %s478
    %s481 = sphi 0, %s480
    %s495 = sphi 0, %s481
    %s499 = sphi 0, %s499
    %s501 = sphi 0, %s499
    %s502 = sphi 0, %s501
    %s516 = sphi 0, %s502
    %s520 = sphi 0, %s520
    %s522 = sphi 0, %s520
    %s523 = sphi 0, %s522
    %s537 = sphi 0, %s523
    %s541 = sphi 0, %s541
    %s543 = sphi 0, %s541
    %s544 = sphi 0, %s543
    %s558 = sphi 0, %s544
    %s564 = sphi 0, %s566
    %s567 = sphi 0, %s564
    %s568 = sphi 0, %s567
    %s584 = sphi 0, %s568
  $region4: #{_lambda_.7} parent=0 // loop_header_branch
    %33 = sbr.rel (%p31) target = $region8
  $region5: #{_lambda_.7} parent=0 // loop_body
    %s35 = ssub.s32 %s30, 1
    %s36 = ssub.s32 %s30, 2
    %s37 = sadd.s32 %s30, 1
    %s38 = ssub.s32 %s30, %s37
    %p39 = scmp.eq.s32.totalorder %s38, 0
    %s41 = sadd.s32 %s40, 1
    %s42 = scalar_select %p39, %s40, %s41
    %p45 = pneg %p39
    %p46 = scmp.eq.s32.totalorder %s30, 1
    %p47 = por %p45, %p46
    %p48 = scmp.ne.s32.totalorder %s40, %s43
    %p49 = scmp.eq.s32.totalorder %s30, 0
    %p50 = por %p48, %p49
    %p51 = scmp.ne.s32.totalorder %s40, %s43
    %p52 = scmp.eq.s32.totalorder %s35, 1
    %p53 = por %p51, %p52
    %p54 = scmp.ne.s32.totalorder %s43, %s44
    %p55 = scmp.eq.s32.totalorder %s35, 0
    %p56 = por %p54, %p55
    %p57 = scmp.ne.s32.totalorder %s43, %s44
    %p58 = scmp.eq.s32.totalorder %s36, 1
    %p59 = por %p57, %p58
    %p61 = scmp.ne.s32.totalorder %s44, %s60
    %p62 = scmp.eq.s32.totalorder %s36, 0
    %p63 = por %p61, %p62
    %s64 = ssub.s32 %s30, %s37
    %p65 = scmp.eq.s32.totalorder %s64, 0
    %s67 = sadd.s32 %s66, 1
    %s68 = scalar_select %p65, %s66, %s67
    %p71 = pneg %p65
    %p72 = scmp.eq.s32.totalorder %s30, 1
    %p73 = por %p71, %p72
    %p74 = scmp.ne.s32.totalorder %s66, %s69
    %p75 = scmp.eq.s32.totalorder %s30, 0
    %p76 = por %p74, %p75
    %p77 = scmp.ne.s32.totalorder %s66, %s69
    %p78 = scmp.eq.s32.totalorder %s35, 1
    %p79 = por %p77, %p78
    %p80 = scmp.ne.s32.totalorder %s69, %s70
    %p81 = scmp.eq.s32.totalorder %s35, 0
    %p82 = por %p80, %p81
    %p83 = scmp.ne.s32.totalorder %s69, %s70
    %p84 = scmp.eq.s32.totalorder %s36, 1
    %p85 = por %p83, %p84
    %p87 = scmp.ne.s32.totalorder %s70, %s86
    %p88 = scmp.eq.s32.totalorder %s36, 0
    %p89 = por %p87, %p88
    %s90 = ssub.s32 %s30, %s37
    %p91 = scmp.eq.s32.totalorder %s90, 0
    %s93 = sadd.s32 %s92, 1
    %s94 = scalar_select %p91, %s92, %s93
    %p97 = pneg %p91
    %p98 = scmp.eq.s32.totalorder %s30, 1
    %p99 = por %p97, %p98
    %p100 = scmp.ne.s32.totalorder %s92, %s95
    %p101 = scmp.eq.s32.totalorder %s30, 0
    %p102 = por %p100, %p101
    %p103 = scmp.ne.s32.totalorder %s92, %s95
    %p104 = scmp.eq.s32.totalorder %s35, 1
    %p105 = por %p103, %p104
    %p106 = scmp.ne.s32.totalorder %s95, %s96
    %p107 = scmp.eq.s32.totalorder %s35, 0
    %p108 = por %p106, %p107
    %p109 = scmp.ne.s32.totalorder %s95, %s96
    %p110 = scmp.eq.s32.totalorder %s36, 1
    %p111 = por %p109, %p110
    %p113 = scmp.ne.s32.totalorder %s96, %s112
    %p114 = scmp.eq.s32.totalorder %s36, 0
    %p115 = por %p113, %p114
    %s116 = ssub.s32 %s30, %s37
    %p117 = scmp.eq.s32.totalorder %s116, 0
    %s119 = sadd.s32 %s118, 1
    %s120 = scalar_select %p117, %s118, %s119
    %p123 = pneg %p117
    %p124 = scmp.eq.s32.totalorder %s30, 1
    %p125 = por %p123, %p124
    %p126 = scmp.ne.s32.totalorder %s118, %s121
    %p127 = scmp.eq.s32.totalorder %s30, 0
    %p128 = por %p126, %p127
    %p129 = scmp.ne.s32.totalorder %s118, %s121
    %p130 = scmp.eq.s32.totalorder %s35, 1
    %p131 = por %p129, %p130
    %p132 = scmp.ne.s32.totalorder %s121, %s122
    %p133 = scmp.eq.s32.totalorder %s35, 0
    %p134 = por %p132, %p133
    %p135 = scmp.ne.s32.totalorder %s121, %s122
    %p136 = scmp.eq.s32.totalorder %s36, 1
    %p137 = por %p135, %p136
    %p139 = scmp.ne.s32.totalorder %s122, %s138
    %p140 = scmp.eq.s32.totalorder %s36, 0
    %p141 = por %p139, %p140
    %s143 = sadd.s32 %s142, 1
    %p146 = scmp.eq.s32.totalorder %s30, 1
    %p147 = scmp.ne.s32.totalorder %s142, %s144
    %p148 = scmp.eq.s32.totalorder %s30, 0
    %p149 = por %p147, %p148
    %p150 = scmp.ne.s32.totalorder %s142, %s144
    %p151 = scmp.eq.s32.totalorder %s35, 1
    %p152 = por %p150, %p151
    %p153 = scmp.ne.s32.totalorder %s144, %s145
    %p154 = scmp.eq.s32.totalorder %s35, 0
    %p155 = por %p153, %p154
    %p156 = scmp.ne.s32.totalorder %s144, %s145
    %p157 = scmp.eq.s32.totalorder %s36, 1
    %p158 = por %p156, %p157
    %p160 = scmp.ne.s32.totalorder %s145, %s159
    %p161 = scmp.eq.s32.totalorder %s36, 0
    %p162 = por %p160, %p161
    %s164 = sadd.s32 %s163, 1
    %p167 = scmp.eq.s32.totalorder %s30, 1
    %p168 = scmp.ne.s32.totalorder %s163, %s165
    %p169 = scmp.eq.s32.totalorder %s30, 0
    %p170 = por %p168, %p169
    %p171 = scmp.ne.s32.totalorder %s163, %s165
    %p172 = scmp.eq.s32.totalorder %s35, 1
    %p173 = por %p171, %p172
    %p174 = scmp.ne.s32.totalorder %s165, %s166
    %p175 = scmp.eq.s32.totalorder %s35, 0
    %p176 = por %p174, %p175
    %p177 = scmp.ne.s32.totalorder %s165, %s166
    %p178 = scmp.eq.s32.totalorder %s36, 1
    %p179 = por %p177, %p178
    %p181 = scmp.ne.s32.totalorder %s166, %s180
    %p182 = scmp.eq.s32.totalorder %s36, 0
    %p183 = por %p181, %p182
    %s185 = sadd.s32 %s184, 1
    %p188 = scmp.eq.s32.totalorder %s30, 1
    %p189 = scmp.ne.s32.totalorder %s184, %s186
    %p190 = scmp.eq.s32.totalorder %s30, 0
    %p191 = por %p189, %p190
    %p192 = scmp.ne.s32.totalorder %s184, %s186
    %p193 = scmp.eq.s32.totalorder %s35, 1
    %p194 = por %p192, %p193
    %p195 = scmp.ne.s32.totalorder %s186, %s187
    %p196 = scmp.eq.s32.totalorder %s35, 0
    %p197 = por %p195, %p196
    %p198 = scmp.ne.s32.totalorder %s186, %s187
    %p199 = scmp.eq.s32.totalorder %s36, 1
    %p200 = por %p198, %p199
    %p202 = scmp.ne.s32.totalorder %s187, %s201
    %p203 = scmp.eq.s32.totalorder %s36, 0
    %p204 = por %p202, %p203
    %s206 = sadd.s32 %s205, 1
    %p209 = scmp.eq.s32.totalorder %s30, 1
    %p210 = scmp.ne.s32.totalorder %s205, %s207
    %p211 = scmp.eq.s32.totalorder %s30, 0
    %p212 = por %p210, %p211
    %p213 = scmp.ne.s32.totalorder %s205, %s207
    %p214 = scmp.eq.s32.totalorder %s35, 1
    %p215 = por %p213, %p214
    %p216 = scmp.ne.s32.totalorder %s207, %s208
    %p217 = scmp.eq.s32.totalorder %s35, 0
    %p218 = por %p216, %p217
    %p219 = scmp.ne.s32.totalorder %s207, %s208
    %p220 = scmp.eq.s32.totalorder %s36, 1
    %p221 = por %p219, %p220
    %p223 = scmp.ne.s32.totalorder %s208, %s222
    %p224 = scmp.eq.s32.totalorder %s36, 0
    %p225 = por %p223, %p224
    %s227 = sadd.s32 %s226, 1
    %p230 = scmp.eq.s32.totalorder %s30, 1
    %p231 = scmp.ne.s32.totalorder %s226, %s228
    %p232 = scmp.eq.s32.totalorder %s30, 0
    %p233 = por %p231, %p232
    %p234 = scmp.ne.s32.totalorder %s226, %s228
    %p235 = scmp.eq.s32.totalorder %s35, 1
    %p236 = por %p234, %p235
    %p237 = scmp.ne.s32.totalorder %s228, %s229
    %p238 = scmp.eq.s32.totalorder %s35, 0
    %p239 = por %p237, %p238
    %p240 = scmp.ne.s32.totalorder %s228, %s229
    %p241 = scmp.eq.s32.totalorder %s36, 1
    %p242 = por %p240, %p241
    %p244 = scmp.ne.s32.totalorder %s229, %s243
    %p245 = scmp.eq.s32.totalorder %s36, 0
    %p246 = por %p244, %p245
    %s248 = sadd.s32 %s247, 1
    %p251 = scmp.eq.s32.totalorder %s30, 1
    %p252 = scmp.ne.s32.totalorder %s247, %s249
    %p253 = scmp.eq.s32.totalorder %s30, 0
    %p254 = por %p252, %p253
    %p255 = scmp.ne.s32.totalorder %s247, %s249
    %p256 = scmp.eq.s32.totalorder %s35, 1
    %p257 = por %p255, %p256
    %p258 = scmp.ne.s32.totalorder %s249, %s250
    %p259 = scmp.eq.s32.totalorder %s35, 0
    %p260 = por %p258, %p259
    %p261 = scmp.ne.s32.totalorder %s249, %s250
    %p262 = scmp.eq.s32.totalorder %s36, 1
    %p263 = por %p261, %p262
    %p265 = scmp.ne.s32.totalorder %s250, %s264
    %p266 = scmp.eq.s32.totalorder %s36, 0
    %p267 = por %p265, %p266
    %s269 = sadd.s32 %s268, 1
    %p272 = scmp.eq.s32.totalorder %s30, 1
    %p273 = scmp.ne.s32.totalorder %s268, %s270
    %p274 = scmp.eq.s32.totalorder %s30, 0
    %p275 = por %p273, %p274
    %p276 = scmp.ne.s32.totalorder %s268, %s270
    %p277 = scmp.eq.s32.totalorder %s35, 1
    %p278 = por %p276, %p277
    %p279 = scmp.ne.s32.totalorder %s270, %s271
    %p280 = scmp.eq.s32.totalorder %s35, 0
    %p281 = por %p279, %p280
    %p282 = scmp.ne.s32.totalorder %s270, %s271
    %p283 = scmp.eq.s32.totalorder %s36, 1
    %p284 = por %p282, %p283
    %p286 = scmp.ne.s32.totalorder %s271, %s285
    %p287 = scmp.eq.s32.totalorder %s36, 0
    %p288 = por %p286, %p287
    %s290 = sadd.s32 %s289, 1
    %p293 = scmp.eq.s32.totalorder %s30, 1
    %p294 = scmp.ne.s32.totalorder %s289, %s291
    %p295 = scmp.eq.s32.totalorder %s30, 0
    %p296 = por %p294, %p295
    %p297 = scmp.ne.s32.totalorder %s289, %s291
    %p298 = scmp.eq.s32.totalorder %s35, 1
    %p299 = por %p297, %p298
    %p300 = scmp.ne.s32.totalorder %s291, %s292
    %p301 = scmp.eq.s32.totalorder %s35, 0
    %p302 = por %p300, %p301
    %p303 = scmp.ne.s32.totalorder %s291, %s292
    %p304 = scmp.eq.s32.totalorder %s36, 1
    %p305 = por %p303, %p304
    %p307 = scmp.ne.s32.totalorder %s292, %s306
    %p308 = scmp.eq.s32.totalorder %s36, 0
    %p309 = por %p307, %p308
    %s311 = sadd.s32 %s310, 1
    %p314 = scmp.eq.s32.totalorder %s30, 1
    %p315 = scmp.ne.s32.totalorder %s310, %s312
    %p316 = scmp.eq.s32.totalorder %s30, 0
    %p317 = por %p315, %p316
    %p318 = scmp.ne.s32.totalorder %s310, %s312
    %p319 = scmp.eq.s32.totalorder %s35, 1
    %p320 = por %p318, %p319
    %p321 = scmp.ne.s32.totalorder %s312, %s313
    %p322 = scmp.eq.s32.totalorder %s35, 0
    %p323 = por %p321, %p322
    %p324 = scmp.ne.s32.totalorder %s312, %s313
    %p325 = scmp.eq.s32.totalorder %s36, 1
    %p326 = por %p324, %p325
    %p328 = scmp.ne.s32.totalorder %s313, %s327
    %p329 = scmp.eq.s32.totalorder %s36, 0
    %p330 = por %p328, %p329
    %s332 = sadd.s32 %s331, 1
    %p335 = scmp.eq.s32.totalorder %s30, 1
    %p336 = scmp.ne.s32.totalorder %s331, %s333
    %p337 = scmp.eq.s32.totalorder %s30, 0
    %p338 = por %p336, %p337
    %p339 = scmp.ne.s32.totalorder %s331, %s333
    %p340 = scmp.eq.s32.totalorder %s35, 1
    %p341 = por %p339, %p340
    %p342 = scmp.ne.s32.totalorder %s333, %s334
    %p343 = scmp.eq.s32.totalorder %s35, 0
    %p344 = por %p342, %p343
    %p345 = scmp.ne.s32.totalorder %s333, %s334
    %p346 = scmp.eq.s32.totalorder %s36, 1
    %p347 = por %p345, %p346
    %p349 = scmp.ne.s32.totalorder %s334, %s348
    %p350 = scmp.eq.s32.totalorder %s36, 0
    %p351 = por %p349, %p350
    %s353 = sadd.s32 %s352, 1
    %p356 = scmp.eq.s32.totalorder %s30, 1
    %p357 = scmp.ne.s32.totalorder %s352, %s354
    %p358 = scmp.eq.s32.totalorder %s30, 0
    %p359 = por %p357, %p358
    %p360 = scmp.ne.s32.totalorder %s352, %s354
    %p361 = scmp.eq.s32.totalorder %s35, 1
    %p362 = por %p360, %p361
    %p363 = scmp.ne.s32.totalorder %s354, %s355
    %p364 = scmp.eq.s32.totalorder %s35, 0
    %p365 = por %p363, %p364
    %p366 = scmp.ne.s32.totalorder %s354, %s355
    %p367 = scmp.eq.s32.totalorder %s36, 1
    %p368 = por %p366, %p367
    %p370 = scmp.ne.s32.totalorder %s355, %s369
    %p371 = scmp.eq.s32.totalorder %s36, 0
    %p372 = por %p370, %p371
    %s374 = sadd.s32 %s373, 1
    %p377 = scmp.eq.s32.totalorder %s30, 1
    %p378 = scmp.ne.s32.totalorder %s373, %s375
    %p379 = scmp.eq.s32.totalorder %s30, 0
    %p380 = por %p378, %p379
    %p381 = scmp.ne.s32.totalorder %s373, %s375
    %p382 = scmp.eq.s32.totalorder %s35, 1
    %p383 = por %p381, %p382
    %p384 = scmp.ne.s32.totalorder %s375, %s376
    %p385 = scmp.eq.s32.totalorder %s35, 0
    %p386 = por %p384, %p385
    %p387 = scmp.ne.s32.totalorder %s375, %s376
    %p388 = scmp.eq.s32.totalorder %s36, 1
    %p389 = por %p387, %p388
    %p391 = scmp.ne.s32.totalorder %s376, %s390
    %p392 = scmp.eq.s32.totalorder %s36, 0
    %p393 = por %p391, %p392
    %s395 = sadd.s32 %s394, 1
    %p398 = scmp.eq.s32.totalorder %s30, 1
    %p399 = scmp.ne.s32.totalorder %s394, %s396
    %p400 = scmp.eq.s32.totalorder %s30, 0
    %p401 = por %p399, %p400
    %p402 = scmp.ne.s32.totalorder %s394, %s396
    %p403 = scmp.eq.s32.totalorder %s35, 1
    %p404 = por %p402, %p403
    %p405 = scmp.ne.s32.totalorder %s396, %s397
    %p406 = scmp.eq.s32.totalorder %s35, 0
    %p407 = por %p405, %p406
    %p408 = scmp.ne.s32.totalorder %s396, %s397
    %p409 = scmp.eq.s32.totalorder %s36, 1
    %p410 = por %p408, %p409
    %p412 = scmp.ne.s32.totalorder %s397, %s411
    %p413 = scmp.eq.s32.totalorder %s36, 0
    %p414 = por %p412, %p413
    %s416 = sadd.s32 %s415, 1
    %p419 = scmp.eq.s32.totalorder %s30, 1
    %p420 = scmp.ne.s32.totalorder %s415, %s417
    %p421 = scmp.eq.s32.totalorder %s30, 0
    %p422 = por %p420, %p421
    %p423 = scmp.ne.s32.totalorder %s415, %s417
    %p424 = scmp.eq.s32.totalorder %s35, 1
    %p425 = por %p423, %p424
    %p426 = scmp.ne.s32.totalorder %s417, %s418
    %p427 = scmp.eq.s32.totalorder %s35, 0
    %p428 = por %p426, %p427
    %p429 = scmp.ne.s32.totalorder %s417, %s418
    %p430 = scmp.eq.s32.totalorder %s36, 1
    %p431 = por %p429, %p430
    %p433 = scmp.ne.s32.totalorder %s418, %s432
    %p434 = scmp.eq.s32.totalorder %s36, 0
    %p435 = por %p433, %p434
    %s437 = sadd.s32 %s436, 1
    %p440 = scmp.eq.s32.totalorder %s30, 1
    %p441 = scmp.ne.s32.totalorder %s436, %s438
    %p442 = scmp.eq.s32.totalorder %s30, 0
    %p443 = por %p441, %p442
    %p444 = scmp.ne.s32.totalorder %s436, %s438
    %p445 = scmp.eq.s32.totalorder %s35, 1
    %p446 = por %p444, %p445
    %p447 = scmp.ne.s32.totalorder %s438, %s439
    %p448 = scmp.eq.s32.totalorder %s35, 0
    %p449 = por %p447, %p448
    %p450 = scmp.ne.s32.totalorder %s438, %s439
    %p451 = scmp.eq.s32.totalorder %s36, 1
    %p452 = por %p450, %p451
    %p454 = scmp.ne.s32.totalorder %s439, %s453
    %p455 = scmp.eq.s32.totalorder %s36, 0
    %p456 = por %p454, %p455
    %s458 = sadd.s32 %s457, 1
    %p461 = scmp.eq.s32.totalorder %s30, 1
    %p462 = scmp.ne.s32.totalorder %s457, %s459
    %p463 = scmp.eq.s32.totalorder %s30, 0
    %p464 = por %p462, %p463
    %p465 = scmp.ne.s32.totalorder %s457, %s459
    %p466 = scmp.eq.s32.totalorder %s35, 1
    %p467 = por %p465, %p466
    %p468 = scmp.ne.s32.totalorder %s459, %s460
    %p469 = scmp.eq.s32.totalorder %s35, 0
    %p470 = por %p468, %p469
    %p471 = scmp.ne.s32.totalorder %s459, %s460
    %p472 = scmp.eq.s32.totalorder %s36, 1
    %p473 = por %p471, %p472
    %p475 = scmp.ne.s32.totalorder %s460, %s474
    %p476 = scmp.eq.s32.totalorder %s36, 0
    %p477 = por %p475, %p476
    %s479 = sadd.s32 %s478, 1
    %p482 = scmp.eq.s32.totalorder %s30, 1
    %p483 = scmp.ne.s32.totalorder %s478, %s480
    %p484 = scmp.eq.s32.totalorder %s30, 0
    %p485 = por %p483, %p484
    %p486 = scmp.ne.s32.totalorder %s478, %s480
    %p487 = scmp.eq.s32.totalorder %s35, 1
    %p488 = por %p486, %p487
    %p489 = scmp.ne.s32.totalorder %s480, %s481
    %p490 = scmp.eq.s32.totalorder %s35, 0
    %p491 = por %p489, %p490
    %p492 = scmp.ne.s32.totalorder %s480, %s481
    %p493 = scmp.eq.s32.totalorder %s36, 1
    %p494 = por %p492, %p493
    %p496 = scmp.ne.s32.totalorder %s481, %s495
    %p497 = scmp.eq.s32.totalorder %s36, 0
    %p498 = por %p496, %p497
    %s500 = sadd.s32 %s499, 1
    %p503 = scmp.eq.s32.totalorder %s30, 1
    %p504 = scmp.ne.s32.totalorder %s499, %s501
    %p505 = scmp.eq.s32.totalorder %s30, 0
    %p506 = por %p504, %p505
    %p507 = scmp.ne.s32.totalorder %s499, %s501
    %p508 = scmp.eq.s32.totalorder %s35, 1
    %p509 = por %p507, %p508
    %p510 = scmp.ne.s32.totalorder %s501, %s502
    %p511 = scmp.eq.s32.totalorder %s35, 0
    %p512 = por %p510, %p511
    %p513 = scmp.ne.s32.totalorder %s501, %s502
    %p514 = scmp.eq.s32.totalorder %s36, 1
    %p515 = por %p513, %p514
    %p517 = scmp.ne.s32.totalorder %s502, %s516
    %p518 = scmp.eq.s32.totalorder %s36, 0
    %p519 = por %p517, %p518
    %s521 = sadd.s32 %s520, 1
    %p524 = scmp.eq.s32.totalorder %s30, 1
    %p525 = scmp.ne.s32.totalorder %s520, %s522
    %p526 = scmp.eq.s32.totalorder %s30, 0
    %p527 = por %p525, %p526
    %p528 = scmp.ne.s32.totalorder %s520, %s522
    %p529 = scmp.eq.s32.totalorder %s35, 1
    %p530 = por %p528, %p529
    %p531 = scmp.ne.s32.totalorder %s522, %s523
    %p532 = scmp.eq.s32.totalorder %s35, 0
    %p533 = por %p531, %p532
    %p534 = scmp.ne.s32.totalorder %s522, %s523
    %p535 = scmp.eq.s32.totalorder %s36, 1
    %p536 = por %p534, %p535
    %p538 = scmp.ne.s32.totalorder %s523, %s537
    %p539 = scmp.eq.s32.totalorder %s36, 0
    %p540 = por %p538, %p539
    %s542 = sadd.s32 %s541, 1
    %p545 = scmp.eq.s32.totalorder %s30, 1
    %p546 = scmp.ne.s32.totalorder %s541, %s543
    %p547 = scmp.eq.s32.totalorder %s30, 0
    %p548 = por %p546, %p547
    %p549 = scmp.ne.s32.totalorder %s541, %s543
    %p550 = scmp.eq.s32.totalorder %s35, 1
    %p551 = por %p549, %p550
    %p552 = scmp.ne.s32.totalorder %s543, %s544
    %p553 = scmp.eq.s32.totalorder %s35, 0
    %p554 = por %p552, %p553
    %p555 = scmp.ne.s32.totalorder %s543, %s544
    %p556 = scmp.eq.s32.totalorder %s36, 1
    %p557 = por %p555, %p556
    %p559 = scmp.ne.s32.totalorder %s544, %s558
    %p560 = scmp.eq.s32.totalorder %s36, 0
    %p561 = por %p559, %p560
    %s562 = ssub.s32 %s30, %s37
    %p563 = scmp.eq.s32.totalorder %s562, 0
    %s565 = sadd.s32 %s564, 1
    %s566 = scalar_select %p563, %s564, %s565
    %p569 = pneg %p563
    %p570 = scmp.eq.s32.totalorder %s30, 1
    %p571 = por %p569, %p570
    %p572 = scmp.ne.s32.totalorder %s564, %s567
    %p573 = scmp.eq.s32.totalorder %s30, 0
    %p574 = por %p572, %p573
    %p575 = scmp.ne.s32.totalorder %s564, %s567
    %p576 = scmp.eq.s32.totalorder %s35, 1
    %p577 = por %p575, %p576
    %p578 = scmp.ne.s32.totalorder %s567, %s568
    %p579 = scmp.eq.s32.totalorder %s35, 0
    %p580 = por %p578, %p579
    %p581 = scmp.ne.s32.totalorder %s567, %s568
    %p582 = scmp.eq.s32.totalorder %s36, 1
    %p583 = por %p581, %p582
    %p585 = scmp.ne.s32.totalorder %s568, %s584
    %p586 = scmp.eq.s32.totalorder %s36, 0
    %p587 = por %p585, %p586
    %p588 = scmp.le.s32.totalorder 1, %s30
    %p589 = scmp.lt.s32.totalorder %s30, 3
    %p590 = pnand %p588, %p589
    %p591 = pneg %p590
    // Predicated region
    $region9: #{_lambda_.7} parent=5 // pred_check
      _
    $region10: #{_lambda_.7} parent=5 // pred_check_branch
      %593 = sbr.rel (%p590) target = $region12
    $region11: #{_lambda_.7} parent=5 // pred_region
      %s594 = ssub.s32 %s30, 1
      // Predicated region
      $region13: #{_lambda_.7} parent=11 // pred_check
        %p595 = pneg %p155
      $region14: #{_lambda_.7} parent=11 // pred_check_branch
        %597 = sbr.rel (%p595) target = $region16
      $region15: #{_lambda_.7} parent=11 // pred_region
        _
      $region16: #{_lambda_.7} parent=11 // pred_fallthru
        _
      // Predicated region
      $region17: #{_lambda_.7} parent=11 // pred_check
        %p598 = pneg %p176
      $region18: #{_lambda_.7} parent=11 // pred_check_branch
        %600 = sbr.rel (%p598) target = $region20
      $region19: #{_lambda_.7} parent=11 // pred_region
        _
      $region20: #{_lambda_.7} parent=11 // pred_fallthru
        _
      // Predicated region
      $region21: #{_lambda_.7} parent=11 // pred_check
        %p601 = pneg %p197
      $region22: #{_lambda_.7} parent=11 // pred_check_branch
        %603 = sbr.rel (%p601) target = $region24
      $region23: #{_lambda_.7} parent=11 // pred_region
        _
      $region24: #{_lambda_.7} parent=11 // pred_fallthru
        _
      // Predicated region
      $region25: #{_lambda_.7} parent=11 // pred_check
        %p604 = pneg %p218
      $region26: #{_lambda_.7} parent=11 // pred_check_branch
        %606 = sbr.rel (%p604) target = $region28
      $region27: #{_lambda_.7} parent=11 // pred_region
        _
      $region28: #{_lambda_.7} parent=11 // pred_fallthru
        _
      // Predicated region
      $region29: #{_lambda_.7} parent=11 // pred_check
        %p607 = pneg %p239
      $region30: #{_lambda_.7} parent=11 // pred_check_branch
        %609 = sbr.rel (%p607) target = $region32
      $region31: #{_lambda_.7} parent=11 // pred_region
        _
      $region32: #{_lambda_.7} parent=11 // pred_fallthru
        _
      // Predicated region
      $region33: #{_lambda_.7} parent=11 // pred_check
        %p610 = pneg %p260
      $region34: #{_lambda_.7} parent=11 // pred_check_branch
        %612 = sbr.rel (%p610) target = $region36
      $region35: #{_lambda_.7} parent=11 // pred_region
        _
      $region36: #{_lambda_.7} parent=11 // pred_fallthru
        _
      // Predicated region
      $region37: #{_lambda_.7} parent=11 // pred_check
        %p613 = pneg %p281
      $region38: #{_lambda_.7} parent=11 // pred_check_branch
        %615 = sbr.rel (%p613) target = $region40
      $region39: #{_lambda_.7} parent=11 // pred_region
        _
      $region40: #{_lambda_.7} parent=11 // pred_fallthru
        _
      // Predicated region
      $region41: #{_lambda_.7} parent=11 // pred_check
        %p616 = pneg %p302
      $region42: #{_lambda_.7} parent=11 // pred_check_branch
        %618 = sbr.rel (%p616) target = $region44
      $region43: #{_lambda_.7} parent=11 // pred_region
        _
      $region44: #{_lambda_.7} parent=11 // pred_fallthru
        _
      // Predicated region
      $region45: #{_lambda_.7} parent=11 // pred_check
        %p619 = pneg %p323
      $region46: #{_lambda_.7} parent=11 // pred_check_branch
        %621 = sbr.rel (%p619) target = $region48
      $region47: #{_lambda_.7} parent=11 // pred_region
        _
      $region48: #{_lambda_.7} parent=11 // pred_fallthru
        _
      // Predicated region
      $region49: #{_lambda_.7} parent=11 // pred_check
        %p622 = pneg %p344
      $region50: #{_lambda_.7} parent=11 // pred_check_branch
        %624 = sbr.rel (%p622) target = $region52
      $region51: #{_lambda_.7} parent=11 // pred_region
        _
      $region52: #{_lambda_.7} parent=11 // pred_fallthru
        _
      // Predicated region
      $region53: #{_lambda_.7} parent=11 // pred_check
        %p625 = pneg %p365
      $region54: #{_lambda_.7} parent=11 // pred_check_branch
        %627 = sbr.rel (%p625) target = $region56
      $region55: #{_lambda_.7} parent=11 // pred_region
        _
      $region56: #{_lambda_.7} parent=11 // pred_fallthru
        _
      // Predicated region
      $region57: #{_lambda_.7} parent=11 // pred_check
        %p628 = pneg %p386
      $region58: #{_lambda_.7} parent=11 // pred_check_branch
        %630 = sbr.rel (%p628) target = $region60
      $region59: #{_lambda_.7} parent=11 // pred_region
        _
      $region60: #{_lambda_.7} parent=11 // pred_fallthru
        _
      // Predicated region
      $region61: #{_lambda_.7} parent=11 // pred_check
        %p631 = pneg %p407
      $region62: #{_lambda_.7} parent=11 // pred_check_branch
        %633 = sbr.rel (%p631) target = $region64
      $region63: #{_lambda_.7} parent=11 // pred_region
        _
      $region64: #{_lambda_.7} parent=11 // pred_fallthru
        _
      // Predicated region
      $region65: #{_lambda_.7} parent=11 // pred_check
        %p634 = pneg %p428
      $region66: #{_lambda_.7} parent=11 // pred_check_branch
        %636 = sbr.rel (%p634) target = $region68
      $region67: #{_lambda_.7} parent=11 // pred_region
        _
      $region68: #{_lambda_.7} parent=11 // pred_fallthru
        _
      // Predicated region
      $region69: #{_lambda_.7} parent=11 // pred_check
        %p637 = pneg %p449
      $region70: #{_lambda_.7} parent=11 // pred_check_branch
        %639 = sbr.rel (%p637) target = $region72
      $region71: #{_lambda_.7} parent=11 // pred_region
        _
      $region72: #{_lambda_.7} parent=11 // pred_fallthru
        _
      // Predicated region
      $region73: #{_lambda_.7} parent=11 // pred_check
        %p640 = pneg %p470
      $region74: #{_lambda_.7} parent=11 // pred_check_branch
        %642 = sbr.rel (%p640) target = $region76
      $region75: #{_lambda_.7} parent=11 // pred_region
        _
      $region76: #{_lambda_.7} parent=11 // pred_fallthru
        _
      // Predicated region
      $region77: #{_lambda_.7} parent=11 // pred_check
        %p643 = pneg %p491
      $region78: #{_lambda_.7} parent=11 // pred_check_branch
        %645 = sbr.rel (%p643) target = $region80
      $region79: #{_lambda_.7} parent=11 // pred_region
        _
      $region80: #{_lambda_.7} parent=11 // pred_fallthru
        _
      // Predicated region
      $region81: #{_lambda_.7} parent=11 // pred_check
        %p646 = pneg %p512
      $region82: #{_lambda_.7} parent=11 // pred_check_branch
        %648 = sbr.rel (%p646) target = $region84
      $region83: #{_lambda_.7} parent=11 // pred_region
        _
      $region84: #{_lambda_.7} parent=11 // pred_fallthru
        _
      // Predicated region
      $region85: #{_lambda_.7} parent=11 // pred_check
        %p649 = pneg %p533
      $region86: #{_lambda_.7} parent=11 // pred_check_branch
        %651 = sbr.rel (%p649) target = $region88
      $region87: #{_lambda_.7} parent=11 // pred_region
        _
      $region88: #{_lambda_.7} parent=11 // pred_fallthru
        _
      // Predicated region
      $region89: #{_lambda_.7} parent=11 // pred_check
        %p652 = pneg %p554
      $region90: #{_lambda_.7} parent=11 // pred_check_branch
        %654 = sbr.rel (%p652) target = $region92
      $region91: #{_lambda_.7} parent=11 // pred_region
        _
      $region92: #{_lambda_.7} parent=11 // pred_fallthru
        _
    $region12: #{_lambda_.7} parent=5 // pred_fallthru
      _
    %p655 = scmp.lt.s32.totalorder %s30, 2
    // Predicated region
    $region93: #{_lambda_.7} parent=5 // pred_check
      %p656 = pneg %p655
    $region94: #{_lambda_.7} parent=5 // pred_check_branch
      %658 = sbr.rel (%p656) target = $region96
    $region95: #{_lambda_.7} parent=5 // pred_region
      // Predicated region
      $region97: #{_lambda_.7} parent=95 // pred_check
        %p659 = pneg %p50
      $region98: #{_lambda_.7} parent=95 // pred_check_branch
        %661 = sbr.rel (%p659) target = $region100
      $region99: #{_lambda_.7} parent=95 // pred_region
        %p662 = scmp.lt.s32.totalorder %s30, 1
        %s663 = scalar_select %p662, %s30, 1
        %s664 = smul.addr %s663, 8
        %s665 = scalar_lea.vmem %s0, %s664
      $region100: #{_lambda_.7} parent=95 // pred_fallthru
        _
      // Predicated region
      $region101: #{_lambda_.7} parent=95 // pred_check
        %p666 = pneg %p76
      $region102: #{_lambda_.7} parent=95 // pred_check_branch
        %668 = sbr.rel (%p666) target = $region104
      $region103: #{_lambda_.7} parent=95 // pred_region
        %p669 = scmp.lt.s32.totalorder %s30, 1
        %s670 = scalar_select %p669, %s30, 1
        %s671 = smul.addr %s670, 8
        %s672 = scalar_lea.vmem %s1, %s671
      $region104: #{_lambda_.7} parent=95 // pred_fallthru
        _
      // Predicated region
      $region105: #{_lambda_.7} parent=95 // pred_check
        %p673 = pneg %p102
      $region106: #{_lambda_.7} parent=95 // pred_check_branch
        %675 = sbr.rel (%p673) target = $region108
      $region107: #{_lambda_.7} parent=95 // pred_region
        %p676 = scmp.lt.s32.totalorder %s30, 1
        %s677 = scalar_select %p676, %s30, 1
        %s678 = scalar_lea.vmem %s2, %s677
      $region108: #{_lambda_.7} parent=95 // pred_fallthru
        _
      // Predicated region
      $region109: #{_lambda_.7} parent=95 // pred_check
        %p679 = pneg %p128
      $region110: #{_lambda_.7} parent=95 // pred_check_branch
        %681 = sbr.rel (%p679) target = $region112
      $region111: #{_lambda_.7} parent=95 // pred_region
        %p682 = scmp.lt.s32.totalorder %s30, 1
        %s683 = scalar_select %p682, %s30, 1
        %s684 = scalar_lea.vmem %s3, %s683
      $region112: #{_lambda_.7} parent=95 // pred_fallthru
        _
    $region96: #{_lambda_.7} parent=5 // pred_fallthru
      _
    %p685 = scmp.le.s32.totalorder 1, %s30
    %p686 = scmp.lt.s32.totalorder %s30, 3
    %p687 = pnand %p685, %p686
    %p688 = pneg %p687
    // Predicated region
    $region113: #{_lambda_.7} parent=5 // pred_check
      _
    $region114: #{_lambda_.7} parent=5 // pred_check_branch
      %690 = sbr.rel (%p687) target = $region116
    $region115: #{_lambda_.7} parent=5 // pred_region
      %s691 = ssub.s32 %s30, 1
      %p692 = scmp.lt.s32.totalorder %s35, 1
      %s693 = scalar_select %p692, %s35, 1
      %s694 = smul.addr %s693, 8
      %s695 = scalar_lea.vmem %s0, %s694
      %p696 = pneg %p56
      %p697 = pneg %p53
      %p698 = scmp.lt.s32.totalorder %s35, 1
      %s699 = scalar_select %p698, %s35, 1
      %s700 = smul.addr %s699, 8
      %s701 = scalar_lea.vmem %s1, %s700
      %p702 = pneg %p82
      %p703 = pneg %p79
      %p704 = scmp.lt.s32.totalorder %s35, 1
      %s705 = scalar_select %p704, %s35, 1
      %s706 = scalar_lea.vmem %s2, %s705
      %p707 = pneg %p108
      %p708 = pneg %p105
      %p709 = scmp.lt.s32.totalorder %s35, 1
      %s710 = scalar_select %p709, %s35, 1
      %s711 = scalar_lea.vmem %s3, %s710
      %p712 = pneg %p134
      %p713 = pneg %p131
      %p714 = pneg %p155
      %p715 = pneg %p152
      %p716 = pneg %p176
      %p717 = pneg %p173
      %p718 = pneg %p197
      %p719 = pneg %p194
      %p720 = pneg %p218
      %p721 = pneg %p215
      %p722 = pneg %p239
      %p723 = pneg %p236
      %p724 = pneg %p260
      %p725 = pneg %p257
      %p726 = pneg %p281
      %p727 = pneg %p278
      %p728 = pneg %p302
      %p729 = pneg %p299
      %p730 = pneg %p323
      %p731 = pneg %p320
      %p732 = pneg %p344
      %p733 = pneg %p341
      %p734 = pneg %p365
      %p735 = pneg %p362
      %p736 = pneg %p386
      %p737 = pneg %p383
      %p738 = pneg %p407
      %p739 = pneg %p404
      %p740 = pneg %p428
      %p741 = pneg %p425
      %p742 = pneg %p449
      %p743 = pneg %p446
      %p744 = pneg %p470
      %p745 = pneg %p467
      %p746 = pneg %p491
      %p747 = pneg %p488
      %p748 = pneg %p512
      %p749 = pneg %p509
      %p750 = pneg %p533
      %p751 = pneg %p530
      %p752 = pneg %p554
      %p753 = pneg %p551
      %p754 = pneg %p580
      %p755 = pneg %p577
      %p756 = scmp.lt.s32.totalorder %s35, 1
      %s757 = scalar_select %p756, %s35, 1
      %s758 = smul.addr %s757, 8
      %s759 = scalar_lea.vmem %s24, %s758
      %p760 = scmp.lt.s32.totalorder %s35, 1
      %s761 = scalar_select %p760, %s35, 1
      %s762 = smul.addr %s761, 8
      %s763 = scalar_lea.vmem %s0, %s762
      %p764 = scmp.lt.s32.totalorder %s35, 1
      %s765 = scalar_select %p764, %s35, 1
      %s766 = smul.addr %s765, 8
      %s767 = scalar_lea.vmem %s1, %s766
      %p768 = scmp.lt.s32.totalorder %s35, 1
      %s769 = scalar_select %p768, %s35, 1
      %s770 = scalar_lea.vmem %s2, %s769
      %p771 = scmp.lt.s32.totalorder %s35, 1
      %s772 = scalar_select %p771, %s35, 1
      %s773 = scalar_lea.vmem %s3, %s772
      %p774 = scmp.lt.s32.totalorder %s35, 1
      %s775 = scalar_select %p774, %s35, 1
      %s776 = smul.addr %s775, 8
      %s777 = scalar_lea.vmem %s24, %s776
      %v779 = vld [vmem:[%s763] sm:$0xff]
      %v780 = vld [vmem:[%s767] sm:$0xff]
      %v781 = vld [vmem:[%s770] sm:$0x1]
      %vm782 = vcmp.gt.f32.partialorder %v781, 0.0
      %v783 = vld [vmem:[%s773] sm:$0x1]
      %vm784 = vcmp.gt.f32.partialorder %v783, 0.0
      %v785 = vlaneseq
      %v786 = vshrl.u32 %v785, 7
      %v787 = vlaneseq
      %v788 = vand.u32 %v787, 127
      %vm789 = vcmp.le.s32.totalorder %v788, %v786
      %v790 = vsel %vm782, 1, 0
      %v791 = vlaneseq
      %v792 = vshrl.u32 %v791, 7
      %v793 = vsub.s32 0, %v792
      %v794 = vrot.slane %v790, %v793
      %vm795 = vcmp.eq.s32.totalorder %v794, 1
      %vm796 = vmand %vm789, %vm795
      %v797 = vld [vmem:[%s4] sm:$0xf]
      %v798 = vld [vmem:[%s4 + $0x4] sm:$0xf]
      %v799 = vld [vmem:[%s4 + $0x8] sm:$0xf]
      %v800 = vld [vmem:[%s4 + $0xc] sm:$0xf]
      %v801 = vpack.c.bf16 %v779, %v779
      %v802 = vld [vmem:[%s5] sm:$0x1]
      %v804 = vlaneseq
      %v805 = vshrl.u32 %v804, 7
      %v806 = vsub.s32 0, %v805
      %v807 = vrot.slane %v802, %v806
      %v813 = vunpack.c.l.b16 %v797
      %v814 = vunpack.c.l.b16 %v798
      %v815 = vunpack.c.l.b16 %v799
      %v816 = vunpack.c.l.b16 %v800
      %v817 = vpack.c.b16 %v814, %v813
      %v818 = vpack.c.b16 %v816, %v815
      %vm821 = vcmask 261120
      %v823 = vsel %vm821, %v801, 0
      %825 = vmatprep.subr.bf16.mxu0 0
      %826 = vmatpush1.bf16.msra.mxu0 %v817
      %827 = vmatprep.subr.bf16.mxu0 0
      %828 = vmatpush1.bf16.msra.mxu0 %v818
      %829 = vmatprep.subr.bf16.mxu0 0
      %830 = vmatpush1.bf16.msra.mxu0 0
      %831 = vmatprep.subr.bf16.mxu0 0
      %832 = vmatpush1.bf16.msra.mxu0 0
      %833 = vmatprep.subr.bf16.mxu0 0
      %834 = vmatpush1.bf16.msra.mxu0 0
      %835 = vmatprep.subr.bf16.mxu0 0
      %836 = vmatpush1.bf16.msra.mxu0 0
      %837 = vmatprep.subr.bf16.mxu0 0
      %838 = vmatpush1.bf16.msra.mxu0 0
      %839 = vmatprep.subr.bf16.mxu0 0
      %840 = vmatpush1.bf16.msra.mxu0 0
      %841 = vmatprep.subr.bf16.mxu0 0
      %842 = vmatpush1.bf16.msra.mxu0 0
      %843 = vmatprep.subr.bf16.mxu0 0
      %844 = vmatpush1.bf16.msra.mxu0 0
      %845 = vmatprep.subr.bf16.mxu0 0
      %846 = vmatpush1.bf16.msra.mxu0 0
      %847 = vmatprep.subr.bf16.mxu0 0
      %848 = vmatpush1.bf16.msra.mxu0 0
      %849 = vmatprep.subr.bf16.mxu0 0
      %850 = vmatpush1.bf16.msra.mxu0 0
      %851 = vmatprep.subr.bf16.mxu0 0
      %852 = vmatpush1.bf16.msra.mxu0 0
      %853 = vmatprep.subr.bf16.mxu0 0
      %854 = vmatpush1.bf16.msra.mxu0 0
      %855 = vmatprep.subr.bf16.mxu0 0
      %856 = vmatpush1.bf16.msra.mxu0 0
      %857 = vmatprep.mubr.bf16.mxu0 0
      %858 = vmatmul.mubr.bf16.gmra.mrb[0].mxu0 %v823
      %v859 = vpop.f32.mrb[0].mxu0
      %v860 = vadd.f32 %v807, %v859
      %v861 = vpop.f32.mrb[0].mxu0
      %v862 = vpop.f32.mrb[0].mxu0
      %v863 = vpop.f32.mrb[0].mxu0
      %864 = vdwg.mxu0
      %v865 = vpack.c.bf16 %v860, %v860
      %867 = vrot.lane.b32.xlu0 %v865, 96
      %v868 = vpop.permute.xlu0 %867
      %vm869 = vcmask 64512
      %v871 = vsel %vm869, %v865, 0
      %v874 = vsel %vm869, %v868, 0
      %876 = vmatprep.subr.bf16.mxu0 0
      %877 = vmatpush1.bf16.xpose.msra.mxu0 %v874
      %878 = vmatprep.subr.bf16.mxu0 0
      %879 = vmatpush1.bf16.xpose.msra.mxu0 0
      %880 = vmatprep.subr.bf16.mxu0 0
      %881 = vmatpush1.bf16.xpose.msra.mxu0 0
      %882 = vmatprep.subr.bf16.mxu0 0
      %883 = vmatpush1.bf16.xpose.msra.mxu0 0
      %884 = vmatprep.subr.bf16.mxu0 0
      %885 = vmatpush1.bf16.xpose.msra.mxu0 0
      %886 = vmatprep.subr.bf16.mxu0 0
      %887 = vmatpush1.bf16.xpose.msra.mxu0 0
      %888 = vmatprep.subr.bf16.mxu0 0
      %889 = vmatpush1.bf16.xpose.msra.mxu0 0
      %890 = vmatprep.subr.bf16.mxu0 0
      %891 = vmatpush1.bf16.xpose.msra.mxu0 0
      %892 = vmatprep.subr.bf16.mxu0 0
      %893 = vmatpush1.bf16.xpose.msra.mxu0 0
      %894 = vmatprep.subr.bf16.mxu0 0
      %895 = vmatpush1.bf16.xpose.msra.mxu0 0
      %896 = vmatprep.subr.bf16.mxu0 0
      %897 = vmatpush1.bf16.xpose.msra.mxu0 0
      %898 = vmatprep.subr.bf16.mxu0 0
      %899 = vmatpush1.bf16.xpose.msra.mxu0 0
      %900 = vmatprep.subr.bf16.mxu0 0
      %901 = vmatpush1.bf16.xpose.msra.mxu0 0
      %902 = vmatprep.subr.bf16.mxu0 0
      %903 = vmatpush1.bf16.xpose.msra.mxu0 0
      %904 = vmatprep.subr.bf16.mxu0 0
      %905 = vmatpush1.bf16.xpose.msra.mxu0 0
      %906 = vmatprep.subr.bf16.mxu0 0
      %907 = vmatpush1.bf16.xpose.msra.mxu0 0
      %908 = vmatprep.mubr.bf16.mxu0 0
      %909 = vmatmul.mubr.bf16.gmra.mrb[0].mxu0 %v871
      %v910 = vpop.f32.mrb[0].mxu0
      %v911 = vadd.f32 0.0, %v910
      %v912 = vpop.f32.mrb[0].mxu0
      %v913 = vpop.f32.mrb[0].mxu0
      %v914 = vpop.f32.mrb[0].mxu0
      %915 = vdwg.mxu0
      %v916 = vmul.f32 %v911, 0.35355338
      %v917 = vsel %vm796, %v916, -1e+10
      %v918 = vsel %vm869, %v917, -inf
      %919 = vmax.xlane.f32.xlu0 %v918
      %v920 = vpop.xlane.xlu0 %919
      %v921 = vsub.f32 %v917, %v920
      %v922 = vmul.f32 %v921, 1.442695
      %v923 = vpow.pop %v922
      %v924 = vsel %vm869, %v923, 0.0
      %925 = vadd.xlane.f32.xlu0 %v924
      %v926 = vpop.xlane.xlu0 %925
      %v927 = vrcp.pop %v926
      %v928 = vmul.f32 %v923, %v927
      %v929 = vpack.c.bf16 %v928, %v928
      %930 = vrot.lane.b32.xlu0 %v865, 64
      %v931 = vpop.permute.xlu0 %930
      %v933 = vsel %vm869, %v929, 0
      %vm935 = vcmask 1043456
      %v937 = vsel %vm935, %v931, 0
      %939 = vmatprep.subr.bf16.mxu0 0
      %940 = vmatpush1.bf16.msra.mxu0 %v937
      %941 = vmatprep.subr.bf16.mxu0 0
      %942 = vmatpush1.bf16.msra.mxu0 0
      %943 = vmatprep.subr.bf16.mxu0 0
      %944 = vmatpush1.bf16.msra.mxu0 0
      %945 = vmatprep.subr.bf16.mxu0 0
      %946 = vmatpush1.bf16.msra.mxu0 0
      %947 = vmatprep.subr.bf16.mxu0 0
      %948 = vmatpush1.bf16.msra.mxu0 0
      %949 = vmatprep.subr.bf16.mxu0 0
      %950 = vmatpush1.bf16.msra.mxu0 0
      %951 = vmatprep.subr.bf16.mxu0 0
      %952 = vmatpush1.bf16.msra.mxu0 0
      %953 = vmatprep.subr.bf16.mxu0 0
      %954 = vmatpush1.bf16.msra.mxu0 0
      %955 = vmatprep.subr.bf16.mxu0 0
      %956 = vmatpush1.bf16.msra.mxu0 0
      %957 = vmatprep.subr.bf16.mxu0 0
      %958 = vmatpush1.bf16.msra.mxu0 0
      %959 = vmatprep.subr.bf16.mxu0 0
      %960 = vmatpush1.bf16.msra.mxu0 0
      %961 = vmatprep.subr.bf16.mxu0 0
      %962 = vmatpush1.bf16.msra.mxu0 0
      %963 = vmatprep.subr.bf16.mxu0 0
      %964 = vmatpush1.bf16.msra.mxu0 0
      %965 = vmatprep.subr.bf16.mxu0 0
      %966 = vmatpush1.bf16.msra.mxu0 0
      %967 = vmatprep.subr.bf16.mxu0 0
      %968 = vmatpush1.bf16.msra.mxu0 0
      %969 = vmatprep.subr.bf16.mxu0 0
      %970 = vmatpush1.bf16.msra.mxu0 0
      %971 = vmatprep.mubr.bf16.mxu0 0
      %972 = vmatmul.mubr.bf16.gmra.mrb[0].mxu0 %v933
      %v973 = vpop.f32.mrb[0].mxu0
      %v974 = vadd.f32 0.0, %v973
      %v975 = vpop.f32.mrb[0].mxu0
      %v976 = vpop.f32.mrb[0].mxu0
      %v977 = vpop.f32.mrb[0].mxu0
      %978 = vdwg.mxu0
      %979 = vrot.lane.b32.xlu0 %v865, 120
      %v980 = vpop.permute.xlu0 %979
      %981 = vrot.lane.b32.xlu0 %v865, 88
      %v982 = vpop.permute.xlu0 %981
      %v984 = vsel %vm869, %v980, 0
      %v987 = vsel %vm869, %v982, 0
      %989 = vmatprep.subr.bf16.mxu0 0
      %990 = vmatpush1.bf16.xpose.msra.mxu0 %v987
      %991 = vmatprep.subr.bf16.mxu0 0
      %992 = vmatpush1.bf16.xpose.msra.mxu0 0
      %993 = vmatprep.subr.bf16.mxu0 0
      %994 = vmatpush1.bf16.xpose.msra.mxu0 0
      %995 = vmatprep.subr.bf16.mxu0 0
      %996 = vmatpush1.bf16.xpose.msra.mxu0 0
      %997 = vmatprep.subr.bf16.mxu0 0
      %998 = vmatpush1.bf16.xpose.msra.mxu0 0
      %999 = vmatprep.subr.bf16.mxu0 0
      %1000 = vmatpush1.bf16.xpose.msra.mxu0 0
      %1001 = vmatprep.subr.bf16.mxu0 0
      %1002 = vmatpush1.bf16.xpose.msra.mxu0 0
      %1003 = vmatprep.subr.bf16.mxu0 0
      %1004 = vmatpush1.bf16.xpose.msra.mxu0 0
      %1005 = vmatprep.subr.bf16.mxu0 0
      %1006 = vmatpush1.bf16.xpose.msra.mxu0 0
      %1007 = vmatprep.subr.bf16.mxu0 0
      %1008 = vmatpush1.bf16.xpose.msra.mxu0 0
      %1009 = vmatprep.subr.bf16.mxu0 0
      %1010 = vmatpush1.bf16.xpose.msra.mxu0 0
      %1011 = vmatprep.subr.bf16.mxu0 0
      %1012 = vmatpush1.bf16.xpose.msra.mxu0 0
      %1013 = vmatprep.subr.bf16.mxu0 0
      %1014 = vmatpush1.bf16.xpose.msra.mxu0 0
      %1015 = vmatprep.subr.bf16.mxu0 0
      %1016 = vmatpush1.bf16.xpose.msra.mxu0 0
      %1017 = vmatprep.subr.bf16.mxu0 0
      %1018 = vmatpush1.bf16.xpose.msra.mxu0 0
      %1019 = vmatprep.subr.bf16.mxu0 0
      %1020 = vmatpush1.bf16.xpose.msra.mxu0 0
      %1021 = vmatprep.mubr.bf16.mxu0 0
      %1022 = vmatmul.mubr.bf16.gmra.mrb[0].mxu0 %v984
      %v1023 = vpop.f32.mrb[0].mxu0
      %v1024 = vadd.f32 0.0, %v1023
      %v1025 = vpop.f32.mrb[0].mxu0
      %v1026 = vpop.f32.mrb[0].mxu0
      %v1027 = vpop.f32.mrb[0].mxu0
      %1028 = vdwg.mxu0
      %v1029 = vmul.f32 %v1024, 0.35355338
      %v1030 = vsel %vm796, %v1029, -1e+10
      %v1031 = vsel %vm869, %v1030, -inf
      %1032 = vmax.xlane.f32.xlu0 %v1031
      %v1033 = vpop.xlane.xlu0 %1032
      %v1034 = vsub.f32 %v1030, %v1033
      %v1035 = vmul.f32 %v1034, 1.442695
      %v1036 = vpow.pop %v1035
      %v1037 = vsel %vm869, %v1036, 0.0
      %1038 = vadd.xlane.f32.xlu0 %v1037
      %v1039 = vpop.xlane.xlu0 %1038
      %v1040 = vrcp.pop %v1039
      %v1041 = vmul.f32 %v1036, %v1040
      %v1042 = vpack.c.bf16 %v1041, %v1041
      %1043 = vrot.lane.b32.xlu0 %v865, 56
      %v1044 = vpop.permute.xlu0 %1043
      %v1046 = vsel %vm869, %v1042, 0
      %v1049 = vsel %vm935, %v1044, 0
      %1051 = vmatprep.subr.bf16.mxu0 0
      %1052 = vmatpush1.bf16.msra.mxu0 %v1049
      %1053 = vmatprep.subr.bf16.mxu0 0
      %1054 = vmatpush1.bf16.msra.mxu0 0
      %1055 = vmatprep.subr.bf16.mxu0 0
      %1056 = vmatpush1.bf16.msra.mxu0 0
      %1057 = vmatprep.subr.bf16.mxu0 0
      %1058 = vmatpush1.bf16.msra.mxu0 0
      %1059 = vmatprep.subr.bf16.mxu0 0
      %1060 = vmatpush1.bf16.msra.mxu0 0
      %1061 = vmatprep.subr.bf16.mxu0 0
      %1062 = vmatpush1.bf16.msra.mxu0 0
      %1063 = vmatprep.subr.bf16.mxu0 0
      %1064 = vmatpush1.bf16.msra.mxu0 0
      %1065 = vmatprep.subr.bf16.mxu0 0
      %1066 = vmatpush1.bf16.msra.mxu0 0
      %1067 = vmatprep.subr.bf16.mxu0 0
      %1068 = vmatpush1.bf16.msra.mxu0 0
      %1069 = vmatprep.subr.bf16.mxu0 0
      %1070 = vmatpush1.bf16.msra.mxu0 0
      %1071 = vmatprep.subr.bf16.mxu0 0
      %1072 = vmatpush1.bf16.msra.mxu0 0
      %1073 = vmatprep.subr.bf16.mxu0 0
      %1074 = vmatpush1.bf16.msra.mxu0 0
      %1075 = vmatprep.subr.bf16.mxu0 0
      %1076 = vmatpush1.bf16.msra.mxu0 0
      %1077 = vmatprep.subr.bf16.mxu0 0
      %1078 = vmatpush1.bf16.msra.mxu0 0
      %1079 = vmatprep.subr.bf16.mxu0 0
      %1080 = vmatpush1.bf16.msra.mxu0 0
      %1081 = vmatprep.subr.bf16.mxu0 0
      %1082 = vmatpush1.bf16.msra.mxu0 0
      %1083 = vmatprep.mubr.bf16.mxu0 0
      %1084 = vmatmul.mubr.bf16.gmra.mrb[0].mxu0 %v1046
      %v1085 = vpop.f32.mrb[0].mxu0
      %v1086 = vadd.f32 0.0, %v1085
      %v1087 = vpop.f32.mrb[0].mxu0
      %v1088 = vpop.f32.mrb[0].mxu0
      %v1089 = vpop.f32.mrb[0].mxu0
      %1090 = vdwg.mxu0
      %1091 = vrot.lane.b32.xlu0 %v865, 112
      %v1092 = vpop.permute.xlu0 %1091
      %1093 = vrot.lane.b32.xlu0 %v865, 80
      %v1094 = vpop.permute.xlu0 %1093
      %v1096 = vsel %vm869, %v1092, 0
      %v1099 = vsel %vm869, %v1094, 0
      %1101 = vmatprep.subr.bf16.mxu0 0
      %1102 = vmatpush1.bf16.xpose.msra.mxu0 %v1099
      %1103 = vmatprep.subr.bf16.mxu0 0
      %1104 = vmatpush1.bf16.xpose.msra.mxu0 0
      %1105 = vmatprep.subr.bf16.mxu0 0
      %1106 = vmatpush1.bf16.xpose.msra.mxu0 0
      %1107 = vmatprep.subr.bf16.mxu0 0
      %1108 = vmatpush1.bf16.xpose.msra.mxu0 0
      %1109 = vmatprep.subr.bf16.mxu0 0
      %1110 = vmatpush1.bf16.xpose.msra.mxu0 0
      %1111 = vmatprep.subr.bf16.mxu0 0
      %1112 = vmatpush1.bf16.xpose.msra.mxu0 0
      %1113 = vmatprep.subr.bf16.mxu0 0
      %1114 = vmatpush1.bf16.xpose.msra.mxu0 0
      %1115 = vmatprep.subr.bf16.mxu0 0
      %1116 = vmatpush1.bf16.xpose.msra.mxu0 0
      %1117 = vmatprep.subr.bf16.mxu0 0
      %1118 = vmatpush1.bf16.xpose.msra.mxu0 0
      %1119 = vmatprep.subr.bf16.mxu0 0
      %1120 = vmatpush1.bf16.xpose.msra.mxu0 0
      %1121 = vmatprep.subr.bf16.mxu0 0
      %1122 = vmatpush1.bf16.xpose.msra.mxu0 0
      %1123 = vmatprep.subr.bf16.mxu0 0
      %1124 = vmatpush1.bf16.xpose.msra.mxu0 0
      %1125 = vmatprep.subr.bf16.mxu0 0
      %1126 = vmatpush1.bf16.xpose.msra.mxu0 0
      %1127 = vmatprep.subr.bf16.mxu0 0
      %1128 = vmatpush1.bf16.xpose.msra.mxu0 0
      %1129 = vmatprep.subr.bf16.mxu0 0
      %1130 = vmatpush1.bf16.xpose.msra.mxu0 0
      %1131 = vmatprep.subr.bf16.mxu0 0
      %1132 = vmatpush1.bf16.xpose.msra.mxu0 0
      %1133 = vmatprep.mubr.bf16.mxu0 0
      %1134 = vmatmul.mubr.bf16.gmra.mrb[0].mxu0 %v1096
      %v1135 = vpop.f32.mrb[0].mxu0
      %v1136 = vadd.f32 0.0, %v1135
      %v1137 = vpop.f32.mrb[0].mxu0
      %v1138 = vpop.f32.mrb[0].mxu0
      %v1139 = vpop.f32.mrb[0].mxu0
      %1140 = vdwg.mxu0
      %v1141 = vmul.f32 %v1136, 0.35355338
      %v1142 = vsel %vm796, %v1141, -1e+10
      %v1143 = vsel %vm869, %v1142, -inf
      %1144 = vmax.xlane.f32.xlu0 %v1143
      %v1145 = vpop.xlane.xlu0 %1144
      %v1146 = vsub.f32 %v1142, %v1145
      %v1147 = vmul.f32 %v1146, 1.442695
      %v1148 = vpow.pop %v1147
      %v1149 = vsel %vm869, %v1148, 0.0
      %1150 = vadd.xlane.f32.xlu0 %v1149
      %v1151 = vpop.xlane.xlu0 %1150
      %v1152 = vrcp.pop %v1151
      %v1153 = vmul.f32 %v1148, %v1152
      %v1154 = vpack.c.bf16 %v1153, %v1153
      %1155 = vrot.lane.b32.xlu0 %v865, 48
      %v1156 = vpop.permute.xlu0 %1155
      %v1158 = vsel %vm869, %v1154, 0
      %v1161 = vsel %vm935, %v1156, 0
      %1163 = vmatprep.subr.bf16.mxu0 0
      %1164 = vmatpush1.bf16.msra.mxu0 %v1161
      %1165 = vmatprep.subr.bf16.mxu0 0
      %1166 = vmatpush1.bf16.msra.mxu0 0
      %1167 = vmatprep.subr.bf16.mxu0 0
      %1168 = vmatpush1.bf16.msra.mxu0 0
      %1169 = vmatprep.subr.bf16.mxu0 0
      %1170 = vmatpush1.bf16.msra.mxu0 0
      %1171 = vmatprep.subr.bf16.mxu0 0
      %1172 = vmatpush1.bf16.msra.mxu0 0
      %1173 = vmatprep.subr.bf16.mxu0 0
      %1174 = vmatpush1.bf16.msra.mxu0 0
      %1175 = vmatprep.subr.bf16.mxu0 0
      %1176 = vmatpush1.bf16.msra.mxu0 0
      %1177 = vmatprep.subr.bf16.mxu0 0
      %1178 = vmatpush1.bf16.msra.mxu0 0
      %1179 = vmatprep.subr.bf16.mxu0 0
      %1180 = vmatpush1.bf16.msra.mxu0 0
      %1181 = vmatprep.subr.bf16.mxu0 0
      %1182 = vmatpush1.bf16.msra.mxu0 0
      %1183 = vmatprep.subr.bf16.mxu0 0
      %1184 = vmatpush1.bf16.msra.mxu0 0
      %1185 = vmatprep.subr.bf16.mxu0 0
      %1186 = vmatpush1.bf16.msra.mxu0 0
      %1187 = vmatprep.subr.bf16.mxu0 0
      %1188 = vmatpush1.bf16.msra.mxu0 0
      %1189 = vmatprep.subr.bf16.mxu0 0
      %1190 = vmatpush1.bf16.msra.mxu0 0
      %1191 = vmatprep.subr.bf16.mxu0 0
      %1192 = vmatpush1.bf16.msra.mxu0 0
      %1193 = vmatprep.subr.bf16.mxu0 0
      %1194 = vmatpush1.bf16.msra.mxu0 0
      %1195 = vmatprep.mubr.bf16.mxu0 0
      %1196 = vmatmul.mubr.bf16.gmra.mrb[0].mxu0 %v1158
      %v1197 = vpop.f32.mrb[0].mxu0
      %v1198 = vadd.f32 0.0, %v1197
      %v1199 = vpop.f32.mrb[0].mxu0
      %v1200 = vpop.f32.mrb[0].mxu0
      %v1201 = vpop.f32.mrb[0].mxu0
      %1202 = vdwg.mxu0
      %1203 = vrot.lane.b32.xlu0 %v865, 104
      %v1204 = vpop.permute.xlu0 %1203
      %1205 = vrot.lane.b32.xlu0 %v865, 72
      %v1206 = vpop.permute.xlu0 %1205
      %v1208 = vsel %vm869, %v1204, 0
      %v1211 = vsel %vm869, %v1206, 0
      %1213 = vmatprep.subr.bf16.mxu0 0
      %1214 = vmatpush1.bf16.xpose.msra.mxu0 %v1211
      %1215 = vmatprep.subr.bf16.mxu0 0
      %1216 = vmatpush1.bf16.xpose.msra.mxu0 0
      %1217 = vmatprep.subr.bf16.mxu0 0
      %1218 = vmatpush1.bf16.xpose.msra.mxu0 0
      %1219 = vmatprep.subr.bf16.mxu0 0
      %1220 = vmatpush1.bf16.xpose.msra.mxu0 0
      %1221 = vmatprep.subr.bf16.mxu0 0
      %1222 = vmatpush1.bf16.xpose.msra.mxu0 0
      %1223 = vmatprep.subr.bf16.mxu0 0
      %1224 = vmatpush1.bf16.xpose.msra.mxu0 0
      %1225 = vmatprep.subr.bf16.mxu0 0
      %1226 = vmatpush1.bf16.xpose.msra.mxu0 0
      %1227 = vmatprep.subr.bf16.mxu0 0
      %1228 = vmatpush1.bf16.xpose.msra.mxu0 0
      %1229 = vmatprep.subr.bf16.mxu0 0
      %1230 = vmatpush1.bf16.xpose.msra.mxu0 0
      %1231 = vmatprep.subr.bf16.mxu0 0
      %1232 = vmatpush1.bf16.xpose.msra.mxu0 0
      %1233 = vmatprep.subr.bf16.mxu0 0
      %1234 = vmatpush1.bf16.xpose.msra.mxu0 0
      %1235 = vmatprep.subr.bf16.mxu0 0
      %1236 = vmatpush1.bf16.xpose.msra.mxu0 0
      %1237 = vmatprep.subr.bf16.mxu0 0
      %1238 = vmatpush1.bf16.xpose.msra.mxu0 0
      %1239 = vmatprep.subr.bf16.mxu0 0
      %1240 = vmatpush1.bf16.xpose.msra.mxu0 0
      %1241 = vmatprep.subr.bf16.mxu0 0
      %1242 = vmatpush1.bf16.xpose.msra.mxu0 0
      %1243 = vmatprep.subr.bf16.mxu0 0
      %1244 = vmatpush1.bf16.xpose.msra.mxu0 0
      %1245 = vmatprep.mubr.bf16.mxu0 0
      %1246 = vmatmul.mubr.bf16.gmra.mrb[0].mxu0 %v1208
      %v1247 = vpop.f32.mrb[0].mxu0
      %v1248 = vadd.f32 0.0, %v1247
      %v1249 = vpop.f32.mrb[0].mxu0
      %v1250 = vpop.f32.mrb[0].mxu0
      %v1251 = vpop.f32.mrb[0].mxu0
      %1252 = vdwg.mxu0
      %v1253 = vmul.f32 %v1248, 0.35355338
      %v1254 = vsel %vm796, %v1253, -1e+10
      %v1255 = vsel %vm869, %v1254, -inf
      %1256 = vmax.xlane.f32.xlu0 %v1255
      %v1257 = vpop.xlane.xlu0 %1256
      %v1258 = vsub.f32 %v1254, %v1257
      %v1259 = vmul.f32 %v1258, 1.442695
      %v1260 = vpow.pop %v1259
      %v1261 = vsel %vm869, %v1260, 0.0
      %1262 = vadd.xlane.f32.xlu0 %v1261
      %v1263 = vpop.xlane.xlu0 %1262
      %v1264 = vrcp.pop %v1263
      %v1265 = vmul.f32 %v1260, %v1264
      %v1266 = vpack.c.bf16 %v1265, %v1265
      %1267 = vrot.lane.b32.xlu0 %v865, 40
      %v1268 = vpop.permute.xlu0 %1267
      %v1270 = vsel %vm869, %v1266, 0
      %v1273 = vsel %vm935, %v1268, 0
      %1275 = vmatprep.subr.bf16.mxu0 0
      %1276 = vmatpush1.bf16.msra.mxu0 %v1273
      %1277 = vmatprep.subr.bf16.mxu0 0
      %1278 = vmatpush1.bf16.msra.mxu0 0
      %1279 = vmatprep.subr.bf16.mxu0 0
      %1280 = vmatpush1.bf16.msra.mxu0 0
      %1281 = vmatprep.subr.bf16.mxu0 0
      %1282 = vmatpush1.bf16.msra.mxu0 0
      %1283 = vmatprep.subr.bf16.mxu0 0
      %1284 = vmatpush1.bf16.msra.mxu0 0
      %1285 = vmatprep.subr.bf16.mxu0 0
      %1286 = vmatpush1.bf16.msra.mxu0 0
      %1287 = vmatprep.subr.bf16.mxu0 0
      %1288 = vmatpush1.bf16.msra.mxu0 0
      %1289 = vmatprep.subr.bf16.mxu0 0
      %1290 = vmatpush1.bf16.msra.mxu0 0
      %1291 = vmatprep.subr.bf16.mxu0 0
      %1292 = vmatpush1.bf16.msra.mxu0 0
      %1293 = vmatprep.subr.bf16.mxu0 0
      %1294 = vmatpush1.bf16.msra.mxu0 0
      %1295 = vmatprep.subr.bf16.mxu0 0
      %1296 = vmatpush1.bf16.msra.mxu0 0
      %1297 = vmatprep.subr.bf16.mxu0 0
      %1298 = vmatpush1.bf16.msra.mxu0 0
      %1299 = vmatprep.subr.bf16.mxu0 0
      %1300 = vmatpush1.bf16.msra.mxu0 0
      %1301 = vmatprep.subr.bf16.mxu0 0
      %1302 = vmatpush1.bf16.msra.mxu0 0
      %1303 = vmatprep.subr.bf16.mxu0 0
      %1304 = vmatpush1.bf16.msra.mxu0 0
      %1305 = vmatprep.subr.bf16.mxu0 0
      %1306 = vmatpush1.bf16.msra.mxu0 0
      %1307 = vmatprep.mubr.bf16.mxu0 0
      %1308 = vmatmul.mubr.bf16.gmra.mrb[0].mxu0 %v1270
      %v1309 = vpop.f32.mrb[0].mxu0
      %v1310 = vadd.f32 0.0, %v1309
      %v1311 = vpop.f32.mrb[0].mxu0
      %v1312 = vpop.f32.mrb[0].mxu0
      %v1313 = vpop.f32.mrb[0].mxu0
      %1314 = vdwg.mxu0
      %1316 = vrot.lane.b32.xlu0 %v1086, 8
      %v1317 = vpop.permute.xlu0 %1316
      %1320 = vrot.lane.b32.xlu0 %v1198, 16
      %v1321 = vpop.permute.xlu0 %1320
      %1324 = vrot.lane.b32.xlu0 %v1310, 24
      %v1325 = vpop.permute.xlu0 %1324
      %v1327 = vsel %vm869, %v974, %v1317
      %vm1328 = vcmask 130048
      %v1329 = vsel %vm1328, %v1327, %v1321
      %vm1330 = vcmask 195584
      %v1331 = vsel %vm1330, %v1329, %v1325
      %v1332 = vld [vmem:[%s6] sm:$0xf]
      %v1333 = vld [vmem:[%s6 + $0x4] sm:$0xf]
      %v1334 = vld [vmem:[%s6 + $0x8] sm:$0xf]
      %v1335 = vld [vmem:[%s6 + $0xc] sm:$0xf]
      %v1336 = vpack.c.bf16 %v1331, %v1331
      %v1337 = vld [vmem:[%s7] sm:$0x1]
      %v1339 = vlaneseq
      %v1340 = vshrl.u32 %v1339, 7
      %v1341 = vsub.s32 0, %v1340
      %v1342 = vrot.slane %v1337, %v1341
      %v1348 = vunpack.c.l.b16 %v1332
      %v1349 = vunpack.c.l.b16 %v1333
      %v1350 = vunpack.c.l.b16 %v1334
      %v1351 = vunpack.c.l.b16 %v1335
      %v1352 = vpack.c.b16 %v1349, %v1348
      %v1353 = vpack.c.b16 %v1351, %v1350
      %v1357 = vsel %vm821, %v1336, 0
      %1359 = vmatprep.subr.bf16.mxu0 0
      %1360 = vmatpush1.bf16.msra.mxu0 %v1352
      %1361 = vmatprep.subr.bf16.mxu0 0
      %1362 = vmatpush1.bf16.msra.mxu0 %v1353
      %1363 = vmatprep.subr.bf16.mxu0 0
      %1364 = vmatpush1.bf16.msra.mxu0 0
      %1365 = vmatprep.subr.bf16.mxu0 0
      %1366 = vmatpush1.bf16.msra.mxu0 0
      %1367 = vmatprep.subr.bf16.mxu0 0
      %1368 = vmatpush1.bf16.msra.mxu0 0
      %1369 = vmatprep.subr.bf16.mxu0 0
      %1370 = vmatpush1.bf16.msra.mxu0 0
      %1371 = vmatprep.subr.bf16.mxu0 0
      %1372 = vmatpush1.bf16.msra.mxu0 0
      %1373 = vmatprep.subr.bf16.mxu0 0
      %1374 = vmatpush1.bf16.msra.mxu0 0
      %1375 = vmatprep.subr.bf16.mxu0 0
      %1376 = vmatpush1.bf16.msra.mxu0 0
      %1377 = vmatprep.subr.bf16.mxu0 0
      %1378 = vmatpush1.bf16.msra.mxu0 0
      %1379 = vmatprep.subr.bf16.mxu0 0
      %1380 = vmatpush1.bf16.msra.mxu0 0
      %1381 = vmatprep.subr.bf16.mxu0 0
      %1382 = vmatpush1.bf16.msra.mxu0 0
      %1383 = vmatprep.subr.bf16.mxu0 0
      %1384 = vmatpush1.bf16.msra.mxu0 0
      %1385 = vmatprep.subr.bf16.mxu0 0
      %1386 = vmatpush1.bf16.msra.mxu0 0
      %1387 = vmatprep.subr.bf16.mxu0 0
      %1388 = vmatpush1.bf16.msra.mxu0 0
      %1389 = vmatprep.subr.bf16.mxu0 0
      %1390 = vmatpush1.bf16.msra.mxu0 0
      %1391 = vmatprep.mubr.bf16.mxu0 0
      %1392 = vmatmul.mubr.bf16.gmra.mrb[0].mxu0 %v1357
      %v1393 = vpop.f32.mrb[0].mxu0
      %v1394 = vadd.f32 %v1342, %v1393
      %v1395 = vpop.f32.mrb[0].mxu0
      %v1396 = vpop.f32.mrb[0].mxu0
      %v1397 = vpop.f32.mrb[0].mxu0
      %1398 = vdwg.mxu0
      %v1399 = vadd.f32 %v779, %v1394
      %v1400 = vld [vmem:[%s8] sm:$0x1]
      %v1401 = vld [vmem:[%s9] sm:$0x1]
      %v1402 = vsel %vm821, %v1399, 0.0
      %1403 = vadd.xlane.f32.xlu0 %v1402
      %v1404 = vpop.xlane.xlu0 %1403
      %v1405 = vrcp.pop 32.0
      %v1406 = vmul.f32 %v1404, %v1405
      %v1407 = vsub.f32 %v1399, %v1406
      %v1408 = vmul.f32 %v1407, %v1407
      %v1409 = vsel %vm821, %v1408, 0.0
      %1410 = vadd.xlane.f32.xlu0 %v1409
      %v1411 = vpop.xlane.xlu0 %1410
      %v1412 = vmul.f32 %v1411, %v1405
      %v1413 = vadd.f32 %v1412, 1e-05
      %v1414 = vrsqrt.pop %v1413
      %v1415 = vmul.f32 %v1407, %v1414
      %v1417 = vlaneseq
      %v1418 = vshrl.u32 %v1417, 7
      %v1419 = vsub.s32 0, %v1418
      %v1420 = vrot.slane %v1400, %v1419
      %v1422 = vmul.f32 %v1415, %v1420
      %v1424 = vlaneseq
      %v1425 = vshrl.u32 %v1424, 7
      %v1426 = vsub.s32 0, %v1425
      %v1427 = vrot.slane %v1401, %v1426
      %v1429 = vadd.f32 %v1422, %v1427
      %v1430 = vld [vmem:[%s10] sm:$0xf]
      %v1431 = vld [vmem:[%s10 + $0x4] sm:$0xf]
      %v1432 = vld [vmem:[%s10 + $0x8] sm:$0xf]
      %v1433 = vld [vmem:[%s10 + $0xc] sm:$0xf]
      %v1434 = vpack.c.bf16 %v1429, %v1429
      %v1435 = vld [vmem:[%s11] sm:$0x1]
      %v1437 = vlaneseq
      %v1438 = vshrl.u32 %v1437, 7
      %v1439 = vsub.s32 0, %v1438
      %v1440 = vrot.slane %v1435, %v1439
      %v1446 = vunpack.c.l.b16 %v1430
      %v1447 = vunpack.c.l.b16 %v1431
      %v1448 = vunpack.c.l.b16 %v1432
      %v1449 = vunpack.c.l.b16 %v1433
      %v1450 = vpack.c.b16 %v1447, %v1446
      %v1451 = vpack.c.b16 %v1449, %v1448
      %v1455 = vsel %vm821, %v1434, 0
      %1457 = vmatprep.subr.bf16.mxu0 0
      %1458 = vmatpush1.bf16.msra.mxu0 %v1450
      %1459 = vmatprep.subr.bf16.mxu0 0
      %1460 = vmatpush1.bf16.msra.mxu0 %v1451
      %1461 = vmatprep.subr.bf16.mxu0 0
      %1462 = vmatpush1.bf16.msra.mxu0 0
      %1463 = vmatprep.subr.bf16.mxu0 0
      %1464 = vmatpush1.bf16.msra.mxu0 0
      %1465 = vmatprep.subr.bf16.mxu0 0
      %1466 = vmatpush1.bf16.msra.mxu0 0
      %1467 = vmatprep.subr.bf16.mxu0 0
      %1468 = vmatpush1.bf16.msra.mxu0 0
      %1469 = vmatprep.subr.bf16.mxu0 0
      %1470 = vmatpush1.bf16.msra.mxu0 0
      %1471 = vmatprep.subr.bf16.mxu0 0
      %1472 = vmatpush1.bf16.msra.mxu0 0
      %1473 = vmatprep.subr.bf16.mxu0 0
      %1474 = vmatpush1.bf16.msra.mxu0 0
      %1475 = vmatprep.subr.bf16.mxu0 0
      %1476 = vmatpush1.bf16.msra.mxu0 0
      %1477 = vmatprep.subr.bf16.mxu0 0
      %1478 = vmatpush1.bf16.msra.mxu0 0
      %1479 = vmatprep.subr.bf16.mxu0 0
      %1480 = vmatpush1.bf16.msra.mxu0 0
      %1481 = vmatprep.subr.bf16.mxu0 0
      %1482 = vmatpush1.bf16.msra.mxu0 0
      %1483 = vmatprep.subr.bf16.mxu0 0
      %1484 = vmatpush1.bf16.msra.mxu0 0
      %1485 = vmatprep.subr.bf16.mxu0 0
      %1486 = vmatpush1.bf16.msra.mxu0 0
      %1487 = vmatprep.subr.bf16.mxu0 0
      %1488 = vmatpush1.bf16.msra.mxu0 0
      %1489 = vmatprep.mubr.bf16.mxu0 0
      %1490 = vmatmul.mubr.bf16.gmra.mrb[0].mxu0 %v1455
      %v1491 = vpop.f32.mrb[0].mxu0
      %v1492 = vadd.f32 %v1440, %v1491
      %v1493 = vpop.f32.mrb[0].mxu0
      %v1494 = vpop.f32.mrb[0].mxu0
      %v1495 = vpop.f32.mrb[0].mxu0
      %1496 = vdwg.mxu0
      %v1497 = vld [vmem:[%s12] sm:$0xf]
      %v1498 = vld [vmem:[%s12 + $0x4] sm:$0xf]
      %v1499 = vld [vmem:[%s12 + $0x8] sm:$0xf]
      %v1500 = vld [vmem:[%s12 + $0xc] sm:$0xf]
      %v1501 = vpack.c.bf16 %v780, %v780
      %v1502 = vld [vmem:[%s13] sm:$0x1]
      %v1504 = vlaneseq
      %v1505 = vshrl.u32 %v1504, 7
      %v1506 = vsub.s32 0, %v1505
      %v1507 = vrot.slane %v1502, %v1506
      %v1513 = vunpack.c.l.b16 %v1497
      %v1514 = vunpack.c.l.b16 %v1498
      %v1515 = vunpack.c.l.b16 %v1499
      %v1516 = vunpack.c.l.b16 %v1500
      %v1517 = vpack.c.b16 %v1514, %v1513
      %v1518 = vpack.c.b16 %v1516, %v1515
      %v1522 = vsel %vm821, %v1501, 0
      %1524 = vmatprep.subr.bf16.mxu0 0
      %1525 = vmatpush1.bf16.msra.mxu0 %v1517
      %1526 = vmatprep.subr.bf16.mxu0 0
      %1527 = vmatpush1.bf16.msra.mxu0 %v1518
      %1528 = vmatprep.subr.bf16.mxu0 0
      %1529 = vmatpush1.bf16.msra.mxu0 0
      %1530 = vmatprep.subr.bf16.mxu0 0
      %1531 = vmatpush1.bf16.msra.mxu0 0
      %1532 = vmatprep.subr.bf16.mxu0 0
      %1533 = vmatpush1.bf16.msra.mxu0 0
      %1534 = vmatprep.subr.bf16.mxu0 0
      %1535 = vmatpush1.bf16.msra.mxu0 0
      %1536 = vmatprep.subr.bf16.mxu0 0
      %1537 = vmatpush1.bf16.msra.mxu0 0
      %1538 = vmatprep.subr.bf16.mxu0 0
      %1539 = vmatpush1.bf16.msra.mxu0 0
      %1540 = vmatprep.subr.bf16.mxu0 0
      %1541 = vmatpush1.bf16.msra.mxu0 0
      %1542 = vmatprep.subr.bf16.mxu0 0
      %1543 = vmatpush1.bf16.msra.mxu0 0
      %1544 = vmatprep.subr.bf16.mxu0 0
      %1545 = vmatpush1.bf16.msra.mxu0 0
      %1546 = vmatprep.subr.bf16.mxu0 0
      %1547 = vmatpush1.bf16.msra.mxu0 0
      %1548 = vmatprep.subr.bf16.mxu0 0
      %1549 = vmatpush1.bf16.msra.mxu0 0
      %1550 = vmatprep.subr.bf16.mxu0 0
      %1551 = vmatpush1.bf16.msra.mxu0 0
      %1552 = vmatprep.subr.bf16.mxu0 0
      %1553 = vmatpush1.bf16.msra.mxu0 0
      %1554 = vmatprep.subr.bf16.mxu0 0
      %1555 = vmatpush1.bf16.msra.mxu0 0
      %1556 = vmatprep.mubr.bf16.mxu0 0
      %1557 = vmatmul.mubr.bf16.gmra.mrb[0].mxu0 %v1522
      %v1558 = vpop.f32.mrb[0].mxu0
      %v1559 = vadd.f32 %v1507, %v1558
      %v1560 = vpop.f32.mrb[0].mxu0
      %v1561 = vpop.f32.mrb[0].mxu0
      %v1562 = vpop.f32.mrb[0].mxu0
      %1563 = vdwg.mxu0
      %v1564 = vpack.c.bf16 %v1492, %v1492
      %v1565 = vpack.c.bf16 %v1559, %v1559
      %v1567 = vsel %vm869, %v1564, 0
      %v1570 = vsel %vm869, %v1565, 0
      %1572 = vmatprep.subr.bf16.mxu0 0
      %1573 = vmatpush1.bf16.xpose.msra.mxu0 %v1570
      %1574 = vmatprep.subr.bf16.mxu0 0
      %1575 = vmatpush1.bf16.xpose.msra.mxu0 0
      %1576 = vmatprep.subr.bf16.mxu0 0
      %1577 = vmatpush1.bf16.xpose.msra.mxu0 0
      %1578 = vmatprep.subr.bf16.mxu0 0
      %1579 = vmatpush1.bf16.xpose.msra.mxu0 0
      %1580 = vmatprep.subr.bf16.mxu0 0
      %1581 = vmatpush1.bf16.xpose.msra.mxu0 0
      %1582 = vmatprep.subr.bf16.mxu0 0
      %1583 = vmatpush1.bf16.xpose.msra.mxu0 0
      %1584 = vmatprep.subr.bf16.mxu0 0
      %1585 = vmatpush1.bf16.xpose.msra.mxu0 0
      %1586 = vmatprep.subr.bf16.mxu0 0
      %1587 = vmatpush1.bf16.xpose.msra.mxu0 0
      %1588 = vmatprep.subr.bf16.mxu0 0
      %1589 = vmatpush1.bf16.xpose.msra.mxu0 0
      %1590 = vmatprep.subr.bf16.mxu0 0
      %1591 = vmatpush1.bf16.xpose.msra.mxu0 0
      %1592 = vmatprep.subr.bf16.mxu0 0
      %1593 = vmatpush1.bf16.xpose.msra.mxu0 0
      %1594 = vmatprep.subr.bf16.mxu0 0
      %1595 = vmatpush1.bf16.xpose.msra.mxu0 0
      %1596 = vmatprep.subr.bf16.mxu0 0
      %1597 = vmatpush1.bf16.xpose.msra.mxu0 0
      %1598 = vmatprep.subr.bf16.mxu0 0
      %1599 = vmatpush1.bf16.xpose.msra.mxu0 0
      %1600 = vmatprep.subr.bf16.mxu0 0
      %1601 = vmatpush1.bf16.xpose.msra.mxu0 0
      %1602 = vmatprep.subr.bf16.mxu0 0
      %1603 = vmatpush1.bf16.xpose.msra.mxu0 0
      %1604 = vmatprep.mubr.bf16.mxu0 0
      %1605 = vmatmul.mubr.bf16.gmra.mrb[0].mxu0 %v1567
      %v1606 = vpop.f32.mrb[0].mxu0
      %v1607 = vadd.f32 0.0, %v1606
      %v1608 = vpop.f32.mrb[0].mxu0
      %v1609 = vpop.f32.mrb[0].mxu0
      %v1610 = vpop.f32.mrb[0].mxu0
      %1611 = vdwg.mxu0
      %v1612 = vmul.f32 %v1607, 0.35355338
      %v1613 = vsel %vm784, 1, 0
      %v1614 = vlaneseq
      %v1615 = vshrl.u32 %v1614, 7
      %v1616 = vsub.s32 0, %v1615
      %v1617 = vrot.slane %v1613, %v1616
      %vm1618 = vcmp.eq.s32.totalorder %v1617, 1
      %v1619 = vsel %vm1618, %v1612, -1e+10
      %v1620 = vsel %vm869, %v1619, -inf
      %1621 = vmax.xlane.f32.xlu0 %v1620
      %v1622 = vpop.xlane.xlu0 %1621
      %v1623 = vsub.f32 %v1619, %v1622
      %v1624 = vmul.f32 %v1623, 1.442695
      %v1625 = vpow.pop %v1624
      %v1626 = vsel %vm869, %v1625, 0.0
      %1627 = vadd.xlane.f32.xlu0 %v1626
      %v1628 = vpop.xlane.xlu0 %1627
      %v1629 = vrcp.pop %v1628
      %v1630 = vmul.f32 %v1625, %v1629
      %v1631 = vpack.c.bf16 %v1630, %v1630
      %1633 = vrot.lane.b32.xlu0 %v1565, 96
      %v1634 = vpop.permute.xlu0 %1633
      %v1636 = vsel %vm869, %v1631, 0
      %v1639 = vsel %vm935, %v1634, 0
      %1641 = vmatprep.subr.bf16.mxu0 0
      %1642 = vmatpush1.bf16.msra.mxu0 %v1639
      %1643 = vmatprep.subr.bf16.mxu0 0
      %1644 = vmatpush1.bf16.msra.mxu0 0
      %1645 = vmatprep.subr.bf16.mxu0 0
      %1646 = vmatpush1.bf16.msra.mxu0 0
      %1647 = vmatprep.subr.bf16.mxu0 0
      %1648 = vmatpush1.bf16.msra.mxu0 0
      %1649 = vmatprep.subr.bf16.mxu0 0
      %1650 = vmatpush1.bf16.msra.mxu0 0
      %1651 = vmatprep.subr.bf16.mxu0 0
      %1652 = vmatpush1.bf16.msra.mxu0 0
      %1653 = vmatprep.subr.bf16.mxu0 0
      %1654 = vmatpush1.bf16.msra.mxu0 0
      %1655 = vmatprep.subr.bf16.mxu0 0
      %1656 = vmatpush1.bf16.msra.mxu0 0
      %1657 = vmatprep.subr.bf16.mxu0 0
      %1658 = vmatpush1.bf16.msra.mxu0 0
      %1659 = vmatprep.subr.bf16.mxu0 0
      %1660 = vmatpush1.bf16.msra.mxu0 0
      %1661 = vmatprep.subr.bf16.mxu0 0
      %1662 = vmatpush1.bf16.msra.mxu0 0
      %1663 = vmatprep.subr.bf16.mxu0 0
      %1664 = vmatpush1.bf16.msra.mxu0 0
      %1665 = vmatprep.subr.bf16.mxu0 0
      %1666 = vmatpush1.bf16.msra.mxu0 0
      %1667 = vmatprep.subr.bf16.mxu0 0
      %1668 = vmatpush1.bf16.msra.mxu0 0
      %1669 = vmatprep.subr.bf16.mxu0 0
      %1670 = vmatpush1.bf16.msra.mxu0 0
      %1671 = vmatprep.subr.bf16.mxu0 0
      %1672 = vmatpush1.bf16.msra.mxu0 0
      %1673 = vmatprep.mubr.bf16.mxu0 0
      %1674 = vmatmul.mubr.bf16.gmra.mrb[0].mxu0 %v1636
      %v1675 = vpop.f32.mrb[0].mxu0
      %v1676 = vadd.f32 0.0, %v1675
      %v1677 = vpop.f32.mrb[0].mxu0
      %v1678 = vpop.f32.mrb[0].mxu0
      %v1679 = vpop.f32.mrb[0].mxu0
      %1680 = vdwg.mxu0
      %1682 = vrot.lane.b32.xlu0 %v1564, 120
      %v1683 = vpop.permute.xlu0 %1682
      %1684 = vrot.lane.b32.xlu0 %v1565, 120
      %v1685 = vpop.permute.xlu0 %1684
      %v1687 = vsel %vm869, %v1683, 0
      %v1690 = vsel %vm869, %v1685, 0
      %1692 = vmatprep.subr.bf16.mxu0 0
      %1693 = vmatpush1.bf16.xpose.msra.mxu0 %v1690
      %1694 = vmatprep.subr.bf16.mxu0 0
      %1695 = vmatpush1.bf16.xpose.msra.mxu0 0
      %1696 = vmatprep.subr.bf16.mxu0 0
      %1697 = vmatpush1.bf16.xpose.msra.mxu0 0
      %1698 = vmatprep.subr.bf16.mxu0 0
      %1699 = vmatpush1.bf16.xpose.msra.mxu0 0
      %1700 = vmatprep.subr.bf16.mxu0 0
      %1701 = vmatpush1.bf16.xpose.msra.mxu0 0
      %1702 = vmatprep.subr.bf16.mxu0 0
      %1703 = vmatpush1.bf16.xpose.msra.mxu0 0
      %1704 = vmatprep.subr.bf16.mxu0 0
      %1705 = vmatpush1.bf16.xpose.msra.mxu0 0
      %1706 = vmatprep.subr.bf16.mxu0 0
      %1707 = vmatpush1.bf16.xpose.msra.mxu0 0
      %1708 = vmatprep.subr.bf16.mxu0 0
      %1709 = vmatpush1.bf16.xpose.msra.mxu0 0
      %1710 = vmatprep.subr.bf16.mxu0 0
      %1711 = vmatpush1.bf16.xpose.msra.mxu0 0
      %1712 = vmatprep.subr.bf16.mxu0 0
      %1713 = vmatpush1.bf16.xpose.msra.mxu0 0
      %1714 = vmatprep.subr.bf16.mxu0 0
      %1715 = vmatpush1.bf16.xpose.msra.mxu0 0
      %1716 = vmatprep.subr.bf16.mxu0 0
      %1717 = vmatpush1.bf16.xpose.msra.mxu0 0
      %1718 = vmatprep.subr.bf16.mxu0 0
      %1719 = vmatpush1.bf16.xpose.msra.mxu0 0
      %1720 = vmatprep.subr.bf16.mxu0 0
      %1721 = vmatpush1.bf16.xpose.msra.mxu0 0
      %1722 = vmatprep.subr.bf16.mxu0 0
      %1723 = vmatpush1.bf16.xpose.msra.mxu0 0
      %1724 = vmatprep.mubr.bf16.mxu0 0
      %1725 = vmatmul.mubr.bf16.gmra.mrb[0].mxu0 %v1687
      %v1726 = vpop.f32.mrb[0].mxu0
      %v1727 = vadd.f32 0.0, %v1726
      %v1728 = vpop.f32.mrb[0].mxu0
      %v1729 = vpop.f32.mrb[0].mxu0
      %v1730 = vpop.f32.mrb[0].mxu0
      %1731 = vdwg.mxu0
      %v1732 = vmul.f32 %v1727, 0.35355338
      %v1733 = vsel %vm1618, %v1732, -1e+10
      %v1734 = vsel %vm869, %v1733, -inf
      %1735 = vmax.xlane.f32.xlu0 %v1734
      %v1736 = vpop.xlane.xlu0 %1735
      %v1737 = vsub.f32 %v1733, %v1736
      %v1738 = vmul.f32 %v1737, 1.442695
      %v1739 = vpow.pop %v1738
      %v1740 = vsel %vm869, %v1739, 0.0
      %1741 = vadd.xlane.f32.xlu0 %v1740
      %v1742 = vpop.xlane.xlu0 %1741
      %v1743 = vrcp.pop %v1742
      %v1744 = vmul.f32 %v1739, %v1743
      %v1745 = vpack.c.bf16 %v1744, %v1744
      %1746 = vrot.lane.b32.xlu0 %v1565, 88
      %v1747 = vpop.permute.xlu0 %1746
      %v1749 = vsel %vm869, %v1745, 0
      %v1752 = vsel %vm935, %v1747, 0
      %1754 = vmatprep.subr.bf16.mxu0 0
      %1755 = vmatpush1.bf16.msra.mxu0 %v1752
      %1756 = vmatprep.subr.bf16.mxu0 0
      %1757 = vmatpush1.bf16.msra.mxu0 0
      %1758 = vmatprep.subr.bf16.mxu0 0
      %1759 = vmatpush1.bf16.msra.mxu0 0
      %1760 = vmatprep.subr.bf16.mxu0 0
      %1761 = vmatpush1.bf16.msra.mxu0 0
      %1762 = vmatprep.subr.bf16.mxu0 0
      %1763 = vmatpush1.bf16.msra.mxu0 0
      %1764 = vmatprep.subr.bf16.mxu0 0
      %1765 = vmatpush1.bf16.msra.mxu0 0
      %1766 = vmatprep.subr.bf16.mxu0 0
      %1767 = vmatpush1.bf16.msra.mxu0 0
      %1768 = vmatprep.subr.bf16.mxu0 0
      %1769 = vmatpush1.bf16.msra.mxu0 0
      %1770 = vmatprep.subr.bf16.mxu0 0
      %1771 = vmatpush1.bf16.msra.mxu0 0
      %1772 = vmatprep.subr.bf16.mxu0 0
      %1773 = vmatpush1.bf16.msra.mxu0 0
      %1774 = vmatprep.subr.bf16.mxu0 0
      %1775 = vmatpush1.bf16.msra.mxu0 0
      %1776 = vmatprep.subr.bf16.mxu0 0
      %1777 = vmatpush1.bf16.msra.mxu0 0
      %1778 = vmatprep.subr.bf16.mxu0 0
      %1779 = vmatpush1.bf16.msra.mxu0 0
      %1780 = vmatprep.subr.bf16.mxu0 0
      %1781 = vmatpush1.bf16.msra.mxu0 0
      %1782 = vmatprep.subr.bf16.mxu0 0
      %1783 = vmatpush1.bf16.msra.mxu0 0
      %1784 = vmatprep.subr.bf16.mxu0 0
      %1785 = vmatpush1.bf16.msra.mxu0 0
      %1786 = vmatprep.mubr.bf16.mxu0 0
      %1787 = vmatmul.mubr.bf16.gmra.mrb[0].mxu0 %v1749
      %v1788 = vpop.f32.mrb[0].mxu0
      %v1789 = vadd.f32 0.0, %v1788
      %v1790 = vpop.f32.mrb[0].mxu0
      %v1791 = vpop.f32.mrb[0].mxu0
      %v1792 = vpop.f32.mrb[0].mxu0
      %1793 = vdwg.mxu0
      %1794 = vrot.lane.b32.xlu0 %v1564, 112
      %v1795 = vpop.permute.xlu0 %1794
      %1796 = vrot.lane.b32.xlu0 %v1565, 112
      %v1797 = vpop.permute.xlu0 %1796
      %v1799 = vsel %vm869, %v1795, 0
      %v1802 = vsel %vm869, %v1797, 0
      %1804 = vmatprep.subr.bf16.mxu0 0
      %1805 = vmatpush1.bf16.xpose.msra.mxu0 %v1802
      %1806 = vmatprep.subr.bf16.mxu0 0
      %1807 = vmatpush1.bf16.xpose.msra.mxu0 0
      %1808 = vmatprep.subr.bf16.mxu0 0
      %1809 = vmatpush1.bf16.xpose.msra.mxu0 0
      %1810 = vmatprep.subr.bf16.mxu0 0
      %1811 = vmatpush1.bf16.xpose.msra.mxu0 0
      %1812 = vmatprep.subr.bf16.mxu0 0
      %1813 = vmatpush1.bf16.xpose.msra.mxu0 0
      %1814 = vmatprep.subr.bf16.mxu0 0
      %1815 = vmatpush1.bf16.xpose.msra.mxu0 0
      %1816 = vmatprep.subr.bf16.mxu0 0
      %1817 = vmatpush1.bf16.xpose.msra.mxu0 0
      %1818 = vmatprep.subr.bf16.mxu0 0
      %1819 = vmatpush1.bf16.xpose.msra.mxu0 0
      %1820 = vmatprep.subr.bf16.mxu0 0
      %1821 = vmatpush1.bf16.xpose.msra.mxu0 0
      %1822 = vmatprep.subr.bf16.mxu0 0
      %1823 = vmatpush1.bf16.xpose.msra.mxu0 0
      %1824 = vmatprep.subr.bf16.mxu0 0
      %1825 = vmatpush1.bf16.xpose.msra.mxu0 0
      %1826 = vmatprep.subr.bf16.mxu0 0
      %1827 = vmatpush1.bf16.xpose.msra.mxu0 0
      %1828 = vmatprep.subr.bf16.mxu0 0
      %1829 = vmatpush1.bf16.xpose.msra.mxu0 0
      %1830 = vmatprep.subr.bf16.mxu0 0
      %1831 = vmatpush1.bf16.xpose.msra.mxu0 0
      %1832 = vmatprep.subr.bf16.mxu0 0
      %1833 = vmatpush1.bf16.xpose.msra.mxu0 0
      %1834 = vmatprep.subr.bf16.mxu0 0
      %1835 = vmatpush1.bf16.xpose.msra.mxu0 0
      %1836 = vmatprep.mubr.bf16.mxu0 0
      %1837 = vmatmul.mubr.bf16.gmra.mrb[0].mxu0 %v1799
      %v1838 = vpop.f32.mrb[0].mxu0
      %v1839 = vadd.f32 0.0, %v1838
      %v1840 = vpop.f32.mrb[0].mxu0
      %v1841 = vpop.f32.mrb[0].mxu0
      %v1842 = vpop.f32.mrb[0].mxu0
      %1843 = vdwg.mxu0
      %v1844 = vmul.f32 %v1839, 0.35355338
      %v1845 = vsel %vm1618, %v1844, -1e+10
      %v1846 = vsel %vm869, %v1845, -inf
      %1847 = vmax.xlane.f32.xlu0 %v1846
      %v1848 = vpop.xlane.xlu0 %1847
      %v1849 = vsub.f32 %v1845, %v1848
      %v1850 = vmul.f32 %v1849, 1.442695
      %v1851 = vpow.pop %v1850
      %v1852 = vsel %vm869, %v1851, 0.0
      %1853 = vadd.xlane.f32.xlu0 %v1852
      %v1854 = vpop.xlane.xlu0 %1853
      %v1855 = vrcp.pop %v1854
      %v1856 = vmul.f32 %v1851, %v1855
      %v1857 = vpack.c.bf16 %v1856, %v1856
      %1858 = vrot.lane.b32.xlu0 %v1565, 80
      %v1859 = vpop.permute.xlu0 %1858
      %v1861 = vsel %vm869, %v1857, 0
      %v1864 = vsel %vm935, %v1859, 0
      %1866 = vmatprep.subr.bf16.mxu0 0
      %1867 = vmatpush1.bf16.msra.mxu0 %v1864
      %1868 = vmatprep.subr.bf16.mxu0 0
      %1869 = vmatpush1.bf16.msra.mxu0 0
      %1870 = vmatprep.subr.bf16.mxu0 0
      %1871 = vmatpush1.bf16.msra.mxu0 0
      %1872 = vmatprep.subr.bf16.mxu0 0
      %1873 = vmatpush1.bf16.msra.mxu0 0
      %1874 = vmatprep.subr.bf16.mxu0 0
      %1875 = vmatpush1.bf16.msra.mxu0 0
      %1876 = vmatprep.subr.bf16.mxu0 0
      %1877 = vmatpush1.bf16.msra.mxu0 0
      %1878 = vmatprep.subr.bf16.mxu0 0
      %1879 = vmatpush1.bf16.msra.mxu0 0
      %1880 = vmatprep.subr.bf16.mxu0 0
      %1881 = vmatpush1.bf16.msra.mxu0 0
      %1882 = vmatprep.subr.bf16.mxu0 0
      %1883 = vmatpush1.bf16.msra.mxu0 0
      %1884 = vmatprep.subr.bf16.mxu0 0
      %1885 = vmatpush1.bf16.msra.mxu0 0
      %1886 = vmatprep.subr.bf16.mxu0 0
      %1887 = vmatpush1.bf16.msra.mxu0 0
      %1888 = vmatprep.subr.bf16.mxu0 0
      %1889 = vmatpush1.bf16.msra.mxu0 0
      %1890 = vmatprep.subr.bf16.mxu0 0
      %1891 = vmatpush1.bf16.msra.mxu0 0
      %1892 = vmatprep.subr.bf16.mxu0 0
      %1893 = vmatpush1.bf16.msra.mxu0 0
      %1894 = vmatprep.subr.bf16.mxu0 0
      %1895 = vmatpush1.bf16.msra.mxu0 0
      %1896 = vmatprep.subr.bf16.mxu0 0
      %1897 = vmatpush1.bf16.msra.mxu0 0
      %1898 = vmatprep.mubr.bf16.mxu0 0
      %1899 = vmatmul.mubr.bf16.gmra.mrb[0].mxu0 %v1861
      %v1900 = vpop.f32.mrb[0].mxu0
      %v1901 = vadd.f32 0.0, %v1900
      %v1902 = vpop.f32.mrb[0].mxu0
      %v1903 = vpop.f32.mrb[0].mxu0
      %v1904 = vpop.f32.mrb[0].mxu0
      %1905 = vdwg.mxu0
      %1906 = vrot.lane.b32.xlu0 %v1564, 104
      %v1907 = vpop.permute.xlu0 %1906
      %1908 = vrot.lane.b32.xlu0 %v1565, 104
      %v1909 = vpop.permute.xlu0 %1908
      %v1911 = vsel %vm869, %v1907, 0
      %v1914 = vsel %vm869, %v1909, 0
      %1916 = vmatprep.subr.bf16.mxu0 0
      %1917 = vmatpush1.bf16.xpose.msra.mxu0 %v1914
      %1918 = vmatprep.subr.bf16.mxu0 0
      %1919 = vmatpush1.bf16.xpose.msra.mxu0 0
      %1920 = vmatprep.subr.bf16.mxu0 0
      %1921 = vmatpush1.bf16.xpose.msra.mxu0 0
      %1922 = vmatprep.subr.bf16.mxu0 0
      %1923 = vmatpush1.bf16.xpose.msra.mxu0 0
      %1924 = vmatprep.subr.bf16.mxu0 0
      %1925 = vmatpush1.bf16.xpose.msra.mxu0 0
      %1926 = vmatprep.subr.bf16.mxu0 0
      %1927 = vmatpush1.bf16.xpose.msra.mxu0 0
      %1928 = vmatprep.subr.bf16.mxu0 0
      %1929 = vmatpush1.bf16.xpose.msra.mxu0 0
      %1930 = vmatprep.subr.bf16.mxu0 0
      %1931 = vmatpush1.bf16.xpose.msra.mxu0 0
      %1932 = vmatprep.subr.bf16.mxu0 0
      %1933 = vmatpush1.bf16.xpose.msra.mxu0 0
      %1934 = vmatprep.subr.bf16.mxu0 0
      %1935 = vmatpush1.bf16.xpose.msra.mxu0 0
      %1936 = vmatprep.subr.bf16.mxu0 0
      %1937 = vmatpush1.bf16.xpose.msra.mxu0 0
      %1938 = vmatprep.subr.bf16.mxu0 0
      %1939 = vmatpush1.bf16.xpose.msra.mxu0 0
      %1940 = vmatprep.subr.bf16.mxu0 0
      %1941 = vmatpush1.bf16.xpose.msra.mxu0 0
      %1942 = vmatprep.subr.bf16.mxu0 0
      %1943 = vmatpush1.bf16.xpose.msra.mxu0 0
      %1944 = vmatprep.subr.bf16.mxu0 0
      %1945 = vmatpush1.bf16.xpose.msra.mxu0 0
      %1946 = vmatprep.subr.bf16.mxu0 0
      %1947 = vmatpush1.bf16.xpose.msra.mxu0 0
      %1948 = vmatprep.mubr.bf16.mxu0 0
      %1949 = vmatmul.mubr.bf16.gmra.mrb[0].mxu0 %v1911
      %v1950 = vpop.f32.mrb[0].mxu0
      %v1951 = vadd.f32 0.0, %v1950
      %v1952 = vpop.f32.mrb[0].mxu0
      %v1953 = vpop.f32.mrb[0].mxu0
      %v1954 = vpop.f32.mrb[0].mxu0
      %1955 = vdwg.mxu0
      %v1956 = vmul.f32 %v1951, 0.35355338
      %v1957 = vsel %vm1618, %v1956, -1e+10
      %v1958 = vsel %vm869, %v1957, -inf
      %1959 = vmax.xlane.f32.xlu0 %v1958
      %v1960 = vpop.xlane.xlu0 %1959
      %v1961 = vsub.f32 %v1957, %v1960
      %v1962 = vmul.f32 %v1961, 1.442695
      %v1963 = vpow.pop %v1962
      %v1964 = vsel %vm869, %v1963, 0.0
      %1965 = vadd.xlane.f32.xlu0 %v1964
      %v1966 = vpop.xlane.xlu0 %1965
      %v1967 = vrcp.pop %v1966
      %v1968 = vmul.f32 %v1963, %v1967
      %v1969 = vpack.c.bf16 %v1968, %v1968
      %1970 = vrot.lane.b32.xlu0 %v1565, 72
      %v1971 = vpop.permute.xlu0 %1970
      %v1973 = vsel %vm869, %v1969, 0
      %v1976 = vsel %vm935, %v1971, 0
      %1978 = vmatprep.subr.bf16.mxu0 0
      %1979 = vmatpush1.bf16.msra.mxu0 %v1976
      %1980 = vmatprep.subr.bf16.mxu0 0
      %1981 = vmatpush1.bf16.msra.mxu0 0
      %1982 = vmatprep.subr.bf16.mxu0 0
      %1983 = vmatpush1.bf16.msra.mxu0 0
      %1984 = vmatprep.subr.bf16.mxu0 0
      %1985 = vmatpush1.bf16.msra.mxu0 0
      %1986 = vmatprep.subr.bf16.mxu0 0
      %1987 = vmatpush1.bf16.msra.mxu0 0
      %1988 = vmatprep.subr.bf16.mxu0 0
      %1989 = vmatpush1.bf16.msra.mxu0 0
      %1990 = vmatprep.subr.bf16.mxu0 0
      %1991 = vmatpush1.bf16.msra.mxu0 0
      %1992 = vmatprep.subr.bf16.mxu0 0
      %1993 = vmatpush1.bf16.msra.mxu0 0
      %1994 = vmatprep.subr.bf16.mxu0 0
      %1995 = vmatpush1.bf16.msra.mxu0 0
      %1996 = vmatprep.subr.bf16.mxu0 0
      %1997 = vmatpush1.bf16.msra.mxu0 0
      %1998 = vmatprep.subr.bf16.mxu0 0
      %1999 = vmatpush1.bf16.msra.mxu0 0
      %2000 = vmatprep.subr.bf16.mxu0 0
      %2001 = vmatpush1.bf16.msra.mxu0 0
      %2002 = vmatprep.subr.bf16.mxu0 0
      %2003 = vmatpush1.bf16.msra.mxu0 0
      %2004 = vmatprep.subr.bf16.mxu0 0
      %2005 = vmatpush1.bf16.msra.mxu0 0
      %2006 = vmatprep.subr.bf16.mxu0 0
      %2007 = vmatpush1.bf16.msra.mxu0 0
      %2008 = vmatprep.subr.bf16.mxu0 0
      %2009 = vmatpush1.bf16.msra.mxu0 0
      %2010 = vmatprep.mubr.bf16.mxu0 0
      %2011 = vmatmul.mubr.bf16.gmra.mrb[0].mxu0 %v1973
      %v2012 = vpop.f32.mrb[0].mxu0
      %v2013 = vadd.f32 0.0, %v2012
      %v2014 = vpop.f32.mrb[0].mxu0
      %v2015 = vpop.f32.mrb[0].mxu0
      %v2016 = vpop.f32.mrb[0].mxu0
      %2017 = vdwg.mxu0
      %2019 = vrot.lane.b32.xlu0 %v1789, 8
      %v2020 = vpop.permute.xlu0 %2019
      %2023 = vrot.lane.b32.xlu0 %v1901, 16
      %v2024 = vpop.permute.xlu0 %2023
      %2027 = vrot.lane.b32.xlu0 %v2013, 24
      %v2028 = vpop.permute.xlu0 %2027
      %v2030 = vsel %vm869, %v1676, %v2020
      %v2031 = vsel %vm1328, %v2030, %v2024
      %v2032 = vsel %vm1330, %v2031, %v2028
      %v2033 = vld [vmem:[%s14] sm:$0xf]
      %v2034 = vld [vmem:[%s14 + $0x4] sm:$0xf]
      %v2035 = vld [vmem:[%s14 + $0x8] sm:$0xf]
      %v2036 = vld [vmem:[%s14 + $0xc] sm:$0xf]
      %v2037 = vpack.c.bf16 %v2032, %v2032
      %v2038 = vld [vmem:[%s15] sm:$0x1]
      %v2040 = vlaneseq
      %v2041 = vshrl.u32 %v2040, 7
      %v2042 = vsub.s32 0, %v2041
      %v2043 = vrot.slane %v2038, %v2042
      %v2049 = vunpack.c.l.b16 %v2033
      %v2050 = vunpack.c.l.b16 %v2034
      %v2051 = vunpack.c.l.b16 %v2035
      %v2052 = vunpack.c.l.b16 %v2036
      %v2053 = vpack.c.b16 %v2050, %v2049
      %v2054 = vpack.c.b16 %v2052, %v2051
      %v2058 = vsel %vm821, %v2037, 0
      %2060 = vmatprep.subr.bf16.mxu0 0
      %2061 = vmatpush1.bf16.msra.mxu0 %v2053
      %2062 = vmatprep.subr.bf16.mxu0 0
      %2063 = vmatpush1.bf16.msra.mxu0 %v2054
      %2064 = vmatprep.subr.bf16.mxu0 0
      %2065 = vmatpush1.bf16.msra.mxu0 0
      %2066 = vmatprep.subr.bf16.mxu0 0
      %2067 = vmatpush1.bf16.msra.mxu0 0
      %2068 = vmatprep.subr.bf16.mxu0 0
      %2069 = vmatpush1.bf16.msra.mxu0 0
      %2070 = vmatprep.subr.bf16.mxu0 0
      %2071 = vmatpush1.bf16.msra.mxu0 0
      %2072 = vmatprep.subr.bf16.mxu0 0
      %2073 = vmatpush1.bf16.msra.mxu0 0
      %2074 = vmatprep.subr.bf16.mxu0 0
      %2075 = vmatpush1.bf16.msra.mxu0 0
      %2076 = vmatprep.subr.bf16.mxu0 0
      %2077 = vmatpush1.bf16.msra.mxu0 0
      %2078 = vmatprep.subr.bf16.mxu0 0
      %2079 = vmatpush1.bf16.msra.mxu0 0
      %2080 = vmatprep.subr.bf16.mxu0 0
      %2081 = vmatpush1.bf16.msra.mxu0 0
      %2082 = vmatprep.subr.bf16.mxu0 0
      %2083 = vmatpush1.bf16.msra.mxu0 0
      %2084 = vmatprep.subr.bf16.mxu0 0
      %2085 = vmatpush1.bf16.msra.mxu0 0
      %2086 = vmatprep.subr.bf16.mxu0 0
      %2087 = vmatpush1.bf16.msra.mxu0 0
      %2088 = vmatprep.subr.bf16.mxu0 0
      %2089 = vmatpush1.bf16.msra.mxu0 0
      %2090 = vmatprep.subr.bf16.mxu0 0
      %2091 = vmatpush1.bf16.msra.mxu0 0
      %2092 = vmatprep.mubr.bf16.mxu0 0
      %2093 = vmatmul.mubr.bf16.gmra.mrb[0].mxu0 %v2058
      %v2094 = vpop.f32.mrb[0].mxu0
      %v2095 = vadd.f32 %v2043, %v2094
      %v2096 = vpop.f32.mrb[0].mxu0
      %v2097 = vpop.f32.mrb[0].mxu0
      %v2098 = vpop.f32.mrb[0].mxu0
      %2099 = vdwg.mxu0
      %v2100 = vadd.f32 %v1429, %v2095
      %v2101 = vld [vmem:[%s16] sm:$0x1]
      %v2102 = vld [vmem:[%s17] sm:$0x1]
      %v2103 = vsel %vm821, %v2100, 0.0
      %2104 = vadd.xlane.f32.xlu0 %v2103
      %v2105 = vpop.xlane.xlu0 %2104
      %v2106 = vmul.f32 %v2105, %v1405
      %v2107 = vsub.f32 %v2100, %v2106
      %v2108 = vmul.f32 %v2107, %v2107
      %v2109 = vsel %vm821, %v2108, 0.0
      %2110 = vadd.xlane.f32.xlu0 %v2109
      %v2111 = vpop.xlane.xlu0 %2110
      %v2112 = vmul.f32 %v2111, %v1405
      %v2113 = vadd.f32 %v2112, 1e-05
      %v2114 = vrsqrt.pop %v2113
      %v2115 = vmul.f32 %v2107, %v2114
      %v2117 = vlaneseq
      %v2118 = vshrl.u32 %v2117, 7
      %v2119 = vsub.s32 0, %v2118
      %v2120 = vrot.slane %v2101, %v2119
      %v2122 = vmul.f32 %v2115, %v2120
      %v2124 = vlaneseq
      %v2125 = vshrl.u32 %v2124, 7
      %v2126 = vsub.s32 0, %v2125
      %v2127 = vrot.slane %v2102, %v2126
      %v2129 = vadd.f32 %v2122, %v2127
      %v2130 = vld [vmem:[%s18] sm:$0xf]
      %v2131 = vld [vmem:[%s18 + $0x4] sm:$0xf]
      %v2132 = vld [vmem:[%s18 + $0x8] sm:$0xf]
      %v2133 = vld [vmem:[%s18 + $0xc] sm:$0xf]
      %v2134 = vpack.c.bf16 %v2129, %v2129
      %v2135 = vld [vmem:[%s19] sm:$0x1]
      %v2137 = vlaneseq
      %v2138 = vshrl.u32 %v2137, 7
      %v2139 = vsub.s32 0, %v2138
      %v2140 = vrot.slane %v2135, %v2139
      %v2146 = vunpack.c.l.b16 %v2130
      %v2147 = vunpack.c.l.b16 %v2131
      %v2148 = vunpack.c.l.b16 %v2132
      %v2149 = vunpack.c.l.b16 %v2133
      %v2150 = vpack.c.b16 %v2147, %v2146
      %v2151 = vpack.c.b16 %v2149, %v2148
      %v2155 = vsel %vm821, %v2134, 0
      %2157 = vmatprep.subr.bf16.mxu0 0
      %2158 = vmatpush1.bf16.msra.mxu0 %v2150
      %2159 = vmatprep.subr.bf16.mxu0 0
      %2160 = vmatpush1.bf16.msra.mxu0 %v2151
      %2161 = vmatprep.subr.bf16.mxu0 0
      %2162 = vmatpush1.bf16.msra.mxu0 0
      %2163 = vmatprep.subr.bf16.mxu0 0
      %2164 = vmatpush1.bf16.msra.mxu0 0
      %2165 = vmatprep.subr.bf16.mxu0 0
      %2166 = vmatpush1.bf16.msra.mxu0 0
      %2167 = vmatprep.subr.bf16.mxu0 0
      %2168 = vmatpush1.bf16.msra.mxu0 0
      %2169 = vmatprep.subr.bf16.mxu0 0
      %2170 = vmatpush1.bf16.msra.mxu0 0
      %2171 = vmatprep.subr.bf16.mxu0 0
      %2172 = vmatpush1.bf16.msra.mxu0 0
      %2173 = vmatprep.subr.bf16.mxu0 0
      %2174 = vmatpush1.bf16.msra.mxu0 0
      %2175 = vmatprep.subr.bf16.mxu0 0
      %2176 = vmatpush1.bf16.msra.mxu0 0
      %2177 = vmatprep.subr.bf16.mxu0 0
      %2178 = vmatpush1.bf16.msra.mxu0 0
      %2179 = vmatprep.subr.bf16.mxu0 0
      %2180 = vmatpush1.bf16.msra.mxu0 0
      %2181 = vmatprep.subr.bf16.mxu0 0
      %2182 = vmatpush1.bf16.msra.mxu0 0
      %2183 = vmatprep.subr.bf16.mxu0 0
      %2184 = vmatpush1.bf16.msra.mxu0 0
      %2185 = vmatprep.subr.bf16.mxu0 0
      %2186 = vmatpush1.bf16.msra.mxu0 0
      %2187 = vmatprep.subr.bf16.mxu0 0
      %2188 = vmatpush1.bf16.msra.mxu0 0
      %2189 = vmatprep.mubr.bf16.mxu0 0
      %2190 = vmatmul.mubr.bf16.gmra.mrb[0].mxu0 %v2155
      %v2191 = vpop.f32.mrb[0].mxu0
      %v2192 = vadd.f32 %v2140, %v2191
      %v2193 = vpop.f32.mrb[0].mxu0
      %v2194 = vpop.f32.mrb[0].mxu0
      %v2195 = vpop.f32.mrb[0].mxu0
      %2196 = vdwg.mxu0
      %v2197 = vmax.f32 %v2192, 0.0
      %v2198 = vld [vmem:[%s20] sm:$0xf]
      %v2199 = vld [vmem:[%s20 + $0x4] sm:$0xf]
      %v2200 = vld [vmem:[%s20 + $0x8] sm:$0xf]
      %v2201 = vld [vmem:[%s20 + $0xc] sm:$0xf]
      %v2202 = vld [vmem:[%s20 + $0x10] sm:$0xf]
      %v2203 = vld [vmem:[%s20 + $0x14] sm:$0xf]
      %v2204 = vld [vmem:[%s20 + $0x18] sm:$0xf]
      %v2205 = vld [vmem:[%s20 + $0x1c] sm:$0xf]
      %v2206 = vpack.c.bf16 %v2197, %v2197
      %v2207 = vld [vmem:[%s21] sm:$0x1]
      %v2209 = vlaneseq
      %v2210 = vshrl.u32 %v2209, 7
      %v2211 = vsub.s32 0, %v2210
      %v2212 = vrot.slane %v2207, %v2211
      %v2222 = vunpack.c.l.b16 %v2198
      %v2223 = vunpack.c.l.b16 %v2199
      %v2224 = vunpack.c.l.b16 %v2200
      %v2225 = vunpack.c.l.b16 %v2201
      %v2226 = vunpack.c.l.b16 %v2202
      %v2227 = vunpack.c.l.b16 %v2203
      %v2228 = vunpack.c.l.b16 %v2204
      %v2229 = vunpack.c.l.b16 %v2205
      %v2230 = vpack.c.b16 %v2223, %v2222
      %v2231 = vpack.c.b16 %v2225, %v2224
      %v2232 = vpack.c.b16 %v2227, %v2226
      %v2233 = vpack.c.b16 %v2229, %v2228
      %vm2238 = vcmask 523264
      %v2240 = vsel %vm2238, %v2206, 0
      %2242 = vmatprep.subr.bf16.mxu0 0
      %2243 = vmatpush1.bf16.msra.mxu0 %v2230
      %2244 = vmatprep.subr.bf16.mxu0 0
      %2245 = vmatpush1.bf16.msra.mxu0 %v2231
      %2246 = vmatprep.subr.bf16.mxu0 0
      %2247 = vmatpush1.bf16.msra.mxu0 %v2232
      %2248 = vmatprep.subr.bf16.mxu0 0
      %2249 = vmatpush1.bf16.msra.mxu0 %v2233
      %2250 = vmatprep.subr.bf16.mxu0 0
      %2251 = vmatpush1.bf16.msra.mxu0 0
      %2252 = vmatprep.subr.bf16.mxu0 0
      %2253 = vmatpush1.bf16.msra.mxu0 0
      %2254 = vmatprep.subr.bf16.mxu0 0
      %2255 = vmatpush1.bf16.msra.mxu0 0
      %2256 = vmatprep.subr.bf16.mxu0 0
      %2257 = vmatpush1.bf16.msra.mxu0 0
      %2258 = vmatprep.subr.bf16.mxu0 0
      %2259 = vmatpush1.bf16.msra.mxu0 0
      %2260 = vmatprep.subr.bf16.mxu0 0
      %2261 = vmatpush1.bf16.msra.mxu0 0
      %2262 = vmatprep.subr.bf16.mxu0 0
      %2263 = vmatpush1.bf16.msra.mxu0 0
      %2264 = vmatprep.subr.bf16.mxu0 0
      %2265 = vmatpush1.bf16.msra.mxu0 0
      %2266 = vmatprep.subr.bf16.mxu0 0
      %2267 = vmatpush1.bf16.msra.mxu0 0
      %2268 = vmatprep.subr.bf16.mxu0 0
      %2269 = vmatpush1.bf16.msra.mxu0 0
      %2270 = vmatprep.subr.bf16.mxu0 0
      %2271 = vmatpush1.bf16.msra.mxu0 0
      %2272 = vmatprep.subr.bf16.mxu0 0
      %2273 = vmatpush1.bf16.msra.mxu0 0
      %2274 = vmatprep.mubr.bf16.mxu0 0
      %2275 = vmatmul.mubr.bf16.gmra.mrb[0].mxu0 %v2240
      %v2276 = vpop.f32.mrb[0].mxu0
      %v2277 = vadd.f32 %v2212, %v2276
      %v2278 = vpop.f32.mrb[0].mxu0
      %v2279 = vpop.f32.mrb[0].mxu0
      %v2280 = vpop.f32.mrb[0].mxu0
      %2281 = vdwg.mxu0
      %v2282 = vadd.f32 %v2129, %v2277
      %v2283 = vld [vmem:[%s22] sm:$0x1]
      %v2284 = vld [vmem:[%s23] sm:$0x1]
      %v2285 = vsel %vm821, %v2282, 0.0
      %2286 = vadd.xlane.f32.xlu0 %v2285
      %v2287 = vpop.xlane.xlu0 %2286
      %v2288 = vmul.f32 %v2287, %v1405
      %v2289 = vsub.f32 %v2282, %v2288
      %v2290 = vmul.f32 %v2289, %v2289
      %v2291 = vsel %vm821, %v2290, 0.0
      %2292 = vadd.xlane.f32.xlu0 %v2291
      %v2293 = vpop.xlane.xlu0 %2292
      %v2294 = vmul.f32 %v2293, %v1405
      %v2295 = vadd.f32 %v2294, 1e-05
      %v2296 = vrsqrt.pop %v2295
      %v2297 = vmul.f32 %v2289, %v2296
      %v2299 = vlaneseq
      %v2300 = vshrl.u32 %v2299, 7
      %v2301 = vsub.s32 0, %v2300
      %v2302 = vrot.slane %v2283, %v2301
      %v2304 = vmul.f32 %v2297, %v2302
      %v2306 = vlaneseq
      %v2307 = vshrl.u32 %v2306, 7
      %v2308 = vsub.s32 0, %v2307
      %v2309 = vrot.slane %v2284, %v2308
      %v2311 = vadd.f32 %v2304, %v2309
      %2312 = vst.msk [vmem:[%s777] sm:$0xff] %vm821, %v2311
      %p2313 = scmp.lt.s32.totalorder %s35, 1
      %s2314 = scalar_select %p2313, %s35, 1
      %s2315 = smul.addr %s2314, 8
      %s2316 = scalar_lea.vmem %s24, %s2315
      // Predicated region
      $region117: #{_lambda_.7} parent=115 // pred_check
        %p2317 = pneg %p577
      $region118: #{_lambda_.7} parent=115 // pred_check_branch
        %2319 = sbr.rel (%p2317) target = $region120
      $region119: #{_lambda_.7} parent=115 // pred_region
        _
      $region120: #{_lambda_.7} parent=115 // pred_fallthru
        _
    $region116: #{_lambda_.7} parent=5 // pred_fallthru
      _
    %p2320 = scmp.le.s32.totalorder 2, %s30
    // Predicated region
    $region121: #{_lambda_.7} parent=5 // pred_check
      %p2321 = pneg %p2320
    $region122: #{_lambda_.7} parent=5 // pred_check_branch
      %2323 = sbr.rel (%p2321) target = $region124
    $region123: #{_lambda_.7} parent=5 // pred_region
      %s2324 = ssub.s32 %s30, 2
      // Predicated region
      $region125: #{_lambda_.7} parent=123 // pred_check
        %p2325 = pneg %p583
      $region126: #{_lambda_.7} parent=123 // pred_check_branch
        %2327 = sbr.rel (%p2325) target = $region128
      $region127: #{_lambda_.7} parent=123 // pred_region
        %p2328 = scmp.lt.s32.totalorder %s36, 1
        %s2329 = scalar_select %p2328, %s36, 1
        %s2330 = smul.addr %s2329, 8
        %s2331 = scalar_lea.vmem %s24, %s2330
      $region128: #{_lambda_.7} parent=123 // pred_fallthru
        _
    $region124: #{_lambda_.7} parent=5 // pred_fallthru
      _
  $region6: #{_lambda_.7} parent=0 // loop_footer
    %s34 = sadd.s32 1, %s30
  $region7: #{_lambda_.7} parent=0 // loop_footer_branch
    %29 = sbr.rel target = $region3
  $region8: #{_lambda_.7} parent=0 // loop_exit
    _

</llo_original>
